<compile_context>
chip_gen: v7x
topology: tpu7x:2x2x1
jax: 0.10.0
libtpu: 0.0.40
codegen_flags: <defaults>
</compile_context>

<pallas_src>
import functools

import jax
import jax.numpy as jnp
from jax.experimental import pallas as pl
from jax.experimental.pallas import tpu as pltpu

INPUT_SIZE = 19
HIDDEN = 128
NUM_LAYERS = 2


def _lstm2_chunk_kernel(gx0_ref, whh0_ref, wih1_ref, whh1_ref, b1_ref,
                        out_ref, gx1_sc, h0_sc, c0_sc, h1_sc, c1_sc):
    """Both LSTM layers over one T-chunk.

    gx0_ref:  (TC, B, 4H)  precomputed x @ W_ih0^T + (b_ih0 + b_hh0)
    whh0_ref: (H, 4H)      layer-0 recurrent weight (transposed)
    wih1_ref: (H, 4H)      layer-1 input weight (transposed)
    whh1_ref: (H, 4H)      layer-1 recurrent weight (transposed)
    b1_ref:   (1, 4H)      layer-1 bias (b_ih1 + b_hh1)
    out_ref:  (TC, B, H)   layer-1 hidden sequence for this chunk
    gx1_sc:   (TC, B, 4H)  layer-1 input projection, filled by the layer-0 loop
    h?_sc/c?_sc: (B, H)    recurrent state, persistent across grid steps
    """
    TC = gx0_ref.shape[0]
    B, H = h0_sc.shape

    @pl.when(pl.program_id(0) == 0)
    def _():
        h0_sc[...] = jnp.zeros_like(h0_sc)
        c0_sc[...] = jnp.zeros_like(c0_sc)
        h1_sc[...] = jnp.zeros_like(h1_sc)
        c1_sc[...] = jnp.zeros_like(c1_sc)

    # Hoisted bias broadcast (JAX does not CSE broadcast_in_dim).
    b1_b = jnp.broadcast_to(b1_ref[...], (B, 4 * H))

    def lstm_cell(gates, c_prev):
        i_g = jax.nn.sigmoid(gates[:, 0 * H:1 * H])
        f_g = jax.nn.sigmoid(gates[:, 1 * H:2 * H])
        g_g = jnp.tanh(gates[:, 2 * H:3 * H])
        o_g = jax.nn.sigmoid(gates[:, 3 * H:4 * H])
        c_new = f_g * c_prev + i_g * g_g
        h_new = o_g * jnp.tanh(c_new)
        return h_new, c_new

    unroll = TC if TC <= 32 else 8   # full unroll when short, partial otherwise

    # ---------------- layer 0 (state carried in vregs) ----------------
    # gates_t = gx0[t] + h_{t-1} @ W_hh0^T   (one K=128 matmul on the chain)
    # gx1[t]  = h_t @ W_ih1^T + b1           (off the critical path)
    def step0(t, carry):
        h_prev, c_prev = carry
        gates = gx0_ref[t] + jnp.dot(h_prev, whh0_ref[...],
                                     preferred_element_type=jnp.float32)
        h_new, c_new = lstm_cell(gates, c_prev)
        gx1_sc[t] = jnp.dot(h_new, wih1_ref[...],
                            preferred_element_type=jnp.float32) + b1_b
        return (h_new, c_new)

    h0, c0 = jax.lax.fori_loop(0, TC, step0, (h0_sc[...], c0_sc[...]),
                               unroll=unroll)
    h0_sc[...] = h0
    c0_sc[...] = c0

    # ---------------- layer 1 (state carried in vregs) ----------------
    # gates_t = gx1[t] + h1_{t-1} @ W_hh1^T   (single K=128 matmul per step)
    def step1(t, carry):
        h_prev, c_prev = carry
        gates = gx1_sc[t] + jnp.dot(h_prev, whh1_ref[...],
                                    preferred_element_type=jnp.float32)
        h_new, c_new = lstm_cell(gates, c_prev)
        out_ref[t] = h_new
        return (h_new, c_new)

    h1, c1 = jax.lax.fori_loop(0, TC, step1, (h1_sc[...], c1_sc[...]),
                               unroll=unroll)
    h1_sc[...] = h1
    c1_sc[...] = c1


def context_encoder_pallas(x_btd, params, *, chunk=128):
    """x_btd: (B, T, 19) float32 -> (B, T, 128) float32."""
    (w_ih0, w_hh0, b_ih0, b_hh0), (w_ih1, w_hh1, b_ih1, b_hh1) = params
    B, T, _ = x_btd.shape
    H = w_hh0.shape[1]

    x_tbd = jnp.transpose(x_btd, (1, 0, 2)).astype(jnp.float32)      # (T, B, D)

    # Batched (all timesteps) layer-0 input projection: one big GEMM.
    gx0 = (jnp.einsum('tbd,gd->tbg', x_tbd, w_ih0.astype(jnp.float32),
                      preferred_element_type=jnp.float32)
           + (b_ih0 + b_hh0).astype(jnp.float32))                    # (T, B, 4H)

    whh0_t = jnp.transpose(w_hh0).astype(jnp.float32)                # (H, 4H)
    wih1_t = jnp.transpose(w_ih1).astype(jnp.float32)                # (H, 4H)
    whh1_t = jnp.transpose(w_hh1).astype(jnp.float32)                # (H, 4H)
    b1 = (b_ih1 + b_hh1).reshape(1, 4 * H).astype(jnp.float32)       # (1, 4H)

    # ---- chunk the time axis so VMEM stays bounded for any T ----
    tc = min(chunk, T)
    t_pad = ((T + tc - 1) // tc) * tc
    if t_pad != T:
        gx0 = jnp.pad(gx0, ((0, t_pad - T), (0, 0), (0, 0)))         # zero pad
    n_chunks = t_pad // tc

    # VMEM budget for the compiler (f32, B padded to 8 sublanes).
    b_pad = max(8, ((B + 7) // 8) * 8)
    step_bytes = b_pad * 4 * H * 4
    vmem_est = (2 * tc * step_bytes                 # gx0, double-buffered
                + tc * step_bytes                   # gx1 scratch
                + 2 * tc * b_pad * H * 4            # out, double-buffered
                + 3 * H * 4 * H * 4                 # weights
                + (2 << 20))                        # slack
    vmem_limit = int(min(max(vmem_est, 16 << 20), 60 << 20))

    out_tbh = pl.pallas_call(
        _lstm2_chunk_kernel,
        out_shape=jax.ShapeDtypeStruct((t_pad, B, H), jnp.float32),
        grid=(n_chunks,),
        in_specs=[
            pl.BlockSpec((tc, B, 4 * H), lambda t: (t, 0, 0)),   # gx0 chunk
            pl.BlockSpec((H, 4 * H), lambda t: (0, 0)),          # whh0_t
            pl.BlockSpec((H, 4 * H), lambda t: (0, 0)),          # wih1_t
            pl.BlockSpec((H, 4 * H), lambda t: (0, 0)),          # whh1_t
            pl.BlockSpec((1, 4 * H), lambda t: (0, 0)),          # b1
        ],
        out_specs=pl.BlockSpec((tc, B, H), lambda t: (t, 0, 0)),
        scratch_shapes=[
            pltpu.VMEM((tc, B, 4 * H), jnp.float32),   # gx1 (layer-1 input proj)
            pltpu.VMEM((B, H), jnp.float32),           # h0
            pltpu.VMEM((B, H), jnp.float32),           # c0
            pltpu.VMEM((B, H), jnp.float32),           # h1
            pltpu.VMEM((B, H), jnp.float32),           # c1
        ],
        compiler_params=pltpu.CompilerParams(
            dimension_semantics=("arbitrary",),        # recurrence -> sequential
            vmem_limit_bytes=vmem_limit,
        ),
    )(gx0, whh0_t, wih1_t, whh1_t, b1)

    if t_pad != T:
        out_tbh = out_tbh[:T]
    return jnp.transpose(out_tbh, (1, 0, 2))                         # (B, T, H)


context_encoder_forward = jax.jit(context_encoder_pallas,
                                  static_argnames=("chunk",))


def make_params(key):
    """Deterministic LSTM weights with PyTorch-style shapes and init range."""
    params = []
    bound = 1.0 / jnp.sqrt(jnp.float32(HIDDEN))
    for layer in range(NUM_LAYERS):
        d_in = INPUT_SIZE if layer == 0 else HIDDEN
        key, k1, k2, k3, k4 = jax.random.split(key, 5)
        w_ih = jax.random.uniform(k1, (4 * HIDDEN, d_in), jnp.float32, -bound, bound)
        w_hh = jax.random.uniform(k2, (4 * HIDDEN, HIDDEN), jnp.float32, -bound, bound)
        b_ih = jax.random.uniform(k3, (4 * HIDDEN,), jnp.float32, -bound, bound)
        b_hh = jax.random.uniform(k4, (4 * HIDDEN,), jnp.float32, -bound, bound)
        params.append((w_ih, w_hh, b_ih, b_hh))
    return params


def _reference_forward(x_btd, params):
    """Pure-JAX LSTM reference (lax.scan) for correctness checking."""
    x = jnp.transpose(x_btd, (1, 0, 2))  # (T, B, D)
    B = x.shape[1]
    for (w_ih, w_hh, b_ih, b_hh) in params:
        h0 = jnp.zeros((B, HIDDEN), jnp.float32)
        c0 = jnp.zeros((B, HIDDEN), jnp.float32)

        def step(carry, x_t, w_ih=w_ih, w_hh=w_hh, b_ih=b_ih, b_hh=b_hh):
            h, c = carry
            gates = x_t @ w_ih.T + b_ih + h @ w_hh.T + b_hh
            i_g, f_g, g_g, o_g = jnp.split(gates, 4, axis=-1)
            i_g = jax.nn.sigmoid(i_g)
            f_g = jax.nn.sigmoid(f_g)
            g_g = jnp.tanh(g_g)
            o_g = jax.nn.sigmoid(o_g)
            c_new = f_g * c + i_g * g_g
            h_new = o_g * jnp.tanh(c_new)
            return (h_new, c_new), h_new

        _, x = jax.lax.scan(step, (h0, c0), x)
    return jnp.transpose(x, (1, 0, 2))


if __name__ == "__main__":
    key = jax.random.PRNGKey(0)
    key, kx1, kx2 = jax.random.split(key, 3)
    params = make_params(key)

    # Small primary test (single chunk, fully-unrolled time loop).
    B, T = 2, 8
    x = jax.random.normal(kx1, (B, T, INPUT_SIZE), jnp.float32)
    out = jax.block_until_ready(context_encoder_forward(x, params))
    assert out.shape == (B, T, HIDDEN), out.shape
    ref = _reference_forward(x, params)
    assert jnp.allclose(out, ref, atol=2e-5, rtol=2e-5), (
        float(jnp.max(jnp.abs(out - ref))))

    # Exercise the multi-chunk grid + partially-unrolled path (T padded 40->48).
    T2 = 40
    x2 = jax.random.normal(kx2, (B, T2, INPUT_SIZE), jnp.float32)
    out2 = jax.block_until_ready(context_encoder_forward(x2, params, chunk=16))
    assert out2.shape == (B, T2, HIDDEN), out2.shape
    ref2 = _reference_forward(x2, params)
    assert jnp.allclose(out2, ref2, atol=2e-5, rtol=2e-5), (
        float(jnp.max(jnp.abs(out2 - ref2))))

    print("KERNEL_OK")
</pallas_src>

<mosaic_0001>
module attributes {stable_mosaic.version = 11 : i64} {
  func.func @_lstm2_chunk_kernel(%arg0: i32, %arg1: memref<8x2x512xf32, #tpu.memory_space<vmem>>, %arg2: memref<128x512xf32, #tpu.memory_space<vmem>>, %arg3: memref<128x512xf32, #tpu.memory_space<vmem>>, %arg4: memref<128x512xf32, #tpu.memory_space<vmem>>, %arg5: memref<1x512xf32, #tpu.memory_space<vmem>>, %arg6: memref<8x2x128xf32, #tpu.memory_space<vmem>>, %arg7: memref<8x2x512xf32, #tpu.memory_space<vmem>>, %arg8: memref<2x128xf32, #tpu.memory_space<vmem>>, %arg9: memref<2x128xf32, #tpu.memory_space<vmem>>, %arg10: memref<2x128xf32, #tpu.memory_space<vmem>>, %arg11: memref<2x128xf32, #tpu.memory_space<vmem>>) attributes {dimension_semantics = [#tpu.dimension_semantics<arbitrary>], iteration_bounds = array<i64: 1>, scalar_prefetch = 0 : i64, scratch_operands = 5 : i64, tpu.core_type = #tpu.core_type<tc>, window_params = [{transform_indices = @transform_0, window_bounds = array<i64: 8, 2, 512>}, {pipeline_mode = #tpu.pipeline_mode<synchronous>, transform_indices = @transform_1, window_bounds = array<i64: 128, 512>}, {pipeline_mode = #tpu.pipeline_mode<synchronous>, transform_indices = @transform_2, window_bounds = array<i64: 128, 512>}, {pipeline_mode = #tpu.pipeline_mode<synchronous>, transform_indices = @transform_3, window_bounds = array<i64: 128, 512>}, {pipeline_mode = #tpu.pipeline_mode<synchronous>, transform_indices = @transform_4, window_bounds = array<i64: 1, 512>}, {transform_indices = @transform_5, window_bounds = array<i64: 8, 2, 128>}]} {
    %c0_i32 = arith.constant 0 : i32
    %0 = arith.cmpi eq, %arg0, %c0_i32 : i32
    %1 = arith.extui %0 : i1 to i32
    %c0_i32_0 = arith.constant 0 : i32
    %2 = arith.cmpi ne, %1, %c0_i32_0 : i32
    scf.if %2 {
      %cst_211 = arith.constant 0.000000e+00 : f32
      %598 = vector.broadcast %cst_211 : f32 to vector<2x128xf32>
      %c0_212 = arith.constant 0 : index
      %c0_213 = arith.constant 0 : index
      %599 = vector.load %arg8[%c0_212, %c0_213] : memref<2x128xf32, #tpu.memory_space<vmem>>, vector<2x128xf32>
      tpu.vector_store %arg8[%c0_212, %c0_213], %598 {strides = array<i32>} : memref<2x128xf32, #tpu.memory_space<vmem>>, vector<2x128xf32>,
      %cst_214 = arith.constant 0.000000e+00 : f32
      %600 = vector.broadcast %cst_214 : f32 to vector<2x128xf32>
      %c0_215 = arith.constant 0 : index
      %c0_216 = arith.constant 0 : index
      %601 = vector.load %arg9[%c0_215, %c0_216] : memref<2x128xf32, #tpu.memory_space<vmem>>, vector<2x128xf32>
      tpu.vector_store %arg9[%c0_215, %c0_216], %600 {strides = array<i32>} : memref<2x128xf32, #tpu.memory_space<vmem>>, vector<2x128xf32>,
      %cst_217 = arith.constant 0.000000e+00 : f32
      %602 = vector.broadcast %cst_217 : f32 to vector<2x128xf32>
      %c0_218 = arith.constant 0 : index
      %c0_219 = arith.constant 0 : index
      %603 = vector.load %arg10[%c0_218, %c0_219] : memref<2x128xf32, #tpu.memory_space<vmem>>, vector<2x128xf32>
      tpu.vector_store %arg10[%c0_218, %c0_219], %602 {strides = array<i32>} : memref<2x128xf32, #tpu.memory_space<vmem>>, vector<2x128xf32>,
      %cst_220 = arith.constant 0.000000e+00 : f32
      %604 = vector.broadcast %cst_220 : f32 to vector<2x128xf32>
      %c0_221 = arith.constant 0 : index
      %c0_222 = arith.constant 0 : index
      %605 = vector.load %arg11[%c0_221, %c0_222] : memref<2x128xf32, #tpu.memory_space<vmem>>, vector<2x128xf32>
      tpu.vector_store %arg11[%c0_221, %c0_222], %604 {strides = array<i32>} : memref<2x128xf32, #tpu.memory_space<vmem>>, vector<2x128xf32>,
    } else {
    }
    %c0 = arith.constant 0 : index
    %c0_1 = arith.constant 0 : index
    %3 = vector.load %arg5[%c0, %c0_1] : memref<1x512xf32, #tpu.memory_space<vmem>>, vector<1x512xf32>
    %4 = vector.shape_cast %3 : vector<1x512xf32> to vector<1x512xf32>
    %5 = vector.broadcast %4 : vector<1x512xf32> to vector<2x512xf32>
    %c0_2 = arith.constant 0 : index
    %c0_3 = arith.constant 0 : index
    %6 = vector.load %arg8[%c0_2, %c0_3] : memref<2x128xf32, #tpu.memory_space<vmem>>, vector<2x128xf32>
    %c0_4 = arith.constant 0 : index
    %c0_5 = arith.constant 0 : index
    %7 = vector.load %arg9[%c0_4, %c0_5] : memref<2x128xf32, #tpu.memory_space<vmem>>, vector<2x128xf32>
    %c0_i32_6 = arith.constant 0 : i32
    %8 = arith.index_cast %c0_i32_6 : i32 to index
    %c0_7 = arith.constant 0 : index
    %c0_8 = arith.constant 0 : index
    %9 = vector.load %arg1[%8, %c0_7, %c0_8] : memref<8x2x512xf32, #tpu.memory_space<vmem>>, vector<1x2x512xf32>
    %10 = vector.shape_cast %9 : vector<1x2x512xf32> to vector<2x512xf32>
    %c0_9 = arith.constant 0 : index
    %c0_10 = arith.constant 0 : index
    %11 = vector.load %arg2[%c0_9, %c0_10] : memref<128x512xf32, #tpu.memory_space<vmem>>, vector<128x512xf32>
    %cst = arith.constant dense<0.000000e+00> : vector<2x512xf32>
    %12 = tpu.matmul %6, %11, %cst {dimension_numbers = #tpu.dot_dimension_numbers<[1], [0], [0], [1], [0, 0, 1, 1], [], []>} : vector<2x128xf32>, vector<128x512xf32>, vector<2x512xf32> -> vector<2x512xf32>
    %13 = arith.addf %10, %12 : vector<2x512xf32>
    %14 = vector.extract_strided_slice %13 {offsets = [0, 0], sizes = [2, 128], strides = [1, 1]} : vector<2x512xf32> to vector<2x128xf32>
    %15 = arith.negf %14 : vector<2x128xf32>
    %16 = math.exp %15 : vector<2x128xf32>
    %cst_11 = arith.constant 1.000000e+00 : f32
    %17 = vector.broadcast %cst_11 : f32 to vector<2x128xf32>
    %18 = arith.addf %17, %16 : vector<2x128xf32>
    %19 = arith.divf %17, %18 : vector<2x128xf32>
    %20 = vector.extract_strided_slice %13 {offsets = [0, 128], sizes = [2, 128], strides = [1, 1]} : vector<2x512xf32> to vector<2x128xf32>
    %21 = arith.negf %20 : vector<2x128xf32>
    %22 = math.exp %21 : vector<2x128xf32>
    %cst_12 = arith.constant 1.000000e+00 : f32
    %23 = vector.broadcast %cst_12 : f32 to vector<2x128xf32>
    %24 = arith.addf %23, %22 : vector<2x128xf32>
    %25 = arith.divf %23, %24 : vector<2x128xf32>
    %26 = vector.extract_strided_slice %13 {offsets = [0, 256], sizes = [2, 128], strides = [1, 1]} : vector<2x512xf32> to vector<2x128xf32>
    %27 = math.tanh %26 : vector<2x128xf32>
    %28 = vector.extract_strided_slice %13 {offsets = [0, 384], sizes = [2, 128], strides = [1, 1]} : vector<2x512xf32> to vector<2x128xf32>
    %29 = arith.negf %28 : vector<2x128xf32>
    %30 = math.exp %29 : vector<2x128xf32>
    %cst_13 = arith.constant 1.000000e+00 : f32
    %31 = vector.broadcast %cst_13 : f32 to vector<2x128xf32>
    %32 = arith.addf %31, %30 : vector<2x128xf32>
    %33 = arith.divf %31, %32 : vector<2x128xf32>
    %34 = arith.mulf %25, %7 : vector<2x128xf32>
    %35 = arith.mulf %19, %27 : vector<2x128xf32>
    %36 = arith.addf %34, %35 : vector<2x128xf32>
    %37 = math.tanh %36 : vector<2x128xf32>
    %38 = arith.mulf %33, %37 : vector<2x128xf32>
    %c0_14 = arith.constant 0 : index
    %c0_15 = arith.constant 0 : index
    %39 = vector.load %arg3[%c0_14, %c0_15] : memref<128x512xf32, #tpu.memory_space<vmem>>, vector<128x512xf32>
    %cst_16 = arith.constant dense<0.000000e+00> : vector<2x512xf32>
    %40 = tpu.matmul %38, %39, %cst_16 {dimension_numbers = #tpu.dot_dimension_numbers<[1], [0], [0], [1], [0, 0, 1, 1], [], []>} : vector<2x128xf32>, vector<128x512xf32>, vector<2x512xf32> -> vector<2x512xf32>
    %41 = arith.addf %40, %5 : vector<2x512xf32>
    %42 = arith.index_cast %c0_i32_6 : i32 to index
    %c0_17 = arith.constant 0 : index
    %c0_18 = arith.constant 0 : index
    %43 = vector.load %arg7[%42, %c0_17, %c0_18] : memref<8x2x512xf32, #tpu.memory_space<vmem>>, vector<1x2x512xf32>
    %44 = vector.shape_cast %43 : vector<1x2x512xf32> to vector<2x512xf32>
    %45 = vector.shape_cast %41 : vector<2x512xf32> to vector<1x2x512xf32>
    tpu.vector_store %arg7[%42, %c0_17, %c0_18], %45 {strides = array<i32>} : memref<8x2x512xf32, #tpu.memory_space<vmem>>, vector<1x2x512xf32>,
    %c1_i32 = arith.constant 1 : i32
    %46 = arith.index_cast %c1_i32 : i32 to index
    %c0_19 = arith.constant 0 : index
    %c0_20 = arith.constant 0 : index
    %47 = vector.load %arg1[%46, %c0_19, %c0_20] : memref<8x2x512xf32, #tpu.memory_space<vmem>>, vector<1x2x512xf32>
    %48 = vector.shape_cast %47 : vector<1x2x512xf32> to vector<2x512xf32>
    %c0_21 = arith.constant 0 : index
    %c0_22 = arith.constant 0 : index
    %49 = vector.load %arg2[%c0_21, %c0_22] : memref<128x512xf32, #tpu.memory_space<vmem>>, vector<128x512xf32>
    %cst_23 = arith.constant dense<0.000000e+00> : vector<2x512xf32>
    %50 = tpu.matmul %38, %49, %cst_23 {dimension_numbers = #tpu.dot_dimension_numbers<[1], [0], [0], [1], [0, 0, 1, 1], [], []>} : vector<2x128xf32>, vector<128x512xf32>, vector<2x512xf32> -> vector<2x512xf32>
    %51 = arith.addf %48, %50 : vector<2x512xf32>
    %52 = vector.extract_strided_slice %51 {offsets = [0, 0], sizes = [2, 128], strides = [1, 1]} : vector<2x512xf32> to vector<2x128xf32>
    %53 = arith.negf %52 : vector<2x128xf32>
    %54 = math.exp %53 : vector<2x128xf32>
    %cst_24 = arith.constant 1.000000e+00 : f32
    %55 = vector.broadcast %cst_24 : f32 to vector<2x128xf32>
    %56 = arith.addf %55, %54 : vector<2x128xf32>
    %57 = arith.divf %55, %56 : vector<2x128xf32>
    %58 = vector.extract_strided_slice %51 {offsets = [0, 128], sizes = [2, 128], strides = [1, 1]} : vector<2x512xf32> to vector<2x128xf32>
    %59 = arith.negf %58 : vector<2x128xf32>
    %60 = math.exp %59 : vector<2x128xf32>
    %cst_25 = arith.constant 1.000000e+00 : f32
    %61 = vector.broadcast %cst_25 : f32 to vector<2x128xf32>
    %62 = arith.addf %61, %60 : vector<2x128xf32>
    %63 = arith.divf %61, %62 : vector<2x128xf32>
    %64 = vector.extract_strided_slice %51 {offsets = [0, 256], sizes = [2, 128], strides = [1, 1]} : vector<2x512xf32> to vector<2x128xf32>
    %65 = math.tanh %64 : vector<2x128xf32>
    %66 = vector.extract_strided_slice %51 {offsets = [0, 384], sizes = [2, 128], strides = [1, 1]} : vector<2x512xf32> to vector<2x128xf32>
    %67 = arith.negf %66 : vector<2x128xf32>
    %68 = math.exp %67 : vector<2x128xf32>
    %cst_26 = arith.constant 1.000000e+00 : f32
    %69 = vector.broadcast %cst_26 : f32 to vector<2x128xf32>
    %70 = arith.addf %69, %68 : vector<2x128xf32>
    %71 = arith.divf %69, %70 : vector<2x128xf32>
    %72 = arith.mulf %63, %36 : vector<2x128xf32>
    %73 = arith.mulf %57, %65 : vector<2x128xf32>
    %74 = arith.addf %72, %73 : vector<2x128xf32>
    %75 = math.tanh %74 : vector<2x128xf32>
    %76 = arith.mulf %71, %75 : vector<2x128xf32>
    %c0_27 = arith.constant 0 : index
    %c0_28 = arith.constant 0 : index
    %77 = vector.load %arg3[%c0_27, %c0_28] : memref<128x512xf32, #tpu.memory_space<vmem>>, vector<128x512xf32>
    %cst_29 = arith.constant dense<0.000000e+00> : vector<2x512xf32>
    %78 = tpu.matmul %76, %77, %cst_29 {dimension_numbers = #tpu.dot_dimension_numbers<[1], [0], [0], [1], [0, 0, 1, 1], [], []>} : vector<2x128xf32>, vector<128x512xf32>, vector<2x512xf32> -> vector<2x512xf32>
    %79 = arith.addf %78, %5 : vector<2x512xf32>
    %80 = arith.index_cast %c1_i32 : i32 to index
    %c0_30 = arith.constant 0 : index
    %c0_31 = arith.constant 0 : index
    %81 = vector.load %arg7[%80, %c0_30, %c0_31] : memref<8x2x512xf32, #tpu.memory_space<vmem>>, vector<1x2x512xf32>
    %82 = vector.shape_cast %81 : vector<1x2x512xf32> to vector<2x512xf32>
    %83 = vector.shape_cast %79 : vector<2x512xf32> to vector<1x2x512xf32>
    tpu.vector_store %arg7[%80, %c0_30, %c0_31], %83 {strides = array<i32>} : memref<8x2x512xf32, #tpu.memory_space<vmem>>, vector<1x2x512xf32>,
    %c2_i32 = arith.constant 2 : i32
    %84 = arith.index_cast %c2_i32 : i32 to index
    %c0_32 = arith.constant 0 : index
    %c0_33 = arith.constant 0 : index
    %85 = vector.load %arg1[%84, %c0_32, %c0_33] : memref<8x2x512xf32, #tpu.memory_space<vmem>>, vector<1x2x512xf32>
    %86 = vector.shape_cast %85 : vector<1x2x512xf32> to vector<2x512xf32>
    %c0_34 = arith.constant 0 : index
    %c0_35 = arith.constant 0 : index
    %87 = vector.load %arg2[%c0_34, %c0_35] : memref<128x512xf32, #tpu.memory_space<vmem>>, vector<128x512xf32>
    %cst_36 = arith.constant dense<0.000000e+00> : vector<2x512xf32>
    %88 = tpu.matmul %76, %87, %cst_36 {dimension_numbers = #tpu.dot_dimension_numbers<[1], [0], [0], [1], [0, 0, 1, 1], [], []>} : vector<2x128xf32>, vector<128x512xf32>, vector<2x512xf32> -> vector<2x512xf32>
    %89 = arith.addf %86, %88 : vector<2x512xf32>
    %90 = vector.extract_strided_slice %89 {offsets = [0, 0], sizes = [2, 128], strides = [1, 1]} : vector<2x512xf32> to vector<2x128xf32>
    %91 = arith.negf %90 : vector<2x128xf32>
    %92 = math.exp %91 : vector<2x128xf32>
    %cst_37 = arith.constant 1.000000e+00 : f32
    %93 = vector.broadcast %cst_37 : f32 to vector<2x128xf32>
    %94 = arith.addf %93, %92 : vector<2x128xf32>
    %95 = arith.divf %93, %94 : vector<2x128xf32>
    %96 = vector.extract_strided_slice %89 {offsets = [0, 128], sizes = [2, 128], strides = [1, 1]} : vector<2x512xf32> to vector<2x128xf32>
    %97 = arith.negf %96 : vector<2x128xf32>
    %98 = math.exp %97 : vector<2x128xf32>
    %cst_38 = arith.constant 1.000000e+00 : f32
    %99 = vector.broadcast %cst_38 : f32 to vector<2x128xf32>
    %100 = arith.addf %99, %98 : vector<2x128xf32>
    %101 = arith.divf %99, %100 : vector<2x128xf32>
    %102 = vector.extract_strided_slice %89 {offsets = [0, 256], sizes = [2, 128], strides = [1, 1]} : vector<2x512xf32> to vector<2x128xf32>
    %103 = math.tanh %102 : vector<2x128xf32>
    %104 = vector.extract_strided_slice %89 {offsets = [0, 384], sizes = [2, 128], strides = [1, 1]} : vector<2x512xf32> to vector<2x128xf32>
    %105 = arith.negf %104 : vector<2x128xf32>
    %106 = math.exp %105 : vector<2x128xf32>
    %cst_39 = arith.constant 1.000000e+00 : f32
    %107 = vector.broadcast %cst_39 : f32 to vector<2x128xf32>
    %108 = arith.addf %107, %106 : vector<2x128xf32>
    %109 = arith.divf %107, %108 : vector<2x128xf32>
    %110 = arith.mulf %101, %74 : vector<2x128xf32>
    %111 = arith.mulf %95, %103 : vector<2x128xf32>
    %112 = arith.addf %110, %111 : vector<2x128xf32>
    %113 = math.tanh %112 : vector<2x128xf32>
    %114 = arith.mulf %109, %113 : vector<2x128xf32>
    %c0_40 = arith.constant 0 : index
    %c0_41 = arith.constant 0 : index
    %115 = vector.load %arg3[%c0_40, %c0_41] : memref<128x512xf32, #tpu.memory_space<vmem>>, vector<128x512xf32>
    %cst_42 = arith.constant dense<0.000000e+00> : vector<2x512xf32>
    %116 = tpu.matmul %114, %115, %cst_42 {dimension_numbers = #tpu.dot_dimension_numbers<[1], [0], [0], [1], [0, 0, 1, 1], [], []>} : vector<2x128xf32>, vector<128x512xf32>, vector<2x512xf32> -> vector<2x512xf32>
    %117 = arith.addf %116, %5 : vector<2x512xf32>
    %118 = arith.index_cast %c2_i32 : i32 to index
    %c0_43 = arith.constant 0 : index
    %c0_44 = arith.constant 0 : index
    %119 = vector.load %arg7[%118, %c0_43, %c0_44] : memref<8x2x512xf32, #tpu.memory_space<vmem>>, vector<1x2x512xf32>
    %120 = vector.shape_cast %119 : vector<1x2x512xf32> to vector<2x512xf32>
    %121 = vector.shape_cast %117 : vector<2x512xf32> to vector<1x2x512xf32>
    tpu.vector_store %arg7[%118, %c0_43, %c0_44], %121 {strides = array<i32>} : memref<8x2x512xf32, #tpu.memory_space<vmem>>, vector<1x2x512xf32>,
    %c3_i32 = arith.constant 3 : i32
    %122 = arith.index_cast %c3_i32 : i32 to index
    %c0_45 = arith.constant 0 : index
    %c0_46 = arith.constant 0 : index
    %123 = vector.load %arg1[%122, %c0_45, %c0_46] : memref<8x2x512xf32, #tpu.memory_space<vmem>>, vector<1x2x512xf32>
    %124 = vector.shape_cast %123 : vector<1x2x512xf32> to vector<2x512xf32>
    %c0_47 = arith.constant 0 : index
    %c0_48 = arith.constant 0 : index
    %125 = vector.load %arg2[%c0_47, %c0_48] : memref<128x512xf32, #tpu.memory_space<vmem>>, vector<128x512xf32>
    %cst_49 = arith.constant dense<0.000000e+00> : vector<2x512xf32>
    %126 = tpu.matmul %114, %125, %cst_49 {dimension_numbers = #tpu.dot_dimension_numbers<[1], [0], [0], [1], [0, 0, 1, 1], [], []>} : vector<2x128xf32>, vector<128x512xf32>, vector<2x512xf32> -> vector<2x512xf32>
    %127 = arith.addf %124, %126 : vector<2x512xf32>
    %128 = vector.extract_strided_slice %127 {offsets = [0, 0], sizes = [2, 128], strides = [1, 1]} : vector<2x512xf32> to vector<2x128xf32>
    %129 = arith.negf %128 : vector<2x128xf32>
    %130 = math.exp %129 : vector<2x128xf32>
    %cst_50 = arith.constant 1.000000e+00 : f32
    %131 = vector.broadcast %cst_50 : f32 to vector<2x128xf32>
    %132 = arith.addf %131, %130 : vector<2x128xf32>
    %133 = arith.divf %131, %132 : vector<2x128xf32>
    %134 = vector.extract_strided_slice %127 {offsets = [0, 128], sizes = [2, 128], strides = [1, 1]} : vector<2x512xf32> to vector<2x128xf32>
    %135 = arith.negf %134 : vector<2x128xf32>
    %136 = math.exp %135 : vector<2x128xf32>
    %cst_51 = arith.constant 1.000000e+00 : f32
    %137 = vector.broadcast %cst_51 : f32 to vector<2x128xf32>
    %138 = arith.addf %137, %136 : vector<2x128xf32>
    %139 = arith.divf %137, %138 : vector<2x128xf32>
    %140 = vector.extract_strided_slice %127 {offsets = [0, 256], sizes = [2, 128], strides = [1, 1]} : vector<2x512xf32> to vector<2x128xf32>
    %141 = math.tanh %140 : vector<2x128xf32>
    %142 = vector.extract_strided_slice %127 {offsets = [0, 384], sizes = [2, 128], strides = [1, 1]} : vector<2x512xf32> to vector<2x128xf32>
    %143 = arith.negf %142 : vector<2x128xf32>
    %144 = math.exp %143 : vector<2x128xf32>
    %cst_52 = arith.constant 1.000000e+00 : f32
    %145 = vector.broadcast %cst_52 : f32 to vector<2x128xf32>
    %146 = arith.addf %145, %144 : vector<2x128xf32>
    %147 = arith.divf %145, %146 : vector<2x128xf32>
    %148 = arith.mulf %139, %112 : vector<2x128xf32>
    %149 = arith.mulf %133, %141 : vector<2x128xf32>
    %150 = arith.addf %148, %149 : vector<2x128xf32>
    %151 = math.tanh %150 : vector<2x128xf32>
    %152 = arith.mulf %147, %151 : vector<2x128xf32>
    %c0_53 = arith.constant 0 : index
    %c0_54 = arith.constant 0 : index
    %153 = vector.load %arg3[%c0_53, %c0_54] : memref<128x512xf32, #tpu.memory_space<vmem>>, vector<128x512xf32>
    %cst_55 = arith.constant dense<0.000000e+00> : vector<2x512xf32>
    %154 = tpu.matmul %152, %153, %cst_55 {dimension_numbers = #tpu.dot_dimension_numbers<[1], [0], [0], [1], [0, 0, 1, 1], [], []>} : vector<2x128xf32>, vector<128x512xf32>, vector<2x512xf32> -> vector<2x512xf32>
    %155 = arith.addf %154, %5 : vector<2x512xf32>
    %156 = arith.index_cast %c3_i32 : i32 to index
    %c0_56 = arith.constant 0 : index
    %c0_57 = arith.constant 0 : index
    %157 = vector.load %arg7[%156, %c0_56, %c0_57] : memref<8x2x512xf32, #tpu.memory_space<vmem>>, vector<1x2x512xf32>
    %158 = vector.shape_cast %157 : vector<1x2x512xf32> to vector<2x512xf32>
    %159 = vector.shape_cast %155 : vector<2x512xf32> to vector<1x2x512xf32>
    tpu.vector_store %arg7[%156, %c0_56, %c0_57], %159 {strides = array<i32>} : memref<8x2x512xf32, #tpu.memory_space<vmem>>, vector<1x2x512xf32>,
    %c4_i32 = arith.constant 4 : i32
    %160 = arith.index_cast %c4_i32 : i32 to index
    %c0_58 = arith.constant 0 : index
    %c0_59 = arith.constant 0 : index
    %161 = vector.load %arg1[%160, %c0_58, %c0_59] : memref<8x2x512xf32, #tpu.memory_space<vmem>>, vector<1x2x512xf32>
    %162 = vector.shape_cast %161 : vector<1x2x512xf32> to vector<2x512xf32>
    %c0_60 = arith.constant 0 : index
    %c0_61 = arith.constant 0 : index
    %163 = vector.load %arg2[%c0_60, %c0_61] : memref<128x512xf32, #tpu.memory_space<vmem>>, vector<128x512xf32>
    %cst_62 = arith.constant dense<0.000000e+00> : vector<2x512xf32>
    %164 = tpu.matmul %152, %163, %cst_62 {dimension_numbers = #tpu.dot_dimension_numbers<[1], [0], [0], [1], [0, 0, 1, 1], [], []>} : vector<2x128xf32>, vector<128x512xf32>, vector<2x512xf32> -> vector<2x512xf32>
    %165 = arith.addf %162, %164 : vector<2x512xf32>
    %166 = vector.extract_strided_slice %165 {offsets = [0, 0], sizes = [2, 128], strides = [1, 1]} : vector<2x512xf32> to vector<2x128xf32>
    %167 = arith.negf %166 : vector<2x128xf32>
    %168 = math.exp %167 : vector<2x128xf32>
    %cst_63 = arith.constant 1.000000e+00 : f32
    %169 = vector.broadcast %cst_63 : f32 to vector<2x128xf32>
    %170 = arith.addf %169, %168 : vector<2x128xf32>
    %171 = arith.divf %169, %170 : vector<2x128xf32>
    %172 = vector.extract_strided_slice %165 {offsets = [0, 128], sizes = [2, 128], strides = [1, 1]} : vector<2x512xf32> to vector<2x128xf32>
    %173 = arith.negf %172 : vector<2x128xf32>
    %174 = math.exp %173 : vector<2x128xf32>
    %cst_64 = arith.constant 1.000000e+00 : f32
    %175 = vector.broadcast %cst_64 : f32 to vector<2x128xf32>
    %176 = arith.addf %175, %174 : vector<2x128xf32>
    %177 = arith.divf %175, %176 : vector<2x128xf32>
    %178 = vector.extract_strided_slice %165 {offsets = [0, 256], sizes = [2, 128], strides = [1, 1]} : vector<2x512xf32> to vector<2x128xf32>
    %179 = math.tanh %178 : vector<2x128xf32>
    %180 = vector.extract_strided_slice %165 {offsets = [0, 384], sizes = [2, 128], strides = [1, 1]} : vector<2x512xf32> to vector<2x128xf32>
    %181 = arith.negf %180 : vector<2x128xf32>
    %182 = math.exp %181 : vector<2x128xf32>
    %cst_65 = arith.constant 1.000000e+00 : f32
    %183 = vector.broadcast %cst_65 : f32 to vector<2x128xf32>
    %184 = arith.addf %183, %182 : vector<2x128xf32>
    %185 = arith.divf %183, %184 : vector<2x128xf32>
    %186 = arith.mulf %177, %150 : vector<2x128xf32>
    %187 = arith.mulf %171, %179 : vector<2x128xf32>
    %188 = arith.addf %186, %187 : vector<2x128xf32>
    %189 = math.tanh %188 : vector<2x128xf32>
    %190 = arith.mulf %185, %189 : vector<2x128xf32>
    %c0_66 = arith.constant 0 : index
    %c0_67 = arith.constant 0 : index
    %191 = vector.load %arg3[%c0_66, %c0_67] : memref<128x512xf32, #tpu.memory_space<vmem>>, vector<128x512xf32>
    %cst_68 = arith.constant dense<0.000000e+00> : vector<2x512xf32>
    %192 = tpu.matmul %190, %191, %cst_68 {dimension_numbers = #tpu.dot_dimension_numbers<[1], [0], [0], [1], [0, 0, 1, 1], [], []>} : vector<2x128xf32>, vector<128x512xf32>, vector<2x512xf32> -> vector<2x512xf32>
    %193 = arith.addf %192, %5 : vector<2x512xf32>
    %194 = arith.index_cast %c4_i32 : i32 to index
    %c0_69 = arith.constant 0 : index
    %c0_70 = arith.constant 0 : index
    %195 = vector.load %arg7[%194, %c0_69, %c0_70] : memref<8x2x512xf32, #tpu.memory_space<vmem>>, vector<1x2x512xf32>
    %196 = vector.shape_cast %195 : vector<1x2x512xf32> to vector<2x512xf32>
    %197 = vector.shape_cast %193 : vector<2x512xf32> to vector<1x2x512xf32>
    tpu.vector_store %arg7[%194, %c0_69, %c0_70], %197 {strides = array<i32>} : memref<8x2x512xf32, #tpu.memory_space<vmem>>, vector<1x2x512xf32>,
    %c5_i32 = arith.constant 5 : i32
    %198 = arith.index_cast %c5_i32 : i32 to index
    %c0_71 = arith.constant 0 : index
    %c0_72 = arith.constant 0 : index
    %199 = vector.load %arg1[%198, %c0_71, %c0_72] : memref<8x2x512xf32, #tpu.memory_space<vmem>>, vector<1x2x512xf32>
    %200 = vector.shape_cast %199 : vector<1x2x512xf32> to vector<2x512xf32>
    %c0_73 = arith.constant 0 : index
    %c0_74 = arith.constant 0 : index
    %201 = vector.load %arg2[%c0_73, %c0_74] : memref<128x512xf32, #tpu.memory_space<vmem>>, vector<128x512xf32>
    %cst_75 = arith.constant dense<0.000000e+00> : vector<2x512xf32>
    %202 = tpu.matmul %190, %201, %cst_75 {dimension_numbers = #tpu.dot_dimension_numbers<[1], [0], [0], [1], [0, 0, 1, 1], [], []>} : vector<2x128xf32>, vector<128x512xf32>, vector<2x512xf32> -> vector<2x512xf32>
    %203 = arith.addf %200, %202 : vector<2x512xf32>
    %204 = vector.extract_strided_slice %203 {offsets = [0, 0], sizes = [2, 128], strides = [1, 1]} : vector<2x512xf32> to vector<2x128xf32>
    %205 = arith.negf %204 : vector<2x128xf32>
    %206 = math.exp %205 : vector<2x128xf32>
    %cst_76 = arith.constant 1.000000e+00 : f32
    %207 = vector.broadcast %cst_76 : f32 to vector<2x128xf32>
    %208 = arith.addf %207, %206 : vector<2x128xf32>
    %209 = arith.divf %207, %208 : vector<2x128xf32>
    %210 = vector.extract_strided_slice %203 {offsets = [0, 128], sizes = [2, 128], strides = [1, 1]} : vector<2x512xf32> to vector<2x128xf32>
    %211 = arith.negf %210 : vector<2x128xf32>
    %212 = math.exp %211 : vector<2x128xf32>
    %cst_77 = arith.constant 1.000000e+00 : f32
    %213 = vector.broadcast %cst_77 : f32 to vector<2x128xf32>
    %214 = arith.addf %213, %212 : vector<2x128xf32>
    %215 = arith.divf %213, %214 : vector<2x128xf32>
    %216 = vector.extract_strided_slice %203 {offsets = [0, 256], sizes = [2, 128], strides = [1, 1]} : vector<2x512xf32> to vector<2x128xf32>
    %217 = math.tanh %216 : vector<2x128xf32>
    %218 = vector.extract_strided_slice %203 {offsets = [0, 384], sizes = [2, 128], strides = [1, 1]} : vector<2x512xf32> to vector<2x128xf32>
    %219 = arith.negf %218 : vector<2x128xf32>
    %220 = math.exp %219 : vector<2x128xf32>
    %cst_78 = arith.constant 1.000000e+00 : f32
    %221 = vector.broadcast %cst_78 : f32 to vector<2x128xf32>
    %222 = arith.addf %221, %220 : vector<2x128xf32>
    %223 = arith.divf %221, %222 : vector<2x128xf32>
    %224 = arith.mulf %215, %188 : vector<2x128xf32>
    %225 = arith.mulf %209, %217 : vector<2x128xf32>
    %226 = arith.addf %224, %225 : vector<2x128xf32>
    %227 = math.tanh %226 : vector<2x128xf32>
    %228 = arith.mulf %223, %227 : vector<2x128xf32>
    %c0_79 = arith.constant 0 : index
    %c0_80 = arith.constant 0 : index
    %229 = vector.load %arg3[%c0_79, %c0_80] : memref<128x512xf32, #tpu.memory_space<vmem>>, vector<128x512xf32>
    %cst_81 = arith.constant dense<0.000000e+00> : vector<2x512xf32>
    %230 = tpu.matmul %228, %229, %cst_81 {dimension_numbers = #tpu.dot_dimension_numbers<[1], [0], [0], [1], [0, 0, 1, 1], [], []>} : vector<2x128xf32>, vector<128x512xf32>, vector<2x512xf32> -> vector<2x512xf32>
    %231 = arith.addf %230, %5 : vector<2x512xf32>
    %232 = arith.index_cast %c5_i32 : i32 to index
    %c0_82 = arith.constant 0 : index
    %c0_83 = arith.constant 0 : index
    %233 = vector.load %arg7[%232, %c0_82, %c0_83] : memref<8x2x512xf32, #tpu.memory_space<vmem>>, vector<1x2x512xf32>
    %234 = vector.shape_cast %233 : vector<1x2x512xf32> to vector<2x512xf32>
    %235 = vector.shape_cast %231 : vector<2x512xf32> to vector<1x2x512xf32>
    tpu.vector_store %arg7[%232, %c0_82, %c0_83], %235 {strides = array<i32>} : memref<8x2x512xf32, #tpu.memory_space<vmem>>, vector<1x2x512xf32>,
    %c6_i32 = arith.constant 6 : i32
    %236 = arith.index_cast %c6_i32 : i32 to index
    %c0_84 = arith.constant 0 : index
    %c0_85 = arith.constant 0 : index
    %237 = vector.load %arg1[%236, %c0_84, %c0_85] : memref<8x2x512xf32, #tpu.memory_space<vmem>>, vector<1x2x512xf32>
    %238 = vector.shape_cast %237 : vector<1x2x512xf32> to vector<2x512xf32>
    %c0_86 = arith.constant 0 : index
    %c0_87 = arith.constant 0 : index
    %239 = vector.load %arg2[%c0_86, %c0_87] : memref<128x512xf32, #tpu.memory_space<vmem>>, vector<128x512xf32>
    %cst_88 = arith.constant dense<0.000000e+00> : vector<2x512xf32>
    %240 = tpu.matmul %228, %239, %cst_88 {dimension_numbers = #tpu.dot_dimension_numbers<[1], [0], [0], [1], [0, 0, 1, 1], [], []>} : vector<2x128xf32>, vector<128x512xf32>, vector<2x512xf32> -> vector<2x512xf32>
    %241 = arith.addf %238, %240 : vector<2x512xf32>
    %242 = vector.extract_strided_slice %241 {offsets = [0, 0], sizes = [2, 128], strides = [1, 1]} : vector<2x512xf32> to vector<2x128xf32>
    %243 = arith.negf %242 : vector<2x128xf32>
    %244 = math.exp %243 : vector<2x128xf32>
    %cst_89 = arith.constant 1.000000e+00 : f32
    %245 = vector.broadcast %cst_89 : f32 to vector<2x128xf32>
    %246 = arith.addf %245, %244 : vector<2x128xf32>
    %247 = arith.divf %245, %246 : vector<2x128xf32>
    %248 = vector.extract_strided_slice %241 {offsets = [0, 128], sizes = [2, 128], strides = [1, 1]} : vector<2x512xf32> to vector<2x128xf32>
    %249 = arith.negf %248 : vector<2x128xf32>
    %250 = math.exp %249 : vector<2x128xf32>
    %cst_90 = arith.constant 1.000000e+00 : f32
    %251 = vector.broadcast %cst_90 : f32 to vector<2x128xf32>
    %252 = arith.addf %251, %250 : vector<2x128xf32>
    %253 = arith.divf %251, %252 : vector<2x128xf32>
    %254 = vector.extract_strided_slice %241 {offsets = [0, 256], sizes = [2, 128], strides = [1, 1]} : vector<2x512xf32> to vector<2x128xf32>
    %255 = math.tanh %254 : vector<2x128xf32>
    %256 = vector.extract_strided_slice %241 {offsets = [0, 384], sizes = [2, 128], strides = [1, 1]} : vector<2x512xf32> to vector<2x128xf32>
    %257 = arith.negf %256 : vector<2x128xf32>
    %258 = math.exp %257 : vector<2x128xf32>
    %cst_91 = arith.constant 1.000000e+00 : f32
    %259 = vector.broadcast %cst_91 : f32 to vector<2x128xf32>
    %260 = arith.addf %259, %258 : vector<2x128xf32>
    %261 = arith.divf %259, %260 : vector<2x128xf32>
    %262 = arith.mulf %253, %226 : vector<2x128xf32>
    %263 = arith.mulf %247, %255 : vector<2x128xf32>
    %264 = arith.addf %262, %263 : vector<2x128xf32>
    %265 = math.tanh %264 : vector<2x128xf32>
    %266 = arith.mulf %261, %265 : vector<2x128xf32>
    %c0_92 = arith.constant 0 : index
    %c0_93 = arith.constant 0 : index
    %267 = vector.load %arg3[%c0_92, %c0_93] : memref<128x512xf32, #tpu.memory_space<vmem>>, vector<128x512xf32>
    %cst_94 = arith.constant dense<0.000000e+00> : vector<2x512xf32>
    %268 = tpu.matmul %266, %267, %cst_94 {dimension_numbers = #tpu.dot_dimension_numbers<[1], [0], [0], [1], [0, 0, 1, 1], [], []>} : vector<2x128xf32>, vector<128x512xf32>, vector<2x512xf32> -> vector<2x512xf32>
    %269 = arith.addf %268, %5 : vector<2x512xf32>
    %270 = arith.index_cast %c6_i32 : i32 to index
    %c0_95 = arith.constant 0 : index
    %c0_96 = arith.constant 0 : index
    %271 = vector.load %arg7[%270, %c0_95, %c0_96] : memref<8x2x512xf32, #tpu.memory_space<vmem>>, vector<1x2x512xf32>
    %272 = vector.shape_cast %271 : vector<1x2x512xf32> to vector<2x512xf32>
    %273 = vector.shape_cast %269 : vector<2x512xf32> to vector<1x2x512xf32>
    tpu.vector_store %arg7[%270, %c0_95, %c0_96], %273 {strides = array<i32>} : memref<8x2x512xf32, #tpu.memory_space<vmem>>, vector<1x2x512xf32>,
    %c7_i32 = arith.constant 7 : i32
    %274 = arith.index_cast %c7_i32 : i32 to index
    %c0_97 = arith.constant 0 : index
    %c0_98 = arith.constant 0 : index
    %275 = vector.load %arg1[%274, %c0_97, %c0_98] : memref<8x2x512xf32, #tpu.memory_space<vmem>>, vector<1x2x512xf32>
    %276 = vector.shape_cast %275 : vector<1x2x512xf32> to vector<2x512xf32>
    %c0_99 = arith.constant 0 : index
    %c0_100 = arith.constant 0 : index
    %277 = vector.load %arg2[%c0_99, %c0_100] : memref<128x512xf32, #tpu.memory_space<vmem>>, vector<128x512xf32>
    %cst_101 = arith.constant dense<0.000000e+00> : vector<2x512xf32>
    %278 = tpu.matmul %266, %277, %cst_101 {dimension_numbers = #tpu.dot_dimension_numbers<[1], [0], [0], [1], [0, 0, 1, 1], [], []>} : vector<2x128xf32>, vector<128x512xf32>, vector<2x512xf32> -> vector<2x512xf32>
    %279 = arith.addf %276, %278 : vector<2x512xf32>
    %280 = vector.extract_strided_slice %279 {offsets = [0, 0], sizes = [2, 128], strides = [1, 1]} : vector<2x512xf32> to vector<2x128xf32>
    %281 = arith.negf %280 : vector<2x128xf32>
    %282 = math.exp %281 : vector<2x128xf32>
    %cst_102 = arith.constant 1.000000e+00 : f32
    %283 = vector.broadcast %cst_102 : f32 to vector<2x128xf32>
    %284 = arith.addf %283, %282 : vector<2x128xf32>
    %285 = arith.divf %283, %284 : vector<2x128xf32>
    %286 = vector.extract_strided_slice %279 {offsets = [0, 128], sizes = [2, 128], strides = [1, 1]} : vector<2x512xf32> to vector<2x128xf32>
    %287 = arith.negf %286 : vector<2x128xf32>
    %288 = math.exp %287 : vector<2x128xf32>
    %cst_103 = arith.constant 1.000000e+00 : f32
    %289 = vector.broadcast %cst_103 : f32 to vector<2x128xf32>
    %290 = arith.addf %289, %288 : vector<2x128xf32>
    %291 = arith.divf %289, %290 : vector<2x128xf32>
    %292 = vector.extract_strided_slice %279 {offsets = [0, 256], sizes = [2, 128], strides = [1, 1]} : vector<2x512xf32> to vector<2x128xf32>
    %293 = math.tanh %292 : vector<2x128xf32>
    %294 = vector.extract_strided_slice %279 {offsets = [0, 384], sizes = [2, 128], strides = [1, 1]} : vector<2x512xf32> to vector<2x128xf32>
    %295 = arith.negf %294 : vector<2x128xf32>
    %296 = math.exp %295 : vector<2x128xf32>
    %cst_104 = arith.constant 1.000000e+00 : f32
    %297 = vector.broadcast %cst_104 : f32 to vector<2x128xf32>
    %298 = arith.addf %297, %296 : vector<2x128xf32>
    %299 = arith.divf %297, %298 : vector<2x128xf32>
    %300 = arith.mulf %291, %264 : vector<2x128xf32>
    %301 = arith.mulf %285, %293 : vector<2x128xf32>
    %302 = arith.addf %300, %301 : vector<2x128xf32>
    %303 = math.tanh %302 : vector<2x128xf32>
    %304 = arith.mulf %299, %303 : vector<2x128xf32>
    %c0_105 = arith.constant 0 : index
    %c0_106 = arith.constant 0 : index
    %305 = vector.load %arg3[%c0_105, %c0_106] : memref<128x512xf32, #tpu.memory_space<vmem>>, vector<128x512xf32>
    %cst_107 = arith.constant dense<0.000000e+00> : vector<2x512xf32>
    %306 = tpu.matmul %304, %305, %cst_107 {dimension_numbers = #tpu.dot_dimension_numbers<[1], [0], [0], [1], [0, 0, 1, 1], [], []>} : vector<2x128xf32>, vector<128x512xf32>, vector<2x512xf32> -> vector<2x512xf32>
    %307 = arith.addf %306, %5 : vector<2x512xf32>
    %308 = arith.index_cast %c7_i32 : i32 to index
    %c0_108 = arith.constant 0 : index
    %c0_109 = arith.constant 0 : index
    %309 = vector.load %arg7[%308, %c0_108, %c0_109] : memref<8x2x512xf32, #tpu.memory_space<vmem>>, vector<1x2x512xf32>
    %310 = vector.shape_cast %309 : vector<1x2x512xf32> to vector<2x512xf32>
    %311 = vector.shape_cast %307 : vector<2x512xf32> to vector<1x2x512xf32>
    tpu.vector_store %arg7[%308, %c0_108, %c0_109], %311 {strides = array<i32>} : memref<8x2x512xf32, #tpu.memory_space<vmem>>, vector<1x2x512xf32>,
    %c8_i32 = arith.constant 8 : i32
    %c0_110 = arith.constant 0 : index
    %c0_111 = arith.constant 0 : index
    %312 = vector.load %arg8[%c0_110, %c0_111] : memref<2x128xf32, #tpu.memory_space<vmem>>, vector<2x128xf32>
    tpu.vector_store %arg8[%c0_110, %c0_111], %304 {strides = array<i32>} : memref<2x128xf32, #tpu.memory_space<vmem>>, vector<2x128xf32>,
    %c0_112 = arith.constant 0 : index
    %c0_113 = arith.constant 0 : index
    %313 = vector.load %arg9[%c0_112, %c0_113] : memref<2x128xf32, #tpu.memory_space<vmem>>, vector<2x128xf32>
    tpu.vector_store %arg9[%c0_112, %c0_113], %302 {strides = array<i32>} : memref<2x128xf32, #tpu.memory_space<vmem>>, vector<2x128xf32>,
    %c0_114 = arith.constant 0 : index
    %c0_115 = arith.constant 0 : index
    %314 = vector.load %arg10[%c0_114, %c0_115] : memref<2x128xf32, #tpu.memory_space<vmem>>, vector<2x128xf32>
    %c0_116 = arith.constant 0 : index
    %c0_117 = arith.constant 0 : index
    %315 = vector.load %arg11[%c0_116, %c0_117] : memref<2x128xf32, #tpu.memory_space<vmem>>, vector<2x128xf32>
    %c0_i32_118 = arith.constant 0 : i32
    %316 = arith.index_cast %c0_i32_118 : i32 to index
    %c0_119 = arith.constant 0 : index
    %c0_120 = arith.constant 0 : index
    %317 = vector.load %arg7[%316, %c0_119, %c0_120] : memref<8x2x512xf32, #tpu.memory_space<vmem>>, vector<1x2x512xf32>
    %318 = vector.shape_cast %317 : vector<1x2x512xf32> to vector<2x512xf32>
    %c0_121 = arith.constant 0 : index
    %c0_122 = arith.constant 0 : index
    %319 = vector.load %arg4[%c0_121, %c0_122] : memref<128x512xf32, #tpu.memory_space<vmem>>, vector<128x512xf32>
    %cst_123 = arith.constant dense<0.000000e+00> : vector<2x512xf32>
    %320 = tpu.matmul %314, %319, %cst_123 {dimension_numbers = #tpu.dot_dimension_numbers<[1], [0], [0], [1], [0, 0, 1, 1], [], []>} : vector<2x128xf32>, vector<128x512xf32>, vector<2x512xf32> -> vector<2x512xf32>
    %321 = arith.addf %318, %320 : vector<2x512xf32>
    %322 = vector.extract_strided_slice %321 {offsets = [0, 0], sizes = [2, 128], strides = [1, 1]} : vector<2x512xf32> to vector<2x128xf32>
    %323 = arith.negf %322 : vector<2x128xf32>
    %324 = math.exp %323 : vector<2x128xf32>
    %cst_124 = arith.constant 1.000000e+00 : f32
    %325 = vector.broadcast %cst_124 : f32 to vector<2x128xf32>
    %326 = arith.addf %325, %324 : vector<2x128xf32>
    %327 = arith.divf %325, %326 : vector<2x128xf32>
    %328 = vector.extract_strided_slice %321 {offsets = [0, 128], sizes = [2, 128], strides = [1, 1]} : vector<2x512xf32> to vector<2x128xf32>
    %329 = arith.negf %328 : vector<2x128xf32>
    %330 = math.exp %329 : vector<2x128xf32>
    %cst_125 = arith.constant 1.000000e+00 : f32
    %331 = vector.broadcast %cst_125 : f32 to vector<2x128xf32>
    %332 = arith.addf %331, %330 : vector<2x128xf32>
    %333 = arith.divf %331, %332 : vector<2x128xf32>
    %334 = vector.extract_strided_slice %321 {offsets = [0, 256], sizes = [2, 128], strides = [1, 1]} : vector<2x512xf32> to vector<2x128xf32>
    %335 = math.tanh %334 : vector<2x128xf32>
    %336 = vector.extract_strided_slice %321 {offsets = [0, 384], sizes = [2, 128], strides = [1, 1]} : vector<2x512xf32> to vector<2x128xf32>
    %337 = arith.negf %336 : vector<2x128xf32>
    %338 = math.exp %337 : vector<2x128xf32>
    %cst_126 = arith.constant 1.000000e+00 : f32
    %339 = vector.broadcast %cst_126 : f32 to vector<2x128xf32>
    %340 = arith.addf %339, %338 : vector<2x128xf32>
    %341 = arith.divf %339, %340 : vector<2x128xf32>
    %342 = arith.mulf %333, %315 : vector<2x128xf32>
    %343 = arith.mulf %327, %335 : vector<2x128xf32>
    %344 = arith.addf %342, %343 : vector<2x128xf32>
    %345 = math.tanh %344 : vector<2x128xf32>
    %346 = arith.mulf %341, %345 : vector<2x128xf32>
    %347 = arith.index_cast %c0_i32_118 : i32 to index
    %c0_127 = arith.constant 0 : index
    %c0_128 = arith.constant 0 : index
    %348 = vector.load %arg6[%347, %c0_127, %c0_128] : memref<8x2x128xf32, #tpu.memory_space<vmem>>, vector<1x2x128xf32>
    %349 = vector.shape_cast %348 : vector<1x2x128xf32> to vector<2x128xf32>
    %350 = vector.shape_cast %346 : vector<2x128xf32> to vector<1x2x128xf32>
    tpu.vector_store %arg6[%347, %c0_127, %c0_128], %350 {strides = array<i32>} : memref<8x2x128xf32, #tpu.memory_space<vmem>>, vector<1x2x128xf32>,
    %c1_i32_129 = arith.constant 1 : i32
    %351 = arith.index_cast %c1_i32_129 : i32 to index
    %c0_130 = arith.constant 0 : index
    %c0_131 = arith.constant 0 : index
    %352 = vector.load %arg7[%351, %c0_130, %c0_131] : memref<8x2x512xf32, #tpu.memory_space<vmem>>, vector<1x2x512xf32>
    %353 = vector.shape_cast %352 : vector<1x2x512xf32> to vector<2x512xf32>
    %c0_132 = arith.constant 0 : index
    %c0_133 = arith.constant 0 : index
    %354 = vector.load %arg4[%c0_132, %c0_133] : memref<128x512xf32, #tpu.memory_space<vmem>>, vector<128x512xf32>
    %cst_134 = arith.constant dense<0.000000e+00> : vector<2x512xf32>
    %355 = tpu.matmul %346, %354, %cst_134 {dimension_numbers = #tpu.dot_dimension_numbers<[1], [0], [0], [1], [0, 0, 1, 1], [], []>} : vector<2x128xf32>, vector<128x512xf32>, vector<2x512xf32> -> vector<2x512xf32>
    %356 = arith.addf %353, %355 : vector<2x512xf32>
    %357 = vector.extract_strided_slice %356 {offsets = [0, 0], sizes = [2, 128], strides = [1, 1]} : vector<2x512xf32> to vector<2x128xf32>
    %358 = arith.negf %357 : vector<2x128xf32>
    %359 = math.exp %358 : vector<2x128xf32>
    %cst_135 = arith.constant 1.000000e+00 : f32
    %360 = vector.broadcast %cst_135 : f32 to vector<2x128xf32>
    %361 = arith.addf %360, %359 : vector<2x128xf32>
    %362 = arith.divf %360, %361 : vector<2x128xf32>
    %363 = vector.extract_strided_slice %356 {offsets = [0, 128], sizes = [2, 128], strides = [1, 1]} : vector<2x512xf32> to vector<2x128xf32>
    %364 = arith.negf %363 : vector<2x128xf32>
    %365 = math.exp %364 : vector<2x128xf32>
    %cst_136 = arith.constant 1.000000e+00 : f32
    %366 = vector.broadcast %cst_136 : f32 to vector<2x128xf32>
    %367 = arith.addf %366, %365 : vector<2x128xf32>
    %368 = arith.divf %366, %367 : vector<2x128xf32>
    %369 = vector.extract_strided_slice %356 {offsets = [0, 256], sizes = [2, 128], strides = [1, 1]} : vector<2x512xf32> to vector<2x128xf32>
    %370 = math.tanh %369 : vector<2x128xf32>
    %371 = vector.extract_strided_slice %356 {offsets = [0, 384], sizes = [2, 128], strides = [1, 1]} : vector<2x512xf32> to vector<2x128xf32>
    %372 = arith.negf %371 : vector<2x128xf32>
    %373 = math.exp %372 : vector<2x128xf32>
    %cst_137 = arith.constant 1.000000e+00 : f32
    %374 = vector.broadcast %cst_137 : f32 to vector<2x128xf32>
    %375 = arith.addf %374, %373 : vector<2x128xf32>
    %376 = arith.divf %374, %375 : vector<2x128xf32>
    %377 = arith.mulf %368, %344 : vector<2x128xf32>
    %378 = arith.mulf %362, %370 : vector<2x128xf32>
    %379 = arith.addf %377, %378 : vector<2x128xf32>
    %380 = math.tanh %379 : vector<2x128xf32>
    %381 = arith.mulf %376, %380 : vector<2x128xf32>
    %382 = arith.index_cast %c1_i32_129 : i32 to index
    %c0_138 = arith.constant 0 : index
    %c0_139 = arith.constant 0 : index
    %383 = vector.load %arg6[%382, %c0_138, %c0_139] : memref<8x2x128xf32, #tpu.memory_space<vmem>>, vector<1x2x128xf32>
    %384 = vector.shape_cast %383 : vector<1x2x128xf32> to vector<2x128xf32>
    %385 = vector.shape_cast %381 : vector<2x128xf32> to vector<1x2x128xf32>
    tpu.vector_store %arg6[%382, %c0_138, %c0_139], %385 {strides = array<i32>} : memref<8x2x128xf32, #tpu.memory_space<vmem>>, vector<1x2x128xf32>,
    %c2_i32_140 = arith.constant 2 : i32
    %386 = arith.index_cast %c2_i32_140 : i32 to index
    %c0_141 = arith.constant 0 : index
    %c0_142 = arith.constant 0 : index
    %387 = vector.load %arg7[%386, %c0_141, %c0_142] : memref<8x2x512xf32, #tpu.memory_space<vmem>>, vector<1x2x512xf32>
    %388 = vector.shape_cast %387 : vector<1x2x512xf32> to vector<2x512xf32>
    %c0_143 = arith.constant 0 : index
    %c0_144 = arith.constant 0 : index
    %389 = vector.load %arg4[%c0_143, %c0_144] : memref<128x512xf32, #tpu.memory_space<vmem>>, vector<128x512xf32>
    %cst_145 = arith.constant dense<0.000000e+00> : vector<2x512xf32>
    %390 = tpu.matmul %381, %389, %cst_145 {dimension_numbers = #tpu.dot_dimension_numbers<[1], [0], [0], [1], [0, 0, 1, 1], [], []>} : vector<2x128xf32>, vector<128x512xf32>, vector<2x512xf32> -> vector<2x512xf32>
    %391 = arith.addf %388, %390 : vector<2x512xf32>
    %392 = vector.extract_strided_slice %391 {offsets = [0, 0], sizes = [2, 128], strides = [1, 1]} : vector<2x512xf32> to vector<2x128xf32>
    %393 = arith.negf %392 : vector<2x128xf32>
    %394 = math.exp %393 : vector<2x128xf32>
    %cst_146 = arith.constant 1.000000e+00 : f32
    %395 = vector.broadcast %cst_146 : f32 to vector<2x128xf32>
    %396 = arith.addf %395, %394 : vector<2x128xf32>
    %397 = arith.divf %395, %396 : vector<2x128xf32>
    %398 = vector.extract_strided_slice %391 {offsets = [0, 128], sizes = [2, 128], strides = [1, 1]} : vector<2x512xf32> to vector<2x128xf32>
    %399 = arith.negf %398 : vector<2x128xf32>
    %400 = math.exp %399 : vector<2x128xf32>
    %cst_147 = arith.constant 1.000000e+00 : f32
    %401 = vector.broadcast %cst_147 : f32 to vector<2x128xf32>
    %402 = arith.addf %401, %400 : vector<2x128xf32>
    %403 = arith.divf %401, %402 : vector<2x128xf32>
    %404 = vector.extract_strided_slice %391 {offsets = [0, 256], sizes = [2, 128], strides = [1, 1]} : vector<2x512xf32> to vector<2x128xf32>
    %405 = math.tanh %404 : vector<2x128xf32>
    %406 = vector.extract_strided_slice %391 {offsets = [0, 384], sizes = [2, 128], strides = [1, 1]} : vector<2x512xf32> to vector<2x128xf32>
    %407 = arith.negf %406 : vector<2x128xf32>
    %408 = math.exp %407 : vector<2x128xf32>
    %cst_148 = arith.constant 1.000000e+00 : f32
    %409 = vector.broadcast %cst_148 : f32 to vector<2x128xf32>
    %410 = arith.addf %409, %408 : vector<2x128xf32>
    %411 = arith.divf %409, %410 : vector<2x128xf32>
    %412 = arith.mulf %403, %379 : vector<2x128xf32>
    %413 = arith.mulf %397, %405 : vector<2x128xf32>
    %414 = arith.addf %412, %413 : vector<2x128xf32>
    %415 = math.tanh %414 : vector<2x128xf32>
    %416 = arith.mulf %411, %415 : vector<2x128xf32>
    %417 = arith.index_cast %c2_i32_140 : i32 to index
    %c0_149 = arith.constant 0 : index
    %c0_150 = arith.constant 0 : index
    %418 = vector.load %arg6[%417, %c0_149, %c0_150] : memref<8x2x128xf32, #tpu.memory_space<vmem>>, vector<1x2x128xf32>
    %419 = vector.shape_cast %418 : vector<1x2x128xf32> to vector<2x128xf32>
    %420 = vector.shape_cast %416 : vector<2x128xf32> to vector<1x2x128xf32>
    tpu.vector_store %arg6[%417, %c0_149, %c0_150], %420 {strides = array<i32>} : memref<8x2x128xf32, #tpu.memory_space<vmem>>, vector<1x2x128xf32>,
    %c3_i32_151 = arith.constant 3 : i32
    %421 = arith.index_cast %c3_i32_151 : i32 to index
    %c0_152 = arith.constant 0 : index
    %c0_153 = arith.constant 0 : index
    %422 = vector.load %arg7[%421, %c0_152, %c0_153] : memref<8x2x512xf32, #tpu.memory_space<vmem>>, vector<1x2x512xf32>
    %423 = vector.shape_cast %422 : vector<1x2x512xf32> to vector<2x512xf32>
    %c0_154 = arith.constant 0 : index
    %c0_155 = arith.constant 0 : index
    %424 = vector.load %arg4[%c0_154, %c0_155] : memref<128x512xf32, #tpu.memory_space<vmem>>, vector<128x512xf32>
    %cst_156 = arith.constant dense<0.000000e+00> : vector<2x512xf32>
    %425 = tpu.matmul %416, %424, %cst_156 {dimension_numbers = #tpu.dot_dimension_numbers<[1], [0], [0], [1], [0, 0, 1, 1], [], []>} : vector<2x128xf32>, vector<128x512xf32>, vector<2x512xf32> -> vector<2x512xf32>
    %426 = arith.addf %423, %425 : vector<2x512xf32>
    %427 = vector.extract_strided_slice %426 {offsets = [0, 0], sizes = [2, 128], strides = [1, 1]} : vector<2x512xf32> to vector<2x128xf32>
    %428 = arith.negf %427 : vector<2x128xf32>
    %429 = math.exp %428 : vector<2x128xf32>
    %cst_157 = arith.constant 1.000000e+00 : f32
    %430 = vector.broadcast %cst_157 : f32 to vector<2x128xf32>
    %431 = arith.addf %430, %429 : vector<2x128xf32>
    %432 = arith.divf %430, %431 : vector<2x128xf32>
    %433 = vector.extract_strided_slice %426 {offsets = [0, 128], sizes = [2, 128], strides = [1, 1]} : vector<2x512xf32> to vector<2x128xf32>
    %434 = arith.negf %433 : vector<2x128xf32>
    %435 = math.exp %434 : vector<2x128xf32>
    %cst_158 = arith.constant 1.000000e+00 : f32
    %436 = vector.broadcast %cst_158 : f32 to vector<2x128xf32>
    %437 = arith.addf %436, %435 : vector<2x128xf32>
    %438 = arith.divf %436, %437 : vector<2x128xf32>
    %439 = vector.extract_strided_slice %426 {offsets = [0, 256], sizes = [2, 128], strides = [1, 1]} : vector<2x512xf32> to vector<2x128xf32>
    %440 = math.tanh %439 : vector<2x128xf32>
    %441 = vector.extract_strided_slice %426 {offsets = [0, 384], sizes = [2, 128], strides = [1, 1]} : vector<2x512xf32> to vector<2x128xf32>
    %442 = arith.negf %441 : vector<2x128xf32>
    %443 = math.exp %442 : vector<2x128xf32>
    %cst_159 = arith.constant 1.000000e+00 : f32
    %444 = vector.broadcast %cst_159 : f32 to vector<2x128xf32>
    %445 = arith.addf %444, %443 : vector<2x128xf32>
    %446 = arith.divf %444, %445 : vector<2x128xf32>
    %447 = arith.mulf %438, %414 : vector<2x128xf32>
    %448 = arith.mulf %432, %440 : vector<2x128xf32>
    %449 = arith.addf %447, %448 : vector<2x128xf32>
    %450 = math.tanh %449 : vector<2x128xf32>
    %451 = arith.mulf %446, %450 : vector<2x128xf32>
    %452 = arith.index_cast %c3_i32_151 : i32 to index
    %c0_160 = arith.constant 0 : index
    %c0_161 = arith.constant 0 : index
    %453 = vector.load %arg6[%452, %c0_160, %c0_161] : memref<8x2x128xf32, #tpu.memory_space<vmem>>, vector<1x2x128xf32>
    %454 = vector.shape_cast %453 : vector<1x2x128xf32> to vector<2x128xf32>
    %455 = vector.shape_cast %451 : vector<2x128xf32> to vector<1x2x128xf32>
    tpu.vector_store %arg6[%452, %c0_160, %c0_161], %455 {strides = array<i32>} : memref<8x2x128xf32, #tpu.memory_space<vmem>>, vector<1x2x128xf32>,
    %c4_i32_162 = arith.constant 4 : i32
    %456 = arith.index_cast %c4_i32_162 : i32 to index
    %c0_163 = arith.constant 0 : index
    %c0_164 = arith.constant 0 : index
    %457 = vector.load %arg7[%456, %c0_163, %c0_164] : memref<8x2x512xf32, #tpu.memory_space<vmem>>, vector<1x2x512xf32>
    %458 = vector.shape_cast %457 : vector<1x2x512xf32> to vector<2x512xf32>
    %c0_165 = arith.constant 0 : index
    %c0_166 = arith.constant 0 : index
    %459 = vector.load %arg4[%c0_165, %c0_166] : memref<128x512xf32, #tpu.memory_space<vmem>>, vector<128x512xf32>
    %cst_167 = arith.constant dense<0.000000e+00> : vector<2x512xf32>
    %460 = tpu.matmul %451, %459, %cst_167 {dimension_numbers = #tpu.dot_dimension_numbers<[1], [0], [0], [1], [0, 0, 1, 1], [], []>} : vector<2x128xf32>, vector<128x512xf32>, vector<2x512xf32> -> vector<2x512xf32>
    %461 = arith.addf %458, %460 : vector<2x512xf32>
    %462 = vector.extract_strided_slice %461 {offsets = [0, 0], sizes = [2, 128], strides = [1, 1]} : vector<2x512xf32> to vector<2x128xf32>
    %463 = arith.negf %462 : vector<2x128xf32>
    %464 = math.exp %463 : vector<2x128xf32>
    %cst_168 = arith.constant 1.000000e+00 : f32
    %465 = vector.broadcast %cst_168 : f32 to vector<2x128xf32>
    %466 = arith.addf %465, %464 : vector<2x128xf32>
    %467 = arith.divf %465, %466 : vector<2x128xf32>
    %468 = vector.extract_strided_slice %461 {offsets = [0, 128], sizes = [2, 128], strides = [1, 1]} : vector<2x512xf32> to vector<2x128xf32>
    %469 = arith.negf %468 : vector<2x128xf32>
    %470 = math.exp %469 : vector<2x128xf32>
    %cst_169 = arith.constant 1.000000e+00 : f32
    %471 = vector.broadcast %cst_169 : f32 to vector<2x128xf32>
    %472 = arith.addf %471, %470 : vector<2x128xf32>
    %473 = arith.divf %471, %472 : vector<2x128xf32>
    %474 = vector.extract_strided_slice %461 {offsets = [0, 256], sizes = [2, 128], strides = [1, 1]} : vector<2x512xf32> to vector<2x128xf32>
    %475 = math.tanh %474 : vector<2x128xf32>
    %476 = vector.extract_strided_slice %461 {offsets = [0, 384], sizes = [2, 128], strides = [1, 1]} : vector<2x512xf32> to vector<2x128xf32>
    %477 = arith.negf %476 : vector<2x128xf32>
    %478 = math.exp %477 : vector<2x128xf32>
    %cst_170 = arith.constant 1.000000e+00 : f32
    %479 = vector.broadcast %cst_170 : f32 to vector<2x128xf32>
    %480 = arith.addf %479, %478 : vector<2x128xf32>
    %481 = arith.divf %479, %480 : vector<2x128xf32>
    %482 = arith.mulf %473, %449 : vector<2x128xf32>
    %483 = arith.mulf %467, %475 : vector<2x128xf32>
    %484 = arith.addf %482, %483 : vector<2x128xf32>
    %485 = math.tanh %484 : vector<2x128xf32>
    %486 = arith.mulf %481, %485 : vector<2x128xf32>
    %487 = arith.index_cast %c4_i32_162 : i32 to index
    %c0_171 = arith.constant 0 : index
    %c0_172 = arith.constant 0 : index
    %488 = vector.load %arg6[%487, %c0_171, %c0_172] : memref<8x2x128xf32, #tpu.memory_space<vmem>>, vector<1x2x128xf32>
    %489 = vector.shape_cast %488 : vector<1x2x128xf32> to vector<2x128xf32>
    %490 = vector.shape_cast %486 : vector<2x128xf32> to vector<1x2x128xf32>
    tpu.vector_store %arg6[%487, %c0_171, %c0_172], %490 {strides = array<i32>} : memref<8x2x128xf32, #tpu.memory_space<vmem>>, vector<1x2x128xf32>,
    %c5_i32_173 = arith.constant 5 : i32
    %491 = arith.index_cast %c5_i32_173 : i32 to index
    %c0_174 = arith.constant 0 : index
    %c0_175 = arith.constant 0 : index
    %492 = vector.load %arg7[%491, %c0_174, %c0_175] : memref<8x2x512xf32, #tpu.memory_space<vmem>>, vector<1x2x512xf32>
    %493 = vector.shape_cast %492 : vector<1x2x512xf32> to vector<2x512xf32>
    %c0_176 = arith.constant 0 : index
    %c0_177 = arith.constant 0 : index
    %494 = vector.load %arg4[%c0_176, %c0_177] : memref<128x512xf32, #tpu.memory_space<vmem>>, vector<128x512xf32>
    %cst_178 = arith.constant dense<0.000000e+00> : vector<2x512xf32>
    %495 = tpu.matmul %486, %494, %cst_178 {dimension_numbers = #tpu.dot_dimension_numbers<[1], [0], [0], [1], [0, 0, 1, 1], [], []>} : vector<2x128xf32>, vector<128x512xf32>, vector<2x512xf32> -> vector<2x512xf32>
    %496 = arith.addf %493, %495 : vector<2x512xf32>
    %497 = vector.extract_strided_slice %496 {offsets = [0, 0], sizes = [2, 128], strides = [1, 1]} : vector<2x512xf32> to vector<2x128xf32>
    %498 = arith.negf %497 : vector<2x128xf32>
    %499 = math.exp %498 : vector<2x128xf32>
    %cst_179 = arith.constant 1.000000e+00 : f32
    %500 = vector.broadcast %cst_179 : f32 to vector<2x128xf32>
    %501 = arith.addf %500, %499 : vector<2x128xf32>
    %502 = arith.divf %500, %501 : vector<2x128xf32>
    %503 = vector.extract_strided_slice %496 {offsets = [0, 128], sizes = [2, 128], strides = [1, 1]} : vector<2x512xf32> to vector<2x128xf32>
    %504 = arith.negf %503 : vector<2x128xf32>
    %505 = math.exp %504 : vector<2x128xf32>
    %cst_180 = arith.constant 1.000000e+00 : f32
    %506 = vector.broadcast %cst_180 : f32 to vector<2x128xf32>
    %507 = arith.addf %506, %505 : vector<2x128xf32>
    %508 = arith.divf %506, %507 : vector<2x128xf32>
    %509 = vector.extract_strided_slice %496 {offsets = [0, 256], sizes = [2, 128], strides = [1, 1]} : vector<2x512xf32> to vector<2x128xf32>
    %510 = math.tanh %509 : vector<2x128xf32>
    %511 = vector.extract_strided_slice %496 {offsets = [0, 384], sizes = [2, 128], strides = [1, 1]} : vector<2x512xf32> to vector<2x128xf32>
    %512 = arith.negf %511 : vector<2x128xf32>
    %513 = math.exp %512 : vector<2x128xf32>
    %cst_181 = arith.constant 1.000000e+00 : f32
    %514 = vector.broadcast %cst_181 : f32 to vector<2x128xf32>
    %515 = arith.addf %514, %513 : vector<2x128xf32>
    %516 = arith.divf %514, %515 : vector<2x128xf32>
    %517 = arith.mulf %508, %484 : vector<2x128xf32>
    %518 = arith.mulf %502, %510 : vector<2x128xf32>
    %519 = arith.addf %517, %518 : vector<2x128xf32>
    %520 = math.tanh %519 : vector<2x128xf32>
    %521 = arith.mulf %516, %520 : vector<2x128xf32>
    %522 = arith.index_cast %c5_i32_173 : i32 to index
    %c0_182 = arith.constant 0 : index
    %c0_183 = arith.constant 0 : index
    %523 = vector.load %arg6[%522, %c0_182, %c0_183] : memref<8x2x128xf32, #tpu.memory_space<vmem>>, vector<1x2x128xf32>
    %524 = vector.shape_cast %523 : vector<1x2x128xf32> to vector<2x128xf32>
    %525 = vector.shape_cast %521 : vector<2x128xf32> to vector<1x2x128xf32>
    tpu.vector_store %arg6[%522, %c0_182, %c0_183], %525 {strides = array<i32>} : memref<8x2x128xf32, #tpu.memory_space<vmem>>, vector<1x2x128xf32>,
    %c6_i32_184 = arith.constant 6 : i32
    %526 = arith.index_cast %c6_i32_184 : i32 to index
    %c0_185 = arith.constant 0 : index
    %c0_186 = arith.constant 0 : index
    %527 = vector.load %arg7[%526, %c0_185, %c0_186] : memref<8x2x512xf32, #tpu.memory_space<vmem>>, vector<1x2x512xf32>
    %528 = vector.shape_cast %527 : vector<1x2x512xf32> to vector<2x512xf32>
    %c0_187 = arith.constant 0 : index
    %c0_188 = arith.constant 0 : index
    %529 = vector.load %arg4[%c0_187, %c0_188] : memref<128x512xf32, #tpu.memory_space<vmem>>, vector<128x512xf32>
    %cst_189 = arith.constant dense<0.000000e+00> : vector<2x512xf32>
    %530 = tpu.matmul %521, %529, %cst_189 {dimension_numbers = #tpu.dot_dimension_numbers<[1], [0], [0], [1], [0, 0, 1, 1], [], []>} : vector<2x128xf32>, vector<128x512xf32>, vector<2x512xf32> -> vector<2x512xf32>
    %531 = arith.addf %528, %530 : vector<2x512xf32>
    %532 = vector.extract_strided_slice %531 {offsets = [0, 0], sizes = [2, 128], strides = [1, 1]} : vector<2x512xf32> to vector<2x128xf32>
    %533 = arith.negf %532 : vector<2x128xf32>
    %534 = math.exp %533 : vector<2x128xf32>
    %cst_190 = arith.constant 1.000000e+00 : f32
    %535 = vector.broadcast %cst_190 : f32 to vector<2x128xf32>
    %536 = arith.addf %535, %534 : vector<2x128xf32>
    %537 = arith.divf %535, %536 : vector<2x128xf32>
    %538 = vector.extract_strided_slice %531 {offsets = [0, 128], sizes = [2, 128], strides = [1, 1]} : vector<2x512xf32> to vector<2x128xf32>
    %539 = arith.negf %538 : vector<2x128xf32>
    %540 = math.exp %539 : vector<2x128xf32>
    %cst_191 = arith.constant 1.000000e+00 : f32
    %541 = vector.broadcast %cst_191 : f32 to vector<2x128xf32>
    %542 = arith.addf %541, %540 : vector<2x128xf32>
    %543 = arith.divf %541, %542 : vector<2x128xf32>
    %544 = vector.extract_strided_slice %531 {offsets = [0, 256], sizes = [2, 128], strides = [1, 1]} : vector<2x512xf32> to vector<2x128xf32>
    %545 = math.tanh %544 : vector<2x128xf32>
    %546 = vector.extract_strided_slice %531 {offsets = [0, 384], sizes = [2, 128], strides = [1, 1]} : vector<2x512xf32> to vector<2x128xf32>
    %547 = arith.negf %546 : vector<2x128xf32>
    %548 = math.exp %547 : vector<2x128xf32>
    %cst_192 = arith.constant 1.000000e+00 : f32
    %549 = vector.broadcast %cst_192 : f32 to vector<2x128xf32>
    %550 = arith.addf %549, %548 : vector<2x128xf32>
    %551 = arith.divf %549, %550 : vector<2x128xf32>
    %552 = arith.mulf %543, %519 : vector<2x128xf32>
    %553 = arith.mulf %537, %545 : vector<2x128xf32>
    %554 = arith.addf %552, %553 : vector<2x128xf32>
    %555 = math.tanh %554 : vector<2x128xf32>
    %556 = arith.mulf %551, %555 : vector<2x128xf32>
    %557 = arith.index_cast %c6_i32_184 : i32 to index
    %c0_193 = arith.constant 0 : index
    %c0_194 = arith.constant 0 : index
    %558 = vector.load %arg6[%557, %c0_193, %c0_194] : memref<8x2x128xf32, #tpu.memory_space<vmem>>, vector<1x2x128xf32>
    %559 = vector.shape_cast %558 : vector<1x2x128xf32> to vector<2x128xf32>
    %560 = vector.shape_cast %556 : vector<2x128xf32> to vector<1x2x128xf32>
    tpu.vector_store %arg6[%557, %c0_193, %c0_194], %560 {strides = array<i32>} : memref<8x2x128xf32, #tpu.memory_space<vmem>>, vector<1x2x128xf32>,
    %c7_i32_195 = arith.constant 7 : i32
    %561 = arith.index_cast %c7_i32_195 : i32 to index
    %c0_196 = arith.constant 0 : index
    %c0_197 = arith.constant 0 : index
    %562 = vector.load %arg7[%561, %c0_196, %c0_197] : memref<8x2x512xf32, #tpu.memory_space<vmem>>, vector<1x2x512xf32>
    %563 = vector.shape_cast %562 : vector<1x2x512xf32> to vector<2x512xf32>
    %c0_198 = arith.constant 0 : index
    %c0_199 = arith.constant 0 : index
    %564 = vector.load %arg4[%c0_198, %c0_199] : memref<128x512xf32, #tpu.memory_space<vmem>>, vector<128x512xf32>
    %cst_200 = arith.constant dense<0.000000e+00> : vector<2x512xf32>
    %565 = tpu.matmul %556, %564, %cst_200 {dimension_numbers = #tpu.dot_dimension_numbers<[1], [0], [0], [1], [0, 0, 1, 1], [], []>} : vector<2x128xf32>, vector<128x512xf32>, vector<2x512xf32> -> vector<2x512xf32>
    %566 = arith.addf %563, %565 : vector<2x512xf32>
    %567 = vector.extract_strided_slice %566 {offsets = [0, 0], sizes = [2, 128], strides = [1, 1]} : vector<2x512xf32> to vector<2x128xf32>
    %568 = arith.negf %567 : vector<2x128xf32>
    %569 = math.exp %568 : vector<2x128xf32>
    %cst_201 = arith.constant 1.000000e+00 : f32
    %570 = vector.broadcast %cst_201 : f32 to vector<2x128xf32>
    %571 = arith.addf %570, %569 : vector<2x128xf32>
    %572 = arith.divf %570, %571 : vector<2x128xf32>
    %573 = vector.extract_strided_slice %566 {offsets = [0, 128], sizes = [2, 128], strides = [1, 1]} : vector<2x512xf32> to vector<2x128xf32>
    %574 = arith.negf %573 : vector<2x128xf32>
    %575 = math.exp %574 : vector<2x128xf32>
    %cst_202 = arith.constant 1.000000e+00 : f32
    %576 = vector.broadcast %cst_202 : f32 to vector<2x128xf32>
    %577 = arith.addf %576, %575 : vector<2x128xf32>
    %578 = arith.divf %576, %577 : vector<2x128xf32>
    %579 = vector.extract_strided_slice %566 {offsets = [0, 256], sizes = [2, 128], strides = [1, 1]} : vector<2x512xf32> to vector<2x128xf32>
    %580 = math.tanh %579 : vector<2x128xf32>
    %581 = vector.extract_strided_slice %566 {offsets = [0, 384], sizes = [2, 128], strides = [1, 1]} : vector<2x512xf32> to vector<2x128xf32>
    %582 = arith.negf %581 : vector<2x128xf32>
    %583 = math.exp %582 : vector<2x128xf32>
    %cst_203 = arith.constant 1.000000e+00 : f32
    %584 = vector.broadcast %cst_203 : f32 to vector<2x128xf32>
    %585 = arith.addf %584, %583 : vector<2x128xf32>
    %586 = arith.divf %584, %585 : vector<2x128xf32>
    %587 = arith.mulf %578, %554 : vector<2x128xf32>
    %588 = arith.mulf %572, %580 : vector<2x128xf32>
    %589 = arith.addf %587, %588 : vector<2x128xf32>
    %590 = math.tanh %589 : vector<2x128xf32>
    %591 = arith.mulf %586, %590 : vector<2x128xf32>
    %592 = arith.index_cast %c7_i32_195 : i32 to index
    %c0_204 = arith.constant 0 : index
    %c0_205 = arith.constant 0 : index
    %593 = vector.load %arg6[%592, %c0_204, %c0_205] : memref<8x2x128xf32, #tpu.memory_space<vmem>>, vector<1x2x128xf32>
    %594 = vector.shape_cast %593 : vector<1x2x128xf32> to vector<2x128xf32>
    %595 = vector.shape_cast %591 : vector<2x128xf32> to vector<1x2x128xf32>
    tpu.vector_store %arg6[%592, %c0_204, %c0_205], %595 {strides = array<i32>} : memref<8x2x128xf32, #tpu.memory_space<vmem>>, vector<1x2x128xf32>,
    %c8_i32_206 = arith.constant 8 : i32
    %c0_207 = arith.constant 0 : index
    %c0_208 = arith.constant 0 : index
    %596 = vector.load %arg10[%c0_207, %c0_208] : memref<2x128xf32, #tpu.memory_space<vmem>>, vector<2x128xf32>
    tpu.vector_store %arg10[%c0_207, %c0_208], %591 {strides = array<i32>} : memref<2x128xf32, #tpu.memory_space<vmem>>, vector<2x128xf32>,
    %c0_209 = arith.constant 0 : index
    %c0_210 = arith.constant 0 : index
    %597 = vector.load %arg11[%c0_209, %c0_210] : memref<2x128xf32, #tpu.memory_space<vmem>>, vector<2x128xf32>
    tpu.vector_store %arg11[%c0_209, %c0_210], %589 {strides = array<i32>} : memref<2x128xf32, #tpu.memory_space<vmem>>, vector<2x128xf32>,
    return
  }
  func.func @transform_0(%arg0: i32) -> (i32, i32, i32) {
    %c0_i32 = arith.constant 0 : i32
    %c0_i32_0 = arith.constant 0 : i32
    %c0_i32_1 = arith.constant 0 : i32
    return %arg0, %c0_i32, %c0_i32_0 : i32, i32, i32
  }
  func.func @transform_1(%arg0: i32) -> (i32, i32) {
    %c0_i32 = arith.constant 0 : i32
    %c0_i32_0 = arith.constant 0 : i32
    %c0_i32_1 = arith.constant 0 : i32
    return %c0_i32, %c0_i32_0 : i32, i32
  }
  func.func @transform_2(%arg0: i32) -> (i32, i32) {
    %c0_i32 = arith.constant 0 : i32
    %c0_i32_0 = arith.constant 0 : i32
    %c0_i32_1 = arith.constant 0 : i32
    return %c0_i32, %c0_i32_0 : i32, i32
  }
  func.func @transform_3(%arg0: i32) -> (i32, i32) {
    %c0_i32 = arith.constant 0 : i32
    %c0_i32_0 = arith.constant 0 : i32
    %c0_i32_1 = arith.constant 0 : i32
    return %c0_i32, %c0_i32_0 : i32, i32
  }
  func.func @transform_4(%arg0: i32) -> (i32, i32) {
    %c0_i32 = arith.constant 0 : i32
    %c0_i32_0 = arith.constant 0 : i32
    %c0_i32_1 = arith.constant 0 : i32
    return %c0_i32, %c0_i32_0 : i32, i32
  }
  func.func @transform_5(%arg0: i32) -> (i32, i32, i32) {
    %c0_i32 = arith.constant 0 : i32
    %c0_i32_0 = arith.constant 0 : i32
    %c0_i32_1 = arith.constant 0 : i32
    return %arg0, %c0_i32, %c0_i32_0 : i32, i32, i32
  }
}

</mosaic_0001>

<llo_original>
// kernel: context_encoder_pallas.1
$region0: #{context_encoder_pallas.1}
  #allocation0 [shape = 'u32[]', space=smem, size = 0x4, offset = 0x4, fixed_abs, tag = 'smem constant byte address 0x4 - core index']
  #allocation1 [shape = 'u32[144,128]{1,0:T(1,128)}', space=vmem, size = 0x12000, scoped, tag = 'internal scratch']
  #allocation2 [shape = 'f32[8,2,512]{2,1,0:T(2,128)}', space=vmem, size = 0x8000, scoped, tag = 'scratch operand']
  #allocation3 [shape = 'f32[2,128]{1,0:T(2,128)}', space=vmem, size = 0x400, scoped, tag = 'scratch operand']
  #allocation4 [shape = 'f32[2,128]{1,0:T(2,128)}', space=vmem, size = 0x400, scoped, tag = 'scratch operand']
  #allocation5 [shape = 'f32[2,128]{1,0:T(2,128)}', space=vmem, size = 0x400, scoped, tag = 'scratch operand']
  #allocation6 [shape = 'f32[2,128]{1,0:T(2,128)}', space=vmem, size = 0x400, scoped, tag = 'scratch operand']
  %s0 = inlined_call_operand.vmem [shape: f32[8,2,512], index: 0, kind: input, shape index: {}]
  %s1 = inlined_call_operand.vmem [shape: f32[128,512], index: 1, kind: input, shape index: {}]
  %s2 = inlined_call_operand.vmem [shape: f32[128,512], index: 2, kind: input, shape index: {}]
  %s3 = inlined_call_operand.vmem [shape: f32[128,512], index: 3, kind: input, shape index: {}]
  %s4 = inlined_call_operand.vmem [shape: f32[1,512], index: 4, kind: input, shape index: {}]
  %s5 = inlined_call_operand.vmem [shape: f32[8,2,128], index: 5, kind: output, shape index: {}]
  %s6 = sld [smem:[#allocation0]]
  $region34: #{context_encoder_pallas.1} parent=0
    _
  %s8 = ssub.s32 1, %s6
  %s9 = scalar_select 0, %s8, %s6
  // Predicated region
  $region2: #{context_encoder_pallas.1} parent=0 // pred_check
    _
  $region3: #{context_encoder_pallas.1} parent=0 // pred_check_branch
    %11 = sbr.rel (0) target = $region5
  $region4: #{context_encoder_pallas.1} parent=0 // pred_region
    _
  $region5: #{context_encoder_pallas.1} parent=0 // pred_fallthru
    _
  // Predicated region
  $region6: #{context_encoder_pallas.1} parent=0 // pred_check
    _
  $region7: #{context_encoder_pallas.1} parent=0 // pred_check_branch
    %13 = sbr.rel (0) target = $region9
  $region8: #{context_encoder_pallas.1} parent=0 // pred_region
    _
  $region9: #{context_encoder_pallas.1} parent=0 // pred_fallthru
    _
  // Predicated region
  $region10: #{context_encoder_pallas.1} parent=0 // pred_check
    _
  $region11: #{context_encoder_pallas.1} parent=0 // pred_check_branch
    %15 = sbr.rel (0) target = $region13
  $region12: #{context_encoder_pallas.1} parent=0 // pred_region
    _
  $region13: #{context_encoder_pallas.1} parent=0 // pred_fallthru
    _
  // Predicated region
  $region14: #{context_encoder_pallas.1} parent=0 // pred_check
    _
  $region15: #{context_encoder_pallas.1} parent=0 // pred_check_branch
    %17 = sbr.rel (0) target = $region17
  $region16: #{context_encoder_pallas.1} parent=0 // pred_region
    _
  $region17: #{context_encoder_pallas.1} parent=0 // pred_fallthru
    _
  // Predicated region
  $region18: #{context_encoder_pallas.1} parent=0 // pred_check
    _
  $region19: #{context_encoder_pallas.1} parent=0 // pred_check_branch
    %19 = sbr.rel (0) target = $region21
  $region20: #{context_encoder_pallas.1} parent=0 // pred_region
    _
  $region21: #{context_encoder_pallas.1} parent=0 // pred_fallthru
    _
  %p20 = scmp.eq.s32.totalorder 0, 0
  // Predicated region
  $region22: #{context_encoder_pallas.1} parent=0 // pred_check
    %p21 = pneg %p20
  $region23: #{context_encoder_pallas.1} parent=0 // pred_check_branch
    %23 = sbr.rel (%p21) target = $region25
  $region24: #{context_encoder_pallas.1} parent=0 // pred_region
    %24 = vst [vmem:[#allocation3] sm:$0x3] 0.0
    %25 = vst [vmem:[#allocation4] sm:$0x3] 0.0
    %26 = vst [vmem:[#allocation5] sm:$0x3] 0.0
    %27 = vst [vmem:[#allocation6] sm:$0x3] 0.0
  $region25: #{context_encoder_pallas.1} parent=0 // pred_fallthru
    _
  %v28 = vld [vmem:[%s4] sm:$0xf]
  %v30 = vlaneseq
  %v31 = vshrl.u32 %v30, 7
  %v32 = vsub.s32 0, %v31
  %v33 = vrot.slane %v28, %v32
  %v34 = vlaneseq
  %v35 = vshrl.u32 %v34, 7
  %v36 = vsub.s32 1, %v35
  %v37 = vrot.slane %v28, %v36
  %v38 = vlaneseq
  %v39 = vshrl.u32 %v38, 7
  %v40 = vsub.s32 2, %v39
  %v41 = vrot.slane %v28, %v40
  %v42 = vlaneseq
  %v43 = vshrl.u32 %v42, 7
  %v44 = vsub.s32 3, %v43
  %v45 = vrot.slane %v28, %v44
  %v50 = vld [vmem:[#allocation3] sm:$0x3]
  %v51 = vld [vmem:[#allocation4] sm:$0x3]
  %v52 = vld [vmem:[%s0] sm:$0xff]
  %v53 = vld [vmem:[%s1] sm:$0xff]
  %v54 = vld [vmem:[%s1 + $0x8] sm:$0xff]
  %v55 = vld [vmem:[%s1 + $0x10] sm:$0xff]
  %v56 = vld [vmem:[%s1 + $0x18] sm:$0xff]
  %v57 = vld [vmem:[%s1 + $0x20] sm:$0xff]
  %v58 = vld [vmem:[%s1 + $0x28] sm:$0xff]
  %v59 = vld [vmem:[%s1 + $0x30] sm:$0xff]
  %v60 = vld [vmem:[%s1 + $0x38] sm:$0xff]
  %v61 = vld [vmem:[%s1 + $0x40] sm:$0xff]
  %v62 = vld [vmem:[%s1 + $0x48] sm:$0xff]
  %v63 = vld [vmem:[%s1 + $0x50] sm:$0xff]
  %v64 = vld [vmem:[%s1 + $0x58] sm:$0xff]
  %v65 = vld [vmem:[%s1 + $0x60] sm:$0xff]
  %v66 = vld [vmem:[%s1 + $0x68] sm:$0xff]
  %v67 = vld [vmem:[%s1 + $0x70] sm:$0xff]
  %v68 = vld [vmem:[%s1 + $0x78] sm:$0xff]
  %v69 = vld [vmem:[%s1 + $0x80] sm:$0xff]
  %v70 = vld [vmem:[%s1 + $0x88] sm:$0xff]
  %v71 = vld [vmem:[%s1 + $0x90] sm:$0xff]
  %v72 = vld [vmem:[%s1 + $0x98] sm:$0xff]
  %v73 = vld [vmem:[%s1 + $0xa0] sm:$0xff]
  %v74 = vld [vmem:[%s1 + $0xa8] sm:$0xff]
  %v75 = vld [vmem:[%s1 + $0xb0] sm:$0xff]
  %v76 = vld [vmem:[%s1 + $0xb8] sm:$0xff]
  %v77 = vld [vmem:[%s1 + $0xc0] sm:$0xff]
  %v78 = vld [vmem:[%s1 + $0xc8] sm:$0xff]
  %v79 = vld [vmem:[%s1 + $0xd0] sm:$0xff]
  %v80 = vld [vmem:[%s1 + $0xd8] sm:$0xff]
  %v81 = vld [vmem:[%s1 + $0xe0] sm:$0xff]
  %v82 = vld [vmem:[%s1 + $0xe8] sm:$0xff]
  %v83 = vld [vmem:[%s1 + $0xf0] sm:$0xff]
  %v84 = vld [vmem:[%s1 + $0xf8] sm:$0xff]
  %v85 = vld [vmem:[%s1 + $0x100] sm:$0xff]
  %v86 = vld [vmem:[%s1 + $0x108] sm:$0xff]
  %v87 = vld [vmem:[%s1 + $0x110] sm:$0xff]
  %v88 = vld [vmem:[%s1 + $0x118] sm:$0xff]
  %v89 = vld [vmem:[%s1 + $0x120] sm:$0xff]
  %v90 = vld [vmem:[%s1 + $0x128] sm:$0xff]
  %v91 = vld [vmem:[%s1 + $0x130] sm:$0xff]
  %v92 = vld [vmem:[%s1 + $0x138] sm:$0xff]
  %v93 = vld [vmem:[%s1 + $0x140] sm:$0xff]
  %v94 = vld [vmem:[%s1 + $0x148] sm:$0xff]
  %v95 = vld [vmem:[%s1 + $0x150] sm:$0xff]
  %v96 = vld [vmem:[%s1 + $0x158] sm:$0xff]
  %v97 = vld [vmem:[%s1 + $0x160] sm:$0xff]
  %v98 = vld [vmem:[%s1 + $0x168] sm:$0xff]
  %v99 = vld [vmem:[%s1 + $0x170] sm:$0xff]
  %v100 = vld [vmem:[%s1 + $0x178] sm:$0xff]
  %v101 = vld [vmem:[%s1 + $0x180] sm:$0xff]
  %v102 = vld [vmem:[%s1 + $0x188] sm:$0xff]
  %v103 = vld [vmem:[%s1 + $0x190] sm:$0xff]
  %v104 = vld [vmem:[%s1 + $0x198] sm:$0xff]
  %v105 = vld [vmem:[%s1 + $0x1a0] sm:$0xff]
  %v106 = vld [vmem:[%s1 + $0x1a8] sm:$0xff]
  %v107 = vld [vmem:[%s1 + $0x1b0] sm:$0xff]
  %v108 = vld [vmem:[%s1 + $0x1b8] sm:$0xff]
  %v109 = vld [vmem:[%s1 + $0x1c0] sm:$0xff]
  %v110 = vld [vmem:[%s1 + $0x1c8] sm:$0xff]
  %v111 = vld [vmem:[%s1 + $0x1d0] sm:$0xff]
  %v112 = vld [vmem:[%s1 + $0x1d8] sm:$0xff]
  %v113 = vld [vmem:[%s1 + $0x1e0] sm:$0xff]
  %v114 = vld [vmem:[%s1 + $0x1e8] sm:$0xff]
  %v115 = vld [vmem:[%s1 + $0x1f0] sm:$0xff]
  %v116 = vld [vmem:[%s1 + $0x1f8] sm:$0xff]
  %117 = vmatprep.subr.mxu0 %v54
  %118 = vmatpush1.msra.mxu0 %v53
  %119 = vmatprep.subr.mxu0 %v58
  %120 = vmatpush1.msra.mxu0 %v57
  %121 = vmatprep.subr.mxu0 %v62
  %122 = vmatpush1.msra.mxu0 %v61
  %123 = vmatprep.subr.mxu0 %v66
  %124 = vmatpush1.msra.mxu0 %v65
  %125 = vmatprep.subr.mxu0 %v70
  %126 = vmatpush1.msra.mxu0 %v69
  %127 = vmatprep.subr.mxu0 %v74
  %128 = vmatpush1.msra.mxu0 %v73
  %129 = vmatprep.subr.mxu0 %v78
  %130 = vmatpush1.msra.mxu0 %v77
  %131 = vmatprep.subr.mxu0 %v82
  %132 = vmatpush1.msra.mxu0 %v81
  %133 = vmatprep.subr.mxu0 %v86
  %134 = vmatpush1.msra.mxu0 %v85
  %135 = vmatprep.subr.mxu0 %v90
  %136 = vmatpush1.msra.mxu0 %v89
  %137 = vmatprep.subr.mxu0 %v94
  %138 = vmatpush1.msra.mxu0 %v93
  %139 = vmatprep.subr.mxu0 %v98
  %140 = vmatpush1.msra.mxu0 %v97
  %141 = vmatprep.subr.mxu0 %v102
  %142 = vmatpush1.msra.mxu0 %v101
  %143 = vmatprep.subr.mxu0 %v106
  %144 = vmatpush1.msra.mxu0 %v105
  %145 = vmatprep.subr.mxu0 %v110
  %146 = vmatpush1.msra.mxu0 %v109
  %147 = vmatprep.subr.mxu0 %v114
  %148 = vmatpush1.msra.mxu0 %v113
  %149 = vmatprep.subr.mxu0 0.0
  %150 = vmatpush1.msra.mxu0 0.0
  %151 = vmatprep.subr.mxu0 0.0
  %152 = vmatpush1.msra.mxu0 0.0
  %153 = vmatprep.subr.mxu0 0.0
  %154 = vmatpush1.msra.mxu0 0.0
  %155 = vmatprep.subr.mxu0 0.0
  %156 = vmatpush1.msra.mxu0 0.0
  %157 = vmatprep.subr.mxu0 0.0
  %158 = vmatpush1.msra.mxu0 0.0
  %159 = vmatprep.subr.mxu0 0.0
  %160 = vmatpush1.msra.mxu0 0.0
  %161 = vmatprep.subr.mxu0 0.0
  %162 = vmatpush1.msra.mxu0 0.0
  %163 = vmatprep.subr.mxu0 0.0
  %164 = vmatpush1.msra.mxu0 0.0
  %165 = vmatprep.subr.mxu0 0.0
  %166 = vmatpush1.msra.mxu0 0.0
  %167 = vmatprep.subr.mxu0 0.0
  %168 = vmatpush1.msra.mxu0 0.0
  %169 = vmatprep.subr.mxu0 0.0
  %170 = vmatpush1.msra.mxu0 0.0
  %171 = vmatprep.subr.mxu0 0.0
  %172 = vmatpush1.msra.mxu0 0.0
  %173 = vmatprep.subr.mxu0 0.0
  %174 = vmatpush1.msra.mxu0 0.0
  %175 = vmatprep.subr.mxu0 0.0
  %176 = vmatpush1.msra.mxu0 0.0
  %177 = vmatprep.subr.mxu0 0.0
  %178 = vmatpush1.msra.mxu0 0.0
  %179 = vmatprep.subr.mxu0 0.0
  %180 = vmatpush1.msra.mxu0 0.0
  %181 = vmatprep.mubr.f32.mxu0 0.0
  %182 = vmatmul.mubr.f32.gmra.mrb[0].mxu0 %v50
  %v183 = vpop.f32.mrb[0].mxu0
  %v184 = vadd.f32 0.0, %v183
  %v185 = vpop.f32.mrb[0].mxu0
  %v186 = vadd.f32 0.0, %v185
  %187 = vdwg.mxu0
  %188 = vmatprep.subr.mxu0 %v56
  %189 = vmatpush1.msra.mxu0 %v55
  %190 = vmatprep.subr.mxu0 %v60
  %191 = vmatpush1.msra.mxu0 %v59
  %192 = vmatprep.subr.mxu0 %v64
  %193 = vmatpush1.msra.mxu0 %v63
  %194 = vmatprep.subr.mxu0 %v68
  %195 = vmatpush1.msra.mxu0 %v67
  %196 = vmatprep.subr.mxu0 %v72
  %197 = vmatpush1.msra.mxu0 %v71
  %198 = vmatprep.subr.mxu0 %v76
  %199 = vmatpush1.msra.mxu0 %v75
  %200 = vmatprep.subr.mxu0 %v80
  %201 = vmatpush1.msra.mxu0 %v79
  %202 = vmatprep.subr.mxu0 %v84
  %203 = vmatpush1.msra.mxu0 %v83
  %204 = vmatprep.subr.mxu0 %v88
  %205 = vmatpush1.msra.mxu0 %v87
  %206 = vmatprep.subr.mxu0 %v92
  %207 = vmatpush1.msra.mxu0 %v91
  %208 = vmatprep.subr.mxu0 %v96
  %209 = vmatpush1.msra.mxu0 %v95
  %210 = vmatprep.subr.mxu0 %v100
  %211 = vmatpush1.msra.mxu0 %v99
  %212 = vmatprep.subr.mxu0 %v104
  %213 = vmatpush1.msra.mxu0 %v103
  %214 = vmatprep.subr.mxu0 %v108
  %215 = vmatpush1.msra.mxu0 %v107
  %216 = vmatprep.subr.mxu0 %v112
  %217 = vmatpush1.msra.mxu0 %v111
  %218 = vmatprep.subr.mxu0 %v116
  %219 = vmatpush1.msra.mxu0 %v115
  %220 = vmatprep.subr.mxu0 0.0
  %221 = vmatpush1.msra.mxu0 0.0
  %222 = vmatprep.subr.mxu0 0.0
  %223 = vmatpush1.msra.mxu0 0.0
  %224 = vmatprep.subr.mxu0 0.0
  %225 = vmatpush1.msra.mxu0 0.0
  %226 = vmatprep.subr.mxu0 0.0
  %227 = vmatpush1.msra.mxu0 0.0
  %228 = vmatprep.subr.mxu0 0.0
  %229 = vmatpush1.msra.mxu0 0.0
  %230 = vmatprep.subr.mxu0 0.0
  %231 = vmatpush1.msra.mxu0 0.0
  %232 = vmatprep.subr.mxu0 0.0
  %233 = vmatpush1.msra.mxu0 0.0
  %234 = vmatprep.subr.mxu0 0.0
  %235 = vmatpush1.msra.mxu0 0.0
  %236 = vmatprep.subr.mxu0 0.0
  %237 = vmatpush1.msra.mxu0 0.0
  %238 = vmatprep.subr.mxu0 0.0
  %239 = vmatpush1.msra.mxu0 0.0
  %240 = vmatprep.subr.mxu0 0.0
  %241 = vmatpush1.msra.mxu0 0.0
  %242 = vmatprep.subr.mxu0 0.0
  %243 = vmatpush1.msra.mxu0 0.0
  %244 = vmatprep.subr.mxu0 0.0
  %245 = vmatpush1.msra.mxu0 0.0
  %246 = vmatprep.subr.mxu0 0.0
  %247 = vmatpush1.msra.mxu0 0.0
  %248 = vmatprep.subr.mxu0 0.0
  %249 = vmatpush1.msra.mxu0 0.0
  %250 = vmatprep.subr.mxu0 0.0
  %251 = vmatpush1.msra.mxu0 0.0
  %252 = vmatprep.mubr.f32.mxu0 0.0
  %253 = vmatmul.mubr.f32.gmra.mrb[0].mxu0 %v50
  %v254 = vpop.f32.mrb[0].mxu0
  %v255 = vadd.f32 0.0, %v254
  %v256 = vpop.f32.mrb[0].mxu0
  %v257 = vadd.f32 0.0, %v256
  %258 = vdwg.mxu0
  %v263 = vcombine.low %v184, %v186
  %v264 = vcombine.low %v255, %v257
  %v266 = vunpack.c.l.s4 1983009808
  %v267 = vunpack.c.0.s8 %v266
  %v268 = vlaneseq
  %v269 = vshrl.u32 %v268, 7
  %v270 = vsub.s32 %v267, %v269
  %v271 = vrot.slane %v263, %v270
  %v273 = vunpack.c.l.s4 1983009808
  %v274 = vunpack.c.0.s8 %v273
  %v275 = vlaneseq
  %v276 = vshrl.u32 %v275, 7
  %v277 = vsub.s32 %v274, %v276
  %v278 = vrot.slane %v264, %v277
  %v279 = vcombine.low %v271, %v278
  %v281 = vadd.f32 %v52, %v279
  %v282 = vxor.u32 %v281, 2147483648
  %v283 = vmul.f32 %v282, 1.442695
  %v284 = vpow.pop %v283
  %v285 = vadd.f32 %v284, 1.0
  %v286 = vrcp.pop %v285
  %v287 = vmul.f32 1.0, %v286
  %v289 = vrot.slane %v281, 2
  %v291 = vxor.u32 %v289, 2147483648
  %v292 = vmul.f32 %v291, 1.442695
  %v293 = vpow.pop %v292
  %v294 = vadd.f32 %v293, 1.0
  %v295 = vrcp.pop %v294
  %v296 = vmul.f32 1.0, %v295
  %v297 = vrot.slane %v281, 4
  %v299 = vtanh.pop %v297
  %v300 = vrot.slane %v281, 6
  %v302 = vxor.u32 %v300, 2147483648
  %v303 = vmul.f32 %v302, 1.442695
  %v304 = vpow.pop %v303
  %v305 = vadd.f32 %v304, 1.0
  %v306 = vrcp.pop %v305
  %v307 = vmul.f32 1.0, %v306
  %v308 = vmul.f32 %v296, %v51
  %v309 = vmul.f32 %v287, %v299
  %v310 = vadd.f32 %v308, %v309
  %v311 = vtanh.pop %v310
  %v312 = vmul.f32 %v307, %v311
  %v313 = vld [vmem:[%s2] sm:$0xff]
  %v314 = vld [vmem:[%s2 + $0x8] sm:$0xff]
  %v315 = vld [vmem:[%s2 + $0x10] sm:$0xff]
  %v316 = vld [vmem:[%s2 + $0x18] sm:$0xff]
  %v317 = vld [vmem:[%s2 + $0x20] sm:$0xff]
  %v318 = vld [vmem:[%s2 + $0x28] sm:$0xff]
  %v319 = vld [vmem:[%s2 + $0x30] sm:$0xff]
  %v320 = vld [vmem:[%s2 + $0x38] sm:$0xff]
  %v321 = vld [vmem:[%s2 + $0x40] sm:$0xff]
  %v322 = vld [vmem:[%s2 + $0x48] sm:$0xff]
  %v323 = vld [vmem:[%s2 + $0x50] sm:$0xff]
  %v324 = vld [vmem:[%s2 + $0x58] sm:$0xff]
  %v325 = vld [vmem:[%s2 + $0x60] sm:$0xff]
  %v326 = vld [vmem:[%s2 + $0x68] sm:$0xff]
  %v327 = vld [vmem:[%s2 + $0x70] sm:$0xff]
  %v328 = vld [vmem:[%s2 + $0x78] sm:$0xff]
  %v329 = vld [vmem:[%s2 + $0x80] sm:$0xff]
  %v330 = vld [vmem:[%s2 + $0x88] sm:$0xff]
  %v331 = vld [vmem:[%s2 + $0x90] sm:$0xff]
  %v332 = vld [vmem:[%s2 + $0x98] sm:$0xff]
  %v333 = vld [vmem:[%s2 + $0xa0] sm:$0xff]
  %v334 = vld [vmem:[%s2 + $0xa8] sm:$0xff]
  %v335 = vld [vmem:[%s2 + $0xb0] sm:$0xff]
  %v336 = vld [vmem:[%s2 + $0xb8] sm:$0xff]
  %v337 = vld [vmem:[%s2 + $0xc0] sm:$0xff]
  %v338 = vld [vmem:[%s2 + $0xc8] sm:$0xff]
  %v339 = vld [vmem:[%s2 + $0xd0] sm:$0xff]
  %v340 = vld [vmem:[%s2 + $0xd8] sm:$0xff]
  %v341 = vld [vmem:[%s2 + $0xe0] sm:$0xff]
  %v342 = vld [vmem:[%s2 + $0xe8] sm:$0xff]
  %v343 = vld [vmem:[%s2 + $0xf0] sm:$0xff]
  %v344 = vld [vmem:[%s2 + $0xf8] sm:$0xff]
  %v345 = vld [vmem:[%s2 + $0x100] sm:$0xff]
  %v346 = vld [vmem:[%s2 + $0x108] sm:$0xff]
  %v347 = vld [vmem:[%s2 + $0x110] sm:$0xff]
  %v348 = vld [vmem:[%s2 + $0x118] sm:$0xff]
  %v349 = vld [vmem:[%s2 + $0x120] sm:$0xff]
  %v350 = vld [vmem:[%s2 + $0x128] sm:$0xff]
  %v351 = vld [vmem:[%s2 + $0x130] sm:$0xff]
  %v352 = vld [vmem:[%s2 + $0x138] sm:$0xff]
  %v353 = vld [vmem:[%s2 + $0x140] sm:$0xff]
  %v354 = vld [vmem:[%s2 + $0x148] sm:$0xff]
  %v355 = vld [vmem:[%s2 + $0x150] sm:$0xff]
  %v356 = vld [vmem:[%s2 + $0x158] sm:$0xff]
  %v357 = vld [vmem:[%s2 + $0x160] sm:$0xff]
  %v358 = vld [vmem:[%s2 + $0x168] sm:$0xff]
  %v359 = vld [vmem:[%s2 + $0x170] sm:$0xff]
  %v360 = vld [vmem:[%s2 + $0x178] sm:$0xff]
  %v361 = vld [vmem:[%s2 + $0x180] sm:$0xff]
  %v362 = vld [vmem:[%s2 + $0x188] sm:$0xff]
  %v363 = vld [vmem:[%s2 + $0x190] sm:$0xff]
  %v364 = vld [vmem:[%s2 + $0x198] sm:$0xff]
  %v365 = vld [vmem:[%s2 + $0x1a0] sm:$0xff]
  %v366 = vld [vmem:[%s2 + $0x1a8] sm:$0xff]
  %v367 = vld [vmem:[%s2 + $0x1b0] sm:$0xff]
  %v368 = vld [vmem:[%s2 + $0x1b8] sm:$0xff]
  %v369 = vld [vmem:[%s2 + $0x1c0] sm:$0xff]
  %v370 = vld [vmem:[%s2 + $0x1c8] sm:$0xff]
  %v371 = vld [vmem:[%s2 + $0x1d0] sm:$0xff]
  %v372 = vld [vmem:[%s2 + $0x1d8] sm:$0xff]
  %v373 = vld [vmem:[%s2 + $0x1e0] sm:$0xff]
  %v374 = vld [vmem:[%s2 + $0x1e8] sm:$0xff]
  %v375 = vld [vmem:[%s2 + $0x1f0] sm:$0xff]
  %v376 = vld [vmem:[%s2 + $0x1f8] sm:$0xff]
  %377 = vmatprep.subr.mxu0 %v314
  %378 = vmatpush1.msra.mxu0 %v313
  %379 = vmatprep.subr.mxu0 %v318
  %380 = vmatpush1.msra.mxu0 %v317
  %381 = vmatprep.subr.mxu0 %v322
  %382 = vmatpush1.msra.mxu0 %v321
  %383 = vmatprep.subr.mxu0 %v326
  %384 = vmatpush1.msra.mxu0 %v325
  %385 = vmatprep.subr.mxu0 %v330
  %386 = vmatpush1.msra.mxu0 %v329
  %387 = vmatprep.subr.mxu0 %v334
  %388 = vmatpush1.msra.mxu0 %v333
  %389 = vmatprep.subr.mxu0 %v338
  %390 = vmatpush1.msra.mxu0 %v337
  %391 = vmatprep.subr.mxu0 %v342
  %392 = vmatpush1.msra.mxu0 %v341
  %393 = vmatprep.subr.mxu0 %v346
  %394 = vmatpush1.msra.mxu0 %v345
  %395 = vmatprep.subr.mxu0 %v350
  %396 = vmatpush1.msra.mxu0 %v349
  %397 = vmatprep.subr.mxu0 %v354
  %398 = vmatpush1.msra.mxu0 %v353
  %399 = vmatprep.subr.mxu0 %v358
  %400 = vmatpush1.msra.mxu0 %v357
  %401 = vmatprep.subr.mxu0 %v362
  %402 = vmatpush1.msra.mxu0 %v361
  %403 = vmatprep.subr.mxu0 %v366
  %404 = vmatpush1.msra.mxu0 %v365
  %405 = vmatprep.subr.mxu0 %v370
  %406 = vmatpush1.msra.mxu0 %v369
  %407 = vmatprep.subr.mxu0 %v374
  %408 = vmatpush1.msra.mxu0 %v373
  %409 = vmatprep.subr.mxu0 0.0
  %410 = vmatpush1.msra.mxu0 0.0
  %411 = vmatprep.subr.mxu0 0.0
  %412 = vmatpush1.msra.mxu0 0.0
  %413 = vmatprep.subr.mxu0 0.0
  %414 = vmatpush1.msra.mxu0 0.0
  %415 = vmatprep.subr.mxu0 0.0
  %416 = vmatpush1.msra.mxu0 0.0
  %417 = vmatprep.subr.mxu0 0.0
  %418 = vmatpush1.msra.mxu0 0.0
  %419 = vmatprep.subr.mxu0 0.0
  %420 = vmatpush1.msra.mxu0 0.0
  %421 = vmatprep.subr.mxu0 0.0
  %422 = vmatpush1.msra.mxu0 0.0
  %423 = vmatprep.subr.mxu0 0.0
  %424 = vmatpush1.msra.mxu0 0.0
  %425 = vmatprep.subr.mxu0 0.0
  %426 = vmatpush1.msra.mxu0 0.0
  %427 = vmatprep.subr.mxu0 0.0
  %428 = vmatpush1.msra.mxu0 0.0
  %429 = vmatprep.subr.mxu0 0.0
  %430 = vmatpush1.msra.mxu0 0.0
  %431 = vmatprep.subr.mxu0 0.0
  %432 = vmatpush1.msra.mxu0 0.0
  %433 = vmatprep.subr.mxu0 0.0
  %434 = vmatpush1.msra.mxu0 0.0
  %435 = vmatprep.subr.mxu0 0.0
  %436 = vmatpush1.msra.mxu0 0.0
  %437 = vmatprep.subr.mxu0 0.0
  %438 = vmatpush1.msra.mxu0 0.0
  %439 = vmatprep.subr.mxu0 0.0
  %440 = vmatpush1.msra.mxu0 0.0
  %441 = vmatprep.mubr.f32.mxu0 0.0
  %442 = vmatmul.mubr.f32.gmra.mrb[0].mxu0 %v312
  %v443 = vpop.f32.mrb[0].mxu0
  %v444 = vadd.f32 %v33, %v443
  %v445 = vpop.f32.mrb[0].mxu0
  %v446 = vadd.f32 %v37, %v445
  %447 = vdwg.mxu0
  %448 = vmatprep.subr.mxu0 %v316
  %449 = vmatpush1.msra.mxu0 %v315
  %450 = vmatprep.subr.mxu0 %v320
  %451 = vmatpush1.msra.mxu0 %v319
  %452 = vmatprep.subr.mxu0 %v324
  %453 = vmatpush1.msra.mxu0 %v323
  %454 = vmatprep.subr.mxu0 %v328
  %455 = vmatpush1.msra.mxu0 %v327
  %456 = vmatprep.subr.mxu0 %v332
  %457 = vmatpush1.msra.mxu0 %v331
  %458 = vmatprep.subr.mxu0 %v336
  %459 = vmatpush1.msra.mxu0 %v335
  %460 = vmatprep.subr.mxu0 %v340
  %461 = vmatpush1.msra.mxu0 %v339
  %462 = vmatprep.subr.mxu0 %v344
  %463 = vmatpush1.msra.mxu0 %v343
  %464 = vmatprep.subr.mxu0 %v348
  %465 = vmatpush1.msra.mxu0 %v347
  %466 = vmatprep.subr.mxu0 %v352
  %467 = vmatpush1.msra.mxu0 %v351
  %468 = vmatprep.subr.mxu0 %v356
  %469 = vmatpush1.msra.mxu0 %v355
  %470 = vmatprep.subr.mxu0 %v360
  %471 = vmatpush1.msra.mxu0 %v359
  %472 = vmatprep.subr.mxu0 %v364
  %473 = vmatpush1.msra.mxu0 %v363
  %474 = vmatprep.subr.mxu0 %v368
  %475 = vmatpush1.msra.mxu0 %v367
  %476 = vmatprep.subr.mxu0 %v372
  %477 = vmatpush1.msra.mxu0 %v371
  %478 = vmatprep.subr.mxu0 %v376
  %479 = vmatpush1.msra.mxu0 %v375
  %480 = vmatprep.subr.mxu0 0.0
  %481 = vmatpush1.msra.mxu0 0.0
  %482 = vmatprep.subr.mxu0 0.0
  %483 = vmatpush1.msra.mxu0 0.0
  %484 = vmatprep.subr.mxu0 0.0
  %485 = vmatpush1.msra.mxu0 0.0
  %486 = vmatprep.subr.mxu0 0.0
  %487 = vmatpush1.msra.mxu0 0.0
  %488 = vmatprep.subr.mxu0 0.0
  %489 = vmatpush1.msra.mxu0 0.0
  %490 = vmatprep.subr.mxu0 0.0
  %491 = vmatpush1.msra.mxu0 0.0
  %492 = vmatprep.subr.mxu0 0.0
  %493 = vmatpush1.msra.mxu0 0.0
  %494 = vmatprep.subr.mxu0 0.0
  %495 = vmatpush1.msra.mxu0 0.0
  %496 = vmatprep.subr.mxu0 0.0
  %497 = vmatpush1.msra.mxu0 0.0
  %498 = vmatprep.subr.mxu0 0.0
  %499 = vmatpush1.msra.mxu0 0.0
  %500 = vmatprep.subr.mxu0 0.0
  %501 = vmatpush1.msra.mxu0 0.0
  %502 = vmatprep.subr.mxu0 0.0
  %503 = vmatpush1.msra.mxu0 0.0
  %504 = vmatprep.subr.mxu0 0.0
  %505 = vmatpush1.msra.mxu0 0.0
  %506 = vmatprep.subr.mxu0 0.0
  %507 = vmatpush1.msra.mxu0 0.0
  %508 = vmatprep.subr.mxu0 0.0
  %509 = vmatpush1.msra.mxu0 0.0
  %510 = vmatprep.subr.mxu0 0.0
  %511 = vmatpush1.msra.mxu0 0.0
  %512 = vmatprep.mubr.f32.mxu0 0.0
  %513 = vmatmul.mubr.f32.gmra.mrb[0].mxu0 %v312
  %v514 = vpop.f32.mrb[0].mxu0
  %v515 = vadd.f32 %v41, %v514
  %v516 = vpop.f32.mrb[0].mxu0
  %v517 = vadd.f32 %v45, %v516
  %518 = vdwg.mxu0
  %v523 = vcombine.low %v444, %v446
  %v524 = vcombine.low %v515, %v517
  %v526 = vunpack.c.l.s4 1983009808
  %v527 = vunpack.c.0.s8 %v526
  %v528 = vlaneseq
  %v529 = vshrl.u32 %v528, 7
  %v530 = vsub.s32 %v527, %v529
  %v531 = vrot.slane %v523, %v530
  %v533 = vunpack.c.l.s4 1983009808
  %v534 = vunpack.c.0.s8 %v533
  %v535 = vlaneseq
  %v536 = vshrl.u32 %v535, 7
  %v537 = vsub.s32 %v534, %v536
  %v538 = vrot.slane %v524, %v537
  %v539 = vcombine.low %v531, %v538
  %541 = vst [vmem:[#allocation2] sm:$0xff] %v539
  %s542 = scalar_lea.vmem %s0, 8
  %v543 = vld [vmem:[%s542] sm:$0xff]
  %v544 = vld [vmem:[%s1] sm:$0xff]
  %v545 = vld [vmem:[%s1 + $0x8] sm:$0xff]
  %v546 = vld [vmem:[%s1 + $0x10] sm:$0xff]
  %v547 = vld [vmem:[%s1 + $0x18] sm:$0xff]
  %v548 = vld [vmem:[%s1 + $0x20] sm:$0xff]
  %v549 = vld [vmem:[%s1 + $0x28] sm:$0xff]
  %v550 = vld [vmem:[%s1 + $0x30] sm:$0xff]
  %v551 = vld [vmem:[%s1 + $0x38] sm:$0xff]
  %v552 = vld [vmem:[%s1 + $0x40] sm:$0xff]
  %v553 = vld [vmem:[%s1 + $0x48] sm:$0xff]
  %v554 = vld [vmem:[%s1 + $0x50] sm:$0xff]
  %v555 = vld [vmem:[%s1 + $0x58] sm:$0xff]
  %v556 = vld [vmem:[%s1 + $0x60] sm:$0xff]
  %v557 = vld [vmem:[%s1 + $0x68] sm:$0xff]
  %v558 = vld [vmem:[%s1 + $0x70] sm:$0xff]
  %v559 = vld [vmem:[%s1 + $0x78] sm:$0xff]
  %v560 = vld [vmem:[%s1 + $0x80] sm:$0xff]
  %v561 = vld [vmem:[%s1 + $0x88] sm:$0xff]
  %v562 = vld [vmem:[%s1 + $0x90] sm:$0xff]
  %v563 = vld [vmem:[%s1 + $0x98] sm:$0xff]
  %v564 = vld [vmem:[%s1 + $0xa0] sm:$0xff]
  %v565 = vld [vmem:[%s1 + $0xa8] sm:$0xff]
  %v566 = vld [vmem:[%s1 + $0xb0] sm:$0xff]
  %v567 = vld [vmem:[%s1 + $0xb8] sm:$0xff]
  %v568 = vld [vmem:[%s1 + $0xc0] sm:$0xff]
  %v569 = vld [vmem:[%s1 + $0xc8] sm:$0xff]
  %v570 = vld [vmem:[%s1 + $0xd0] sm:$0xff]
  %v571 = vld [vmem:[%s1 + $0xd8] sm:$0xff]
  %v572 = vld [vmem:[%s1 + $0xe0] sm:$0xff]
  %v573 = vld [vmem:[%s1 + $0xe8] sm:$0xff]
  %v574 = vld [vmem:[%s1 + $0xf0] sm:$0xff]
  %v575 = vld [vmem:[%s1 + $0xf8] sm:$0xff]
  %v576 = vld [vmem:[%s1 + $0x100] sm:$0xff]
  %v577 = vld [vmem:[%s1 + $0x108] sm:$0xff]
  %v578 = vld [vmem:[%s1 + $0x110] sm:$0xff]
  %v579 = vld [vmem:[%s1 + $0x118] sm:$0xff]
  %v580 = vld [vmem:[%s1 + $0x120] sm:$0xff]
  %v581 = vld [vmem:[%s1 + $0x128] sm:$0xff]
  %v582 = vld [vmem:[%s1 + $0x130] sm:$0xff]
  %v583 = vld [vmem:[%s1 + $0x138] sm:$0xff]
  %v584 = vld [vmem:[%s1 + $0x140] sm:$0xff]
  %v585 = vld [vmem:[%s1 + $0x148] sm:$0xff]
  %v586 = vld [vmem:[%s1 + $0x150] sm:$0xff]
  %v587 = vld [vmem:[%s1 + $0x158] sm:$0xff]
  %v588 = vld [vmem:[%s1 + $0x160] sm:$0xff]
  %v589 = vld [vmem:[%s1 + $0x168] sm:$0xff]
  %v590 = vld [vmem:[%s1 + $0x170] sm:$0xff]
  %v591 = vld [vmem:[%s1 + $0x178] sm:$0xff]
  %v592 = vld [vmem:[%s1 + $0x180] sm:$0xff]
  %v593 = vld [vmem:[%s1 + $0x188] sm:$0xff]
  %v594 = vld [vmem:[%s1 + $0x190] sm:$0xff]
  %v595 = vld [vmem:[%s1 + $0x198] sm:$0xff]
  %v596 = vld [vmem:[%s1 + $0x1a0] sm:$0xff]
  %v597 = vld [vmem:[%s1 + $0x1a8] sm:$0xff]
  %v598 = vld [vmem:[%s1 + $0x1b0] sm:$0xff]
  %v599 = vld [vmem:[%s1 + $0x1b8] sm:$0xff]
  %v600 = vld [vmem:[%s1 + $0x1c0] sm:$0xff]
  %v601 = vld [vmem:[%s1 + $0x1c8] sm:$0xff]
  %v602 = vld [vmem:[%s1 + $0x1d0] sm:$0xff]
  %v603 = vld [vmem:[%s1 + $0x1d8] sm:$0xff]
  %v604 = vld [vmem:[%s1 + $0x1e0] sm:$0xff]
  %v605 = vld [vmem:[%s1 + $0x1e8] sm:$0xff]
  %v606 = vld [vmem:[%s1 + $0x1f0] sm:$0xff]
  %v607 = vld [vmem:[%s1 + $0x1f8] sm:$0xff]
  %608 = vmatprep.subr.mxu0 %v545
  %609 = vmatpush1.msra.mxu0 %v544
  %610 = vmatprep.subr.mxu0 %v549
  %611 = vmatpush1.msra.mxu0 %v548
  %612 = vmatprep.subr.mxu0 %v553
  %613 = vmatpush1.msra.mxu0 %v552
  %614 = vmatprep.subr.mxu0 %v557
  %615 = vmatpush1.msra.mxu0 %v556
  %616 = vmatprep.subr.mxu0 %v561
  %617 = vmatpush1.msra.mxu0 %v560
  %618 = vmatprep.subr.mxu0 %v565
  %619 = vmatpush1.msra.mxu0 %v564
  %620 = vmatprep.subr.mxu0 %v569
  %621 = vmatpush1.msra.mxu0 %v568
  %622 = vmatprep.subr.mxu0 %v573
  %623 = vmatpush1.msra.mxu0 %v572
  %624 = vmatprep.subr.mxu0 %v577
  %625 = vmatpush1.msra.mxu0 %v576
  %626 = vmatprep.subr.mxu0 %v581
  %627 = vmatpush1.msra.mxu0 %v580
  %628 = vmatprep.subr.mxu0 %v585
  %629 = vmatpush1.msra.mxu0 %v584
  %630 = vmatprep.subr.mxu0 %v589
  %631 = vmatpush1.msra.mxu0 %v588
  %632 = vmatprep.subr.mxu0 %v593
  %633 = vmatpush1.msra.mxu0 %v592
  %634 = vmatprep.subr.mxu0 %v597
  %635 = vmatpush1.msra.mxu0 %v596
  %636 = vmatprep.subr.mxu0 %v601
  %637 = vmatpush1.msra.mxu0 %v600
  %638 = vmatprep.subr.mxu0 %v605
  %639 = vmatpush1.msra.mxu0 %v604
  %640 = vmatprep.subr.mxu0 0.0
  %641 = vmatpush1.msra.mxu0 0.0
  %642 = vmatprep.subr.mxu0 0.0
  %643 = vmatpush1.msra.mxu0 0.0
  %644 = vmatprep.subr.mxu0 0.0
  %645 = vmatpush1.msra.mxu0 0.0
  %646 = vmatprep.subr.mxu0 0.0
  %647 = vmatpush1.msra.mxu0 0.0
  %648 = vmatprep.subr.mxu0 0.0
  %649 = vmatpush1.msra.mxu0 0.0
  %650 = vmatprep.subr.mxu0 0.0
  %651 = vmatpush1.msra.mxu0 0.0
  %652 = vmatprep.subr.mxu0 0.0
  %653 = vmatpush1.msra.mxu0 0.0
  %654 = vmatprep.subr.mxu0 0.0
  %655 = vmatpush1.msra.mxu0 0.0
  %656 = vmatprep.subr.mxu0 0.0
  %657 = vmatpush1.msra.mxu0 0.0
  %658 = vmatprep.subr.mxu0 0.0
  %659 = vmatpush1.msra.mxu0 0.0
  %660 = vmatprep.subr.mxu0 0.0
  %661 = vmatpush1.msra.mxu0 0.0
  %662 = vmatprep.subr.mxu0 0.0
  %663 = vmatpush1.msra.mxu0 0.0
  %664 = vmatprep.subr.mxu0 0.0
  %665 = vmatpush1.msra.mxu0 0.0
  %666 = vmatprep.subr.mxu0 0.0
  %667 = vmatpush1.msra.mxu0 0.0
  %668 = vmatprep.subr.mxu0 0.0
  %669 = vmatpush1.msra.mxu0 0.0
  %670 = vmatprep.subr.mxu0 0.0
  %671 = vmatpush1.msra.mxu0 0.0
  %672 = vmatprep.mubr.f32.mxu0 0.0
  %673 = vmatmul.mubr.f32.gmra.mrb[0].mxu0 %v312
  %v674 = vpop.f32.mrb[0].mxu0
  %v675 = vadd.f32 0.0, %v674
  %v676 = vpop.f32.mrb[0].mxu0
  %v677 = vadd.f32 0.0, %v676
  %678 = vdwg.mxu0
  %679 = vmatprep.subr.mxu0 %v547
  %680 = vmatpush1.msra.mxu0 %v546
  %681 = vmatprep.subr.mxu0 %v551
  %682 = vmatpush1.msra.mxu0 %v550
  %683 = vmatprep.subr.mxu0 %v555
  %684 = vmatpush1.msra.mxu0 %v554
  %685 = vmatprep.subr.mxu0 %v559
  %686 = vmatpush1.msra.mxu0 %v558
  %687 = vmatprep.subr.mxu0 %v563
  %688 = vmatpush1.msra.mxu0 %v562
  %689 = vmatprep.subr.mxu0 %v567
  %690 = vmatpush1.msra.mxu0 %v566
  %691 = vmatprep.subr.mxu0 %v571
  %692 = vmatpush1.msra.mxu0 %v570
  %693 = vmatprep.subr.mxu0 %v575
  %694 = vmatpush1.msra.mxu0 %v574
  %695 = vmatprep.subr.mxu0 %v579
  %696 = vmatpush1.msra.mxu0 %v578
  %697 = vmatprep.subr.mxu0 %v583
  %698 = vmatpush1.msra.mxu0 %v582
  %699 = vmatprep.subr.mxu0 %v587
  %700 = vmatpush1.msra.mxu0 %v586
  %701 = vmatprep.subr.mxu0 %v591
  %702 = vmatpush1.msra.mxu0 %v590
  %703 = vmatprep.subr.mxu0 %v595
  %704 = vmatpush1.msra.mxu0 %v594
  %705 = vmatprep.subr.mxu0 %v599
  %706 = vmatpush1.msra.mxu0 %v598
  %707 = vmatprep.subr.mxu0 %v603
  %708 = vmatpush1.msra.mxu0 %v602
  %709 = vmatprep.subr.mxu0 %v607
  %710 = vmatpush1.msra.mxu0 %v606
  %711 = vmatprep.subr.mxu0 0.0
  %712 = vmatpush1.msra.mxu0 0.0
  %713 = vmatprep.subr.mxu0 0.0
  %714 = vmatpush1.msra.mxu0 0.0
  %715 = vmatprep.subr.mxu0 0.0
  %716 = vmatpush1.msra.mxu0 0.0
  %717 = vmatprep.subr.mxu0 0.0
  %718 = vmatpush1.msra.mxu0 0.0
  %719 = vmatprep.subr.mxu0 0.0
  %720 = vmatpush1.msra.mxu0 0.0
  %721 = vmatprep.subr.mxu0 0.0
  %722 = vmatpush1.msra.mxu0 0.0
  %723 = vmatprep.subr.mxu0 0.0
  %724 = vmatpush1.msra.mxu0 0.0
  %725 = vmatprep.subr.mxu0 0.0
  %726 = vmatpush1.msra.mxu0 0.0
  %727 = vmatprep.subr.mxu0 0.0
  %728 = vmatpush1.msra.mxu0 0.0
  %729 = vmatprep.subr.mxu0 0.0
  %730 = vmatpush1.msra.mxu0 0.0
  %731 = vmatprep.subr.mxu0 0.0
  %732 = vmatpush1.msra.mxu0 0.0
  %733 = vmatprep.subr.mxu0 0.0
  %734 = vmatpush1.msra.mxu0 0.0
  %735 = vmatprep.subr.mxu0 0.0
  %736 = vmatpush1.msra.mxu0 0.0
  %737 = vmatprep.subr.mxu0 0.0
  %738 = vmatpush1.msra.mxu0 0.0
  %739 = vmatprep.subr.mxu0 0.0
  %740 = vmatpush1.msra.mxu0 0.0
  %741 = vmatprep.subr.mxu0 0.0
  %742 = vmatpush1.msra.mxu0 0.0
  %743 = vmatprep.mubr.f32.mxu0 0.0
  %744 = vmatmul.mubr.f32.gmra.mrb[0].mxu0 %v312
  %v745 = vpop.f32.mrb[0].mxu0
  %v746 = vadd.f32 0.0, %v745
  %v747 = vpop.f32.mrb[0].mxu0
  %v748 = vadd.f32 0.0, %v747
  %749 = vdwg.mxu0
  %v754 = vcombine.low %v675, %v677
  %v755 = vcombine.low %v746, %v748
  %v757 = vunpack.c.l.s4 1983009808
  %v758 = vunpack.c.0.s8 %v757
  %v759 = vlaneseq
  %v760 = vshrl.u32 %v759, 7
  %v761 = vsub.s32 %v758, %v760
  %v762 = vrot.slane %v754, %v761
  %v764 = vunpack.c.l.s4 1983009808
  %v765 = vunpack.c.0.s8 %v764
  %v766 = vlaneseq
  %v767 = vshrl.u32 %v766, 7
  %v768 = vsub.s32 %v765, %v767
  %v769 = vrot.slane %v755, %v768
  %v770 = vcombine.low %v762, %v769
  %v772 = vadd.f32 %v543, %v770
  %v773 = vxor.u32 %v772, 2147483648
  %v774 = vmul.f32 %v773, 1.442695
  %v775 = vpow.pop %v774
  %v776 = vadd.f32 %v775, 1.0
  %v777 = vrcp.pop %v776
  %v778 = vmul.f32 1.0, %v777
  %v780 = vrot.slane %v772, 2
  %v782 = vxor.u32 %v780, 2147483648
  %v783 = vmul.f32 %v782, 1.442695
  %v784 = vpow.pop %v783
  %v785 = vadd.f32 %v784, 1.0
  %v786 = vrcp.pop %v785
  %v787 = vmul.f32 1.0, %v786
  %v788 = vrot.slane %v772, 4
  %v790 = vtanh.pop %v788
  %v791 = vrot.slane %v772, 6
  %v793 = vxor.u32 %v791, 2147483648
  %v794 = vmul.f32 %v793, 1.442695
  %v795 = vpow.pop %v794
  %v796 = vadd.f32 %v795, 1.0
  %v797 = vrcp.pop %v796
  %v798 = vmul.f32 1.0, %v797
  %v799 = vmul.f32 %v787, %v310
  %v800 = vmul.f32 %v778, %v790
  %v801 = vadd.f32 %v799, %v800
  %v802 = vtanh.pop %v801
  %v803 = vmul.f32 %v798, %v802
  %v804 = vld [vmem:[%s2] sm:$0xff]
  %v805 = vld [vmem:[%s2 + $0x8] sm:$0xff]
  %v806 = vld [vmem:[%s2 + $0x10] sm:$0xff]
  %v807 = vld [vmem:[%s2 + $0x18] sm:$0xff]
  %v808 = vld [vmem:[%s2 + $0x20] sm:$0xff]
  %v809 = vld [vmem:[%s2 + $0x28] sm:$0xff]
  %v810 = vld [vmem:[%s2 + $0x30] sm:$0xff]
  %v811 = vld [vmem:[%s2 + $0x38] sm:$0xff]
  %v812 = vld [vmem:[%s2 + $0x40] sm:$0xff]
  %v813 = vld [vmem:[%s2 + $0x48] sm:$0xff]
  %v814 = vld [vmem:[%s2 + $0x50] sm:$0xff]
  %v815 = vld [vmem:[%s2 + $0x58] sm:$0xff]
  %v816 = vld [vmem:[%s2 + $0x60] sm:$0xff]
  %v817 = vld [vmem:[%s2 + $0x68] sm:$0xff]
  %v818 = vld [vmem:[%s2 + $0x70] sm:$0xff]
  %v819 = vld [vmem:[%s2 + $0x78] sm:$0xff]
  %v820 = vld [vmem:[%s2 + $0x80] sm:$0xff]
  %v821 = vld [vmem:[%s2 + $0x88] sm:$0xff]
  %v822 = vld [vmem:[%s2 + $0x90] sm:$0xff]
  %v823 = vld [vmem:[%s2 + $0x98] sm:$0xff]
  %v824 = vld [vmem:[%s2 + $0xa0] sm:$0xff]
  %v825 = vld [vmem:[%s2 + $0xa8] sm:$0xff]
  %v826 = vld [vmem:[%s2 + $0xb0] sm:$0xff]
  %v827 = vld [vmem:[%s2 + $0xb8] sm:$0xff]
  %v828 = vld [vmem:[%s2 + $0xc0] sm:$0xff]
  %v829 = vld [vmem:[%s2 + $0xc8] sm:$0xff]
  %v830 = vld [vmem:[%s2 + $0xd0] sm:$0xff]
  %v831 = vld [vmem:[%s2 + $0xd8] sm:$0xff]
  %v832 = vld [vmem:[%s2 + $0xe0] sm:$0xff]
  %v833 = vld [vmem:[%s2 + $0xe8] sm:$0xff]
  %v834 = vld [vmem:[%s2 + $0xf0] sm:$0xff]
  %v835 = vld [vmem:[%s2 + $0xf8] sm:$0xff]
  %v836 = vld [vmem:[%s2 + $0x100] sm:$0xff]
  %v837 = vld [vmem:[%s2 + $0x108] sm:$0xff]
  %v838 = vld [vmem:[%s2 + $0x110] sm:$0xff]
  %v839 = vld [vmem:[%s2 + $0x118] sm:$0xff]
  %v840 = vld [vmem:[%s2 + $0x120] sm:$0xff]
  %v841 = vld [vmem:[%s2 + $0x128] sm:$0xff]
  %v842 = vld [vmem:[%s2 + $0x130] sm:$0xff]
  %v843 = vld [vmem:[%s2 + $0x138] sm:$0xff]
  %v844 = vld [vmem:[%s2 + $0x140] sm:$0xff]
  %v845 = vld [vmem:[%s2 + $0x148] sm:$0xff]
  %v846 = vld [vmem:[%s2 + $0x150] sm:$0xff]
  %v847 = vld [vmem:[%s2 + $0x158] sm:$0xff]
  %v848 = vld [vmem:[%s2 + $0x160] sm:$0xff]
  %v849 = vld [vmem:[%s2 + $0x168] sm:$0xff]
  %v850 = vld [vmem:[%s2 + $0x170] sm:$0xff]
  %v851 = vld [vmem:[%s2 + $0x178] sm:$0xff]
  %v852 = vld [vmem:[%s2 + $0x180] sm:$0xff]
  %v853 = vld [vmem:[%s2 + $0x188] sm:$0xff]
  %v854 = vld [vmem:[%s2 + $0x190] sm:$0xff]
  %v855 = vld [vmem:[%s2 + $0x198] sm:$0xff]
  %v856 = vld [vmem:[%s2 + $0x1a0] sm:$0xff]
  %v857 = vld [vmem:[%s2 + $0x1a8] sm:$0xff]
  %v858 = vld [vmem:[%s2 + $0x1b0] sm:$0xff]
  %v859 = vld [vmem:[%s2 + $0x1b8] sm:$0xff]
  %v860 = vld [vmem:[%s2 + $0x1c0] sm:$0xff]
  %v861 = vld [vmem:[%s2 + $0x1c8] sm:$0xff]
  %v862 = vld [vmem:[%s2 + $0x1d0] sm:$0xff]
  %v863 = vld [vmem:[%s2 + $0x1d8] sm:$0xff]
  %v864 = vld [vmem:[%s2 + $0x1e0] sm:$0xff]
  %v865 = vld [vmem:[%s2 + $0x1e8] sm:$0xff]
  %v866 = vld [vmem:[%s2 + $0x1f0] sm:$0xff]
  %v867 = vld [vmem:[%s2 + $0x1f8] sm:$0xff]
  %868 = vmatprep.subr.mxu0 %v805
  %869 = vmatpush1.msra.mxu0 %v804
  %870 = vmatprep.subr.mxu0 %v809
  %871 = vmatpush1.msra.mxu0 %v808
  %872 = vmatprep.subr.mxu0 %v813
  %873 = vmatpush1.msra.mxu0 %v812
  %874 = vmatprep.subr.mxu0 %v817
  %875 = vmatpush1.msra.mxu0 %v816
  %876 = vmatprep.subr.mxu0 %v821
  %877 = vmatpush1.msra.mxu0 %v820
  %878 = vmatprep.subr.mxu0 %v825
  %879 = vmatpush1.msra.mxu0 %v824
  %880 = vmatprep.subr.mxu0 %v829
  %881 = vmatpush1.msra.mxu0 %v828
  %882 = vmatprep.subr.mxu0 %v833
  %883 = vmatpush1.msra.mxu0 %v832
  %884 = vmatprep.subr.mxu0 %v837
  %885 = vmatpush1.msra.mxu0 %v836
  %886 = vmatprep.subr.mxu0 %v841
  %887 = vmatpush1.msra.mxu0 %v840
  %888 = vmatprep.subr.mxu0 %v845
  %889 = vmatpush1.msra.mxu0 %v844
  %890 = vmatprep.subr.mxu0 %v849
  %891 = vmatpush1.msra.mxu0 %v848
  %892 = vmatprep.subr.mxu0 %v853
  %893 = vmatpush1.msra.mxu0 %v852
  %894 = vmatprep.subr.mxu0 %v857
  %895 = vmatpush1.msra.mxu0 %v856
  %896 = vmatprep.subr.mxu0 %v861
  %897 = vmatpush1.msra.mxu0 %v860
  %898 = vmatprep.subr.mxu0 %v865
  %899 = vmatpush1.msra.mxu0 %v864
  %900 = vmatprep.subr.mxu0 0.0
  %901 = vmatpush1.msra.mxu0 0.0
  %902 = vmatprep.subr.mxu0 0.0
  %903 = vmatpush1.msra.mxu0 0.0
  %904 = vmatprep.subr.mxu0 0.0
  %905 = vmatpush1.msra.mxu0 0.0
  %906 = vmatprep.subr.mxu0 0.0
  %907 = vmatpush1.msra.mxu0 0.0
  %908 = vmatprep.subr.mxu0 0.0
  %909 = vmatpush1.msra.mxu0 0.0
  %910 = vmatprep.subr.mxu0 0.0
  %911 = vmatpush1.msra.mxu0 0.0
  %912 = vmatprep.subr.mxu0 0.0
  %913 = vmatpush1.msra.mxu0 0.0
  %914 = vmatprep.subr.mxu0 0.0
  %915 = vmatpush1.msra.mxu0 0.0
  %916 = vmatprep.subr.mxu0 0.0
  %917 = vmatpush1.msra.mxu0 0.0
  %918 = vmatprep.subr.mxu0 0.0
  %919 = vmatpush1.msra.mxu0 0.0
  %920 = vmatprep.subr.mxu0 0.0
  %921 = vmatpush1.msra.mxu0 0.0
  %922 = vmatprep.subr.mxu0 0.0
  %923 = vmatpush1.msra.mxu0 0.0
  %924 = vmatprep.subr.mxu0 0.0
  %925 = vmatpush1.msra.mxu0 0.0
  %926 = vmatprep.subr.mxu0 0.0
  %927 = vmatpush1.msra.mxu0 0.0
  %928 = vmatprep.subr.mxu0 0.0
  %929 = vmatpush1.msra.mxu0 0.0
  %930 = vmatprep.subr.mxu0 0.0
  %931 = vmatpush1.msra.mxu0 0.0
  %932 = vmatprep.mubr.f32.mxu0 0.0
  %933 = vmatmul.mubr.f32.gmra.mrb[0].mxu0 %v803
  %v934 = vpop.f32.mrb[0].mxu0
  %v935 = vadd.f32 %v33, %v934
  %v936 = vpop.f32.mrb[0].mxu0
  %v937 = vadd.f32 %v37, %v936
  %938 = vdwg.mxu0
  %939 = vmatprep.subr.mxu0 %v807
  %940 = vmatpush1.msra.mxu0 %v806
  %941 = vmatprep.subr.mxu0 %v811
  %942 = vmatpush1.msra.mxu0 %v810
  %943 = vmatprep.subr.mxu0 %v815
  %944 = vmatpush1.msra.mxu0 %v814
  %945 = vmatprep.subr.mxu0 %v819
  %946 = vmatpush1.msra.mxu0 %v818
  %947 = vmatprep.subr.mxu0 %v823
  %948 = vmatpush1.msra.mxu0 %v822
  %949 = vmatprep.subr.mxu0 %v827
  %950 = vmatpush1.msra.mxu0 %v826
  %951 = vmatprep.subr.mxu0 %v831
  %952 = vmatpush1.msra.mxu0 %v830
  %953 = vmatprep.subr.mxu0 %v835
  %954 = vmatpush1.msra.mxu0 %v834
  %955 = vmatprep.subr.mxu0 %v839
  %956 = vmatpush1.msra.mxu0 %v838
  %957 = vmatprep.subr.mxu0 %v843
  %958 = vmatpush1.msra.mxu0 %v842
  %959 = vmatprep.subr.mxu0 %v847
  %960 = vmatpush1.msra.mxu0 %v846
  %961 = vmatprep.subr.mxu0 %v851
  %962 = vmatpush1.msra.mxu0 %v850
  %963 = vmatprep.subr.mxu0 %v855
  %964 = vmatpush1.msra.mxu0 %v854
  %965 = vmatprep.subr.mxu0 %v859
  %966 = vmatpush1.msra.mxu0 %v858
  %967 = vmatprep.subr.mxu0 %v863
  %968 = vmatpush1.msra.mxu0 %v862
  %969 = vmatprep.subr.mxu0 %v867
  %970 = vmatpush1.msra.mxu0 %v866
  %971 = vmatprep.subr.mxu0 0.0
  %972 = vmatpush1.msra.mxu0 0.0
  %973 = vmatprep.subr.mxu0 0.0
  %974 = vmatpush1.msra.mxu0 0.0
  %975 = vmatprep.subr.mxu0 0.0
  %976 = vmatpush1.msra.mxu0 0.0
  %977 = vmatprep.subr.mxu0 0.0
  %978 = vmatpush1.msra.mxu0 0.0
  %979 = vmatprep.subr.mxu0 0.0
  %980 = vmatpush1.msra.mxu0 0.0
  %981 = vmatprep.subr.mxu0 0.0
  %982 = vmatpush1.msra.mxu0 0.0
  %983 = vmatprep.subr.mxu0 0.0
  %984 = vmatpush1.msra.mxu0 0.0
  %985 = vmatprep.subr.mxu0 0.0
  %986 = vmatpush1.msra.mxu0 0.0
  %987 = vmatprep.subr.mxu0 0.0
  %988 = vmatpush1.msra.mxu0 0.0
  %989 = vmatprep.subr.mxu0 0.0
  %990 = vmatpush1.msra.mxu0 0.0
  %991 = vmatprep.subr.mxu0 0.0
  %992 = vmatpush1.msra.mxu0 0.0
  %993 = vmatprep.subr.mxu0 0.0
  %994 = vmatpush1.msra.mxu0 0.0
  %995 = vmatprep.subr.mxu0 0.0
  %996 = vmatpush1.msra.mxu0 0.0
  %997 = vmatprep.subr.mxu0 0.0
  %998 = vmatpush1.msra.mxu0 0.0
  %999 = vmatprep.subr.mxu0 0.0
  %1000 = vmatpush1.msra.mxu0 0.0
  %1001 = vmatprep.subr.mxu0 0.0
  %1002 = vmatpush1.msra.mxu0 0.0
  %1003 = vmatprep.mubr.f32.mxu0 0.0
  %1004 = vmatmul.mubr.f32.gmra.mrb[0].mxu0 %v803
  %v1005 = vpop.f32.mrb[0].mxu0
  %v1006 = vadd.f32 %v41, %v1005
  %v1007 = vpop.f32.mrb[0].mxu0
  %v1008 = vadd.f32 %v45, %v1007
  %1009 = vdwg.mxu0
  %v1014 = vcombine.low %v935, %v937
  %v1015 = vcombine.low %v1006, %v1008
  %v1017 = vunpack.c.l.s4 1983009808
  %v1018 = vunpack.c.0.s8 %v1017
  %v1019 = vlaneseq
  %v1020 = vshrl.u32 %v1019, 7
  %v1021 = vsub.s32 %v1018, %v1020
  %v1022 = vrot.slane %v1014, %v1021
  %v1024 = vunpack.c.l.s4 1983009808
  %v1025 = vunpack.c.0.s8 %v1024
  %v1026 = vlaneseq
  %v1027 = vshrl.u32 %v1026, 7
  %v1028 = vsub.s32 %v1025, %v1027
  %v1029 = vrot.slane %v1015, %v1028
  %v1030 = vcombine.low %v1022, %v1029
  %s1032 = scalar_lea.vmem [#allocation2], 8
  %1033 = vst [vmem:[%s1032] sm:$0xff] %v1030
  %s1034 = scalar_lea.vmem %s0, 16
  %v1035 = vld [vmem:[%s1034] sm:$0xff]
  %v1036 = vld [vmem:[%s1] sm:$0xff]
  %v1037 = vld [vmem:[%s1 + $0x8] sm:$0xff]
  %v1038 = vld [vmem:[%s1 + $0x10] sm:$0xff]
  %v1039 = vld [vmem:[%s1 + $0x18] sm:$0xff]
  %v1040 = vld [vmem:[%s1 + $0x20] sm:$0xff]
  %v1041 = vld [vmem:[%s1 + $0x28] sm:$0xff]
  %v1042 = vld [vmem:[%s1 + $0x30] sm:$0xff]
  %v1043 = vld [vmem:[%s1 + $0x38] sm:$0xff]
  %v1044 = vld [vmem:[%s1 + $0x40] sm:$0xff]
  %v1045 = vld [vmem:[%s1 + $0x48] sm:$0xff]
  %v1046 = vld [vmem:[%s1 + $0x50] sm:$0xff]
  %v1047 = vld [vmem:[%s1 + $0x58] sm:$0xff]
  %v1048 = vld [vmem:[%s1 + $0x60] sm:$0xff]
  %v1049 = vld [vmem:[%s1 + $0x68] sm:$0xff]
  %v1050 = vld [vmem:[%s1 + $0x70] sm:$0xff]
  %v1051 = vld [vmem:[%s1 + $0x78] sm:$0xff]
  %v1052 = vld [vmem:[%s1 + $0x80] sm:$0xff]
  %v1053 = vld [vmem:[%s1 + $0x88] sm:$0xff]
  %v1054 = vld [vmem:[%s1 + $0x90] sm:$0xff]
  %v1055 = vld [vmem:[%s1 + $0x98] sm:$0xff]
  %v1056 = vld [vmem:[%s1 + $0xa0] sm:$0xff]
  %v1057 = vld [vmem:[%s1 + $0xa8] sm:$0xff]
  %v1058 = vld [vmem:[%s1 + $0xb0] sm:$0xff]
  %v1059 = vld [vmem:[%s1 + $0xb8] sm:$0xff]
  %v1060 = vld [vmem:[%s1 + $0xc0] sm:$0xff]
  %v1061 = vld [vmem:[%s1 + $0xc8] sm:$0xff]
  %v1062 = vld [vmem:[%s1 + $0xd0] sm:$0xff]
  %v1063 = vld [vmem:[%s1 + $0xd8] sm:$0xff]
  %v1064 = vld [vmem:[%s1 + $0xe0] sm:$0xff]
  %v1065 = vld [vmem:[%s1 + $0xe8] sm:$0xff]
  %v1066 = vld [vmem:[%s1 + $0xf0] sm:$0xff]
  %v1067 = vld [vmem:[%s1 + $0xf8] sm:$0xff]
  %v1068 = vld [vmem:[%s1 + $0x100] sm:$0xff]
  %v1069 = vld [vmem:[%s1 + $0x108] sm:$0xff]
  %v1070 = vld [vmem:[%s1 + $0x110] sm:$0xff]
  %v1071 = vld [vmem:[%s1 + $0x118] sm:$0xff]
  %v1072 = vld [vmem:[%s1 + $0x120] sm:$0xff]
  %v1073 = vld [vmem:[%s1 + $0x128] sm:$0xff]
  %v1074 = vld [vmem:[%s1 + $0x130] sm:$0xff]
  %v1075 = vld [vmem:[%s1 + $0x138] sm:$0xff]
  %v1076 = vld [vmem:[%s1 + $0x140] sm:$0xff]
  %v1077 = vld [vmem:[%s1 + $0x148] sm:$0xff]
  %v1078 = vld [vmem:[%s1 + $0x150] sm:$0xff]
  %v1079 = vld [vmem:[%s1 + $0x158] sm:$0xff]
  %v1080 = vld [vmem:[%s1 + $0x160] sm:$0xff]
  %v1081 = vld [vmem:[%s1 + $0x168] sm:$0xff]
  %v1082 = vld [vmem:[%s1 + $0x170] sm:$0xff]
  %v1083 = vld [vmem:[%s1 + $0x178] sm:$0xff]
  %v1084 = vld [vmem:[%s1 + $0x180] sm:$0xff]
  %v1085 = vld [vmem:[%s1 + $0x188] sm:$0xff]
  %v1086 = vld [vmem:[%s1 + $0x190] sm:$0xff]
  %v1087 = vld [vmem:[%s1 + $0x198] sm:$0xff]
  %v1088 = vld [vmem:[%s1 + $0x1a0] sm:$0xff]
  %v1089 = vld [vmem:[%s1 + $0x1a8] sm:$0xff]
  %v1090 = vld [vmem:[%s1 + $0x1b0] sm:$0xff]
  %v1091 = vld [vmem:[%s1 + $0x1b8] sm:$0xff]
  %v1092 = vld [vmem:[%s1 + $0x1c0] sm:$0xff]
  %v1093 = vld [vmem:[%s1 + $0x1c8] sm:$0xff]
  %v1094 = vld [vmem:[%s1 + $0x1d0] sm:$0xff]
  %v1095 = vld [vmem:[%s1 + $0x1d8] sm:$0xff]
  %v1096 = vld [vmem:[%s1 + $0x1e0] sm:$0xff]
  %v1097 = vld [vmem:[%s1 + $0x1e8] sm:$0xff]
  %v1098 = vld [vmem:[%s1 + $0x1f0] sm:$0xff]
  %v1099 = vld [vmem:[%s1 + $0x1f8] sm:$0xff]
  %1100 = vmatprep.subr.mxu0 %v1037
  %1101 = vmatpush1.msra.mxu0 %v1036
  %1102 = vmatprep.subr.mxu0 %v1041
  %1103 = vmatpush1.msra.mxu0 %v1040
  %1104 = vmatprep.subr.mxu0 %v1045
  %1105 = vmatpush1.msra.mxu0 %v1044
  %1106 = vmatprep.subr.mxu0 %v1049
  %1107 = vmatpush1.msra.mxu0 %v1048
  %1108 = vmatprep.subr.mxu0 %v1053
  %1109 = vmatpush1.msra.mxu0 %v1052
  %1110 = vmatprep.subr.mxu0 %v1057
  %1111 = vmatpush1.msra.mxu0 %v1056
  %1112 = vmatprep.subr.mxu0 %v1061
  %1113 = vmatpush1.msra.mxu0 %v1060
  %1114 = vmatprep.subr.mxu0 %v1065
  %1115 = vmatpush1.msra.mxu0 %v1064
  %1116 = vmatprep.subr.mxu0 %v1069
  %1117 = vmatpush1.msra.mxu0 %v1068
  %1118 = vmatprep.subr.mxu0 %v1073
  %1119 = vmatpush1.msra.mxu0 %v1072
  %1120 = vmatprep.subr.mxu0 %v1077
  %1121 = vmatpush1.msra.mxu0 %v1076
  %1122 = vmatprep.subr.mxu0 %v1081
  %1123 = vmatpush1.msra.mxu0 %v1080
  %1124 = vmatprep.subr.mxu0 %v1085
  %1125 = vmatpush1.msra.mxu0 %v1084
  %1126 = vmatprep.subr.mxu0 %v1089
  %1127 = vmatpush1.msra.mxu0 %v1088
  %1128 = vmatprep.subr.mxu0 %v1093
  %1129 = vmatpush1.msra.mxu0 %v1092
  %1130 = vmatprep.subr.mxu0 %v1097
  %1131 = vmatpush1.msra.mxu0 %v1096
  %1132 = vmatprep.subr.mxu0 0.0
  %1133 = vmatpush1.msra.mxu0 0.0
  %1134 = vmatprep.subr.mxu0 0.0
  %1135 = vmatpush1.msra.mxu0 0.0
  %1136 = vmatprep.subr.mxu0 0.0
  %1137 = vmatpush1.msra.mxu0 0.0
  %1138 = vmatprep.subr.mxu0 0.0
  %1139 = vmatpush1.msra.mxu0 0.0
  %1140 = vmatprep.subr.mxu0 0.0
  %1141 = vmatpush1.msra.mxu0 0.0
  %1142 = vmatprep.subr.mxu0 0.0
  %1143 = vmatpush1.msra.mxu0 0.0
  %1144 = vmatprep.subr.mxu0 0.0
  %1145 = vmatpush1.msra.mxu0 0.0
  %1146 = vmatprep.subr.mxu0 0.0
  %1147 = vmatpush1.msra.mxu0 0.0
  %1148 = vmatprep.subr.mxu0 0.0
  %1149 = vmatpush1.msra.mxu0 0.0
  %1150 = vmatprep.subr.mxu0 0.0
  %1151 = vmatpush1.msra.mxu0 0.0
  %1152 = vmatprep.subr.mxu0 0.0
  %1153 = vmatpush1.msra.mxu0 0.0
  %1154 = vmatprep.subr.mxu0 0.0
  %1155 = vmatpush1.msra.mxu0 0.0
  %1156 = vmatprep.subr.mxu0 0.0
  %1157 = vmatpush1.msra.mxu0 0.0
  %1158 = vmatprep.subr.mxu0 0.0
  %1159 = vmatpush1.msra.mxu0 0.0
  %1160 = vmatprep.subr.mxu0 0.0
  %1161 = vmatpush1.msra.mxu0 0.0
  %1162 = vmatprep.subr.mxu0 0.0
  %1163 = vmatpush1.msra.mxu0 0.0
  %1164 = vmatprep.mubr.f32.mxu0 0.0
  %1165 = vmatmul.mubr.f32.gmra.mrb[0].mxu0 %v803
  %v1166 = vpop.f32.mrb[0].mxu0
  %v1167 = vadd.f32 0.0, %v1166
  %v1168 = vpop.f32.mrb[0].mxu0
  %v1169 = vadd.f32 0.0, %v1168
  %1170 = vdwg.mxu0
  %1171 = vmatprep.subr.mxu0 %v1039
  %1172 = vmatpush1.msra.mxu0 %v1038
  %1173 = vmatprep.subr.mxu0 %v1043
  %1174 = vmatpush1.msra.mxu0 %v1042
  %1175 = vmatprep.subr.mxu0 %v1047
  %1176 = vmatpush1.msra.mxu0 %v1046
  %1177 = vmatprep.subr.mxu0 %v1051
  %1178 = vmatpush1.msra.mxu0 %v1050
  %1179 = vmatprep.subr.mxu0 %v1055
  %1180 = vmatpush1.msra.mxu0 %v1054
  %1181 = vmatprep.subr.mxu0 %v1059
  %1182 = vmatpush1.msra.mxu0 %v1058
  %1183 = vmatprep.subr.mxu0 %v1063
  %1184 = vmatpush1.msra.mxu0 %v1062
  %1185 = vmatprep.subr.mxu0 %v1067
  %1186 = vmatpush1.msra.mxu0 %v1066
  %1187 = vmatprep.subr.mxu0 %v1071
  %1188 = vmatpush1.msra.mxu0 %v1070
  %1189 = vmatprep.subr.mxu0 %v1075
  %1190 = vmatpush1.msra.mxu0 %v1074
  %1191 = vmatprep.subr.mxu0 %v1079
  %1192 = vmatpush1.msra.mxu0 %v1078
  %1193 = vmatprep.subr.mxu0 %v1083
  %1194 = vmatpush1.msra.mxu0 %v1082
  %1195 = vmatprep.subr.mxu0 %v1087
  %1196 = vmatpush1.msra.mxu0 %v1086
  %1197 = vmatprep.subr.mxu0 %v1091
  %1198 = vmatpush1.msra.mxu0 %v1090
  %1199 = vmatprep.subr.mxu0 %v1095
  %1200 = vmatpush1.msra.mxu0 %v1094
  %1201 = vmatprep.subr.mxu0 %v1099
  %1202 = vmatpush1.msra.mxu0 %v1098
  %1203 = vmatprep.subr.mxu0 0.0
  %1204 = vmatpush1.msra.mxu0 0.0
  %1205 = vmatprep.subr.mxu0 0.0
  %1206 = vmatpush1.msra.mxu0 0.0
  %1207 = vmatprep.subr.mxu0 0.0
  %1208 = vmatpush1.msra.mxu0 0.0
  %1209 = vmatprep.subr.mxu0 0.0
  %1210 = vmatpush1.msra.mxu0 0.0
  %1211 = vmatprep.subr.mxu0 0.0
  %1212 = vmatpush1.msra.mxu0 0.0
  %1213 = vmatprep.subr.mxu0 0.0
  %1214 = vmatpush1.msra.mxu0 0.0
  %1215 = vmatprep.subr.mxu0 0.0
  %1216 = vmatpush1.msra.mxu0 0.0
  %1217 = vmatprep.subr.mxu0 0.0
  %1218 = vmatpush1.msra.mxu0 0.0
  %1219 = vmatprep.subr.mxu0 0.0
  %1220 = vmatpush1.msra.mxu0 0.0
  %1221 = vmatprep.subr.mxu0 0.0
  %1222 = vmatpush1.msra.mxu0 0.0
  %1223 = vmatprep.subr.mxu0 0.0
  %1224 = vmatpush1.msra.mxu0 0.0
  %1225 = vmatprep.subr.mxu0 0.0
  %1226 = vmatpush1.msra.mxu0 0.0
  %1227 = vmatprep.subr.mxu0 0.0
  %1228 = vmatpush1.msra.mxu0 0.0
  %1229 = vmatprep.subr.mxu0 0.0
  %1230 = vmatpush1.msra.mxu0 0.0
  %1231 = vmatprep.subr.mxu0 0.0
  %1232 = vmatpush1.msra.mxu0 0.0
  %1233 = vmatprep.subr.mxu0 0.0
  %1234 = vmatpush1.msra.mxu0 0.0
  %1235 = vmatprep.mubr.f32.mxu0 0.0
  %1236 = vmatmul.mubr.f32.gmra.mrb[0].mxu0 %v803
  %v1237 = vpop.f32.mrb[0].mxu0
  %v1238 = vadd.f32 0.0, %v1237
  %v1239 = vpop.f32.mrb[0].mxu0
  %v1240 = vadd.f32 0.0, %v1239
  %1241 = vdwg.mxu0
  %v1246 = vcombine.low %v1167, %v1169
  %v1247 = vcombine.low %v1238, %v1240
  %v1249 = vunpack.c.l.s4 1983009808
  %v1250 = vunpack.c.0.s8 %v1249
  %v1251 = vlaneseq
  %v1252 = vshrl.u32 %v1251, 7
  %v1253 = vsub.s32 %v1250, %v1252
  %v1254 = vrot.slane %v1246, %v1253
  %v1256 = vunpack.c.l.s4 1983009808
  %v1257 = vunpack.c.0.s8 %v1256
  %v1258 = vlaneseq
  %v1259 = vshrl.u32 %v1258, 7
  %v1260 = vsub.s32 %v1257, %v1259
  %v1261 = vrot.slane %v1247, %v1260
  %v1262 = vcombine.low %v1254, %v1261
  %v1264 = vadd.f32 %v1035, %v1262
  %v1265 = vxor.u32 %v1264, 2147483648
  %v1266 = vmul.f32 %v1265, 1.442695
  %v1267 = vpow.pop %v1266
  %v1268 = vadd.f32 %v1267, 1.0
  %v1269 = vrcp.pop %v1268
  %v1270 = vmul.f32 1.0, %v1269
  %v1272 = vrot.slane %v1264, 2
  %v1274 = vxor.u32 %v1272, 2147483648
  %v1275 = vmul.f32 %v1274, 1.442695
  %v1276 = vpow.pop %v1275
  %v1277 = vadd.f32 %v1276, 1.0
  %v1278 = vrcp.pop %v1277
  %v1279 = vmul.f32 1.0, %v1278
  %v1280 = vrot.slane %v1264, 4
  %v1282 = vtanh.pop %v1280
  %v1283 = vrot.slane %v1264, 6
  %v1285 = vxor.u32 %v1283, 2147483648
  %v1286 = vmul.f32 %v1285, 1.442695
  %v1287 = vpow.pop %v1286
  %v1288 = vadd.f32 %v1287, 1.0
  %v1289 = vrcp.pop %v1288
  %v1290 = vmul.f32 1.0, %v1289
  %v1291 = vmul.f32 %v1279, %v801
  %v1292 = vmul.f32 %v1270, %v1282
  %v1293 = vadd.f32 %v1291, %v1292
  %v1294 = vtanh.pop %v1293
  %v1295 = vmul.f32 %v1290, %v1294
  %v1296 = vld [vmem:[%s2] sm:$0xff]
  %v1297 = vld [vmem:[%s2 + $0x8] sm:$0xff]
  %v1298 = vld [vmem:[%s2 + $0x10] sm:$0xff]
  %v1299 = vld [vmem:[%s2 + $0x18] sm:$0xff]
  %v1300 = vld [vmem:[%s2 + $0x20] sm:$0xff]
  %v1301 = vld [vmem:[%s2 + $0x28] sm:$0xff]
  %v1302 = vld [vmem:[%s2 + $0x30] sm:$0xff]
  %v1303 = vld [vmem:[%s2 + $0x38] sm:$0xff]
  %v1304 = vld [vmem:[%s2 + $0x40] sm:$0xff]
  %v1305 = vld [vmem:[%s2 + $0x48] sm:$0xff]
  %v1306 = vld [vmem:[%s2 + $0x50] sm:$0xff]
  %v1307 = vld [vmem:[%s2 + $0x58] sm:$0xff]
  %v1308 = vld [vmem:[%s2 + $0x60] sm:$0xff]
  %v1309 = vld [vmem:[%s2 + $0x68] sm:$0xff]
  %v1310 = vld [vmem:[%s2 + $0x70] sm:$0xff]
  %v1311 = vld [vmem:[%s2 + $0x78] sm:$0xff]
  %v1312 = vld [vmem:[%s2 + $0x80] sm:$0xff]
  %v1313 = vld [vmem:[%s2 + $0x88] sm:$0xff]
  %v1314 = vld [vmem:[%s2 + $0x90] sm:$0xff]
  %v1315 = vld [vmem:[%s2 + $0x98] sm:$0xff]
  %v1316 = vld [vmem:[%s2 + $0xa0] sm:$0xff]
  %v1317 = vld [vmem:[%s2 + $0xa8] sm:$0xff]
  %v1318 = vld [vmem:[%s2 + $0xb0] sm:$0xff]
  %v1319 = vld [vmem:[%s2 + $0xb8] sm:$0xff]
  %v1320 = vld [vmem:[%s2 + $0xc0] sm:$0xff]
  %v1321 = vld [vmem:[%s2 + $0xc8] sm:$0xff]
  %v1322 = vld [vmem:[%s2 + $0xd0] sm:$0xff]
  %v1323 = vld [vmem:[%s2 + $0xd8] sm:$0xff]
  %v1324 = vld [vmem:[%s2 + $0xe0] sm:$0xff]
  %v1325 = vld [vmem:[%s2 + $0xe8] sm:$0xff]
  %v1326 = vld [vmem:[%s2 + $0xf0] sm:$0xff]
  %v1327 = vld [vmem:[%s2 + $0xf8] sm:$0xff]
  %v1328 = vld [vmem:[%s2 + $0x100] sm:$0xff]
  %v1329 = vld [vmem:[%s2 + $0x108] sm:$0xff]
  %v1330 = vld [vmem:[%s2 + $0x110] sm:$0xff]
  %v1331 = vld [vmem:[%s2 + $0x118] sm:$0xff]
  %v1332 = vld [vmem:[%s2 + $0x120] sm:$0xff]
  %v1333 = vld [vmem:[%s2 + $0x128] sm:$0xff]
  %v1334 = vld [vmem:[%s2 + $0x130] sm:$0xff]
  %v1335 = vld [vmem:[%s2 + $0x138] sm:$0xff]
  %v1336 = vld [vmem:[%s2 + $0x140] sm:$0xff]
  %v1337 = vld [vmem:[%s2 + $0x148] sm:$0xff]
  %v1338 = vld [vmem:[%s2 + $0x150] sm:$0xff]
  %v1339 = vld [vmem:[%s2 + $0x158] sm:$0xff]
  %v1340 = vld [vmem:[%s2 + $0x160] sm:$0xff]
  %v1341 = vld [vmem:[%s2 + $0x168] sm:$0xff]
  %v1342 = vld [vmem:[%s2 + $0x170] sm:$0xff]
  %v1343 = vld [vmem:[%s2 + $0x178] sm:$0xff]
  %v1344 = vld [vmem:[%s2 + $0x180] sm:$0xff]
  %v1345 = vld [vmem:[%s2 + $0x188] sm:$0xff]
  %v1346 = vld [vmem:[%s2 + $0x190] sm:$0xff]
  %v1347 = vld [vmem:[%s2 + $0x198] sm:$0xff]
  %v1348 = vld [vmem:[%s2 + $0x1a0] sm:$0xff]
  %v1349 = vld [vmem:[%s2 + $0x1a8] sm:$0xff]
  %v1350 = vld [vmem:[%s2 + $0x1b0] sm:$0xff]
  %v1351 = vld [vmem:[%s2 + $0x1b8] sm:$0xff]
  %v1352 = vld [vmem:[%s2 + $0x1c0] sm:$0xff]
  %v1353 = vld [vmem:[%s2 + $0x1c8] sm:$0xff]
  %v1354 = vld [vmem:[%s2 + $0x1d0] sm:$0xff]
  %v1355 = vld [vmem:[%s2 + $0x1d8] sm:$0xff]
  %v1356 = vld [vmem:[%s2 + $0x1e0] sm:$0xff]
  %v1357 = vld [vmem:[%s2 + $0x1e8] sm:$0xff]
  %v1358 = vld [vmem:[%s2 + $0x1f0] sm:$0xff]
  %v1359 = vld [vmem:[%s2 + $0x1f8] sm:$0xff]
  %1360 = vmatprep.subr.mxu0 %v1297
  %1361 = vmatpush1.msra.mxu0 %v1296
  %1362 = vmatprep.subr.mxu0 %v1301
  %1363 = vmatpush1.msra.mxu0 %v1300
  %1364 = vmatprep.subr.mxu0 %v1305
  %1365 = vmatpush1.msra.mxu0 %v1304
  %1366 = vmatprep.subr.mxu0 %v1309
  %1367 = vmatpush1.msra.mxu0 %v1308
  %1368 = vmatprep.subr.mxu0 %v1313
  %1369 = vmatpush1.msra.mxu0 %v1312
  %1370 = vmatprep.subr.mxu0 %v1317
  %1371 = vmatpush1.msra.mxu0 %v1316
  %1372 = vmatprep.subr.mxu0 %v1321
  %1373 = vmatpush1.msra.mxu0 %v1320
  %1374 = vmatprep.subr.mxu0 %v1325
  %1375 = vmatpush1.msra.mxu0 %v1324
  %1376 = vmatprep.subr.mxu0 %v1329
  %1377 = vmatpush1.msra.mxu0 %v1328
  %1378 = vmatprep.subr.mxu0 %v1333
  %1379 = vmatpush1.msra.mxu0 %v1332
  %1380 = vmatprep.subr.mxu0 %v1337
  %1381 = vmatpush1.msra.mxu0 %v1336
  %1382 = vmatprep.subr.mxu0 %v1341
  %1383 = vmatpush1.msra.mxu0 %v1340
  %1384 = vmatprep.subr.mxu0 %v1345
  %1385 = vmatpush1.msra.mxu0 %v1344
  %1386 = vmatprep.subr.mxu0 %v1349
  %1387 = vmatpush1.msra.mxu0 %v1348
  %1388 = vmatprep.subr.mxu0 %v1353
  %1389 = vmatpush1.msra.mxu0 %v1352
  %1390 = vmatprep.subr.mxu0 %v1357
  %1391 = vmatpush1.msra.mxu0 %v1356
  %1392 = vmatprep.subr.mxu0 0.0
  %1393 = vmatpush1.msra.mxu0 0.0
  %1394 = vmatprep.subr.mxu0 0.0
  %1395 = vmatpush1.msra.mxu0 0.0
  %1396 = vmatprep.subr.mxu0 0.0
  %1397 = vmatpush1.msra.mxu0 0.0
  %1398 = vmatprep.subr.mxu0 0.0
  %1399 = vmatpush1.msra.mxu0 0.0
  %1400 = vmatprep.subr.mxu0 0.0
  %1401 = vmatpush1.msra.mxu0 0.0
  %1402 = vmatprep.subr.mxu0 0.0
  %1403 = vmatpush1.msra.mxu0 0.0
  %1404 = vmatprep.subr.mxu0 0.0
  %1405 = vmatpush1.msra.mxu0 0.0
  %1406 = vmatprep.subr.mxu0 0.0
  %1407 = vmatpush1.msra.mxu0 0.0
  %1408 = vmatprep.subr.mxu0 0.0
  %1409 = vmatpush1.msra.mxu0 0.0
  %1410 = vmatprep.subr.mxu0 0.0
  %1411 = vmatpush1.msra.mxu0 0.0
  %1412 = vmatprep.subr.mxu0 0.0
  %1413 = vmatpush1.msra.mxu0 0.0
  %1414 = vmatprep.subr.mxu0 0.0
  %1415 = vmatpush1.msra.mxu0 0.0
  %1416 = vmatprep.subr.mxu0 0.0
  %1417 = vmatpush1.msra.mxu0 0.0
  %1418 = vmatprep.subr.mxu0 0.0
  %1419 = vmatpush1.msra.mxu0 0.0
  %1420 = vmatprep.subr.mxu0 0.0
  %1421 = vmatpush1.msra.mxu0 0.0
  %1422 = vmatprep.subr.mxu0 0.0
  %1423 = vmatpush1.msra.mxu0 0.0
  %1424 = vmatprep.mubr.f32.mxu0 0.0
  %1425 = vmatmul.mubr.f32.gmra.mrb[0].mxu0 %v1295
  %v1426 = vpop.f32.mrb[0].mxu0
  %v1427 = vadd.f32 %v33, %v1426
  %v1428 = vpop.f32.mrb[0].mxu0
  %v1429 = vadd.f32 %v37, %v1428
  %1430 = vdwg.mxu0
  %1431 = vmatprep.subr.mxu0 %v1299
  %1432 = vmatpush1.msra.mxu0 %v1298
  %1433 = vmatprep.subr.mxu0 %v1303
  %1434 = vmatpush1.msra.mxu0 %v1302
  %1435 = vmatprep.subr.mxu0 %v1307
  %1436 = vmatpush1.msra.mxu0 %v1306
  %1437 = vmatprep.subr.mxu0 %v1311
  %1438 = vmatpush1.msra.mxu0 %v1310
  %1439 = vmatprep.subr.mxu0 %v1315
  %1440 = vmatpush1.msra.mxu0 %v1314
  %1441 = vmatprep.subr.mxu0 %v1319
  %1442 = vmatpush1.msra.mxu0 %v1318
  %1443 = vmatprep.subr.mxu0 %v1323
  %1444 = vmatpush1.msra.mxu0 %v1322
  %1445 = vmatprep.subr.mxu0 %v1327
  %1446 = vmatpush1.msra.mxu0 %v1326
  %1447 = vmatprep.subr.mxu0 %v1331
  %1448 = vmatpush1.msra.mxu0 %v1330
  %1449 = vmatprep.subr.mxu0 %v1335
  %1450 = vmatpush1.msra.mxu0 %v1334
  %1451 = vmatprep.subr.mxu0 %v1339
  %1452 = vmatpush1.msra.mxu0 %v1338
  %1453 = vmatprep.subr.mxu0 %v1343
  %1454 = vmatpush1.msra.mxu0 %v1342
  %1455 = vmatprep.subr.mxu0 %v1347
  %1456 = vmatpush1.msra.mxu0 %v1346
  %1457 = vmatprep.subr.mxu0 %v1351
  %1458 = vmatpush1.msra.mxu0 %v1350
  %1459 = vmatprep.subr.mxu0 %v1355
  %1460 = vmatpush1.msra.mxu0 %v1354
  %1461 = vmatprep.subr.mxu0 %v1359
  %1462 = vmatpush1.msra.mxu0 %v1358
  %1463 = vmatprep.subr.mxu0 0.0
  %1464 = vmatpush1.msra.mxu0 0.0
  %1465 = vmatprep.subr.mxu0 0.0
  %1466 = vmatpush1.msra.mxu0 0.0
  %1467 = vmatprep.subr.mxu0 0.0
  %1468 = vmatpush1.msra.mxu0 0.0
  %1469 = vmatprep.subr.mxu0 0.0
  %1470 = vmatpush1.msra.mxu0 0.0
  %1471 = vmatprep.subr.mxu0 0.0
  %1472 = vmatpush1.msra.mxu0 0.0
  %1473 = vmatprep.subr.mxu0 0.0
  %1474 = vmatpush1.msra.mxu0 0.0
  %1475 = vmatprep.subr.mxu0 0.0
  %1476 = vmatpush1.msra.mxu0 0.0
  %1477 = vmatprep.subr.mxu0 0.0
  %1478 = vmatpush1.msra.mxu0 0.0
  %1479 = vmatprep.subr.mxu0 0.0
  %1480 = vmatpush1.msra.mxu0 0.0
  %1481 = vmatprep.subr.mxu0 0.0
  %1482 = vmatpush1.msra.mxu0 0.0
  %1483 = vmatprep.subr.mxu0 0.0
  %1484 = vmatpush1.msra.mxu0 0.0
  %1485 = vmatprep.subr.mxu0 0.0
  %1486 = vmatpush1.msra.mxu0 0.0
  %1487 = vmatprep.subr.mxu0 0.0
  %1488 = vmatpush1.msra.mxu0 0.0
  %1489 = vmatprep.subr.mxu0 0.0
  %1490 = vmatpush1.msra.mxu0 0.0
  %1491 = vmatprep.subr.mxu0 0.0
  %1492 = vmatpush1.msra.mxu0 0.0
  %1493 = vmatprep.subr.mxu0 0.0
  %1494 = vmatpush1.msra.mxu0 0.0
  %1495 = vmatprep.mubr.f32.mxu0 0.0
  %1496 = vmatmul.mubr.f32.gmra.mrb[0].mxu0 %v1295
  %v1497 = vpop.f32.mrb[0].mxu0
  %v1498 = vadd.f32 %v41, %v1497
  %v1499 = vpop.f32.mrb[0].mxu0
  %v1500 = vadd.f32 %v45, %v1499
  %1501 = vdwg.mxu0
  %v1506 = vcombine.low %v1427, %v1429
  %v1507 = vcombine.low %v1498, %v1500
  %v1509 = vunpack.c.l.s4 1983009808
  %v1510 = vunpack.c.0.s8 %v1509
  %v1511 = vlaneseq
  %v1512 = vshrl.u32 %v1511, 7
  %v1513 = vsub.s32 %v1510, %v1512
  %v1514 = vrot.slane %v1506, %v1513
  %v1516 = vunpack.c.l.s4 1983009808
  %v1517 = vunpack.c.0.s8 %v1516
  %v1518 = vlaneseq
  %v1519 = vshrl.u32 %v1518, 7
  %v1520 = vsub.s32 %v1517, %v1519
  %v1521 = vrot.slane %v1507, %v1520
  %v1522 = vcombine.low %v1514, %v1521
  %s1524 = scalar_lea.vmem [#allocation2], 16
  %1525 = vst [vmem:[%s1524] sm:$0xff] %v1522
  %s1526 = scalar_lea.vmem %s0, 24
  %v1527 = vld [vmem:[%s1526] sm:$0xff]
  %v1528 = vld [vmem:[%s1] sm:$0xff]
  %v1529 = vld [vmem:[%s1 + $0x8] sm:$0xff]
  %v1530 = vld [vmem:[%s1 + $0x10] sm:$0xff]
  %v1531 = vld [vmem:[%s1 + $0x18] sm:$0xff]
  %v1532 = vld [vmem:[%s1 + $0x20] sm:$0xff]
  %v1533 = vld [vmem:[%s1 + $0x28] sm:$0xff]
  %v1534 = vld [vmem:[%s1 + $0x30] sm:$0xff]
  %v1535 = vld [vmem:[%s1 + $0x38] sm:$0xff]
  %v1536 = vld [vmem:[%s1 + $0x40] sm:$0xff]
  %v1537 = vld [vmem:[%s1 + $0x48] sm:$0xff]
  %v1538 = vld [vmem:[%s1 + $0x50] sm:$0xff]
  %v1539 = vld [vmem:[%s1 + $0x58] sm:$0xff]
  %v1540 = vld [vmem:[%s1 + $0x60] sm:$0xff]
  %v1541 = vld [vmem:[%s1 + $0x68] sm:$0xff]
  %v1542 = vld [vmem:[%s1 + $0x70] sm:$0xff]
  %v1543 = vld [vmem:[%s1 + $0x78] sm:$0xff]
  %v1544 = vld [vmem:[%s1 + $0x80] sm:$0xff]
  %v1545 = vld [vmem:[%s1 + $0x88] sm:$0xff]
  %v1546 = vld [vmem:[%s1 + $0x90] sm:$0xff]
  %v1547 = vld [vmem:[%s1 + $0x98] sm:$0xff]
  %v1548 = vld [vmem:[%s1 + $0xa0] sm:$0xff]
  %v1549 = vld [vmem:[%s1 + $0xa8] sm:$0xff]
  %v1550 = vld [vmem:[%s1 + $0xb0] sm:$0xff]
  %v1551 = vld [vmem:[%s1 + $0xb8] sm:$0xff]
  %v1552 = vld [vmem:[%s1 + $0xc0] sm:$0xff]
  %v1553 = vld [vmem:[%s1 + $0xc8] sm:$0xff]
  %v1554 = vld [vmem:[%s1 + $0xd0] sm:$0xff]
  %v1555 = vld [vmem:[%s1 + $0xd8] sm:$0xff]
  %v1556 = vld [vmem:[%s1 + $0xe0] sm:$0xff]
  %v1557 = vld [vmem:[%s1 + $0xe8] sm:$0xff]
  %v1558 = vld [vmem:[%s1 + $0xf0] sm:$0xff]
  %v1559 = vld [vmem:[%s1 + $0xf8] sm:$0xff]
  %v1560 = vld [vmem:[%s1 + $0x100] sm:$0xff]
  %v1561 = vld [vmem:[%s1 + $0x108] sm:$0xff]
  %v1562 = vld [vmem:[%s1 + $0x110] sm:$0xff]
  %v1563 = vld [vmem:[%s1 + $0x118] sm:$0xff]
  %v1564 = vld [vmem:[%s1 + $0x120] sm:$0xff]
  %v1565 = vld [vmem:[%s1 + $0x128] sm:$0xff]
  %v1566 = vld [vmem:[%s1 + $0x130] sm:$0xff]
  %v1567 = vld [vmem:[%s1 + $0x138] sm:$0xff]
  %v1568 = vld [vmem:[%s1 + $0x140] sm:$0xff]
  %v1569 = vld [vmem:[%s1 + $0x148] sm:$0xff]
  %v1570 = vld [vmem:[%s1 + $0x150] sm:$0xff]
  %v1571 = vld [vmem:[%s1 + $0x158] sm:$0xff]
  %v1572 = vld [vmem:[%s1 + $0x160] sm:$0xff]
  %v1573 = vld [vmem:[%s1 + $0x168] sm:$0xff]
  %v1574 = vld [vmem:[%s1 + $0x170] sm:$0xff]
  %v1575 = vld [vmem:[%s1 + $0x178] sm:$0xff]
  %v1576 = vld [vmem:[%s1 + $0x180] sm:$0xff]
  %v1577 = vld [vmem:[%s1 + $0x188] sm:$0xff]
  %v1578 = vld [vmem:[%s1 + $0x190] sm:$0xff]
  %v1579 = vld [vmem:[%s1 + $0x198] sm:$0xff]
  %v1580 = vld [vmem:[%s1 + $0x1a0] sm:$0xff]
  %v1581 = vld [vmem:[%s1 + $0x1a8] sm:$0xff]
  %v1582 = vld [vmem:[%s1 + $0x1b0] sm:$0xff]
  %v1583 = vld [vmem:[%s1 + $0x1b8] sm:$0xff]
  %v1584 = vld [vmem:[%s1 + $0x1c0] sm:$0xff]
  %v1585 = vld [vmem:[%s1 + $0x1c8] sm:$0xff]
  %v1586 = vld [vmem:[%s1 + $0x1d0] sm:$0xff]
  %v1587 = vld [vmem:[%s1 + $0x1d8] sm:$0xff]
  %v1588 = vld [vmem:[%s1 + $0x1e0] sm:$0xff]
  %v1589 = vld [vmem:[%s1 + $0x1e8] sm:$0xff]
  %v1590 = vld [vmem:[%s1 + $0x1f0] sm:$0xff]
  %v1591 = vld [vmem:[%s1 + $0x1f8] sm:$0xff]
  %1592 = vmatprep.subr.mxu0 %v1529
  %1593 = vmatpush1.msra.mxu0 %v1528
  %1594 = vmatprep.subr.mxu0 %v1533
  %1595 = vmatpush1.msra.mxu0 %v1532
  %1596 = vmatprep.subr.mxu0 %v1537
  %1597 = vmatpush1.msra.mxu0 %v1536
  %1598 = vmatprep.subr.mxu0 %v1541
  %1599 = vmatpush1.msra.mxu0 %v1540
  %1600 = vmatprep.subr.mxu0 %v1545
  %1601 = vmatpush1.msra.mxu0 %v1544
  %1602 = vmatprep.subr.mxu0 %v1549
  %1603 = vmatpush1.msra.mxu0 %v1548
  %1604 = vmatprep.subr.mxu0 %v1553
  %1605 = vmatpush1.msra.mxu0 %v1552
  %1606 = vmatprep.subr.mxu0 %v1557
  %1607 = vmatpush1.msra.mxu0 %v1556
  %1608 = vmatprep.subr.mxu0 %v1561
  %1609 = vmatpush1.msra.mxu0 %v1560
  %1610 = vmatprep.subr.mxu0 %v1565
  %1611 = vmatpush1.msra.mxu0 %v1564
  %1612 = vmatprep.subr.mxu0 %v1569
  %1613 = vmatpush1.msra.mxu0 %v1568
  %1614 = vmatprep.subr.mxu0 %v1573
  %1615 = vmatpush1.msra.mxu0 %v1572
  %1616 = vmatprep.subr.mxu0 %v1577
  %1617 = vmatpush1.msra.mxu0 %v1576
  %1618 = vmatprep.subr.mxu0 %v1581
  %1619 = vmatpush1.msra.mxu0 %v1580
  %1620 = vmatprep.subr.mxu0 %v1585
  %1621 = vmatpush1.msra.mxu0 %v1584
  %1622 = vmatprep.subr.mxu0 %v1589
  %1623 = vmatpush1.msra.mxu0 %v1588
  %1624 = vmatprep.subr.mxu0 0.0
  %1625 = vmatpush1.msra.mxu0 0.0
  %1626 = vmatprep.subr.mxu0 0.0
  %1627 = vmatpush1.msra.mxu0 0.0
  %1628 = vmatprep.subr.mxu0 0.0
  %1629 = vmatpush1.msra.mxu0 0.0
  %1630 = vmatprep.subr.mxu0 0.0
  %1631 = vmatpush1.msra.mxu0 0.0
  %1632 = vmatprep.subr.mxu0 0.0
  %1633 = vmatpush1.msra.mxu0 0.0
  %1634 = vmatprep.subr.mxu0 0.0
  %1635 = vmatpush1.msra.mxu0 0.0
  %1636 = vmatprep.subr.mxu0 0.0
  %1637 = vmatpush1.msra.mxu0 0.0
  %1638 = vmatprep.subr.mxu0 0.0
  %1639 = vmatpush1.msra.mxu0 0.0
  %1640 = vmatprep.subr.mxu0 0.0
  %1641 = vmatpush1.msra.mxu0 0.0
  %1642 = vmatprep.subr.mxu0 0.0
  %1643 = vmatpush1.msra.mxu0 0.0
  %1644 = vmatprep.subr.mxu0 0.0
  %1645 = vmatpush1.msra.mxu0 0.0
  %1646 = vmatprep.subr.mxu0 0.0
  %1647 = vmatpush1.msra.mxu0 0.0
  %1648 = vmatprep.subr.mxu0 0.0
  %1649 = vmatpush1.msra.mxu0 0.0
  %1650 = vmatprep.subr.mxu0 0.0
  %1651 = vmatpush1.msra.mxu0 0.0
  %1652 = vmatprep.subr.mxu0 0.0
  %1653 = vmatpush1.msra.mxu0 0.0
  %1654 = vmatprep.subr.mxu0 0.0
  %1655 = vmatpush1.msra.mxu0 0.0
  %1656 = vmatprep.mubr.f32.mxu0 0.0
  %1657 = vmatmul.mubr.f32.gmra.mrb[0].mxu0 %v1295
  %v1658 = vpop.f32.mrb[0].mxu0
  %v1659 = vadd.f32 0.0, %v1658
  %v1660 = vpop.f32.mrb[0].mxu0
  %v1661 = vadd.f32 0.0, %v1660
  %1662 = vdwg.mxu0
  %1663 = vmatprep.subr.mxu0 %v1531
  %1664 = vmatpush1.msra.mxu0 %v1530
  %1665 = vmatprep.subr.mxu0 %v1535
  %1666 = vmatpush1.msra.mxu0 %v1534
  %1667 = vmatprep.subr.mxu0 %v1539
  %1668 = vmatpush1.msra.mxu0 %v1538
  %1669 = vmatprep.subr.mxu0 %v1543
  %1670 = vmatpush1.msra.mxu0 %v1542
  %1671 = vmatprep.subr.mxu0 %v1547
  %1672 = vmatpush1.msra.mxu0 %v1546
  %1673 = vmatprep.subr.mxu0 %v1551
  %1674 = vmatpush1.msra.mxu0 %v1550
  %1675 = vmatprep.subr.mxu0 %v1555
  %1676 = vmatpush1.msra.mxu0 %v1554
  %1677 = vmatprep.subr.mxu0 %v1559
  %1678 = vmatpush1.msra.mxu0 %v1558
  %1679 = vmatprep.subr.mxu0 %v1563
  %1680 = vmatpush1.msra.mxu0 %v1562
  %1681 = vmatprep.subr.mxu0 %v1567
  %1682 = vmatpush1.msra.mxu0 %v1566
  %1683 = vmatprep.subr.mxu0 %v1571
  %1684 = vmatpush1.msra.mxu0 %v1570
  %1685 = vmatprep.subr.mxu0 %v1575
  %1686 = vmatpush1.msra.mxu0 %v1574
  %1687 = vmatprep.subr.mxu0 %v1579
  %1688 = vmatpush1.msra.mxu0 %v1578
  %1689 = vmatprep.subr.mxu0 %v1583
  %1690 = vmatpush1.msra.mxu0 %v1582
  %1691 = vmatprep.subr.mxu0 %v1587
  %1692 = vmatpush1.msra.mxu0 %v1586
  %1693 = vmatprep.subr.mxu0 %v1591
  %1694 = vmatpush1.msra.mxu0 %v1590
  %1695 = vmatprep.subr.mxu0 0.0
  %1696 = vmatpush1.msra.mxu0 0.0
  %1697 = vmatprep.subr.mxu0 0.0
  %1698 = vmatpush1.msra.mxu0 0.0
  %1699 = vmatprep.subr.mxu0 0.0
  %1700 = vmatpush1.msra.mxu0 0.0
  %1701 = vmatprep.subr.mxu0 0.0
  %1702 = vmatpush1.msra.mxu0 0.0
  %1703 = vmatprep.subr.mxu0 0.0
  %1704 = vmatpush1.msra.mxu0 0.0
  %1705 = vmatprep.subr.mxu0 0.0
  %1706 = vmatpush1.msra.mxu0 0.0
  %1707 = vmatprep.subr.mxu0 0.0
  %1708 = vmatpush1.msra.mxu0 0.0
  %1709 = vmatprep.subr.mxu0 0.0
  %1710 = vmatpush1.msra.mxu0 0.0
  %1711 = vmatprep.subr.mxu0 0.0
  %1712 = vmatpush1.msra.mxu0 0.0
  %1713 = vmatprep.subr.mxu0 0.0
  %1714 = vmatpush1.msra.mxu0 0.0
  %1715 = vmatprep.subr.mxu0 0.0
  %1716 = vmatpush1.msra.mxu0 0.0
  %1717 = vmatprep.subr.mxu0 0.0
  %1718 = vmatpush1.msra.mxu0 0.0
  %1719 = vmatprep.subr.mxu0 0.0
  %1720 = vmatpush1.msra.mxu0 0.0
  %1721 = vmatprep.subr.mxu0 0.0
  %1722 = vmatpush1.msra.mxu0 0.0
  %1723 = vmatprep.subr.mxu0 0.0
  %1724 = vmatpush1.msra.mxu0 0.0
  %1725 = vmatprep.subr.mxu0 0.0
  %1726 = vmatpush1.msra.mxu0 0.0
  %1727 = vmatprep.mubr.f32.mxu0 0.0
  %1728 = vmatmul.mubr.f32.gmra.mrb[0].mxu0 %v1295
  %v1729 = vpop.f32.mrb[0].mxu0
  %v1730 = vadd.f32 0.0, %v1729
  %v1731 = vpop.f32.mrb[0].mxu0
  %v1732 = vadd.f32 0.0, %v1731
  %1733 = vdwg.mxu0
  %v1738 = vcombine.low %v1659, %v1661
  %v1739 = vcombine.low %v1730, %v1732
  %v1741 = vunpack.c.l.s4 1983009808
  %v1742 = vunpack.c.0.s8 %v1741
  %v1743 = vlaneseq
  %v1744 = vshrl.u32 %v1743, 7
  %v1745 = vsub.s32 %v1742, %v1744
  %v1746 = vrot.slane %v1738, %v1745
  %v1748 = vunpack.c.l.s4 1983009808
  %v1749 = vunpack.c.0.s8 %v1748
  %v1750 = vlaneseq
  %v1751 = vshrl.u32 %v1750, 7
  %v1752 = vsub.s32 %v1749, %v1751
  %v1753 = vrot.slane %v1739, %v1752
  %v1754 = vcombine.low %v1746, %v1753
  %v1756 = vadd.f32 %v1527, %v1754
  %v1757 = vxor.u32 %v1756, 2147483648
  %v1758 = vmul.f32 %v1757, 1.442695
  %v1759 = vpow.pop %v1758
  %v1760 = vadd.f32 %v1759, 1.0
  %v1761 = vrcp.pop %v1760
  %v1762 = vmul.f32 1.0, %v1761
  %v1764 = vrot.slane %v1756, 2
  %v1766 = vxor.u32 %v1764, 2147483648
  %v1767 = vmul.f32 %v1766, 1.442695
  %v1768 = vpow.pop %v1767
  %v1769 = vadd.f32 %v1768, 1.0
  %v1770 = vrcp.pop %v1769
  %v1771 = vmul.f32 1.0, %v1770
  %v1772 = vrot.slane %v1756, 4
  %v1774 = vtanh.pop %v1772
  %v1775 = vrot.slane %v1756, 6
  %v1777 = vxor.u32 %v1775, 2147483648
  %v1778 = vmul.f32 %v1777, 1.442695
  %v1779 = vpow.pop %v1778
  %v1780 = vadd.f32 %v1779, 1.0
  %v1781 = vrcp.pop %v1780
  %v1782 = vmul.f32 1.0, %v1781
  %v1783 = vmul.f32 %v1771, %v1293
  %v1784 = vmul.f32 %v1762, %v1774
  %v1785 = vadd.f32 %v1783, %v1784
  %v1786 = vtanh.pop %v1785
  %v1787 = vmul.f32 %v1782, %v1786
  %v1788 = vld [vmem:[%s2] sm:$0xff]
  %v1789 = vld [vmem:[%s2 + $0x8] sm:$0xff]
  %v1790 = vld [vmem:[%s2 + $0x10] sm:$0xff]
  %v1791 = vld [vmem:[%s2 + $0x18] sm:$0xff]
  %v1792 = vld [vmem:[%s2 + $0x20] sm:$0xff]
  %v1793 = vld [vmem:[%s2 + $0x28] sm:$0xff]
  %v1794 = vld [vmem:[%s2 + $0x30] sm:$0xff]
  %v1795 = vld [vmem:[%s2 + $0x38] sm:$0xff]
  %v1796 = vld [vmem:[%s2 + $0x40] sm:$0xff]
  %v1797 = vld [vmem:[%s2 + $0x48] sm:$0xff]
  %v1798 = vld [vmem:[%s2 + $0x50] sm:$0xff]
  %v1799 = vld [vmem:[%s2 + $0x58] sm:$0xff]
  %v1800 = vld [vmem:[%s2 + $0x60] sm:$0xff]
  %v1801 = vld [vmem:[%s2 + $0x68] sm:$0xff]
  %v1802 = vld [vmem:[%s2 + $0x70] sm:$0xff]
  %v1803 = vld [vmem:[%s2 + $0x78] sm:$0xff]
  %v1804 = vld [vmem:[%s2 + $0x80] sm:$0xff]
  %v1805 = vld [vmem:[%s2 + $0x88] sm:$0xff]
  %v1806 = vld [vmem:[%s2 + $0x90] sm:$0xff]
  %v1807 = vld [vmem:[%s2 + $0x98] sm:$0xff]
  %v1808 = vld [vmem:[%s2 + $0xa0] sm:$0xff]
  %v1809 = vld [vmem:[%s2 + $0xa8] sm:$0xff]
  %v1810 = vld [vmem:[%s2 + $0xb0] sm:$0xff]
  %v1811 = vld [vmem:[%s2 + $0xb8] sm:$0xff]
  %v1812 = vld [vmem:[%s2 + $0xc0] sm:$0xff]
  %v1813 = vld [vmem:[%s2 + $0xc8] sm:$0xff]
  %v1814 = vld [vmem:[%s2 + $0xd0] sm:$0xff]
  %v1815 = vld [vmem:[%s2 + $0xd8] sm:$0xff]
  %v1816 = vld [vmem:[%s2 + $0xe0] sm:$0xff]
  %v1817 = vld [vmem:[%s2 + $0xe8] sm:$0xff]
  %v1818 = vld [vmem:[%s2 + $0xf0] sm:$0xff]
  %v1819 = vld [vmem:[%s2 + $0xf8] sm:$0xff]
  %v1820 = vld [vmem:[%s2 + $0x100] sm:$0xff]
  %v1821 = vld [vmem:[%s2 + $0x108] sm:$0xff]
  %v1822 = vld [vmem:[%s2 + $0x110] sm:$0xff]
  %v1823 = vld [vmem:[%s2 + $0x118] sm:$0xff]
  %v1824 = vld [vmem:[%s2 + $0x120] sm:$0xff]
  %v1825 = vld [vmem:[%s2 + $0x128] sm:$0xff]
  %v1826 = vld [vmem:[%s2 + $0x130] sm:$0xff]
  %v1827 = vld [vmem:[%s2 + $0x138] sm:$0xff]
  %v1828 = vld [vmem:[%s2 + $0x140] sm:$0xff]
  %v1829 = vld [vmem:[%s2 + $0x148] sm:$0xff]
  %v1830 = vld [vmem:[%s2 + $0x150] sm:$0xff]
  %v1831 = vld [vmem:[%s2 + $0x158] sm:$0xff]
  %v1832 = vld [vmem:[%s2 + $0x160] sm:$0xff]
  %v1833 = vld [vmem:[%s2 + $0x168] sm:$0xff]
  %v1834 = vld [vmem:[%s2 + $0x170] sm:$0xff]
  %v1835 = vld [vmem:[%s2 + $0x178] sm:$0xff]
  %v1836 = vld [vmem:[%s2 + $0x180] sm:$0xff]
  %v1837 = vld [vmem:[%s2 + $0x188] sm:$0xff]
  %v1838 = vld [vmem:[%s2 + $0x190] sm:$0xff]
  %v1839 = vld [vmem:[%s2 + $0x198] sm:$0xff]
  %v1840 = vld [vmem:[%s2 + $0x1a0] sm:$0xff]
  %v1841 = vld [vmem:[%s2 + $0x1a8] sm:$0xff]
  %v1842 = vld [vmem:[%s2 + $0x1b0] sm:$0xff]
  %v1843 = vld [vmem:[%s2 + $0x1b8] sm:$0xff]
  %v1844 = vld [vmem:[%s2 + $0x1c0] sm:$0xff]
  %v1845 = vld [vmem:[%s2 + $0x1c8] sm:$0xff]
  %v1846 = vld [vmem:[%s2 + $0x1d0] sm:$0xff]
  %v1847 = vld [vmem:[%s2 + $0x1d8] sm:$0xff]
  %v1848 = vld [vmem:[%s2 + $0x1e0] sm:$0xff]
  %v1849 = vld [vmem:[%s2 + $0x1e8] sm:$0xff]
  %v1850 = vld [vmem:[%s2 + $0x1f0] sm:$0xff]
  %v1851 = vld [vmem:[%s2 + $0x1f8] sm:$0xff]
  %1852 = vmatprep.subr.mxu0 %v1789
  %1853 = vmatpush1.msra.mxu0 %v1788
  %1854 = vmatprep.subr.mxu0 %v1793
  %1855 = vmatpush1.msra.mxu0 %v1792
  %1856 = vmatprep.subr.mxu0 %v1797
  %1857 = vmatpush1.msra.mxu0 %v1796
  %1858 = vmatprep.subr.mxu0 %v1801
  %1859 = vmatpush1.msra.mxu0 %v1800
  %1860 = vmatprep.subr.mxu0 %v1805
  %1861 = vmatpush1.msra.mxu0 %v1804
  %1862 = vmatprep.subr.mxu0 %v1809
  %1863 = vmatpush1.msra.mxu0 %v1808
  %1864 = vmatprep.subr.mxu0 %v1813
  %1865 = vmatpush1.msra.mxu0 %v1812
  %1866 = vmatprep.subr.mxu0 %v1817
  %1867 = vmatpush1.msra.mxu0 %v1816
  %1868 = vmatprep.subr.mxu0 %v1821
  %1869 = vmatpush1.msra.mxu0 %v1820
  %1870 = vmatprep.subr.mxu0 %v1825
  %1871 = vmatpush1.msra.mxu0 %v1824
  %1872 = vmatprep.subr.mxu0 %v1829
  %1873 = vmatpush1.msra.mxu0 %v1828
  %1874 = vmatprep.subr.mxu0 %v1833
  %1875 = vmatpush1.msra.mxu0 %v1832
  %1876 = vmatprep.subr.mxu0 %v1837
  %1877 = vmatpush1.msra.mxu0 %v1836
  %1878 = vmatprep.subr.mxu0 %v1841
  %1879 = vmatpush1.msra.mxu0 %v1840
  %1880 = vmatprep.subr.mxu0 %v1845
  %1881 = vmatpush1.msra.mxu0 %v1844
  %1882 = vmatprep.subr.mxu0 %v1849
  %1883 = vmatpush1.msra.mxu0 %v1848
  %1884 = vmatprep.subr.mxu0 0.0
  %1885 = vmatpush1.msra.mxu0 0.0
  %1886 = vmatprep.subr.mxu0 0.0
  %1887 = vmatpush1.msra.mxu0 0.0
  %1888 = vmatprep.subr.mxu0 0.0
  %1889 = vmatpush1.msra.mxu0 0.0
  %1890 = vmatprep.subr.mxu0 0.0
  %1891 = vmatpush1.msra.mxu0 0.0
  %1892 = vmatprep.subr.mxu0 0.0
  %1893 = vmatpush1.msra.mxu0 0.0
  %1894 = vmatprep.subr.mxu0 0.0
  %1895 = vmatpush1.msra.mxu0 0.0
  %1896 = vmatprep.subr.mxu0 0.0
  %1897 = vmatpush1.msra.mxu0 0.0
  %1898 = vmatprep.subr.mxu0 0.0
  %1899 = vmatpush1.msra.mxu0 0.0
  %1900 = vmatprep.subr.mxu0 0.0
  %1901 = vmatpush1.msra.mxu0 0.0
  %1902 = vmatprep.subr.mxu0 0.0
  %1903 = vmatpush1.msra.mxu0 0.0
  %1904 = vmatprep.subr.mxu0 0.0
  %1905 = vmatpush1.msra.mxu0 0.0
  %1906 = vmatprep.subr.mxu0 0.0
  %1907 = vmatpush1.msra.mxu0 0.0
  %1908 = vmatprep.subr.mxu0 0.0
  %1909 = vmatpush1.msra.mxu0 0.0
  %1910 = vmatprep.subr.mxu0 0.0
  %1911 = vmatpush1.msra.mxu0 0.0
  %1912 = vmatprep.subr.mxu0 0.0
  %1913 = vmatpush1.msra.mxu0 0.0
  %1914 = vmatprep.subr.mxu0 0.0
  %1915 = vmatpush1.msra.mxu0 0.0
  %1916 = vmatprep.mubr.f32.mxu0 0.0
  %1917 = vmatmul.mubr.f32.gmra.mrb[0].mxu0 %v1787
  %v1918 = vpop.f32.mrb[0].mxu0
  %v1919 = vadd.f32 %v33, %v1918
  %v1920 = vpop.f32.mrb[0].mxu0
  %v1921 = vadd.f32 %v37, %v1920
  %1922 = vdwg.mxu0
  %1923 = vmatprep.subr.mxu0 %v1791
  %1924 = vmatpush1.msra.mxu0 %v1790
  %1925 = vmatprep.subr.mxu0 %v1795
  %1926 = vmatpush1.msra.mxu0 %v1794
  %1927 = vmatprep.subr.mxu0 %v1799
  %1928 = vmatpush1.msra.mxu0 %v1798
  %1929 = vmatprep.subr.mxu0 %v1803
  %1930 = vmatpush1.msra.mxu0 %v1802
  %1931 = vmatprep.subr.mxu0 %v1807
  %1932 = vmatpush1.msra.mxu0 %v1806
  %1933 = vmatprep.subr.mxu0 %v1811
  %1934 = vmatpush1.msra.mxu0 %v1810
  %1935 = vmatprep.subr.mxu0 %v1815
  %1936 = vmatpush1.msra.mxu0 %v1814
  %1937 = vmatprep.subr.mxu0 %v1819
  %1938 = vmatpush1.msra.mxu0 %v1818
  %1939 = vmatprep.subr.mxu0 %v1823
  %1940 = vmatpush1.msra.mxu0 %v1822
  %1941 = vmatprep.subr.mxu0 %v1827
  %1942 = vmatpush1.msra.mxu0 %v1826
  %1943 = vmatprep.subr.mxu0 %v1831
  %1944 = vmatpush1.msra.mxu0 %v1830
  %1945 = vmatprep.subr.mxu0 %v1835
  %1946 = vmatpush1.msra.mxu0 %v1834
  %1947 = vmatprep.subr.mxu0 %v1839
  %1948 = vmatpush1.msra.mxu0 %v1838
  %1949 = vmatprep.subr.mxu0 %v1843
  %1950 = vmatpush1.msra.mxu0 %v1842
  %1951 = vmatprep.subr.mxu0 %v1847
  %1952 = vmatpush1.msra.mxu0 %v1846
  %1953 = vmatprep.subr.mxu0 %v1851
  %1954 = vmatpush1.msra.mxu0 %v1850
  %1955 = vmatprep.subr.mxu0 0.0
  %1956 = vmatpush1.msra.mxu0 0.0
  %1957 = vmatprep.subr.mxu0 0.0
  %1958 = vmatpush1.msra.mxu0 0.0
  %1959 = vmatprep.subr.mxu0 0.0
  %1960 = vmatpush1.msra.mxu0 0.0
  %1961 = vmatprep.subr.mxu0 0.0
  %1962 = vmatpush1.msra.mxu0 0.0
  %1963 = vmatprep.subr.mxu0 0.0
  %1964 = vmatpush1.msra.mxu0 0.0
  %1965 = vmatprep.subr.mxu0 0.0
  %1966 = vmatpush1.msra.mxu0 0.0
  %1967 = vmatprep.subr.mxu0 0.0
  %1968 = vmatpush1.msra.mxu0 0.0
  %1969 = vmatprep.subr.mxu0 0.0
  %1970 = vmatpush1.msra.mxu0 0.0
  %1971 = vmatprep.subr.mxu0 0.0
  %1972 = vmatpush1.msra.mxu0 0.0
  %1973 = vmatprep.subr.mxu0 0.0
  %1974 = vmatpush1.msra.mxu0 0.0
  %1975 = vmatprep.subr.mxu0 0.0
  %1976 = vmatpush1.msra.mxu0 0.0
  %1977 = vmatprep.subr.mxu0 0.0
  %1978 = vmatpush1.msra.mxu0 0.0
  %1979 = vmatprep.subr.mxu0 0.0
  %1980 = vmatpush1.msra.mxu0 0.0
  %1981 = vmatprep.subr.mxu0 0.0
  %1982 = vmatpush1.msra.mxu0 0.0
  %1983 = vmatprep.subr.mxu0 0.0
  %1984 = vmatpush1.msra.mxu0 0.0
  %1985 = vmatprep.subr.mxu0 0.0
  %1986 = vmatpush1.msra.mxu0 0.0
  %1987 = vmatprep.mubr.f32.mxu0 0.0
  %1988 = vmatmul.mubr.f32.gmra.mrb[0].mxu0 %v1787
  %v1989 = vpop.f32.mrb[0].mxu0
  %v1990 = vadd.f32 %v41, %v1989
  %v1991 = vpop.f32.mrb[0].mxu0
  %v1992 = vadd.f32 %v45, %v1991
  %1993 = vdwg.mxu0
  %v1998 = vcombine.low %v1919, %v1921
  %v1999 = vcombine.low %v1990, %v1992
  %v2001 = vunpack.c.l.s4 1983009808
  %v2002 = vunpack.c.0.s8 %v2001
  %v2003 = vlaneseq
  %v2004 = vshrl.u32 %v2003, 7
  %v2005 = vsub.s32 %v2002, %v2004
  %v2006 = vrot.slane %v1998, %v2005
  %v2008 = vunpack.c.l.s4 1983009808
  %v2009 = vunpack.c.0.s8 %v2008
  %v2010 = vlaneseq
  %v2011 = vshrl.u32 %v2010, 7
  %v2012 = vsub.s32 %v2009, %v2011
  %v2013 = vrot.slane %v1999, %v2012
  %v2014 = vcombine.low %v2006, %v2013
  %s2016 = scalar_lea.vmem [#allocation2], 24
  %2017 = vst [vmem:[%s2016] sm:$0xff] %v2014
  %s2018 = scalar_lea.vmem %s0, 32
  %v2019 = vld [vmem:[%s2018] sm:$0xff]
  %v2020 = vld [vmem:[%s1] sm:$0xff]
  %v2021 = vld [vmem:[%s1 + $0x8] sm:$0xff]
  %v2022 = vld [vmem:[%s1 + $0x10] sm:$0xff]
  %v2023 = vld [vmem:[%s1 + $0x18] sm:$0xff]
  %v2024 = vld [vmem:[%s1 + $0x20] sm:$0xff]
  %v2025 = vld [vmem:[%s1 + $0x28] sm:$0xff]
  %v2026 = vld [vmem:[%s1 + $0x30] sm:$0xff]
  %v2027 = vld [vmem:[%s1 + $0x38] sm:$0xff]
  %v2028 = vld [vmem:[%s1 + $0x40] sm:$0xff]
  %v2029 = vld [vmem:[%s1 + $0x48] sm:$0xff]
  %v2030 = vld [vmem:[%s1 + $0x50] sm:$0xff]
  %v2031 = vld [vmem:[%s1 + $0x58] sm:$0xff]
  %v2032 = vld [vmem:[%s1 + $0x60] sm:$0xff]
  %v2033 = vld [vmem:[%s1 + $0x68] sm:$0xff]
  %v2034 = vld [vmem:[%s1 + $0x70] sm:$0xff]
  %v2035 = vld [vmem:[%s1 + $0x78] sm:$0xff]
  %v2036 = vld [vmem:[%s1 + $0x80] sm:$0xff]
  %v2037 = vld [vmem:[%s1 + $0x88] sm:$0xff]
  %v2038 = vld [vmem:[%s1 + $0x90] sm:$0xff]
  %v2039 = vld [vmem:[%s1 + $0x98] sm:$0xff]
  %v2040 = vld [vmem:[%s1 + $0xa0] sm:$0xff]
  %v2041 = vld [vmem:[%s1 + $0xa8] sm:$0xff]
  %v2042 = vld [vmem:[%s1 + $0xb0] sm:$0xff]
  %v2043 = vld [vmem:[%s1 + $0xb8] sm:$0xff]
  %v2044 = vld [vmem:[%s1 + $0xc0] sm:$0xff]
  %v2045 = vld [vmem:[%s1 + $0xc8] sm:$0xff]
  %v2046 = vld [vmem:[%s1 + $0xd0] sm:$0xff]
  %v2047 = vld [vmem:[%s1 + $0xd8] sm:$0xff]
  %v2048 = vld [vmem:[%s1 + $0xe0] sm:$0xff]
  %v2049 = vld [vmem:[%s1 + $0xe8] sm:$0xff]
  %v2050 = vld [vmem:[%s1 + $0xf0] sm:$0xff]
  %v2051 = vld [vmem:[%s1 + $0xf8] sm:$0xff]
  %v2052 = vld [vmem:[%s1 + $0x100] sm:$0xff]
  %v2053 = vld [vmem:[%s1 + $0x108] sm:$0xff]
  %v2054 = vld [vmem:[%s1 + $0x110] sm:$0xff]
  %v2055 = vld [vmem:[%s1 + $0x118] sm:$0xff]
  %v2056 = vld [vmem:[%s1 + $0x120] sm:$0xff]
  %v2057 = vld [vmem:[%s1 + $0x128] sm:$0xff]
  %v2058 = vld [vmem:[%s1 + $0x130] sm:$0xff]
  %v2059 = vld [vmem:[%s1 + $0x138] sm:$0xff]
  %v2060 = vld [vmem:[%s1 + $0x140] sm:$0xff]
  %v2061 = vld [vmem:[%s1 + $0x148] sm:$0xff]
  %v2062 = vld [vmem:[%s1 + $0x150] sm:$0xff]
  %v2063 = vld [vmem:[%s1 + $0x158] sm:$0xff]
  %v2064 = vld [vmem:[%s1 + $0x160] sm:$0xff]
  %v2065 = vld [vmem:[%s1 + $0x168] sm:$0xff]
  %v2066 = vld [vmem:[%s1 + $0x170] sm:$0xff]
  %v2067 = vld [vmem:[%s1 + $0x178] sm:$0xff]
  %v2068 = vld [vmem:[%s1 + $0x180] sm:$0xff]
  %v2069 = vld [vmem:[%s1 + $0x188] sm:$0xff]
  %v2070 = vld [vmem:[%s1 + $0x190] sm:$0xff]
  %v2071 = vld [vmem:[%s1 + $0x198] sm:$0xff]
  %v2072 = vld [vmem:[%s1 + $0x1a0] sm:$0xff]
  %v2073 = vld [vmem:[%s1 + $0x1a8] sm:$0xff]
  %v2074 = vld [vmem:[%s1 + $0x1b0] sm:$0xff]
  %v2075 = vld [vmem:[%s1 + $0x1b8] sm:$0xff]
  %v2076 = vld [vmem:[%s1 + $0x1c0] sm:$0xff]
  %v2077 = vld [vmem:[%s1 + $0x1c8] sm:$0xff]
  %v2078 = vld [vmem:[%s1 + $0x1d0] sm:$0xff]
  %v2079 = vld [vmem:[%s1 + $0x1d8] sm:$0xff]
  %v2080 = vld [vmem:[%s1 + $0x1e0] sm:$0xff]
  %v2081 = vld [vmem:[%s1 + $0x1e8] sm:$0xff]
  %v2082 = vld [vmem:[%s1 + $0x1f0] sm:$0xff]
  %v2083 = vld [vmem:[%s1 + $0x1f8] sm:$0xff]
  %2084 = vmatprep.subr.mxu0 %v2021
  %2085 = vmatpush1.msra.mxu0 %v2020
  %2086 = vmatprep.subr.mxu0 %v2025
  %2087 = vmatpush1.msra.mxu0 %v2024
  %2088 = vmatprep.subr.mxu0 %v2029
  %2089 = vmatpush1.msra.mxu0 %v2028
  %2090 = vmatprep.subr.mxu0 %v2033
  %2091 = vmatpush1.msra.mxu0 %v2032
  %2092 = vmatprep.subr.mxu0 %v2037
  %2093 = vmatpush1.msra.mxu0 %v2036
  %2094 = vmatprep.subr.mxu0 %v2041
  %2095 = vmatpush1.msra.mxu0 %v2040
  %2096 = vmatprep.subr.mxu0 %v2045
  %2097 = vmatpush1.msra.mxu0 %v2044
  %2098 = vmatprep.subr.mxu0 %v2049
  %2099 = vmatpush1.msra.mxu0 %v2048
  %2100 = vmatprep.subr.mxu0 %v2053
  %2101 = vmatpush1.msra.mxu0 %v2052
  %2102 = vmatprep.subr.mxu0 %v2057
  %2103 = vmatpush1.msra.mxu0 %v2056
  %2104 = vmatprep.subr.mxu0 %v2061
  %2105 = vmatpush1.msra.mxu0 %v2060
  %2106 = vmatprep.subr.mxu0 %v2065
  %2107 = vmatpush1.msra.mxu0 %v2064
  %2108 = vmatprep.subr.mxu0 %v2069
  %2109 = vmatpush1.msra.mxu0 %v2068
  %2110 = vmatprep.subr.mxu0 %v2073
  %2111 = vmatpush1.msra.mxu0 %v2072
  %2112 = vmatprep.subr.mxu0 %v2077
  %2113 = vmatpush1.msra.mxu0 %v2076
  %2114 = vmatprep.subr.mxu0 %v2081
  %2115 = vmatpush1.msra.mxu0 %v2080
  %2116 = vmatprep.subr.mxu0 0.0
  %2117 = vmatpush1.msra.mxu0 0.0
  %2118 = vmatprep.subr.mxu0 0.0
  %2119 = vmatpush1.msra.mxu0 0.0
  %2120 = vmatprep.subr.mxu0 0.0
  %2121 = vmatpush1.msra.mxu0 0.0
  %2122 = vmatprep.subr.mxu0 0.0
  %2123 = vmatpush1.msra.mxu0 0.0
  %2124 = vmatprep.subr.mxu0 0.0
  %2125 = vmatpush1.msra.mxu0 0.0
  %2126 = vmatprep.subr.mxu0 0.0
  %2127 = vmatpush1.msra.mxu0 0.0
  %2128 = vmatprep.subr.mxu0 0.0
  %2129 = vmatpush1.msra.mxu0 0.0
  %2130 = vmatprep.subr.mxu0 0.0
  %2131 = vmatpush1.msra.mxu0 0.0
  %2132 = vmatprep.subr.mxu0 0.0
  %2133 = vmatpush1.msra.mxu0 0.0
  %2134 = vmatprep.subr.mxu0 0.0
  %2135 = vmatpush1.msra.mxu0 0.0
  %2136 = vmatprep.subr.mxu0 0.0
  %2137 = vmatpush1.msra.mxu0 0.0
  %2138 = vmatprep.subr.mxu0 0.0
  %2139 = vmatpush1.msra.mxu0 0.0
  %2140 = vmatprep.subr.mxu0 0.0
  %2141 = vmatpush1.msra.mxu0 0.0
  %2142 = vmatprep.subr.mxu0 0.0
  %2143 = vmatpush1.msra.mxu0 0.0
  %2144 = vmatprep.subr.mxu0 0.0
  %2145 = vmatpush1.msra.mxu0 0.0
  %2146 = vmatprep.subr.mxu0 0.0
  %2147 = vmatpush1.msra.mxu0 0.0
  %2148 = vmatprep.mubr.f32.mxu0 0.0
  %2149 = vmatmul.mubr.f32.gmra.mrb[0].mxu0 %v1787
  %v2150 = vpop.f32.mrb[0].mxu0
  %v2151 = vadd.f32 0.0, %v2150
  %v2152 = vpop.f32.mrb[0].mxu0
  %v2153 = vadd.f32 0.0, %v2152
  %2154 = vdwg.mxu0
  %2155 = vmatprep.subr.mxu0 %v2023
  %2156 = vmatpush1.msra.mxu0 %v2022
  %2157 = vmatprep.subr.mxu0 %v2027
  %2158 = vmatpush1.msra.mxu0 %v2026
  %2159 = vmatprep.subr.mxu0 %v2031
  %2160 = vmatpush1.msra.mxu0 %v2030
  %2161 = vmatprep.subr.mxu0 %v2035
  %2162 = vmatpush1.msra.mxu0 %v2034
  %2163 = vmatprep.subr.mxu0 %v2039
  %2164 = vmatpush1.msra.mxu0 %v2038
  %2165 = vmatprep.subr.mxu0 %v2043
  %2166 = vmatpush1.msra.mxu0 %v2042
  %2167 = vmatprep.subr.mxu0 %v2047
  %2168 = vmatpush1.msra.mxu0 %v2046
  %2169 = vmatprep.subr.mxu0 %v2051
  %2170 = vmatpush1.msra.mxu0 %v2050
  %2171 = vmatprep.subr.mxu0 %v2055
  %2172 = vmatpush1.msra.mxu0 %v2054
  %2173 = vmatprep.subr.mxu0 %v2059
  %2174 = vmatpush1.msra.mxu0 %v2058
  %2175 = vmatprep.subr.mxu0 %v2063
  %2176 = vmatpush1.msra.mxu0 %v2062
  %2177 = vmatprep.subr.mxu0 %v2067
  %2178 = vmatpush1.msra.mxu0 %v2066
  %2179 = vmatprep.subr.mxu0 %v2071
  %2180 = vmatpush1.msra.mxu0 %v2070
  %2181 = vmatprep.subr.mxu0 %v2075
  %2182 = vmatpush1.msra.mxu0 %v2074
  %2183 = vmatprep.subr.mxu0 %v2079
  %2184 = vmatpush1.msra.mxu0 %v2078
  %2185 = vmatprep.subr.mxu0 %v2083
  %2186 = vmatpush1.msra.mxu0 %v2082
  %2187 = vmatprep.subr.mxu0 0.0
  %2188 = vmatpush1.msra.mxu0 0.0
  %2189 = vmatprep.subr.mxu0 0.0
  %2190 = vmatpush1.msra.mxu0 0.0
  %2191 = vmatprep.subr.mxu0 0.0
  %2192 = vmatpush1.msra.mxu0 0.0
  %2193 = vmatprep.subr.mxu0 0.0
  %2194 = vmatpush1.msra.mxu0 0.0
  %2195 = vmatprep.subr.mxu0 0.0
  %2196 = vmatpush1.msra.mxu0 0.0
  %2197 = vmatprep.subr.mxu0 0.0
  %2198 = vmatpush1.msra.mxu0 0.0
  %2199 = vmatprep.subr.mxu0 0.0
  %2200 = vmatpush1.msra.mxu0 0.0
  %2201 = vmatprep.subr.mxu0 0.0
  %2202 = vmatpush1.msra.mxu0 0.0
  %2203 = vmatprep.subr.mxu0 0.0
  %2204 = vmatpush1.msra.mxu0 0.0
  %2205 = vmatprep.subr.mxu0 0.0
  %2206 = vmatpush1.msra.mxu0 0.0
  %2207 = vmatprep.subr.mxu0 0.0
  %2208 = vmatpush1.msra.mxu0 0.0
  %2209 = vmatprep.subr.mxu0 0.0
  %2210 = vmatpush1.msra.mxu0 0.0
  %2211 = vmatprep.subr.mxu0 0.0
  %2212 = vmatpush1.msra.mxu0 0.0
  %2213 = vmatprep.subr.mxu0 0.0
  %2214 = vmatpush1.msra.mxu0 0.0
  %2215 = vmatprep.subr.mxu0 0.0
  %2216 = vmatpush1.msra.mxu0 0.0
  %2217 = vmatprep.subr.mxu0 0.0
  %2218 = vmatpush1.msra.mxu0 0.0
  %2219 = vmatprep.mubr.f32.mxu0 0.0
  %2220 = vmatmul.mubr.f32.gmra.mrb[0].mxu0 %v1787
  %v2221 = vpop.f32.mrb[0].mxu0
  %v2222 = vadd.f32 0.0, %v2221
  %v2223 = vpop.f32.mrb[0].mxu0
  %v2224 = vadd.f32 0.0, %v2223
  %2225 = vdwg.mxu0
  %v2230 = vcombine.low %v2151, %v2153
  %v2231 = vcombine.low %v2222, %v2224
  %v2233 = vunpack.c.l.s4 1983009808
  %v2234 = vunpack.c.0.s8 %v2233
  %v2235 = vlaneseq
  %v2236 = vshrl.u32 %v2235, 7
  %v2237 = vsub.s32 %v2234, %v2236
  %v2238 = vrot.slane %v2230, %v2237
  %v2240 = vunpack.c.l.s4 1983009808
  %v2241 = vunpack.c.0.s8 %v2240
  %v2242 = vlaneseq
  %v2243 = vshrl.u32 %v2242, 7
  %v2244 = vsub.s32 %v2241, %v2243
  %v2245 = vrot.slane %v2231, %v2244
  %v2246 = vcombine.low %v2238, %v2245
  %v2248 = vadd.f32 %v2019, %v2246
  %v2249 = vxor.u32 %v2248, 2147483648
  %v2250 = vmul.f32 %v2249, 1.442695
  %v2251 = vpow.pop %v2250
  %v2252 = vadd.f32 %v2251, 1.0
  %v2253 = vrcp.pop %v2252
  %v2254 = vmul.f32 1.0, %v2253
  %v2256 = vrot.slane %v2248, 2
  %v2258 = vxor.u32 %v2256, 2147483648
  %v2259 = vmul.f32 %v2258, 1.442695
  %v2260 = vpow.pop %v2259
  %v2261 = vadd.f32 %v2260, 1.0
  %v2262 = vrcp.pop %v2261
  %v2263 = vmul.f32 1.0, %v2262
  %v2264 = vrot.slane %v2248, 4
  %v2266 = vtanh.pop %v2264
  %v2267 = vrot.slane %v2248, 6
  %v2269 = vxor.u32 %v2267, 2147483648
  %v2270 = vmul.f32 %v2269, 1.442695
  %v2271 = vpow.pop %v2270
  %v2272 = vadd.f32 %v2271, 1.0
  %v2273 = vrcp.pop %v2272
  %v2274 = vmul.f32 1.0, %v2273
  %v2275 = vmul.f32 %v2263, %v1785
  %v2276 = vmul.f32 %v2254, %v2266
  %v2277 = vadd.f32 %v2275, %v2276
  %v2278 = vtanh.pop %v2277
  %v2279 = vmul.f32 %v2274, %v2278
  %v2280 = vld [vmem:[%s2] sm:$0xff]
  %v2281 = vld [vmem:[%s2 + $0x8] sm:$0xff]
  %v2282 = vld [vmem:[%s2 + $0x10] sm:$0xff]
  %v2283 = vld [vmem:[%s2 + $0x18] sm:$0xff]
  %v2284 = vld [vmem:[%s2 + $0x20] sm:$0xff]
  %v2285 = vld [vmem:[%s2 + $0x28] sm:$0xff]
  %v2286 = vld [vmem:[%s2 + $0x30] sm:$0xff]
  %v2287 = vld [vmem:[%s2 + $0x38] sm:$0xff]
  %v2288 = vld [vmem:[%s2 + $0x40] sm:$0xff]
  %v2289 = vld [vmem:[%s2 + $0x48] sm:$0xff]
  %v2290 = vld [vmem:[%s2 + $0x50] sm:$0xff]
  %v2291 = vld [vmem:[%s2 + $0x58] sm:$0xff]
  %v2292 = vld [vmem:[%s2 + $0x60] sm:$0xff]
  %v2293 = vld [vmem:[%s2 + $0x68] sm:$0xff]
  %v2294 = vld [vmem:[%s2 + $0x70] sm:$0xff]
  %v2295 = vld [vmem:[%s2 + $0x78] sm:$0xff]
  %v2296 = vld [vmem:[%s2 + $0x80] sm:$0xff]
  %v2297 = vld [vmem:[%s2 + $0x88] sm:$0xff]
  %v2298 = vld [vmem:[%s2 + $0x90] sm:$0xff]
  %v2299 = vld [vmem:[%s2 + $0x98] sm:$0xff]
  %v2300 = vld [vmem:[%s2 + $0xa0] sm:$0xff]
  %v2301 = vld [vmem:[%s2 + $0xa8] sm:$0xff]
  %v2302 = vld [vmem:[%s2 + $0xb0] sm:$0xff]
  %v2303 = vld [vmem:[%s2 + $0xb8] sm:$0xff]
  %v2304 = vld [vmem:[%s2 + $0xc0] sm:$0xff]
  %v2305 = vld [vmem:[%s2 + $0xc8] sm:$0xff]
  %v2306 = vld [vmem:[%s2 + $0xd0] sm:$0xff]
  %v2307 = vld [vmem:[%s2 + $0xd8] sm:$0xff]
  %v2308 = vld [vmem:[%s2 + $0xe0] sm:$0xff]
  %v2309 = vld [vmem:[%s2 + $0xe8] sm:$0xff]
  %v2310 = vld [vmem:[%s2 + $0xf0] sm:$0xff]
  %v2311 = vld [vmem:[%s2 + $0xf8] sm:$0xff]
  %v2312 = vld [vmem:[%s2 + $0x100] sm:$0xff]
  %v2313 = vld [vmem:[%s2 + $0x108] sm:$0xff]
  %v2314 = vld [vmem:[%s2 + $0x110] sm:$0xff]
  %v2315 = vld [vmem:[%s2 + $0x118] sm:$0xff]
  %v2316 = vld [vmem:[%s2 + $0x120] sm:$0xff]
  %v2317 = vld [vmem:[%s2 + $0x128] sm:$0xff]
  %v2318 = vld [vmem:[%s2 + $0x130] sm:$0xff]
  %v2319 = vld [vmem:[%s2 + $0x138] sm:$0xff]
  %v2320 = vld [vmem:[%s2 + $0x140] sm:$0xff]
  %v2321 = vld [vmem:[%s2 + $0x148] sm:$0xff]
  %v2322 = vld [vmem:[%s2 + $0x150] sm:$0xff]
  %v2323 = vld [vmem:[%s2 + $0x158] sm:$0xff]
  %v2324 = vld [vmem:[%s2 + $0x160] sm:$0xff]
  %v2325 = vld [vmem:[%s2 + $0x168] sm:$0xff]
  %v2326 = vld [vmem:[%s2 + $0x170] sm:$0xff]
  %v2327 = vld [vmem:[%s2 + $0x178] sm:$0xff]
  %v2328 = vld [vmem:[%s2 + $0x180] sm:$0xff]
  %v2329 = vld [vmem:[%s2 + $0x188] sm:$0xff]
  %v2330 = vld [vmem:[%s2 + $0x190] sm:$0xff]
  %v2331 = vld [vmem:[%s2 + $0x198] sm:$0xff]
  %v2332 = vld [vmem:[%s2 + $0x1a0] sm:$0xff]
  %v2333 = vld [vmem:[%s2 + $0x1a8] sm:$0xff]
  %v2334 = vld [vmem:[%s2 + $0x1b0] sm:$0xff]
  %v2335 = vld [vmem:[%s2 + $0x1b8] sm:$0xff]
  %v2336 = vld [vmem:[%s2 + $0x1c0] sm:$0xff]
  %v2337 = vld [vmem:[%s2 + $0x1c8] sm:$0xff]
  %v2338 = vld [vmem:[%s2 + $0x1d0] sm:$0xff]
  %v2339 = vld [vmem:[%s2 + $0x1d8] sm:$0xff]
  %v2340 = vld [vmem:[%s2 + $0x1e0] sm:$0xff]
  %v2341 = vld [vmem:[%s2 + $0x1e8] sm:$0xff]
  %v2342 = vld [vmem:[%s2 + $0x1f0] sm:$0xff]
  %v2343 = vld [vmem:[%s2 + $0x1f8] sm:$0xff]
  %2344 = vmatprep.subr.mxu0 %v2281
  %2345 = vmatpush1.msra.mxu0 %v2280
  %2346 = vmatprep.subr.mxu0 %v2285
  %2347 = vmatpush1.msra.mxu0 %v2284
  %2348 = vmatprep.subr.mxu0 %v2289
  %2349 = vmatpush1.msra.mxu0 %v2288
  %2350 = vmatprep.subr.mxu0 %v2293
  %2351 = vmatpush1.msra.mxu0 %v2292
  %2352 = vmatprep.subr.mxu0 %v2297
  %2353 = vmatpush1.msra.mxu0 %v2296
  %2354 = vmatprep.subr.mxu0 %v2301
  %2355 = vmatpush1.msra.mxu0 %v2300
  %2356 = vmatprep.subr.mxu0 %v2305
  %2357 = vmatpush1.msra.mxu0 %v2304
  %2358 = vmatprep.subr.mxu0 %v2309
  %2359 = vmatpush1.msra.mxu0 %v2308
  %2360 = vmatprep.subr.mxu0 %v2313
  %2361 = vmatpush1.msra.mxu0 %v2312
  %2362 = vmatprep.subr.mxu0 %v2317
  %2363 = vmatpush1.msra.mxu0 %v2316
  %2364 = vmatprep.subr.mxu0 %v2321
  %2365 = vmatpush1.msra.mxu0 %v2320
  %2366 = vmatprep.subr.mxu0 %v2325
  %2367 = vmatpush1.msra.mxu0 %v2324
  %2368 = vmatprep.subr.mxu0 %v2329
  %2369 = vmatpush1.msra.mxu0 %v2328
  %2370 = vmatprep.subr.mxu0 %v2333
  %2371 = vmatpush1.msra.mxu0 %v2332
  %2372 = vmatprep.subr.mxu0 %v2337
  %2373 = vmatpush1.msra.mxu0 %v2336
  %2374 = vmatprep.subr.mxu0 %v2341
  %2375 = vmatpush1.msra.mxu0 %v2340
  %2376 = vmatprep.subr.mxu0 0.0
  %2377 = vmatpush1.msra.mxu0 0.0
  %2378 = vmatprep.subr.mxu0 0.0
  %2379 = vmatpush1.msra.mxu0 0.0
  %2380 = vmatprep.subr.mxu0 0.0
  %2381 = vmatpush1.msra.mxu0 0.0
  %2382 = vmatprep.subr.mxu0 0.0
  %2383 = vmatpush1.msra.mxu0 0.0
  %2384 = vmatprep.subr.mxu0 0.0
  %2385 = vmatpush1.msra.mxu0 0.0
  %2386 = vmatprep.subr.mxu0 0.0
  %2387 = vmatpush1.msra.mxu0 0.0
  %2388 = vmatprep.subr.mxu0 0.0
  %2389 = vmatpush1.msra.mxu0 0.0
  %2390 = vmatprep.subr.mxu0 0.0
  %2391 = vmatpush1.msra.mxu0 0.0
  %2392 = vmatprep.subr.mxu0 0.0
  %2393 = vmatpush1.msra.mxu0 0.0
  %2394 = vmatprep.subr.mxu0 0.0
  %2395 = vmatpush1.msra.mxu0 0.0
  %2396 = vmatprep.subr.mxu0 0.0
  %2397 = vmatpush1.msra.mxu0 0.0
  %2398 = vmatprep.subr.mxu0 0.0
  %2399 = vmatpush1.msra.mxu0 0.0
  %2400 = vmatprep.subr.mxu0 0.0
  %2401 = vmatpush1.msra.mxu0 0.0
  %2402 = vmatprep.subr.mxu0 0.0
  %2403 = vmatpush1.msra.mxu0 0.0
  %2404 = vmatprep.subr.mxu0 0.0
  %2405 = vmatpush1.msra.mxu0 0.0
  %2406 = vmatprep.subr.mxu0 0.0
  %2407 = vmatpush1.msra.mxu0 0.0
  %2408 = vmatprep.mubr.f32.mxu0 0.0
  %2409 = vmatmul.mubr.f32.gmra.mrb[0].mxu0 %v2279
  %v2410 = vpop.f32.mrb[0].mxu0
  %v2411 = vadd.f32 %v33, %v2410
  %v2412 = vpop.f32.mrb[0].mxu0
  %v2413 = vadd.f32 %v37, %v2412
  %2414 = vdwg.mxu0
  %2415 = vmatprep.subr.mxu0 %v2283
  %2416 = vmatpush1.msra.mxu0 %v2282
  %2417 = vmatprep.subr.mxu0 %v2287
  %2418 = vmatpush1.msra.mxu0 %v2286
  %2419 = vmatprep.subr.mxu0 %v2291
  %2420 = vmatpush1.msra.mxu0 %v2290
  %2421 = vmatprep.subr.mxu0 %v2295
  %2422 = vmatpush1.msra.mxu0 %v2294
  %2423 = vmatprep.subr.mxu0 %v2299
  %2424 = vmatpush1.msra.mxu0 %v2298
  %2425 = vmatprep.subr.mxu0 %v2303
  %2426 = vmatpush1.msra.mxu0 %v2302
  %2427 = vmatprep.subr.mxu0 %v2307
  %2428 = vmatpush1.msra.mxu0 %v2306
  %2429 = vmatprep.subr.mxu0 %v2311
  %2430 = vmatpush1.msra.mxu0 %v2310
  %2431 = vmatprep.subr.mxu0 %v2315
  %2432 = vmatpush1.msra.mxu0 %v2314
  %2433 = vmatprep.subr.mxu0 %v2319
  %2434 = vmatpush1.msra.mxu0 %v2318
  %2435 = vmatprep.subr.mxu0 %v2323
  %2436 = vmatpush1.msra.mxu0 %v2322
  %2437 = vmatprep.subr.mxu0 %v2327
  %2438 = vmatpush1.msra.mxu0 %v2326
  %2439 = vmatprep.subr.mxu0 %v2331
  %2440 = vmatpush1.msra.mxu0 %v2330
  %2441 = vmatprep.subr.mxu0 %v2335
  %2442 = vmatpush1.msra.mxu0 %v2334
  %2443 = vmatprep.subr.mxu0 %v2339
  %2444 = vmatpush1.msra.mxu0 %v2338
  %2445 = vmatprep.subr.mxu0 %v2343
  %2446 = vmatpush1.msra.mxu0 %v2342
  %2447 = vmatprep.subr.mxu0 0.0
  %2448 = vmatpush1.msra.mxu0 0.0
  %2449 = vmatprep.subr.mxu0 0.0
  %2450 = vmatpush1.msra.mxu0 0.0
  %2451 = vmatprep.subr.mxu0 0.0
  %2452 = vmatpush1.msra.mxu0 0.0
  %2453 = vmatprep.subr.mxu0 0.0
  %2454 = vmatpush1.msra.mxu0 0.0
  %2455 = vmatprep.subr.mxu0 0.0
  %2456 = vmatpush1.msra.mxu0 0.0
  %2457 = vmatprep.subr.mxu0 0.0
  %2458 = vmatpush1.msra.mxu0 0.0
  %2459 = vmatprep.subr.mxu0 0.0
  %2460 = vmatpush1.msra.mxu0 0.0
  %2461 = vmatprep.subr.mxu0 0.0
  %2462 = vmatpush1.msra.mxu0 0.0
  %2463 = vmatprep.subr.mxu0 0.0
  %2464 = vmatpush1.msra.mxu0 0.0
  %2465 = vmatprep.subr.mxu0 0.0
  %2466 = vmatpush1.msra.mxu0 0.0
  %2467 = vmatprep.subr.mxu0 0.0
  %2468 = vmatpush1.msra.mxu0 0.0
  %2469 = vmatprep.subr.mxu0 0.0
  %2470 = vmatpush1.msra.mxu0 0.0
  %2471 = vmatprep.subr.mxu0 0.0
  %2472 = vmatpush1.msra.mxu0 0.0
  %2473 = vmatprep.subr.mxu0 0.0
  %2474 = vmatpush1.msra.mxu0 0.0
  %2475 = vmatprep.subr.mxu0 0.0
  %2476 = vmatpush1.msra.mxu0 0.0
  %2477 = vmatprep.subr.mxu0 0.0
  %2478 = vmatpush1.msra.mxu0 0.0
  %2479 = vmatprep.mubr.f32.mxu0 0.0
  %2480 = vmatmul.mubr.f32.gmra.mrb[0].mxu0 %v2279
  %v2481 = vpop.f32.mrb[0].mxu0
  %v2482 = vadd.f32 %v41, %v2481
  %v2483 = vpop.f32.mrb[0].mxu0
  %v2484 = vadd.f32 %v45, %v2483
  %2485 = vdwg.mxu0
  %v2490 = vcombine.low %v2411, %v2413
  %v2491 = vcombine.low %v2482, %v2484
  %v2493 = vunpack.c.l.s4 1983009808
  %v2494 = vunpack.c.0.s8 %v2493
  %v2495 = vlaneseq
  %v2496 = vshrl.u32 %v2495, 7
  %v2497 = vsub.s32 %v2494, %v2496
  %v2498 = vrot.slane %v2490, %v2497
  %v2500 = vunpack.c.l.s4 1983009808
  %v2501 = vunpack.c.0.s8 %v2500
  %v2502 = vlaneseq
  %v2503 = vshrl.u32 %v2502, 7
  %v2504 = vsub.s32 %v2501, %v2503
  %v2505 = vrot.slane %v2491, %v2504
  %v2506 = vcombine.low %v2498, %v2505
  %s2508 = scalar_lea.vmem [#allocation2], 32
  %2509 = vst [vmem:[%s2508] sm:$0xff] %v2506
  %s2510 = scalar_lea.vmem %s0, 40
  %v2511 = vld [vmem:[%s2510] sm:$0xff]
  %v2512 = vld [vmem:[%s1] sm:$0xff]
  %v2513 = vld [vmem:[%s1 + $0x8] sm:$0xff]
  %v2514 = vld [vmem:[%s1 + $0x10] sm:$0xff]
  %v2515 = vld [vmem:[%s1 + $0x18] sm:$0xff]
  %v2516 = vld [vmem:[%s1 + $0x20] sm:$0xff]
  %v2517 = vld [vmem:[%s1 + $0x28] sm:$0xff]
  %v2518 = vld [vmem:[%s1 + $0x30] sm:$0xff]
  %v2519 = vld [vmem:[%s1 + $0x38] sm:$0xff]
  %v2520 = vld [vmem:[%s1 + $0x40] sm:$0xff]
  %v2521 = vld [vmem:[%s1 + $0x48] sm:$0xff]
  %v2522 = vld [vmem:[%s1 + $0x50] sm:$0xff]
  %v2523 = vld [vmem:[%s1 + $0x58] sm:$0xff]
  %v2524 = vld [vmem:[%s1 + $0x60] sm:$0xff]
  %v2525 = vld [vmem:[%s1 + $0x68] sm:$0xff]
  %v2526 = vld [vmem:[%s1 + $0x70] sm:$0xff]
  %v2527 = vld [vmem:[%s1 + $0x78] sm:$0xff]
  %v2528 = vld [vmem:[%s1 + $0x80] sm:$0xff]
  %v2529 = vld [vmem:[%s1 + $0x88] sm:$0xff]
  %v2530 = vld [vmem:[%s1 + $0x90] sm:$0xff]
  %v2531 = vld [vmem:[%s1 + $0x98] sm:$0xff]
  %v2532 = vld [vmem:[%s1 + $0xa0] sm:$0xff]
  %v2533 = vld [vmem:[%s1 + $0xa8] sm:$0xff]
  %v2534 = vld [vmem:[%s1 + $0xb0] sm:$0xff]
  %v2535 = vld [vmem:[%s1 + $0xb8] sm:$0xff]
  %v2536 = vld [vmem:[%s1 + $0xc0] sm:$0xff]
  %v2537 = vld [vmem:[%s1 + $0xc8] sm:$0xff]
  %v2538 = vld [vmem:[%s1 + $0xd0] sm:$0xff]
  %v2539 = vld [vmem:[%s1 + $0xd8] sm:$0xff]
  %v2540 = vld [vmem:[%s1 + $0xe0] sm:$0xff]
  %v2541 = vld [vmem:[%s1 + $0xe8] sm:$0xff]
  %v2542 = vld [vmem:[%s1 + $0xf0] sm:$0xff]
  %v2543 = vld [vmem:[%s1 + $0xf8] sm:$0xff]
  %v2544 = vld [vmem:[%s1 + $0x100] sm:$0xff]
  %v2545 = vld [vmem:[%s1 + $0x108] sm:$0xff]
  %v2546 = vld [vmem:[%s1 + $0x110] sm:$0xff]
  %v2547 = vld [vmem:[%s1 + $0x118] sm:$0xff]
  %v2548 = vld [vmem:[%s1 + $0x120] sm:$0xff]
  %v2549 = vld [vmem:[%s1 + $0x128] sm:$0xff]
  %v2550 = vld [vmem:[%s1 + $0x130] sm:$0xff]
  %v2551 = vld [vmem:[%s1 + $0x138] sm:$0xff]
  %v2552 = vld [vmem:[%s1 + $0x140] sm:$0xff]
  %v2553 = vld [vmem:[%s1 + $0x148] sm:$0xff]
  %v2554 = vld [vmem:[%s1 + $0x150] sm:$0xff]
  %v2555 = vld [vmem:[%s1 + $0x158] sm:$0xff]
  %v2556 = vld [vmem:[%s1 + $0x160] sm:$0xff]
  %v2557 = vld [vmem:[%s1 + $0x168] sm:$0xff]
  %v2558 = vld [vmem:[%s1 + $0x170] sm:$0xff]
  %v2559 = vld [vmem:[%s1 + $0x178] sm:$0xff]
  %v2560 = vld [vmem:[%s1 + $0x180] sm:$0xff]
  %v2561 = vld [vmem:[%s1 + $0x188] sm:$0xff]
  %v2562 = vld [vmem:[%s1 + $0x190] sm:$0xff]
  %v2563 = vld [vmem:[%s1 + $0x198] sm:$0xff]
  %v2564 = vld [vmem:[%s1 + $0x1a0] sm:$0xff]
  %v2565 = vld [vmem:[%s1 + $0x1a8] sm:$0xff]
  %v2566 = vld [vmem:[%s1 + $0x1b0] sm:$0xff]
  %v2567 = vld [vmem:[%s1 + $0x1b8] sm:$0xff]
  %v2568 = vld [vmem:[%s1 + $0x1c0] sm:$0xff]
  %v2569 = vld [vmem:[%s1 + $0x1c8] sm:$0xff]
  %v2570 = vld [vmem:[%s1 + $0x1d0] sm:$0xff]
  %v2571 = vld [vmem:[%s1 + $0x1d8] sm:$0xff]
  %v2572 = vld [vmem:[%s1 + $0x1e0] sm:$0xff]
  %v2573 = vld [vmem:[%s1 + $0x1e8] sm:$0xff]
  %v2574 = vld [vmem:[%s1 + $0x1f0] sm:$0xff]
  %v2575 = vld [vmem:[%s1 + $0x1f8] sm:$0xff]
  %2576 = vmatprep.subr.mxu0 %v2513
  %2577 = vmatpush1.msra.mxu0 %v2512
  %2578 = vmatprep.subr.mxu0 %v2517
  %2579 = vmatpush1.msra.mxu0 %v2516
  %2580 = vmatprep.subr.mxu0 %v2521
  %2581 = vmatpush1.msra.mxu0 %v2520
  %2582 = vmatprep.subr.mxu0 %v2525
  %2583 = vmatpush1.msra.mxu0 %v2524
  %2584 = vmatprep.subr.mxu0 %v2529
  %2585 = vmatpush1.msra.mxu0 %v2528
  %2586 = vmatprep.subr.mxu0 %v2533
  %2587 = vmatpush1.msra.mxu0 %v2532
  %2588 = vmatprep.subr.mxu0 %v2537
  %2589 = vmatpush1.msra.mxu0 %v2536
  %2590 = vmatprep.subr.mxu0 %v2541
  %2591 = vmatpush1.msra.mxu0 %v2540
  %2592 = vmatprep.subr.mxu0 %v2545
  %2593 = vmatpush1.msra.mxu0 %v2544
  %2594 = vmatprep.subr.mxu0 %v2549
  %2595 = vmatpush1.msra.mxu0 %v2548
  %2596 = vmatprep.subr.mxu0 %v2553
  %2597 = vmatpush1.msra.mxu0 %v2552
  %2598 = vmatprep.subr.mxu0 %v2557
  %2599 = vmatpush1.msra.mxu0 %v2556
  %2600 = vmatprep.subr.mxu0 %v2561
  %2601 = vmatpush1.msra.mxu0 %v2560
  %2602 = vmatprep.subr.mxu0 %v2565
  %2603 = vmatpush1.msra.mxu0 %v2564
  %2604 = vmatprep.subr.mxu0 %v2569
  %2605 = vmatpush1.msra.mxu0 %v2568
  %2606 = vmatprep.subr.mxu0 %v2573
  %2607 = vmatpush1.msra.mxu0 %v2572
  %2608 = vmatprep.subr.mxu0 0.0
  %2609 = vmatpush1.msra.mxu0 0.0
  %2610 = vmatprep.subr.mxu0 0.0
  %2611 = vmatpush1.msra.mxu0 0.0
  %2612 = vmatprep.subr.mxu0 0.0
  %2613 = vmatpush1.msra.mxu0 0.0
  %2614 = vmatprep.subr.mxu0 0.0
  %2615 = vmatpush1.msra.mxu0 0.0
  %2616 = vmatprep.subr.mxu0 0.0
  %2617 = vmatpush1.msra.mxu0 0.0
  %2618 = vmatprep.subr.mxu0 0.0
  %2619 = vmatpush1.msra.mxu0 0.0
  %2620 = vmatprep.subr.mxu0 0.0
  %2621 = vmatpush1.msra.mxu0 0.0
  %2622 = vmatprep.subr.mxu0 0.0
  %2623 = vmatpush1.msra.mxu0 0.0
  %2624 = vmatprep.subr.mxu0 0.0
  %2625 = vmatpush1.msra.mxu0 0.0
  %2626 = vmatprep.subr.mxu0 0.0
  %2627 = vmatpush1.msra.mxu0 0.0
  %2628 = vmatprep.subr.mxu0 0.0
  %2629 = vmatpush1.msra.mxu0 0.0
  %2630 = vmatprep.subr.mxu0 0.0
  %2631 = vmatpush1.msra.mxu0 0.0
  %2632 = vmatprep.subr.mxu0 0.0
  %2633 = vmatpush1.msra.mxu0 0.0
  %2634 = vmatprep.subr.mxu0 0.0
  %2635 = vmatpush1.msra.mxu0 0.0
  %2636 = vmatprep.subr.mxu0 0.0
  %2637 = vmatpush1.msra.mxu0 0.0
  %2638 = vmatprep.subr.mxu0 0.0
  %2639 = vmatpush1.msra.mxu0 0.0
  %2640 = vmatprep.mubr.f32.mxu0 0.0
  %2641 = vmatmul.mubr.f32.gmra.mrb[0].mxu0 %v2279
  %v2642 = vpop.f32.mrb[0].mxu0
  %v2643 = vadd.f32 0.0, %v2642
  %v2644 = vpop.f32.mrb[0].mxu0
  %v2645 = vadd.f32 0.0, %v2644
  %2646 = vdwg.mxu0
  %2647 = vmatprep.subr.mxu0 %v2515
  %2648 = vmatpush1.msra.mxu0 %v2514
  %2649 = vmatprep.subr.mxu0 %v2519
  %2650 = vmatpush1.msra.mxu0 %v2518
  %2651 = vmatprep.subr.mxu0 %v2523
  %2652 = vmatpush1.msra.mxu0 %v2522
  %2653 = vmatprep.subr.mxu0 %v2527
  %2654 = vmatpush1.msra.mxu0 %v2526
  %2655 = vmatprep.subr.mxu0 %v2531
  %2656 = vmatpush1.msra.mxu0 %v2530
  %2657 = vmatprep.subr.mxu0 %v2535
  %2658 = vmatpush1.msra.mxu0 %v2534
  %2659 = vmatprep.subr.mxu0 %v2539
  %2660 = vmatpush1.msra.mxu0 %v2538
  %2661 = vmatprep.subr.mxu0 %v2543
  %2662 = vmatpush1.msra.mxu0 %v2542
  %2663 = vmatprep.subr.mxu0 %v2547
  %2664 = vmatpush1.msra.mxu0 %v2546
  %2665 = vmatprep.subr.mxu0 %v2551
  %2666 = vmatpush1.msra.mxu0 %v2550
  %2667 = vmatprep.subr.mxu0 %v2555
  %2668 = vmatpush1.msra.mxu0 %v2554
  %2669 = vmatprep.subr.mxu0 %v2559
  %2670 = vmatpush1.msra.mxu0 %v2558
  %2671 = vmatprep.subr.mxu0 %v2563
  %2672 = vmatpush1.msra.mxu0 %v2562
  %2673 = vmatprep.subr.mxu0 %v2567
  %2674 = vmatpush1.msra.mxu0 %v2566
  %2675 = vmatprep.subr.mxu0 %v2571
  %2676 = vmatpush1.msra.mxu0 %v2570
  %2677 = vmatprep.subr.mxu0 %v2575
  %2678 = vmatpush1.msra.mxu0 %v2574
  %2679 = vmatprep.subr.mxu0 0.0
  %2680 = vmatpush1.msra.mxu0 0.0
  %2681 = vmatprep.subr.mxu0 0.0
  %2682 = vmatpush1.msra.mxu0 0.0
  %2683 = vmatprep.subr.mxu0 0.0
  %2684 = vmatpush1.msra.mxu0 0.0
  %2685 = vmatprep.subr.mxu0 0.0
  %2686 = vmatpush1.msra.mxu0 0.0
  %2687 = vmatprep.subr.mxu0 0.0
  %2688 = vmatpush1.msra.mxu0 0.0
  %2689 = vmatprep.subr.mxu0 0.0
  %2690 = vmatpush1.msra.mxu0 0.0
  %2691 = vmatprep.subr.mxu0 0.0
  %2692 = vmatpush1.msra.mxu0 0.0
  %2693 = vmatprep.subr.mxu0 0.0
  %2694 = vmatpush1.msra.mxu0 0.0
  %2695 = vmatprep.subr.mxu0 0.0
  %2696 = vmatpush1.msra.mxu0 0.0
  %2697 = vmatprep.subr.mxu0 0.0
  %2698 = vmatpush1.msra.mxu0 0.0
  %2699 = vmatprep.subr.mxu0 0.0
  %2700 = vmatpush1.msra.mxu0 0.0
  %2701 = vmatprep.subr.mxu0 0.0
  %2702 = vmatpush1.msra.mxu0 0.0
  %2703 = vmatprep.subr.mxu0 0.0
  %2704 = vmatpush1.msra.mxu0 0.0
  %2705 = vmatprep.subr.mxu0 0.0
  %2706 = vmatpush1.msra.mxu0 0.0
  %2707 = vmatprep.subr.mxu0 0.0
  %2708 = vmatpush1.msra.mxu0 0.0
  %2709 = vmatprep.subr.mxu0 0.0
  %2710 = vmatpush1.msra.mxu0 0.0
  %2711 = vmatprep.mubr.f32.mxu0 0.0
  %2712 = vmatmul.mubr.f32.gmra.mrb[0].mxu0 %v2279
  %v2713 = vpop.f32.mrb[0].mxu0
  %v2714 = vadd.f32 0.0, %v2713
  %v2715 = vpop.f32.mrb[0].mxu0
  %v2716 = vadd.f32 0.0, %v2715
  %2717 = vdwg.mxu0
  %v2722 = vcombine.low %v2643, %v2645
  %v2723 = vcombine.low %v2714, %v2716
  %v2725 = vunpack.c.l.s4 1983009808
  %v2726 = vunpack.c.0.s8 %v2725
  %v2727 = vlaneseq
  %v2728 = vshrl.u32 %v2727, 7
  %v2729 = vsub.s32 %v2726, %v2728
  %v2730 = vrot.slane %v2722, %v2729
  %v2732 = vunpack.c.l.s4 1983009808
  %v2733 = vunpack.c.0.s8 %v2732
  %v2734 = vlaneseq
  %v2735 = vshrl.u32 %v2734, 7
  %v2736 = vsub.s32 %v2733, %v2735
  %v2737 = vrot.slane %v2723, %v2736
  %v2738 = vcombine.low %v2730, %v2737
  %v2740 = vadd.f32 %v2511, %v2738
  %v2741 = vxor.u32 %v2740, 2147483648
  %v2742 = vmul.f32 %v2741, 1.442695
  %v2743 = vpow.pop %v2742
  %v2744 = vadd.f32 %v2743, 1.0
  %v2745 = vrcp.pop %v2744
  %v2746 = vmul.f32 1.0, %v2745
  %v2748 = vrot.slane %v2740, 2
  %v2750 = vxor.u32 %v2748, 2147483648
  %v2751 = vmul.f32 %v2750, 1.442695
  %v2752 = vpow.pop %v2751
  %v2753 = vadd.f32 %v2752, 1.0
  %v2754 = vrcp.pop %v2753
  %v2755 = vmul.f32 1.0, %v2754
  %v2756 = vrot.slane %v2740, 4
  %v2758 = vtanh.pop %v2756
  %v2759 = vrot.slane %v2740, 6
  %v2761 = vxor.u32 %v2759, 2147483648
  %v2762 = vmul.f32 %v2761, 1.442695
  %v2763 = vpow.pop %v2762
  %v2764 = vadd.f32 %v2763, 1.0
  %v2765 = vrcp.pop %v2764
  %v2766 = vmul.f32 1.0, %v2765
  %v2767 = vmul.f32 %v2755, %v2277
  %v2768 = vmul.f32 %v2746, %v2758
  %v2769 = vadd.f32 %v2767, %v2768
  %v2770 = vtanh.pop %v2769
  %v2771 = vmul.f32 %v2766, %v2770
  %v2772 = vld [vmem:[%s2] sm:$0xff]
  %v2773 = vld [vmem:[%s2 + $0x8] sm:$0xff]
  %v2774 = vld [vmem:[%s2 + $0x10] sm:$0xff]
  %v2775 = vld [vmem:[%s2 + $0x18] sm:$0xff]
  %v2776 = vld [vmem:[%s2 + $0x20] sm:$0xff]
  %v2777 = vld [vmem:[%s2 + $0x28] sm:$0xff]
  %v2778 = vld [vmem:[%s2 + $0x30] sm:$0xff]
  %v2779 = vld [vmem:[%s2 + $0x38] sm:$0xff]
  %v2780 = vld [vmem:[%s2 + $0x40] sm:$0xff]
  %v2781 = vld [vmem:[%s2 + $0x48] sm:$0xff]
  %v2782 = vld [vmem:[%s2 + $0x50] sm:$0xff]
  %v2783 = vld [vmem:[%s2 + $0x58] sm:$0xff]
  %v2784 = vld [vmem:[%s2 + $0x60] sm:$0xff]
  %v2785 = vld [vmem:[%s2 + $0x68] sm:$0xff]
  %v2786 = vld [vmem:[%s2 + $0x70] sm:$0xff]
  %v2787 = vld [vmem:[%s2 + $0x78] sm:$0xff]
  %v2788 = vld [vmem:[%s2 + $0x80] sm:$0xff]
  %v2789 = vld [vmem:[%s2 + $0x88] sm:$0xff]
  %v2790 = vld [vmem:[%s2 + $0x90] sm:$0xff]
  %v2791 = vld [vmem:[%s2 + $0x98] sm:$0xff]
  %v2792 = vld [vmem:[%s2 + $0xa0] sm:$0xff]
  %v2793 = vld [vmem:[%s2 + $0xa8] sm:$0xff]
  %v2794 = vld [vmem:[%s2 + $0xb0] sm:$0xff]
  %v2795 = vld [vmem:[%s2 + $0xb8] sm:$0xff]
  %v2796 = vld [vmem:[%s2 + $0xc0] sm:$0xff]
  %v2797 = vld [vmem:[%s2 + $0xc8] sm:$0xff]
  %v2798 = vld [vmem:[%s2 + $0xd0] sm:$0xff]
  %v2799 = vld [vmem:[%s2 + $0xd8] sm:$0xff]
  %v2800 = vld [vmem:[%s2 + $0xe0] sm:$0xff]
  %v2801 = vld [vmem:[%s2 + $0xe8] sm:$0xff]
  %v2802 = vld [vmem:[%s2 + $0xf0] sm:$0xff]
  %v2803 = vld [vmem:[%s2 + $0xf8] sm:$0xff]
  %v2804 = vld [vmem:[%s2 + $0x100] sm:$0xff]
  %v2805 = vld [vmem:[%s2 + $0x108] sm:$0xff]
  %v2806 = vld [vmem:[%s2 + $0x110] sm:$0xff]
  %v2807 = vld [vmem:[%s2 + $0x118] sm:$0xff]
  %v2808 = vld [vmem:[%s2 + $0x120] sm:$0xff]
  %v2809 = vld [vmem:[%s2 + $0x128] sm:$0xff]
  %v2810 = vld [vmem:[%s2 + $0x130] sm:$0xff]
  %v2811 = vld [vmem:[%s2 + $0x138] sm:$0xff]
  %v2812 = vld [vmem:[%s2 + $0x140] sm:$0xff]
  %v2813 = vld [vmem:[%s2 + $0x148] sm:$0xff]
  %v2814 = vld [vmem:[%s2 + $0x150] sm:$0xff]
  %v2815 = vld [vmem:[%s2 + $0x158] sm:$0xff]
  %v2816 = vld [vmem:[%s2 + $0x160] sm:$0xff]
  %v2817 = vld [vmem:[%s2 + $0x168] sm:$0xff]
  %v2818 = vld [vmem:[%s2 + $0x170] sm:$0xff]
  %v2819 = vld [vmem:[%s2 + $0x178] sm:$0xff]
  %v2820 = vld [vmem:[%s2 + $0x180] sm:$0xff]
  %v2821 = vld [vmem:[%s2 + $0x188] sm:$0xff]
  %v2822 = vld [vmem:[%s2 + $0x190] sm:$0xff]
  %v2823 = vld [vmem:[%s2 + $0x198] sm:$0xff]
  %v2824 = vld [vmem:[%s2 + $0x1a0] sm:$0xff]
  %v2825 = vld [vmem:[%s2 + $0x1a8] sm:$0xff]
  %v2826 = vld [vmem:[%s2 + $0x1b0] sm:$0xff]
  %v2827 = vld [vmem:[%s2 + $0x1b8] sm:$0xff]
  %v2828 = vld [vmem:[%s2 + $0x1c0] sm:$0xff]
  %v2829 = vld [vmem:[%s2 + $0x1c8] sm:$0xff]
  %v2830 = vld [vmem:[%s2 + $0x1d0] sm:$0xff]
  %v2831 = vld [vmem:[%s2 + $0x1d8] sm:$0xff]
  %v2832 = vld [vmem:[%s2 + $0x1e0] sm:$0xff]
  %v2833 = vld [vmem:[%s2 + $0x1e8] sm:$0xff]
  %v2834 = vld [vmem:[%s2 + $0x1f0] sm:$0xff]
  %v2835 = vld [vmem:[%s2 + $0x1f8] sm:$0xff]
  %2836 = vmatprep.subr.mxu0 %v2773
  %2837 = vmatpush1.msra.mxu0 %v2772
  %2838 = vmatprep.subr.mxu0 %v2777
  %2839 = vmatpush1.msra.mxu0 %v2776
  %2840 = vmatprep.subr.mxu0 %v2781
  %2841 = vmatpush1.msra.mxu0 %v2780
  %2842 = vmatprep.subr.mxu0 %v2785
  %2843 = vmatpush1.msra.mxu0 %v2784
  %2844 = vmatprep.subr.mxu0 %v2789
  %2845 = vmatpush1.msra.mxu0 %v2788
  %2846 = vmatprep.subr.mxu0 %v2793
  %2847 = vmatpush1.msra.mxu0 %v2792
  %2848 = vmatprep.subr.mxu0 %v2797
  %2849 = vmatpush1.msra.mxu0 %v2796
  %2850 = vmatprep.subr.mxu0 %v2801
  %2851 = vmatpush1.msra.mxu0 %v2800
  %2852 = vmatprep.subr.mxu0 %v2805
  %2853 = vmatpush1.msra.mxu0 %v2804
  %2854 = vmatprep.subr.mxu0 %v2809
  %2855 = vmatpush1.msra.mxu0 %v2808
  %2856 = vmatprep.subr.mxu0 %v2813
  %2857 = vmatpush1.msra.mxu0 %v2812
  %2858 = vmatprep.subr.mxu0 %v2817
  %2859 = vmatpush1.msra.mxu0 %v2816
  %2860 = vmatprep.subr.mxu0 %v2821
  %2861 = vmatpush1.msra.mxu0 %v2820
  %2862 = vmatprep.subr.mxu0 %v2825
  %2863 = vmatpush1.msra.mxu0 %v2824
  %2864 = vmatprep.subr.mxu0 %v2829
  %2865 = vmatpush1.msra.mxu0 %v2828
  %2866 = vmatprep.subr.mxu0 %v2833
  %2867 = vmatpush1.msra.mxu0 %v2832
  %2868 = vmatprep.subr.mxu0 0.0
  %2869 = vmatpush1.msra.mxu0 0.0
  %2870 = vmatprep.subr.mxu0 0.0
  %2871 = vmatpush1.msra.mxu0 0.0
  %2872 = vmatprep.subr.mxu0 0.0
  %2873 = vmatpush1.msra.mxu0 0.0
  %2874 = vmatprep.subr.mxu0 0.0
  %2875 = vmatpush1.msra.mxu0 0.0
  %2876 = vmatprep.subr.mxu0 0.0
  %2877 = vmatpush1.msra.mxu0 0.0
  %2878 = vmatprep.subr.mxu0 0.0
  %2879 = vmatpush1.msra.mxu0 0.0
  %2880 = vmatprep.subr.mxu0 0.0
  %2881 = vmatpush1.msra.mxu0 0.0
  %2882 = vmatprep.subr.mxu0 0.0
  %2883 = vmatpush1.msra.mxu0 0.0
  %2884 = vmatprep.subr.mxu0 0.0
  %2885 = vmatpush1.msra.mxu0 0.0
  %2886 = vmatprep.subr.mxu0 0.0
  %2887 = vmatpush1.msra.mxu0 0.0
  %2888 = vmatprep.subr.mxu0 0.0
  %2889 = vmatpush1.msra.mxu0 0.0
  %2890 = vmatprep.subr.mxu0 0.0
  %2891 = vmatpush1.msra.mxu0 0.0
  %2892 = vmatprep.subr.mxu0 0.0
  %2893 = vmatpush1.msra.mxu0 0.0
  %2894 = vmatprep.subr.mxu0 0.0
  %2895 = vmatpush1.msra.mxu0 0.0
  %2896 = vmatprep.subr.mxu0 0.0
  %2897 = vmatpush1.msra.mxu0 0.0
  %2898 = vmatprep.subr.mxu0 0.0
  %2899 = vmatpush1.msra.mxu0 0.0
  %2900 = vmatprep.mubr.f32.mxu0 0.0
  %2901 = vmatmul.mubr.f32.gmra.mrb[0].mxu0 %v2771
  %v2902 = vpop.f32.mrb[0].mxu0
  %v2903 = vadd.f32 %v33, %v2902
  %v2904 = vpop.f32.mrb[0].mxu0
  %v2905 = vadd.f32 %v37, %v2904
  %2906 = vdwg.mxu0
  %2907 = vmatprep.subr.mxu0 %v2775
  %2908 = vmatpush1.msra.mxu0 %v2774
  %2909 = vmatprep.subr.mxu0 %v2779
  %2910 = vmatpush1.msra.mxu0 %v2778
  %2911 = vmatprep.subr.mxu0 %v2783
  %2912 = vmatpush1.msra.mxu0 %v2782
  %2913 = vmatprep.subr.mxu0 %v2787
  %2914 = vmatpush1.msra.mxu0 %v2786
  %2915 = vmatprep.subr.mxu0 %v2791
  %2916 = vmatpush1.msra.mxu0 %v2790
  %2917 = vmatprep.subr.mxu0 %v2795
  %2918 = vmatpush1.msra.mxu0 %v2794
  %2919 = vmatprep.subr.mxu0 %v2799
  %2920 = vmatpush1.msra.mxu0 %v2798
  %2921 = vmatprep.subr.mxu0 %v2803
  %2922 = vmatpush1.msra.mxu0 %v2802
  %2923 = vmatprep.subr.mxu0 %v2807
  %2924 = vmatpush1.msra.mxu0 %v2806
  %2925 = vmatprep.subr.mxu0 %v2811
  %2926 = vmatpush1.msra.mxu0 %v2810
  %2927 = vmatprep.subr.mxu0 %v2815
  %2928 = vmatpush1.msra.mxu0 %v2814
  %2929 = vmatprep.subr.mxu0 %v2819
  %2930 = vmatpush1.msra.mxu0 %v2818
  %2931 = vmatprep.subr.mxu0 %v2823
  %2932 = vmatpush1.msra.mxu0 %v2822
  %2933 = vmatprep.subr.mxu0 %v2827
  %2934 = vmatpush1.msra.mxu0 %v2826
  %2935 = vmatprep.subr.mxu0 %v2831
  %2936 = vmatpush1.msra.mxu0 %v2830
  %2937 = vmatprep.subr.mxu0 %v2835
  %2938 = vmatpush1.msra.mxu0 %v2834
  %2939 = vmatprep.subr.mxu0 0.0
  %2940 = vmatpush1.msra.mxu0 0.0
  %2941 = vmatprep.subr.mxu0 0.0
  %2942 = vmatpush1.msra.mxu0 0.0
  %2943 = vmatprep.subr.mxu0 0.0
  %2944 = vmatpush1.msra.mxu0 0.0
  %2945 = vmatprep.subr.mxu0 0.0
  %2946 = vmatpush1.msra.mxu0 0.0
  %2947 = vmatprep.subr.mxu0 0.0
  %2948 = vmatpush1.msra.mxu0 0.0
  %2949 = vmatprep.subr.mxu0 0.0
  %2950 = vmatpush1.msra.mxu0 0.0
  %2951 = vmatprep.subr.mxu0 0.0
  %2952 = vmatpush1.msra.mxu0 0.0
  %2953 = vmatprep.subr.mxu0 0.0
  %2954 = vmatpush1.msra.mxu0 0.0
  %2955 = vmatprep.subr.mxu0 0.0
  %2956 = vmatpush1.msra.mxu0 0.0
  %2957 = vmatprep.subr.mxu0 0.0
  %2958 = vmatpush1.msra.mxu0 0.0
  %2959 = vmatprep.subr.mxu0 0.0
  %2960 = vmatpush1.msra.mxu0 0.0
  %2961 = vmatprep.subr.mxu0 0.0
  %2962 = vmatpush1.msra.mxu0 0.0
  %2963 = vmatprep.subr.mxu0 0.0
  %2964 = vmatpush1.msra.mxu0 0.0
  %2965 = vmatprep.subr.mxu0 0.0
  %2966 = vmatpush1.msra.mxu0 0.0
  %2967 = vmatprep.subr.mxu0 0.0
  %2968 = vmatpush1.msra.mxu0 0.0
  %2969 = vmatprep.subr.mxu0 0.0
  %2970 = vmatpush1.msra.mxu0 0.0
  %2971 = vmatprep.mubr.f32.mxu0 0.0
  %2972 = vmatmul.mubr.f32.gmra.mrb[0].mxu0 %v2771
  %v2973 = vpop.f32.mrb[0].mxu0
  %v2974 = vadd.f32 %v41, %v2973
  %v2975 = vpop.f32.mrb[0].mxu0
  %v2976 = vadd.f32 %v45, %v2975
  %2977 = vdwg.mxu0
  %v2982 = vcombine.low %v2903, %v2905
  %v2983 = vcombine.low %v2974, %v2976
  %v2985 = vunpack.c.l.s4 1983009808
  %v2986 = vunpack.c.0.s8 %v2985
  %v2987 = vlaneseq
  %v2988 = vshrl.u32 %v2987, 7
  %v2989 = vsub.s32 %v2986, %v2988
  %v2990 = vrot.slane %v2982, %v2989
  %v2992 = vunpack.c.l.s4 1983009808
  %v2993 = vunpack.c.0.s8 %v2992
  %v2994 = vlaneseq
  %v2995 = vshrl.u32 %v2994, 7
  %v2996 = vsub.s32 %v2993, %v2995
  %v2997 = vrot.slane %v2983, %v2996
  %v2998 = vcombine.low %v2990, %v2997
  %s3000 = scalar_lea.vmem [#allocation2], 40
  %3001 = vst [vmem:[%s3000] sm:$0xff] %v2998
  %s3002 = scalar_lea.vmem %s0, 48
  %v3003 = vld [vmem:[%s3002] sm:$0xff]
  %v3004 = vld [vmem:[%s1] sm:$0xff]
  %v3005 = vld [vmem:[%s1 + $0x8] sm:$0xff]
  %v3006 = vld [vmem:[%s1 + $0x10] sm:$0xff]
  %v3007 = vld [vmem:[%s1 + $0x18] sm:$0xff]
  %v3008 = vld [vmem:[%s1 + $0x20] sm:$0xff]
  %v3009 = vld [vmem:[%s1 + $0x28] sm:$0xff]
  %v3010 = vld [vmem:[%s1 + $0x30] sm:$0xff]
  %v3011 = vld [vmem:[%s1 + $0x38] sm:$0xff]
  %v3012 = vld [vmem:[%s1 + $0x40] sm:$0xff]
  %v3013 = vld [vmem:[%s1 + $0x48] sm:$0xff]
  %v3014 = vld [vmem:[%s1 + $0x50] sm:$0xff]
  %v3015 = vld [vmem:[%s1 + $0x58] sm:$0xff]
  %v3016 = vld [vmem:[%s1 + $0x60] sm:$0xff]
  %v3017 = vld [vmem:[%s1 + $0x68] sm:$0xff]
  %v3018 = vld [vmem:[%s1 + $0x70] sm:$0xff]
  %v3019 = vld [vmem:[%s1 + $0x78] sm:$0xff]
  %v3020 = vld [vmem:[%s1 + $0x80] sm:$0xff]
  %v3021 = vld [vmem:[%s1 + $0x88] sm:$0xff]
  %v3022 = vld [vmem:[%s1 + $0x90] sm:$0xff]
  %v3023 = vld [vmem:[%s1 + $0x98] sm:$0xff]
  %v3024 = vld [vmem:[%s1 + $0xa0] sm:$0xff]
  %v3025 = vld [vmem:[%s1 + $0xa8] sm:$0xff]
  %v3026 = vld [vmem:[%s1 + $0xb0] sm:$0xff]
  %v3027 = vld [vmem:[%s1 + $0xb8] sm:$0xff]
  %v3028 = vld [vmem:[%s1 + $0xc0] sm:$0xff]
  %v3029 = vld [vmem:[%s1 + $0xc8] sm:$0xff]
  %v3030 = vld [vmem:[%s1 + $0xd0] sm:$0xff]
  %v3031 = vld [vmem:[%s1 + $0xd8] sm:$0xff]
  %v3032 = vld [vmem:[%s1 + $0xe0] sm:$0xff]
  %v3033 = vld [vmem:[%s1 + $0xe8] sm:$0xff]
  %v3034 = vld [vmem:[%s1 + $0xf0] sm:$0xff]
  %v3035 = vld [vmem:[%s1 + $0xf8] sm:$0xff]
  %v3036 = vld [vmem:[%s1 + $0x100] sm:$0xff]
  %v3037 = vld [vmem:[%s1 + $0x108] sm:$0xff]
  %v3038 = vld [vmem:[%s1 + $0x110] sm:$0xff]
  %v3039 = vld [vmem:[%s1 + $0x118] sm:$0xff]
  %v3040 = vld [vmem:[%s1 + $0x120] sm:$0xff]
  %v3041 = vld [vmem:[%s1 + $0x128] sm:$0xff]
  %v3042 = vld [vmem:[%s1 + $0x130] sm:$0xff]
  %v3043 = vld [vmem:[%s1 + $0x138] sm:$0xff]
  %v3044 = vld [vmem:[%s1 + $0x140] sm:$0xff]
  %v3045 = vld [vmem:[%s1 + $0x148] sm:$0xff]
  %v3046 = vld [vmem:[%s1 + $0x150] sm:$0xff]
  %v3047 = vld [vmem:[%s1 + $0x158] sm:$0xff]
  %v3048 = vld [vmem:[%s1 + $0x160] sm:$0xff]
  %v3049 = vld [vmem:[%s1 + $0x168] sm:$0xff]
  %v3050 = vld [vmem:[%s1 + $0x170] sm:$0xff]
  %v3051 = vld [vmem:[%s1 + $0x178] sm:$0xff]
  %v3052 = vld [vmem:[%s1 + $0x180] sm:$0xff]
  %v3053 = vld [vmem:[%s1 + $0x188] sm:$0xff]
  %v3054 = vld [vmem:[%s1 + $0x190] sm:$0xff]
  %v3055 = vld [vmem:[%s1 + $0x198] sm:$0xff]
  %v3056 = vld [vmem:[%s1 + $0x1a0] sm:$0xff]
  %v3057 = vld [vmem:[%s1 + $0x1a8] sm:$0xff]
  %v3058 = vld [vmem:[%s1 + $0x1b0] sm:$0xff]
  %v3059 = vld [vmem:[%s1 + $0x1b8] sm:$0xff]
  %v3060 = vld [vmem:[%s1 + $0x1c0] sm:$0xff]
  %v3061 = vld [vmem:[%s1 + $0x1c8] sm:$0xff]
  %v3062 = vld [vmem:[%s1 + $0x1d0] sm:$0xff]
  %v3063 = vld [vmem:[%s1 + $0x1d8] sm:$0xff]
  %v3064 = vld [vmem:[%s1 + $0x1e0] sm:$0xff]
  %v3065 = vld [vmem:[%s1 + $0x1e8] sm:$0xff]
  %v3066 = vld [vmem:[%s1 + $0x1f0] sm:$0xff]
  %v3067 = vld [vmem:[%s1 + $0x1f8] sm:$0xff]
  %3068 = vmatprep.subr.mxu0 %v3005
  %3069 = vmatpush1.msra.mxu0 %v3004
  %3070 = vmatprep.subr.mxu0 %v3009
  %3071 = vmatpush1.msra.mxu0 %v3008
  %3072 = vmatprep.subr.mxu0 %v3013
  %3073 = vmatpush1.msra.mxu0 %v3012
  %3074 = vmatprep.subr.mxu0 %v3017
  %3075 = vmatpush1.msra.mxu0 %v3016
  %3076 = vmatprep.subr.mxu0 %v3021
  %3077 = vmatpush1.msra.mxu0 %v3020
  %3078 = vmatprep.subr.mxu0 %v3025
  %3079 = vmatpush1.msra.mxu0 %v3024
  %3080 = vmatprep.subr.mxu0 %v3029
  %3081 = vmatpush1.msra.mxu0 %v3028
  %3082 = vmatprep.subr.mxu0 %v3033
  %3083 = vmatpush1.msra.mxu0 %v3032
  %3084 = vmatprep.subr.mxu0 %v3037
  %3085 = vmatpush1.msra.mxu0 %v3036
  %3086 = vmatprep.subr.mxu0 %v3041
  %3087 = vmatpush1.msra.mxu0 %v3040
  %3088 = vmatprep.subr.mxu0 %v3045
  %3089 = vmatpush1.msra.mxu0 %v3044
  %3090 = vmatprep.subr.mxu0 %v3049
  %3091 = vmatpush1.msra.mxu0 %v3048
  %3092 = vmatprep.subr.mxu0 %v3053
  %3093 = vmatpush1.msra.mxu0 %v3052
  %3094 = vmatprep.subr.mxu0 %v3057
  %3095 = vmatpush1.msra.mxu0 %v3056
  %3096 = vmatprep.subr.mxu0 %v3061
  %3097 = vmatpush1.msra.mxu0 %v3060
  %3098 = vmatprep.subr.mxu0 %v3065
  %3099 = vmatpush1.msra.mxu0 %v3064
  %3100 = vmatprep.subr.mxu0 0.0
  %3101 = vmatpush1.msra.mxu0 0.0
  %3102 = vmatprep.subr.mxu0 0.0
  %3103 = vmatpush1.msra.mxu0 0.0
  %3104 = vmatprep.subr.mxu0 0.0
  %3105 = vmatpush1.msra.mxu0 0.0
  %3106 = vmatprep.subr.mxu0 0.0
  %3107 = vmatpush1.msra.mxu0 0.0
  %3108 = vmatprep.subr.mxu0 0.0
  %3109 = vmatpush1.msra.mxu0 0.0
  %3110 = vmatprep.subr.mxu0 0.0
  %3111 = vmatpush1.msra.mxu0 0.0
  %3112 = vmatprep.subr.mxu0 0.0
  %3113 = vmatpush1.msra.mxu0 0.0
  %3114 = vmatprep.subr.mxu0 0.0
  %3115 = vmatpush1.msra.mxu0 0.0
  %3116 = vmatprep.subr.mxu0 0.0
  %3117 = vmatpush1.msra.mxu0 0.0
  %3118 = vmatprep.subr.mxu0 0.0
  %3119 = vmatpush1.msra.mxu0 0.0
  %3120 = vmatprep.subr.mxu0 0.0
  %3121 = vmatpush1.msra.mxu0 0.0
  %3122 = vmatprep.subr.mxu0 0.0
  %3123 = vmatpush1.msra.mxu0 0.0
  %3124 = vmatprep.subr.mxu0 0.0
  %3125 = vmatpush1.msra.mxu0 0.0
  %3126 = vmatprep.subr.mxu0 0.0
  %3127 = vmatpush1.msra.mxu0 0.0
  %3128 = vmatprep.subr.mxu0 0.0
  %3129 = vmatpush1.msra.mxu0 0.0
  %3130 = vmatprep.subr.mxu0 0.0
  %3131 = vmatpush1.msra.mxu0 0.0
  %3132 = vmatprep.mubr.f32.mxu0 0.0
  %3133 = vmatmul.mubr.f32.gmra.mrb[0].mxu0 %v2771
  %v3134 = vpop.f32.mrb[0].mxu0
  %v3135 = vadd.f32 0.0, %v3134
  %v3136 = vpop.f32.mrb[0].mxu0
  %v3137 = vadd.f32 0.0, %v3136
  %3138 = vdwg.mxu0
  %3139 = vmatprep.subr.mxu0 %v3007
  %3140 = vmatpush1.msra.mxu0 %v3006
  %3141 = vmatprep.subr.mxu0 %v3011
  %3142 = vmatpush1.msra.mxu0 %v3010
  %3143 = vmatprep.subr.mxu0 %v3015
  %3144 = vmatpush1.msra.mxu0 %v3014
  %3145 = vmatprep.subr.mxu0 %v3019
  %3146 = vmatpush1.msra.mxu0 %v3018
  %3147 = vmatprep.subr.mxu0 %v3023
  %3148 = vmatpush1.msra.mxu0 %v3022
  %3149 = vmatprep.subr.mxu0 %v3027
  %3150 = vmatpush1.msra.mxu0 %v3026
  %3151 = vmatprep.subr.mxu0 %v3031
  %3152 = vmatpush1.msra.mxu0 %v3030
  %3153 = vmatprep.subr.mxu0 %v3035
  %3154 = vmatpush1.msra.mxu0 %v3034
  %3155 = vmatprep.subr.mxu0 %v3039
  %3156 = vmatpush1.msra.mxu0 %v3038
  %3157 = vmatprep.subr.mxu0 %v3043
  %3158 = vmatpush1.msra.mxu0 %v3042
  %3159 = vmatprep.subr.mxu0 %v3047
  %3160 = vmatpush1.msra.mxu0 %v3046
  %3161 = vmatprep.subr.mxu0 %v3051
  %3162 = vmatpush1.msra.mxu0 %v3050
  %3163 = vmatprep.subr.mxu0 %v3055
  %3164 = vmatpush1.msra.mxu0 %v3054
  %3165 = vmatprep.subr.mxu0 %v3059
  %3166 = vmatpush1.msra.mxu0 %v3058
  %3167 = vmatprep.subr.mxu0 %v3063
  %3168 = vmatpush1.msra.mxu0 %v3062
  %3169 = vmatprep.subr.mxu0 %v3067
  %3170 = vmatpush1.msra.mxu0 %v3066
  %3171 = vmatprep.subr.mxu0 0.0
  %3172 = vmatpush1.msra.mxu0 0.0
  %3173 = vmatprep.subr.mxu0 0.0
  %3174 = vmatpush1.msra.mxu0 0.0
  %3175 = vmatprep.subr.mxu0 0.0
  %3176 = vmatpush1.msra.mxu0 0.0
  %3177 = vmatprep.subr.mxu0 0.0
  %3178 = vmatpush1.msra.mxu0 0.0
  %3179 = vmatprep.subr.mxu0 0.0
  %3180 = vmatpush1.msra.mxu0 0.0
  %3181 = vmatprep.subr.mxu0 0.0
  %3182 = vmatpush1.msra.mxu0 0.0
  %3183 = vmatprep.subr.mxu0 0.0
  %3184 = vmatpush1.msra.mxu0 0.0
  %3185 = vmatprep.subr.mxu0 0.0
  %3186 = vmatpush1.msra.mxu0 0.0
  %3187 = vmatprep.subr.mxu0 0.0
  %3188 = vmatpush1.msra.mxu0 0.0
  %3189 = vmatprep.subr.mxu0 0.0
  %3190 = vmatpush1.msra.mxu0 0.0
  %3191 = vmatprep.subr.mxu0 0.0
  %3192 = vmatpush1.msra.mxu0 0.0
  %3193 = vmatprep.subr.mxu0 0.0
  %3194 = vmatpush1.msra.mxu0 0.0
  %3195 = vmatprep.subr.mxu0 0.0
  %3196 = vmatpush1.msra.mxu0 0.0
  %3197 = vmatprep.subr.mxu0 0.0
  %3198 = vmatpush1.msra.mxu0 0.0
  %3199 = vmatprep.subr.mxu0 0.0
  %3200 = vmatpush1.msra.mxu0 0.0
  %3201 = vmatprep.subr.mxu0 0.0
  %3202 = vmatpush1.msra.mxu0 0.0
  %3203 = vmatprep.mubr.f32.mxu0 0.0
  %3204 = vmatmul.mubr.f32.gmra.mrb[0].mxu0 %v2771
  %v3205 = vpop.f32.mrb[0].mxu0
  %v3206 = vadd.f32 0.0, %v3205
  %v3207 = vpop.f32.mrb[0].mxu0
  %v3208 = vadd.f32 0.0, %v3207
  %3209 = vdwg.mxu0
  %v3214 = vcombine.low %v3135, %v3137
  %v3215 = vcombine.low %v3206, %v3208
  %v3217 = vunpack.c.l.s4 1983009808
  %v3218 = vunpack.c.0.s8 %v3217
  %v3219 = vlaneseq
  %v3220 = vshrl.u32 %v3219, 7
  %v3221 = vsub.s32 %v3218, %v3220
  %v3222 = vrot.slane %v3214, %v3221
  %v3224 = vunpack.c.l.s4 1983009808
  %v3225 = vunpack.c.0.s8 %v3224
  %v3226 = vlaneseq
  %v3227 = vshrl.u32 %v3226, 7
  %v3228 = vsub.s32 %v3225, %v3227
  %v3229 = vrot.slane %v3215, %v3228
  %v3230 = vcombine.low %v3222, %v3229
  %v3232 = vadd.f32 %v3003, %v3230
  %v3233 = vxor.u32 %v3232, 2147483648
  %v3234 = vmul.f32 %v3233, 1.442695
  %v3235 = vpow.pop %v3234
  %v3236 = vadd.f32 %v3235, 1.0
  %v3237 = vrcp.pop %v3236
  %v3238 = vmul.f32 1.0, %v3237
  %v3240 = vrot.slane %v3232, 2
  %v3242 = vxor.u32 %v3240, 2147483648
  %v3243 = vmul.f32 %v3242, 1.442695
  %v3244 = vpow.pop %v3243
  %v3245 = vadd.f32 %v3244, 1.0
  %v3246 = vrcp.pop %v3245
  %v3247 = vmul.f32 1.0, %v3246
  %v3248 = vrot.slane %v3232, 4
  %v3250 = vtanh.pop %v3248
  %v3251 = vrot.slane %v3232, 6
  %v3253 = vxor.u32 %v3251, 2147483648
  %v3254 = vmul.f32 %v3253, 1.442695
  %v3255 = vpow.pop %v3254
  %v3256 = vadd.f32 %v3255, 1.0
  %v3257 = vrcp.pop %v3256
  %v3258 = vmul.f32 1.0, %v3257
  %v3259 = vmul.f32 %v3247, %v2769
  %v3260 = vmul.f32 %v3238, %v3250
  %v3261 = vadd.f32 %v3259, %v3260
  %v3262 = vtanh.pop %v3261
  %v3263 = vmul.f32 %v3258, %v3262
  %v3264 = vld [vmem:[%s2] sm:$0xff]
  %v3265 = vld [vmem:[%s2 + $0x8] sm:$0xff]
  %v3266 = vld [vmem:[%s2 + $0x10] sm:$0xff]
  %v3267 = vld [vmem:[%s2 + $0x18] sm:$0xff]
  %v3268 = vld [vmem:[%s2 + $0x20] sm:$0xff]
  %v3269 = vld [vmem:[%s2 + $0x28] sm:$0xff]
  %v3270 = vld [vmem:[%s2 + $0x30] sm:$0xff]
  %v3271 = vld [vmem:[%s2 + $0x38] sm:$0xff]
  %v3272 = vld [vmem:[%s2 + $0x40] sm:$0xff]
  %v3273 = vld [vmem:[%s2 + $0x48] sm:$0xff]
  %v3274 = vld [vmem:[%s2 + $0x50] sm:$0xff]
  %v3275 = vld [vmem:[%s2 + $0x58] sm:$0xff]
  %v3276 = vld [vmem:[%s2 + $0x60] sm:$0xff]
  %v3277 = vld [vmem:[%s2 + $0x68] sm:$0xff]
  %v3278 = vld [vmem:[%s2 + $0x70] sm:$0xff]
  %v3279 = vld [vmem:[%s2 + $0x78] sm:$0xff]
  %v3280 = vld [vmem:[%s2 + $0x80] sm:$0xff]
  %v3281 = vld [vmem:[%s2 + $0x88] sm:$0xff]
  %v3282 = vld [vmem:[%s2 + $0x90] sm:$0xff]
  %v3283 = vld [vmem:[%s2 + $0x98] sm:$0xff]
  %v3284 = vld [vmem:[%s2 + $0xa0] sm:$0xff]
  %v3285 = vld [vmem:[%s2 + $0xa8] sm:$0xff]
  %v3286 = vld [vmem:[%s2 + $0xb0] sm:$0xff]
  %v3287 = vld [vmem:[%s2 + $0xb8] sm:$0xff]
  %v3288 = vld [vmem:[%s2 + $0xc0] sm:$0xff]
  %v3289 = vld [vmem:[%s2 + $0xc8] sm:$0xff]
  %v3290 = vld [vmem:[%s2 + $0xd0] sm:$0xff]
  %v3291 = vld [vmem:[%s2 + $0xd8] sm:$0xff]
  %v3292 = vld [vmem:[%s2 + $0xe0] sm:$0xff]
  %v3293 = vld [vmem:[%s2 + $0xe8] sm:$0xff]
  %v3294 = vld [vmem:[%s2 + $0xf0] sm:$0xff]
  %v3295 = vld [vmem:[%s2 + $0xf8] sm:$0xff]
  %v3296 = vld [vmem:[%s2 + $0x100] sm:$0xff]
  %v3297 = vld [vmem:[%s2 + $0x108] sm:$0xff]
  %v3298 = vld [vmem:[%s2 + $0x110] sm:$0xff]
  %v3299 = vld [vmem:[%s2 + $0x118] sm:$0xff]
  %v3300 = vld [vmem:[%s2 + $0x120] sm:$0xff]
  %v3301 = vld [vmem:[%s2 + $0x128] sm:$0xff]
  %v3302 = vld [vmem:[%s2 + $0x130] sm:$0xff]
  %v3303 = vld [vmem:[%s2 + $0x138] sm:$0xff]
  %v3304 = vld [vmem:[%s2 + $0x140] sm:$0xff]
  %v3305 = vld [vmem:[%s2 + $0x148] sm:$0xff]
  %v3306 = vld [vmem:[%s2 + $0x150] sm:$0xff]
  %v3307 = vld [vmem:[%s2 + $0x158] sm:$0xff]
  %v3308 = vld [vmem:[%s2 + $0x160] sm:$0xff]
  %v3309 = vld [vmem:[%s2 + $0x168] sm:$0xff]
  %v3310 = vld [vmem:[%s2 + $0x170] sm:$0xff]
  %v3311 = vld [vmem:[%s2 + $0x178] sm:$0xff]
  %v3312 = vld [vmem:[%s2 + $0x180] sm:$0xff]
  %v3313 = vld [vmem:[%s2 + $0x188] sm:$0xff]
  %v3314 = vld [vmem:[%s2 + $0x190] sm:$0xff]
  %v3315 = vld [vmem:[%s2 + $0x198] sm:$0xff]
  %v3316 = vld [vmem:[%s2 + $0x1a0] sm:$0xff]
  %v3317 = vld [vmem:[%s2 + $0x1a8] sm:$0xff]
  %v3318 = vld [vmem:[%s2 + $0x1b0] sm:$0xff]
  %v3319 = vld [vmem:[%s2 + $0x1b8] sm:$0xff]
  %v3320 = vld [vmem:[%s2 + $0x1c0] sm:$0xff]
  %v3321 = vld [vmem:[%s2 + $0x1c8] sm:$0xff]
  %v3322 = vld [vmem:[%s2 + $0x1d0] sm:$0xff]
  %v3323 = vld [vmem:[%s2 + $0x1d8] sm:$0xff]
  %v3324 = vld [vmem:[%s2 + $0x1e0] sm:$0xff]
  %v3325 = vld [vmem:[%s2 + $0x1e8] sm:$0xff]
  %v3326 = vld [vmem:[%s2 + $0x1f0] sm:$0xff]
  %v3327 = vld [vmem:[%s2 + $0x1f8] sm:$0xff]
  %3328 = vmatprep.subr.mxu0 %v3265
  %3329 = vmatpush1.msra.mxu0 %v3264
  %3330 = vmatprep.subr.mxu0 %v3269
  %3331 = vmatpush1.msra.mxu0 %v3268
  %3332 = vmatprep.subr.mxu0 %v3273
  %3333 = vmatpush1.msra.mxu0 %v3272
  %3334 = vmatprep.subr.mxu0 %v3277
  %3335 = vmatpush1.msra.mxu0 %v3276
  %3336 = vmatprep.subr.mxu0 %v3281
  %3337 = vmatpush1.msra.mxu0 %v3280
  %3338 = vmatprep.subr.mxu0 %v3285
  %3339 = vmatpush1.msra.mxu0 %v3284
  %3340 = vmatprep.subr.mxu0 %v3289
  %3341 = vmatpush1.msra.mxu0 %v3288
  %3342 = vmatprep.subr.mxu0 %v3293
  %3343 = vmatpush1.msra.mxu0 %v3292
  %3344 = vmatprep.subr.mxu0 %v3297
  %3345 = vmatpush1.msra.mxu0 %v3296
  %3346 = vmatprep.subr.mxu0 %v3301
  %3347 = vmatpush1.msra.mxu0 %v3300
  %3348 = vmatprep.subr.mxu0 %v3305
  %3349 = vmatpush1.msra.mxu0 %v3304
  %3350 = vmatprep.subr.mxu0 %v3309
  %3351 = vmatpush1.msra.mxu0 %v3308
  %3352 = vmatprep.subr.mxu0 %v3313
  %3353 = vmatpush1.msra.mxu0 %v3312
  %3354 = vmatprep.subr.mxu0 %v3317
  %3355 = vmatpush1.msra.mxu0 %v3316
  %3356 = vmatprep.subr.mxu0 %v3321
  %3357 = vmatpush1.msra.mxu0 %v3320
  %3358 = vmatprep.subr.mxu0 %v3325
  %3359 = vmatpush1.msra.mxu0 %v3324
  %3360 = vmatprep.subr.mxu0 0.0
  %3361 = vmatpush1.msra.mxu0 0.0
  %3362 = vmatprep.subr.mxu0 0.0
  %3363 = vmatpush1.msra.mxu0 0.0
  %3364 = vmatprep.subr.mxu0 0.0
  %3365 = vmatpush1.msra.mxu0 0.0
  %3366 = vmatprep.subr.mxu0 0.0
  %3367 = vmatpush1.msra.mxu0 0.0
  %3368 = vmatprep.subr.mxu0 0.0
  %3369 = vmatpush1.msra.mxu0 0.0
  %3370 = vmatprep.subr.mxu0 0.0
  %3371 = vmatpush1.msra.mxu0 0.0
  %3372 = vmatprep.subr.mxu0 0.0
  %3373 = vmatpush1.msra.mxu0 0.0
  %3374 = vmatprep.subr.mxu0 0.0
  %3375 = vmatpush1.msra.mxu0 0.0
  %3376 = vmatprep.subr.mxu0 0.0
  %3377 = vmatpush1.msra.mxu0 0.0
  %3378 = vmatprep.subr.mxu0 0.0
  %3379 = vmatpush1.msra.mxu0 0.0
  %3380 = vmatprep.subr.mxu0 0.0
  %3381 = vmatpush1.msra.mxu0 0.0
  %3382 = vmatprep.subr.mxu0 0.0
  %3383 = vmatpush1.msra.mxu0 0.0
  %3384 = vmatprep.subr.mxu0 0.0
  %3385 = vmatpush1.msra.mxu0 0.0
  %3386 = vmatprep.subr.mxu0 0.0
  %3387 = vmatpush1.msra.mxu0 0.0
  %3388 = vmatprep.subr.mxu0 0.0
  %3389 = vmatpush1.msra.mxu0 0.0
  %3390 = vmatprep.subr.mxu0 0.0
  %3391 = vmatpush1.msra.mxu0 0.0
  %3392 = vmatprep.mubr.f32.mxu0 0.0
  %3393 = vmatmul.mubr.f32.gmra.mrb[0].mxu0 %v3263
  %v3394 = vpop.f32.mrb[0].mxu0
  %v3395 = vadd.f32 %v33, %v3394
  %v3396 = vpop.f32.mrb[0].mxu0
  %v3397 = vadd.f32 %v37, %v3396
  %3398 = vdwg.mxu0
  %3399 = vmatprep.subr.mxu0 %v3267
  %3400 = vmatpush1.msra.mxu0 %v3266
  %3401 = vmatprep.subr.mxu0 %v3271
  %3402 = vmatpush1.msra.mxu0 %v3270
  %3403 = vmatprep.subr.mxu0 %v3275
  %3404 = vmatpush1.msra.mxu0 %v3274
  %3405 = vmatprep.subr.mxu0 %v3279
  %3406 = vmatpush1.msra.mxu0 %v3278
  %3407 = vmatprep.subr.mxu0 %v3283
  %3408 = vmatpush1.msra.mxu0 %v3282
  %3409 = vmatprep.subr.mxu0 %v3287
  %3410 = vmatpush1.msra.mxu0 %v3286
  %3411 = vmatprep.subr.mxu0 %v3291
  %3412 = vmatpush1.msra.mxu0 %v3290
  %3413 = vmatprep.subr.mxu0 %v3295
  %3414 = vmatpush1.msra.mxu0 %v3294
  %3415 = vmatprep.subr.mxu0 %v3299
  %3416 = vmatpush1.msra.mxu0 %v3298
  %3417 = vmatprep.subr.mxu0 %v3303
  %3418 = vmatpush1.msra.mxu0 %v3302
  %3419 = vmatprep.subr.mxu0 %v3307
  %3420 = vmatpush1.msra.mxu0 %v3306
  %3421 = vmatprep.subr.mxu0 %v3311
  %3422 = vmatpush1.msra.mxu0 %v3310
  %3423 = vmatprep.subr.mxu0 %v3315
  %3424 = vmatpush1.msra.mxu0 %v3314
  %3425 = vmatprep.subr.mxu0 %v3319
  %3426 = vmatpush1.msra.mxu0 %v3318
  %3427 = vmatprep.subr.mxu0 %v3323
  %3428 = vmatpush1.msra.mxu0 %v3322
  %3429 = vmatprep.subr.mxu0 %v3327
  %3430 = vmatpush1.msra.mxu0 %v3326
  %3431 = vmatprep.subr.mxu0 0.0
  %3432 = vmatpush1.msra.mxu0 0.0
  %3433 = vmatprep.subr.mxu0 0.0
  %3434 = vmatpush1.msra.mxu0 0.0
  %3435 = vmatprep.subr.mxu0 0.0
  %3436 = vmatpush1.msra.mxu0 0.0
  %3437 = vmatprep.subr.mxu0 0.0
  %3438 = vmatpush1.msra.mxu0 0.0
  %3439 = vmatprep.subr.mxu0 0.0
  %3440 = vmatpush1.msra.mxu0 0.0
  %3441 = vmatprep.subr.mxu0 0.0
  %3442 = vmatpush1.msra.mxu0 0.0
  %3443 = vmatprep.subr.mxu0 0.0
  %3444 = vmatpush1.msra.mxu0 0.0
  %3445 = vmatprep.subr.mxu0 0.0
  %3446 = vmatpush1.msra.mxu0 0.0
  %3447 = vmatprep.subr.mxu0 0.0
  %3448 = vmatpush1.msra.mxu0 0.0
  %3449 = vmatprep.subr.mxu0 0.0
  %3450 = vmatpush1.msra.mxu0 0.0
  %3451 = vmatprep.subr.mxu0 0.0
  %3452 = vmatpush1.msra.mxu0 0.0
  %3453 = vmatprep.subr.mxu0 0.0
  %3454 = vmatpush1.msra.mxu0 0.0
  %3455 = vmatprep.subr.mxu0 0.0
  %3456 = vmatpush1.msra.mxu0 0.0
  %3457 = vmatprep.subr.mxu0 0.0
  %3458 = vmatpush1.msra.mxu0 0.0
  %3459 = vmatprep.subr.mxu0 0.0
  %3460 = vmatpush1.msra.mxu0 0.0
  %3461 = vmatprep.subr.mxu0 0.0
  %3462 = vmatpush1.msra.mxu0 0.0
  %3463 = vmatprep.mubr.f32.mxu0 0.0
  %3464 = vmatmul.mubr.f32.gmra.mrb[0].mxu0 %v3263
  %v3465 = vpop.f32.mrb[0].mxu0
  %v3466 = vadd.f32 %v41, %v3465
  %v3467 = vpop.f32.mrb[0].mxu0
  %v3468 = vadd.f32 %v45, %v3467
  %3469 = vdwg.mxu0
  %v3474 = vcombine.low %v3395, %v3397
  %v3475 = vcombine.low %v3466, %v3468
  %v3477 = vunpack.c.l.s4 1983009808
  %v3478 = vunpack.c.0.s8 %v3477
  %v3479 = vlaneseq
  %v3480 = vshrl.u32 %v3479, 7
  %v3481 = vsub.s32 %v3478, %v3480
  %v3482 = vrot.slane %v3474, %v3481
  %v3484 = vunpack.c.l.s4 1983009808
  %v3485 = vunpack.c.0.s8 %v3484
  %v3486 = vlaneseq
  %v3487 = vshrl.u32 %v3486, 7
  %v3488 = vsub.s32 %v3485, %v3487
  %v3489 = vrot.slane %v3475, %v3488
  %v3490 = vcombine.low %v3482, %v3489
  %s3492 = scalar_lea.vmem [#allocation2], 48
  %3493 = vst [vmem:[%s3492] sm:$0xff] %v3490
  %s3494 = scalar_lea.vmem %s0, 56
  %v3495 = vld [vmem:[%s3494] sm:$0xff]
  %v3496 = vld [vmem:[%s1] sm:$0xff]
  %v3497 = vld [vmem:[%s1 + $0x8] sm:$0xff]
  %v3498 = vld [vmem:[%s1 + $0x10] sm:$0xff]
  %v3499 = vld [vmem:[%s1 + $0x18] sm:$0xff]
  %v3500 = vld [vmem:[%s1 + $0x20] sm:$0xff]
  %v3501 = vld [vmem:[%s1 + $0x28] sm:$0xff]
  %v3502 = vld [vmem:[%s1 + $0x30] sm:$0xff]
  %v3503 = vld [vmem:[%s1 + $0x38] sm:$0xff]
  %v3504 = vld [vmem:[%s1 + $0x40] sm:$0xff]
  %v3505 = vld [vmem:[%s1 + $0x48] sm:$0xff]
  %v3506 = vld [vmem:[%s1 + $0x50] sm:$0xff]
  %v3507 = vld [vmem:[%s1 + $0x58] sm:$0xff]
  %v3508 = vld [vmem:[%s1 + $0x60] sm:$0xff]
  %v3509 = vld [vmem:[%s1 + $0x68] sm:$0xff]
  %v3510 = vld [vmem:[%s1 + $0x70] sm:$0xff]
  %v3511 = vld [vmem:[%s1 + $0x78] sm:$0xff]
  %v3512 = vld [vmem:[%s1 + $0x80] sm:$0xff]
  %v3513 = vld [vmem:[%s1 + $0x88] sm:$0xff]
  %v3514 = vld [vmem:[%s1 + $0x90] sm:$0xff]
  %v3515 = vld [vmem:[%s1 + $0x98] sm:$0xff]
  %v3516 = vld [vmem:[%s1 + $0xa0] sm:$0xff]
  %v3517 = vld [vmem:[%s1 + $0xa8] sm:$0xff]
  %v3518 = vld [vmem:[%s1 + $0xb0] sm:$0xff]
  %v3519 = vld [vmem:[%s1 + $0xb8] sm:$0xff]
  %v3520 = vld [vmem:[%s1 + $0xc0] sm:$0xff]
  %v3521 = vld [vmem:[%s1 + $0xc8] sm:$0xff]
  %v3522 = vld [vmem:[%s1 + $0xd0] sm:$0xff]
  %v3523 = vld [vmem:[%s1 + $0xd8] sm:$0xff]
  %v3524 = vld [vmem:[%s1 + $0xe0] sm:$0xff]
  %v3525 = vld [vmem:[%s1 + $0xe8] sm:$0xff]
  %v3526 = vld [vmem:[%s1 + $0xf0] sm:$0xff]
  %v3527 = vld [vmem:[%s1 + $0xf8] sm:$0xff]
  %v3528 = vld [vmem:[%s1 + $0x100] sm:$0xff]
  %v3529 = vld [vmem:[%s1 + $0x108] sm:$0xff]
  %v3530 = vld [vmem:[%s1 + $0x110] sm:$0xff]
  %v3531 = vld [vmem:[%s1 + $0x118] sm:$0xff]
  %v3532 = vld [vmem:[%s1 + $0x120] sm:$0xff]
  %v3533 = vld [vmem:[%s1 + $0x128] sm:$0xff]
  %v3534 = vld [vmem:[%s1 + $0x130] sm:$0xff]
  %v3535 = vld [vmem:[%s1 + $0x138] sm:$0xff]
  %v3536 = vld [vmem:[%s1 + $0x140] sm:$0xff]
  %v3537 = vld [vmem:[%s1 + $0x148] sm:$0xff]
  %v3538 = vld [vmem:[%s1 + $0x150] sm:$0xff]
  %v3539 = vld [vmem:[%s1 + $0x158] sm:$0xff]
  %v3540 = vld [vmem:[%s1 + $0x160] sm:$0xff]
  %v3541 = vld [vmem:[%s1 + $0x168] sm:$0xff]
  %v3542 = vld [vmem:[%s1 + $0x170] sm:$0xff]
  %v3543 = vld [vmem:[%s1 + $0x178] sm:$0xff]
  %v3544 = vld [vmem:[%s1 + $0x180] sm:$0xff]
  %v3545 = vld [vmem:[%s1 + $0x188] sm:$0xff]
  %v3546 = vld [vmem:[%s1 + $0x190] sm:$0xff]
  %v3547 = vld [vmem:[%s1 + $0x198] sm:$0xff]
  %v3548 = vld [vmem:[%s1 + $0x1a0] sm:$0xff]
  %v3549 = vld [vmem:[%s1 + $0x1a8] sm:$0xff]
  %v3550 = vld [vmem:[%s1 + $0x1b0] sm:$0xff]
  %v3551 = vld [vmem:[%s1 + $0x1b8] sm:$0xff]
  %v3552 = vld [vmem:[%s1 + $0x1c0] sm:$0xff]
  %v3553 = vld [vmem:[%s1 + $0x1c8] sm:$0xff]
  %v3554 = vld [vmem:[%s1 + $0x1d0] sm:$0xff]
  %v3555 = vld [vmem:[%s1 + $0x1d8] sm:$0xff]
  %v3556 = vld [vmem:[%s1 + $0x1e0] sm:$0xff]
  %v3557 = vld [vmem:[%s1 + $0x1e8] sm:$0xff]
  %v3558 = vld [vmem:[%s1 + $0x1f0] sm:$0xff]
  %v3559 = vld [vmem:[%s1 + $0x1f8] sm:$0xff]
  %3560 = vmatprep.subr.mxu0 %v3497
  %3561 = vmatpush1.msra.mxu0 %v3496
  %3562 = vmatprep.subr.mxu0 %v3501
  %3563 = vmatpush1.msra.mxu0 %v3500
  %3564 = vmatprep.subr.mxu0 %v3505
  %3565 = vmatpush1.msra.mxu0 %v3504
  %3566 = vmatprep.subr.mxu0 %v3509
  %3567 = vmatpush1.msra.mxu0 %v3508
  %3568 = vmatprep.subr.mxu0 %v3513
  %3569 = vmatpush1.msra.mxu0 %v3512
  %3570 = vmatprep.subr.mxu0 %v3517
  %3571 = vmatpush1.msra.mxu0 %v3516
  %3572 = vmatprep.subr.mxu0 %v3521
  %3573 = vmatpush1.msra.mxu0 %v3520
  %3574 = vmatprep.subr.mxu0 %v3525
  %3575 = vmatpush1.msra.mxu0 %v3524
  %3576 = vmatprep.subr.mxu0 %v3529
  %3577 = vmatpush1.msra.mxu0 %v3528
  %3578 = vmatprep.subr.mxu0 %v3533
  %3579 = vmatpush1.msra.mxu0 %v3532
  %3580 = vmatprep.subr.mxu0 %v3537
  %3581 = vmatpush1.msra.mxu0 %v3536
  %3582 = vmatprep.subr.mxu0 %v3541
  %3583 = vmatpush1.msra.mxu0 %v3540
  %3584 = vmatprep.subr.mxu0 %v3545
  %3585 = vmatpush1.msra.mxu0 %v3544
  %3586 = vmatprep.subr.mxu0 %v3549
  %3587 = vmatpush1.msra.mxu0 %v3548
  %3588 = vmatprep.subr.mxu0 %v3553
  %3589 = vmatpush1.msra.mxu0 %v3552
  %3590 = vmatprep.subr.mxu0 %v3557
  %3591 = vmatpush1.msra.mxu0 %v3556
  %3592 = vmatprep.subr.mxu0 0.0
  %3593 = vmatpush1.msra.mxu0 0.0
  %3594 = vmatprep.subr.mxu0 0.0
  %3595 = vmatpush1.msra.mxu0 0.0
  %3596 = vmatprep.subr.mxu0 0.0
  %3597 = vmatpush1.msra.mxu0 0.0
  %3598 = vmatprep.subr.mxu0 0.0
  %3599 = vmatpush1.msra.mxu0 0.0
  %3600 = vmatprep.subr.mxu0 0.0
  %3601 = vmatpush1.msra.mxu0 0.0
  %3602 = vmatprep.subr.mxu0 0.0
  %3603 = vmatpush1.msra.mxu0 0.0
  %3604 = vmatprep.subr.mxu0 0.0
  %3605 = vmatpush1.msra.mxu0 0.0
  %3606 = vmatprep.subr.mxu0 0.0
  %3607 = vmatpush1.msra.mxu0 0.0
  %3608 = vmatprep.subr.mxu0 0.0
  %3609 = vmatpush1.msra.mxu0 0.0
  %3610 = vmatprep.subr.mxu0 0.0
  %3611 = vmatpush1.msra.mxu0 0.0
  %3612 = vmatprep.subr.mxu0 0.0
  %3613 = vmatpush1.msra.mxu0 0.0
  %3614 = vmatprep.subr.mxu0 0.0
  %3615 = vmatpush1.msra.mxu0 0.0
  %3616 = vmatprep.subr.mxu0 0.0
  %3617 = vmatpush1.msra.mxu0 0.0
  %3618 = vmatprep.subr.mxu0 0.0
  %3619 = vmatpush1.msra.mxu0 0.0
  %3620 = vmatprep.subr.mxu0 0.0
  %3621 = vmatpush1.msra.mxu0 0.0
  %3622 = vmatprep.subr.mxu0 0.0
  %3623 = vmatpush1.msra.mxu0 0.0
  %3624 = vmatprep.mubr.f32.mxu0 0.0
  %3625 = vmatmul.mubr.f32.gmra.mrb[0].mxu0 %v3263
  %v3626 = vpop.f32.mrb[0].mxu0
  %v3627 = vadd.f32 0.0, %v3626
  %v3628 = vpop.f32.mrb[0].mxu0
  %v3629 = vadd.f32 0.0, %v3628
  %3630 = vdwg.mxu0
  %3631 = vmatprep.subr.mxu0 %v3499
  %3632 = vmatpush1.msra.mxu0 %v3498
  %3633 = vmatprep.subr.mxu0 %v3503
  %3634 = vmatpush1.msra.mxu0 %v3502
  %3635 = vmatprep.subr.mxu0 %v3507
  %3636 = vmatpush1.msra.mxu0 %v3506
  %3637 = vmatprep.subr.mxu0 %v3511
  %3638 = vmatpush1.msra.mxu0 %v3510
  %3639 = vmatprep.subr.mxu0 %v3515
  %3640 = vmatpush1.msra.mxu0 %v3514
  %3641 = vmatprep.subr.mxu0 %v3519
  %3642 = vmatpush1.msra.mxu0 %v3518
  %3643 = vmatprep.subr.mxu0 %v3523
  %3644 = vmatpush1.msra.mxu0 %v3522
  %3645 = vmatprep.subr.mxu0 %v3527
  %3646 = vmatpush1.msra.mxu0 %v3526
  %3647 = vmatprep.subr.mxu0 %v3531
  %3648 = vmatpush1.msra.mxu0 %v3530
  %3649 = vmatprep.subr.mxu0 %v3535
  %3650 = vmatpush1.msra.mxu0 %v3534
  %3651 = vmatprep.subr.mxu0 %v3539
  %3652 = vmatpush1.msra.mxu0 %v3538
  %3653 = vmatprep.subr.mxu0 %v3543
  %3654 = vmatpush1.msra.mxu0 %v3542
  %3655 = vmatprep.subr.mxu0 %v3547
  %3656 = vmatpush1.msra.mxu0 %v3546
  %3657 = vmatprep.subr.mxu0 %v3551
  %3658 = vmatpush1.msra.mxu0 %v3550
  %3659 = vmatprep.subr.mxu0 %v3555
  %3660 = vmatpush1.msra.mxu0 %v3554
  %3661 = vmatprep.subr.mxu0 %v3559
  %3662 = vmatpush1.msra.mxu0 %v3558
  %3663 = vmatprep.subr.mxu0 0.0
  %3664 = vmatpush1.msra.mxu0 0.0
  %3665 = vmatprep.subr.mxu0 0.0
  %3666 = vmatpush1.msra.mxu0 0.0
  %3667 = vmatprep.subr.mxu0 0.0
  %3668 = vmatpush1.msra.mxu0 0.0
  %3669 = vmatprep.subr.mxu0 0.0
  %3670 = vmatpush1.msra.mxu0 0.0
  %3671 = vmatprep.subr.mxu0 0.0
  %3672 = vmatpush1.msra.mxu0 0.0
  %3673 = vmatprep.subr.mxu0 0.0
  %3674 = vmatpush1.msra.mxu0 0.0
  %3675 = vmatprep.subr.mxu0 0.0
  %3676 = vmatpush1.msra.mxu0 0.0
  %3677 = vmatprep.subr.mxu0 0.0
  %3678 = vmatpush1.msra.mxu0 0.0
  %3679 = vmatprep.subr.mxu0 0.0
  %3680 = vmatpush1.msra.mxu0 0.0
  %3681 = vmatprep.subr.mxu0 0.0
  %3682 = vmatpush1.msra.mxu0 0.0
  %3683 = vmatprep.subr.mxu0 0.0
  %3684 = vmatpush1.msra.mxu0 0.0
  %3685 = vmatprep.subr.mxu0 0.0
  %3686 = vmatpush1.msra.mxu0 0.0
  %3687 = vmatprep.subr.mxu0 0.0
  %3688 = vmatpush1.msra.mxu0 0.0
  %3689 = vmatprep.subr.mxu0 0.0
  %3690 = vmatpush1.msra.mxu0 0.0
  %3691 = vmatprep.subr.mxu0 0.0
  %3692 = vmatpush1.msra.mxu0 0.0
  %3693 = vmatprep.subr.mxu0 0.0
  %3694 = vmatpush1.msra.mxu0 0.0
  %3695 = vmatprep.mubr.f32.mxu0 0.0
  %3696 = vmatmul.mubr.f32.gmra.mrb[0].mxu0 %v3263
  %v3697 = vpop.f32.mrb[0].mxu0
  %v3698 = vadd.f32 0.0, %v3697
  %v3699 = vpop.f32.mrb[0].mxu0
  %v3700 = vadd.f32 0.0, %v3699
  %3701 = vdwg.mxu0
  %v3706 = vcombine.low %v3627, %v3629
  %v3707 = vcombine.low %v3698, %v3700
  %v3709 = vunpack.c.l.s4 1983009808
  %v3710 = vunpack.c.0.s8 %v3709
  %v3711 = vlaneseq
  %v3712 = vshrl.u32 %v3711, 7
  %v3713 = vsub.s32 %v3710, %v3712
  %v3714 = vrot.slane %v3706, %v3713
  %v3716 = vunpack.c.l.s4 1983009808
  %v3717 = vunpack.c.0.s8 %v3716
  %v3718 = vlaneseq
  %v3719 = vshrl.u32 %v3718, 7
  %v3720 = vsub.s32 %v3717, %v3719
  %v3721 = vrot.slane %v3707, %v3720
  %v3722 = vcombine.low %v3714, %v3721
  %v3724 = vadd.f32 %v3495, %v3722
  %v3725 = vxor.u32 %v3724, 2147483648
  %v3726 = vmul.f32 %v3725, 1.442695
  %v3727 = vpow.pop %v3726
  %v3728 = vadd.f32 %v3727, 1.0
  %v3729 = vrcp.pop %v3728
  %v3730 = vmul.f32 1.0, %v3729
  %v3732 = vrot.slane %v3724, 2
  %v3734 = vxor.u32 %v3732, 2147483648
  %v3735 = vmul.f32 %v3734, 1.442695
  %v3736 = vpow.pop %v3735
  %v3737 = vadd.f32 %v3736, 1.0
  %v3738 = vrcp.pop %v3737
  %v3739 = vmul.f32 1.0, %v3738
  %v3740 = vrot.slane %v3724, 4
  %v3742 = vtanh.pop %v3740
  %v3743 = vrot.slane %v3724, 6
  %v3745 = vxor.u32 %v3743, 2147483648
  %v3746 = vmul.f32 %v3745, 1.442695
  %v3747 = vpow.pop %v3746
  %v3748 = vadd.f32 %v3747, 1.0
  %v3749 = vrcp.pop %v3748
  %v3750 = vmul.f32 1.0, %v3749
  %v3751 = vmul.f32 %v3739, %v3261
  %v3752 = vmul.f32 %v3730, %v3742
  %v3753 = vadd.f32 %v3751, %v3752
  %v3754 = vtanh.pop %v3753
  %v3755 = vmul.f32 %v3750, %v3754
  %v3756 = vld [vmem:[%s2] sm:$0xff]
  %v3757 = vld [vmem:[%s2 + $0x8] sm:$0xff]
  %v3758 = vld [vmem:[%s2 + $0x10] sm:$0xff]
  %v3759 = vld [vmem:[%s2 + $0x18] sm:$0xff]
  %v3760 = vld [vmem:[%s2 + $0x20] sm:$0xff]
  %v3761 = vld [vmem:[%s2 + $0x28] sm:$0xff]
  %v3762 = vld [vmem:[%s2 + $0x30] sm:$0xff]
  %v3763 = vld [vmem:[%s2 + $0x38] sm:$0xff]
  %v3764 = vld [vmem:[%s2 + $0x40] sm:$0xff]
  %v3765 = vld [vmem:[%s2 + $0x48] sm:$0xff]
  %v3766 = vld [vmem:[%s2 + $0x50] sm:$0xff]
  %v3767 = vld [vmem:[%s2 + $0x58] sm:$0xff]
  %v3768 = vld [vmem:[%s2 + $0x60] sm:$0xff]
  %v3769 = vld [vmem:[%s2 + $0x68] sm:$0xff]
  %v3770 = vld [vmem:[%s2 + $0x70] sm:$0xff]
  %v3771 = vld [vmem:[%s2 + $0x78] sm:$0xff]
  %v3772 = vld [vmem:[%s2 + $0x80] sm:$0xff]
  %v3773 = vld [vmem:[%s2 + $0x88] sm:$0xff]
  %v3774 = vld [vmem:[%s2 + $0x90] sm:$0xff]
  %v3775 = vld [vmem:[%s2 + $0x98] sm:$0xff]
  %v3776 = vld [vmem:[%s2 + $0xa0] sm:$0xff]
  %v3777 = vld [vmem:[%s2 + $0xa8] sm:$0xff]
  %v3778 = vld [vmem:[%s2 + $0xb0] sm:$0xff]
  %v3779 = vld [vmem:[%s2 + $0xb8] sm:$0xff]
  %v3780 = vld [vmem:[%s2 + $0xc0] sm:$0xff]
  %v3781 = vld [vmem:[%s2 + $0xc8] sm:$0xff]
  %v3782 = vld [vmem:[%s2 + $0xd0] sm:$0xff]
  %v3783 = vld [vmem:[%s2 + $0xd8] sm:$0xff]
  %v3784 = vld [vmem:[%s2 + $0xe0] sm:$0xff]
  %v3785 = vld [vmem:[%s2 + $0xe8] sm:$0xff]
  %v3786 = vld [vmem:[%s2 + $0xf0] sm:$0xff]
  %v3787 = vld [vmem:[%s2 + $0xf8] sm:$0xff]
  %v3788 = vld [vmem:[%s2 + $0x100] sm:$0xff]
  %v3789 = vld [vmem:[%s2 + $0x108] sm:$0xff]
  %v3790 = vld [vmem:[%s2 + $0x110] sm:$0xff]
  %v3791 = vld [vmem:[%s2 + $0x118] sm:$0xff]
  %v3792 = vld [vmem:[%s2 + $0x120] sm:$0xff]
  %v3793 = vld [vmem:[%s2 + $0x128] sm:$0xff]
  %v3794 = vld [vmem:[%s2 + $0x130] sm:$0xff]
  %v3795 = vld [vmem:[%s2 + $0x138] sm:$0xff]
  %v3796 = vld [vmem:[%s2 + $0x140] sm:$0xff]
  %v3797 = vld [vmem:[%s2 + $0x148] sm:$0xff]
  %v3798 = vld [vmem:[%s2 + $0x150] sm:$0xff]
  %v3799 = vld [vmem:[%s2 + $0x158] sm:$0xff]
  %v3800 = vld [vmem:[%s2 + $0x160] sm:$0xff]
  %v3801 = vld [vmem:[%s2 + $0x168] sm:$0xff]
  %v3802 = vld [vmem:[%s2 + $0x170] sm:$0xff]
  %v3803 = vld [vmem:[%s2 + $0x178] sm:$0xff]
  %v3804 = vld [vmem:[%s2 + $0x180] sm:$0xff]
  %v3805 = vld [vmem:[%s2 + $0x188] sm:$0xff]
  %v3806 = vld [vmem:[%s2 + $0x190] sm:$0xff]
  %v3807 = vld [vmem:[%s2 + $0x198] sm:$0xff]
  %v3808 = vld [vmem:[%s2 + $0x1a0] sm:$0xff]
  %v3809 = vld [vmem:[%s2 + $0x1a8] sm:$0xff]
  %v3810 = vld [vmem:[%s2 + $0x1b0] sm:$0xff]
  %v3811 = vld [vmem:[%s2 + $0x1b8] sm:$0xff]
  %v3812 = vld [vmem:[%s2 + $0x1c0] sm:$0xff]
  %v3813 = vld [vmem:[%s2 + $0x1c8] sm:$0xff]
  %v3814 = vld [vmem:[%s2 + $0x1d0] sm:$0xff]
  %v3815 = vld [vmem:[%s2 + $0x1d8] sm:$0xff]
  %v3816 = vld [vmem:[%s2 + $0x1e0] sm:$0xff]
  %v3817 = vld [vmem:[%s2 + $0x1e8] sm:$0xff]
  %v3818 = vld [vmem:[%s2 + $0x1f0] sm:$0xff]
  %v3819 = vld [vmem:[%s2 + $0x1f8] sm:$0xff]
  %3820 = vmatprep.subr.mxu0 %v3757
  %3821 = vmatpush1.msra.mxu0 %v3756
  %3822 = vmatprep.subr.mxu0 %v3761
  %3823 = vmatpush1.msra.mxu0 %v3760
  %3824 = vmatprep.subr.mxu0 %v3765
  %3825 = vmatpush1.msra.mxu0 %v3764
  %3826 = vmatprep.subr.mxu0 %v3769
  %3827 = vmatpush1.msra.mxu0 %v3768
  %3828 = vmatprep.subr.mxu0 %v3773
  %3829 = vmatpush1.msra.mxu0 %v3772
  %3830 = vmatprep.subr.mxu0 %v3777
  %3831 = vmatpush1.msra.mxu0 %v3776
  %3832 = vmatprep.subr.mxu0 %v3781
  %3833 = vmatpush1.msra.mxu0 %v3780
  %3834 = vmatprep.subr.mxu0 %v3785
  %3835 = vmatpush1.msra.mxu0 %v3784
  %3836 = vmatprep.subr.mxu0 %v3789
  %3837 = vmatpush1.msra.mxu0 %v3788
  %3838 = vmatprep.subr.mxu0 %v3793
  %3839 = vmatpush1.msra.mxu0 %v3792
  %3840 = vmatprep.subr.mxu0 %v3797
  %3841 = vmatpush1.msra.mxu0 %v3796
  %3842 = vmatprep.subr.mxu0 %v3801
  %3843 = vmatpush1.msra.mxu0 %v3800
  %3844 = vmatprep.subr.mxu0 %v3805
  %3845 = vmatpush1.msra.mxu0 %v3804
  %3846 = vmatprep.subr.mxu0 %v3809
  %3847 = vmatpush1.msra.mxu0 %v3808
  %3848 = vmatprep.subr.mxu0 %v3813
  %3849 = vmatpush1.msra.mxu0 %v3812
  %3850 = vmatprep.subr.mxu0 %v3817
  %3851 = vmatpush1.msra.mxu0 %v3816
  %3852 = vmatprep.subr.mxu0 0.0
  %3853 = vmatpush1.msra.mxu0 0.0
  %3854 = vmatprep.subr.mxu0 0.0
  %3855 = vmatpush1.msra.mxu0 0.0
  %3856 = vmatprep.subr.mxu0 0.0
  %3857 = vmatpush1.msra.mxu0 0.0
  %3858 = vmatprep.subr.mxu0 0.0
  %3859 = vmatpush1.msra.mxu0 0.0
  %3860 = vmatprep.subr.mxu0 0.0
  %3861 = vmatpush1.msra.mxu0 0.0
  %3862 = vmatprep.subr.mxu0 0.0
  %3863 = vmatpush1.msra.mxu0 0.0
  %3864 = vmatprep.subr.mxu0 0.0
  %3865 = vmatpush1.msra.mxu0 0.0
  %3866 = vmatprep.subr.mxu0 0.0
  %3867 = vmatpush1.msra.mxu0 0.0
  %3868 = vmatprep.subr.mxu0 0.0
  %3869 = vmatpush1.msra.mxu0 0.0
  %3870 = vmatprep.subr.mxu0 0.0
  %3871 = vmatpush1.msra.mxu0 0.0
  %3872 = vmatprep.subr.mxu0 0.0
  %3873 = vmatpush1.msra.mxu0 0.0
  %3874 = vmatprep.subr.mxu0 0.0
  %3875 = vmatpush1.msra.mxu0 0.0
  %3876 = vmatprep.subr.mxu0 0.0
  %3877 = vmatpush1.msra.mxu0 0.0
  %3878 = vmatprep.subr.mxu0 0.0
  %3879 = vmatpush1.msra.mxu0 0.0
  %3880 = vmatprep.subr.mxu0 0.0
  %3881 = vmatpush1.msra.mxu0 0.0
  %3882 = vmatprep.subr.mxu0 0.0
  %3883 = vmatpush1.msra.mxu0 0.0
  %3884 = vmatprep.mubr.f32.mxu0 0.0
  %3885 = vmatmul.mubr.f32.gmra.mrb[0].mxu0 %v3755
  %v3886 = vpop.f32.mrb[0].mxu0
  %v3887 = vadd.f32 %v33, %v3886
  %v3888 = vpop.f32.mrb[0].mxu0
  %v3889 = vadd.f32 %v37, %v3888
  %3890 = vdwg.mxu0
  %3891 = vmatprep.subr.mxu0 %v3759
  %3892 = vmatpush1.msra.mxu0 %v3758
  %3893 = vmatprep.subr.mxu0 %v3763
  %3894 = vmatpush1.msra.mxu0 %v3762
  %3895 = vmatprep.subr.mxu0 %v3767
  %3896 = vmatpush1.msra.mxu0 %v3766
  %3897 = vmatprep.subr.mxu0 %v3771
  %3898 = vmatpush1.msra.mxu0 %v3770
  %3899 = vmatprep.subr.mxu0 %v3775
  %3900 = vmatpush1.msra.mxu0 %v3774
  %3901 = vmatprep.subr.mxu0 %v3779
  %3902 = vmatpush1.msra.mxu0 %v3778
  %3903 = vmatprep.subr.mxu0 %v3783
  %3904 = vmatpush1.msra.mxu0 %v3782
  %3905 = vmatprep.subr.mxu0 %v3787
  %3906 = vmatpush1.msra.mxu0 %v3786
  %3907 = vmatprep.subr.mxu0 %v3791
  %3908 = vmatpush1.msra.mxu0 %v3790
  %3909 = vmatprep.subr.mxu0 %v3795
  %3910 = vmatpush1.msra.mxu0 %v3794
  %3911 = vmatprep.subr.mxu0 %v3799
  %3912 = vmatpush1.msra.mxu0 %v3798
  %3913 = vmatprep.subr.mxu0 %v3803
  %3914 = vmatpush1.msra.mxu0 %v3802
  %3915 = vmatprep.subr.mxu0 %v3807
  %3916 = vmatpush1.msra.mxu0 %v3806
  %3917 = vmatprep.subr.mxu0 %v3811
  %3918 = vmatpush1.msra.mxu0 %v3810
  %3919 = vmatprep.subr.mxu0 %v3815
  %3920 = vmatpush1.msra.mxu0 %v3814
  %3921 = vmatprep.subr.mxu0 %v3819
  %3922 = vmatpush1.msra.mxu0 %v3818
  %3923 = vmatprep.subr.mxu0 0.0
  %3924 = vmatpush1.msra.mxu0 0.0
  %3925 = vmatprep.subr.mxu0 0.0
  %3926 = vmatpush1.msra.mxu0 0.0
  %3927 = vmatprep.subr.mxu0 0.0
  %3928 = vmatpush1.msra.mxu0 0.0
  %3929 = vmatprep.subr.mxu0 0.0
  %3930 = vmatpush1.msra.mxu0 0.0
  %3931 = vmatprep.subr.mxu0 0.0
  %3932 = vmatpush1.msra.mxu0 0.0
  %3933 = vmatprep.subr.mxu0 0.0
  %3934 = vmatpush1.msra.mxu0 0.0
  %3935 = vmatprep.subr.mxu0 0.0
  %3936 = vmatpush1.msra.mxu0 0.0
  %3937 = vmatprep.subr.mxu0 0.0
  %3938 = vmatpush1.msra.mxu0 0.0
  %3939 = vmatprep.subr.mxu0 0.0
  %3940 = vmatpush1.msra.mxu0 0.0
  %3941 = vmatprep.subr.mxu0 0.0
  %3942 = vmatpush1.msra.mxu0 0.0
  %3943 = vmatprep.subr.mxu0 0.0
  %3944 = vmatpush1.msra.mxu0 0.0
  %3945 = vmatprep.subr.mxu0 0.0
  %3946 = vmatpush1.msra.mxu0 0.0
  %3947 = vmatprep.subr.mxu0 0.0
  %3948 = vmatpush1.msra.mxu0 0.0
  %3949 = vmatprep.subr.mxu0 0.0
  %3950 = vmatpush1.msra.mxu0 0.0
  %3951 = vmatprep.subr.mxu0 0.0
  %3952 = vmatpush1.msra.mxu0 0.0
  %3953 = vmatprep.subr.mxu0 0.0
  %3954 = vmatpush1.msra.mxu0 0.0
  %3955 = vmatprep.mubr.f32.mxu0 0.0
  %3956 = vmatmul.mubr.f32.gmra.mrb[0].mxu0 %v3755
  %v3957 = vpop.f32.mrb[0].mxu0
  %v3958 = vadd.f32 %v41, %v3957
  %v3959 = vpop.f32.mrb[0].mxu0
  %v3960 = vadd.f32 %v45, %v3959
  %3961 = vdwg.mxu0
  %v3966 = vcombine.low %v3887, %v3889
  %v3967 = vcombine.low %v3958, %v3960
  %v3969 = vunpack.c.l.s4 1983009808
  %v3970 = vunpack.c.0.s8 %v3969
  %v3971 = vlaneseq
  %v3972 = vshrl.u32 %v3971, 7
  %v3973 = vsub.s32 %v3970, %v3972
  %v3974 = vrot.slane %v3966, %v3973
  %v3976 = vunpack.c.l.s4 1983009808
  %v3977 = vunpack.c.0.s8 %v3976
  %v3978 = vlaneseq
  %v3979 = vshrl.u32 %v3978, 7
  %v3980 = vsub.s32 %v3977, %v3979
  %v3981 = vrot.slane %v3967, %v3980
  %v3982 = vcombine.low %v3974, %v3981
  %s3984 = scalar_lea.vmem [#allocation2], 56
  %3985 = vst [vmem:[%s3984] sm:$0xff] %v3982
  %3986 = vst [vmem:[#allocation3] sm:$0x3] %v3755
  %3987 = vst [vmem:[#allocation4] sm:$0x3] %v3753
  %v3988 = vld [vmem:[#allocation5] sm:$0x3]
  %v3989 = vld [vmem:[#allocation6] sm:$0x3]
  %v3990 = vld [vmem:[#allocation2] sm:$0xff]
  %v3991 = vld [vmem:[%s3] sm:$0xff]
  %v3992 = vld [vmem:[%s3 + $0x8] sm:$0xff]
  %v3993 = vld [vmem:[%s3 + $0x10] sm:$0xff]
  %v3994 = vld [vmem:[%s3 + $0x18] sm:$0xff]
  %v3995 = vld [vmem:[%s3 + $0x20] sm:$0xff]
  %v3996 = vld [vmem:[%s3 + $0x28] sm:$0xff]
  %v3997 = vld [vmem:[%s3 + $0x30] sm:$0xff]
  %v3998 = vld [vmem:[%s3 + $0x38] sm:$0xff]
  %v3999 = vld [vmem:[%s3 + $0x40] sm:$0xff]
  %v4000 = vld [vmem:[%s3 + $0x48] sm:$0xff]
  %v4001 = vld [vmem:[%s3 + $0x50] sm:$0xff]
  %v4002 = vld [vmem:[%s3 + $0x58] sm:$0xff]
  %v4003 = vld [vmem:[%s3 + $0x60] sm:$0xff]
  %v4004 = vld [vmem:[%s3 + $0x68] sm:$0xff]
  %v4005 = vld [vmem:[%s3 + $0x70] sm:$0xff]
  %v4006 = vld [vmem:[%s3 + $0x78] sm:$0xff]
  %v4007 = vld [vmem:[%s3 + $0x80] sm:$0xff]
  %v4008 = vld [vmem:[%s3 + $0x88] sm:$0xff]
  %v4009 = vld [vmem:[%s3 + $0x90] sm:$0xff]
  %v4010 = vld [vmem:[%s3 + $0x98] sm:$0xff]
  %v4011 = vld [vmem:[%s3 + $0xa0] sm:$0xff]
  %v4012 = vld [vmem:[%s3 + $0xa8] sm:$0xff]
  %v4013 = vld [vmem:[%s3 + $0xb0] sm:$0xff]
  %v4014 = vld [vmem:[%s3 + $0xb8] sm:$0xff]
  %v4015 = vld [vmem:[%s3 + $0xc0] sm:$0xff]
  %v4016 = vld [vmem:[%s3 + $0xc8] sm:$0xff]
  %v4017 = vld [vmem:[%s3 + $0xd0] sm:$0xff]
  %v4018 = vld [vmem:[%s3 + $0xd8] sm:$0xff]
  %v4019 = vld [vmem:[%s3 + $0xe0] sm:$0xff]
  %v4020 = vld [vmem:[%s3 + $0xe8] sm:$0xff]
  %v4021 = vld [vmem:[%s3 + $0xf0] sm:$0xff]
  %v4022 = vld [vmem:[%s3 + $0xf8] sm:$0xff]
  %v4023 = vld [vmem:[%s3 + $0x100] sm:$0xff]
  %v4024 = vld [vmem:[%s3 + $0x108] sm:$0xff]
  %v4025 = vld [vmem:[%s3 + $0x110] sm:$0xff]
  %v4026 = vld [vmem:[%s3 + $0x118] sm:$0xff]
  %v4027 = vld [vmem:[%s3 + $0x120] sm:$0xff]
  %v4028 = vld [vmem:[%s3 + $0x128] sm:$0xff]
  %v4029 = vld [vmem:[%s3 + $0x130] sm:$0xff]
  %v4030 = vld [vmem:[%s3 + $0x138] sm:$0xff]
  %v4031 = vld [vmem:[%s3 + $0x140] sm:$0xff]
  %v4032 = vld [vmem:[%s3 + $0x148] sm:$0xff]
  %v4033 = vld [vmem:[%s3 + $0x150] sm:$0xff]
  %v4034 = vld [vmem:[%s3 + $0x158] sm:$0xff]
  %v4035 = vld [vmem:[%s3 + $0x160] sm:$0xff]
  %v4036 = vld [vmem:[%s3 + $0x168] sm:$0xff]
  %v4037 = vld [vmem:[%s3 + $0x170] sm:$0xff]
  %v4038 = vld [vmem:[%s3 + $0x178] sm:$0xff]
  %v4039 = vld [vmem:[%s3 + $0x180] sm:$0xff]
  %v4040 = vld [vmem:[%s3 + $0x188] sm:$0xff]
  %v4041 = vld [vmem:[%s3 + $0x190] sm:$0xff]
  %v4042 = vld [vmem:[%s3 + $0x198] sm:$0xff]
  %v4043 = vld [vmem:[%s3 + $0x1a0] sm:$0xff]
  %v4044 = vld [vmem:[%s3 + $0x1a8] sm:$0xff]
  %v4045 = vld [vmem:[%s3 + $0x1b0] sm:$0xff]
  %v4046 = vld [vmem:[%s3 + $0x1b8] sm:$0xff]
  %v4047 = vld [vmem:[%s3 + $0x1c0] sm:$0xff]
  %v4048 = vld [vmem:[%s3 + $0x1c8] sm:$0xff]
  %v4049 = vld [vmem:[%s3 + $0x1d0] sm:$0xff]
  %v4050 = vld [vmem:[%s3 + $0x1d8] sm:$0xff]
  %v4051 = vld [vmem:[%s3 + $0x1e0] sm:$0xff]
  %v4052 = vld [vmem:[%s3 + $0x1e8] sm:$0xff]
  %v4053 = vld [vmem:[%s3 + $0x1f0] sm:$0xff]
  %v4054 = vld [vmem:[%s3 + $0x1f8] sm:$0xff]
  %4055 = vmatprep.subr.mxu0 %v3992
  %4056 = vmatpush1.msra.mxu0 %v3991
  %4057 = vmatprep.subr.mxu0 %v3996
  %4058 = vmatpush1.msra.mxu0 %v3995
  %4059 = vmatprep.subr.mxu0 %v4000
  %4060 = vmatpush1.msra.mxu0 %v3999
  %4061 = vmatprep.subr.mxu0 %v4004
  %4062 = vmatpush1.msra.mxu0 %v4003
  %4063 = vmatprep.subr.mxu0 %v4008
  %4064 = vmatpush1.msra.mxu0 %v4007
  %4065 = vmatprep.subr.mxu0 %v4012
  %4066 = vmatpush1.msra.mxu0 %v4011
  %4067 = vmatprep.subr.mxu0 %v4016
  %4068 = vmatpush1.msra.mxu0 %v4015
  %4069 = vmatprep.subr.mxu0 %v4020
  %4070 = vmatpush1.msra.mxu0 %v4019
  %4071 = vmatprep.subr.mxu0 %v4024
  %4072 = vmatpush1.msra.mxu0 %v4023
  %4073 = vmatprep.subr.mxu0 %v4028
  %4074 = vmatpush1.msra.mxu0 %v4027
  %4075 = vmatprep.subr.mxu0 %v4032
  %4076 = vmatpush1.msra.mxu0 %v4031
  %4077 = vmatprep.subr.mxu0 %v4036
  %4078 = vmatpush1.msra.mxu0 %v4035
  %4079 = vmatprep.subr.mxu0 %v4040
  %4080 = vmatpush1.msra.mxu0 %v4039
  %4081 = vmatprep.subr.mxu0 %v4044
  %4082 = vmatpush1.msra.mxu0 %v4043
  %4083 = vmatprep.subr.mxu0 %v4048
  %4084 = vmatpush1.msra.mxu0 %v4047
  %4085 = vmatprep.subr.mxu0 %v4052
  %4086 = vmatpush1.msra.mxu0 %v4051
  %4087 = vmatprep.subr.mxu0 0.0
  %4088 = vmatpush1.msra.mxu0 0.0
  %4089 = vmatprep.subr.mxu0 0.0
  %4090 = vmatpush1.msra.mxu0 0.0
  %4091 = vmatprep.subr.mxu0 0.0
  %4092 = vmatpush1.msra.mxu0 0.0
  %4093 = vmatprep.subr.mxu0 0.0
  %4094 = vmatpush1.msra.mxu0 0.0
  %4095 = vmatprep.subr.mxu0 0.0
  %4096 = vmatpush1.msra.mxu0 0.0
  %4097 = vmatprep.subr.mxu0 0.0
  %4098 = vmatpush1.msra.mxu0 0.0
  %4099 = vmatprep.subr.mxu0 0.0
  %4100 = vmatpush1.msra.mxu0 0.0
  %4101 = vmatprep.subr.mxu0 0.0
  %4102 = vmatpush1.msra.mxu0 0.0
  %4103 = vmatprep.subr.mxu0 0.0
  %4104 = vmatpush1.msra.mxu0 0.0
  %4105 = vmatprep.subr.mxu0 0.0
  %4106 = vmatpush1.msra.mxu0 0.0
  %4107 = vmatprep.subr.mxu0 0.0
  %4108 = vmatpush1.msra.mxu0 0.0
  %4109 = vmatprep.subr.mxu0 0.0
  %4110 = vmatpush1.msra.mxu0 0.0
  %4111 = vmatprep.subr.mxu0 0.0
  %4112 = vmatpush1.msra.mxu0 0.0
  %4113 = vmatprep.subr.mxu0 0.0
  %4114 = vmatpush1.msra.mxu0 0.0
  %4115 = vmatprep.subr.mxu0 0.0
  %4116 = vmatpush1.msra.mxu0 0.0
  %4117 = vmatprep.subr.mxu0 0.0
  %4118 = vmatpush1.msra.mxu0 0.0
  %4119 = vmatprep.mubr.f32.mxu0 0.0
  %4120 = vmatmul.mubr.f32.gmra.mrb[0].mxu0 %v3988
  %v4121 = vpop.f32.mrb[0].mxu0
  %v4122 = vadd.f32 0.0, %v4121
  %v4123 = vpop.f32.mrb[0].mxu0
  %v4124 = vadd.f32 0.0, %v4123
  %4125 = vdwg.mxu0
  %4126 = vmatprep.subr.mxu0 %v3994
  %4127 = vmatpush1.msra.mxu0 %v3993
  %4128 = vmatprep.subr.mxu0 %v3998
  %4129 = vmatpush1.msra.mxu0 %v3997
  %4130 = vmatprep.subr.mxu0 %v4002
  %4131 = vmatpush1.msra.mxu0 %v4001
  %4132 = vmatprep.subr.mxu0 %v4006
  %4133 = vmatpush1.msra.mxu0 %v4005
  %4134 = vmatprep.subr.mxu0 %v4010
  %4135 = vmatpush1.msra.mxu0 %v4009
  %4136 = vmatprep.subr.mxu0 %v4014
  %4137 = vmatpush1.msra.mxu0 %v4013
  %4138 = vmatprep.subr.mxu0 %v4018
  %4139 = vmatpush1.msra.mxu0 %v4017
  %4140 = vmatprep.subr.mxu0 %v4022
  %4141 = vmatpush1.msra.mxu0 %v4021
  %4142 = vmatprep.subr.mxu0 %v4026
  %4143 = vmatpush1.msra.mxu0 %v4025
  %4144 = vmatprep.subr.mxu0 %v4030
  %4145 = vmatpush1.msra.mxu0 %v4029
  %4146 = vmatprep.subr.mxu0 %v4034
  %4147 = vmatpush1.msra.mxu0 %v4033
  %4148 = vmatprep.subr.mxu0 %v4038
  %4149 = vmatpush1.msra.mxu0 %v4037
  %4150 = vmatprep.subr.mxu0 %v4042
  %4151 = vmatpush1.msra.mxu0 %v4041
  %4152 = vmatprep.subr.mxu0 %v4046
  %4153 = vmatpush1.msra.mxu0 %v4045
  %4154 = vmatprep.subr.mxu0 %v4050
  %4155 = vmatpush1.msra.mxu0 %v4049
  %4156 = vmatprep.subr.mxu0 %v4054
  %4157 = vmatpush1.msra.mxu0 %v4053
  %4158 = vmatprep.subr.mxu0 0.0
  %4159 = vmatpush1.msra.mxu0 0.0
  %4160 = vmatprep.subr.mxu0 0.0
  %4161 = vmatpush1.msra.mxu0 0.0
  %4162 = vmatprep.subr.mxu0 0.0
  %4163 = vmatpush1.msra.mxu0 0.0
  %4164 = vmatprep.subr.mxu0 0.0
  %4165 = vmatpush1.msra.mxu0 0.0
  %4166 = vmatprep.subr.mxu0 0.0
  %4167 = vmatpush1.msra.mxu0 0.0
  %4168 = vmatprep.subr.mxu0 0.0
  %4169 = vmatpush1.msra.mxu0 0.0
  %4170 = vmatprep.subr.mxu0 0.0
  %4171 = vmatpush1.msra.mxu0 0.0
  %4172 = vmatprep.subr.mxu0 0.0
  %4173 = vmatpush1.msra.mxu0 0.0
  %4174 = vmatprep.subr.mxu0 0.0
  %4175 = vmatpush1.msra.mxu0 0.0
  %4176 = vmatprep.subr.mxu0 0.0
  %4177 = vmatpush1.msra.mxu0 0.0
  %4178 = vmatprep.subr.mxu0 0.0
  %4179 = vmatpush1.msra.mxu0 0.0
  %4180 = vmatprep.subr.mxu0 0.0
  %4181 = vmatpush1.msra.mxu0 0.0
  %4182 = vmatprep.subr.mxu0 0.0
  %4183 = vmatpush1.msra.mxu0 0.0
  %4184 = vmatprep.subr.mxu0 0.0
  %4185 = vmatpush1.msra.mxu0 0.0
  %4186 = vmatprep.subr.mxu0 0.0
  %4187 = vmatpush1.msra.mxu0 0.0
  %4188 = vmatprep.subr.mxu0 0.0
  %4189 = vmatpush1.msra.mxu0 0.0
  %4190 = vmatprep.mubr.f32.mxu0 0.0
  %4191 = vmatmul.mubr.f32.gmra.mrb[0].mxu0 %v3988
  %v4192 = vpop.f32.mrb[0].mxu0
  %v4193 = vadd.f32 0.0, %v4192
  %v4194 = vpop.f32.mrb[0].mxu0
  %v4195 = vadd.f32 0.0, %v4194
  %4196 = vdwg.mxu0
  %v4201 = vcombine.low %v4122, %v4124
  %v4202 = vcombine.low %v4193, %v4195
  %v4204 = vunpack.c.l.s4 1983009808
  %v4205 = vunpack.c.0.s8 %v4204
  %v4206 = vlaneseq
  %v4207 = vshrl.u32 %v4206, 7
  %v4208 = vsub.s32 %v4205, %v4207
  %v4209 = vrot.slane %v4201, %v4208
  %v4211 = vunpack.c.l.s4 1983009808
  %v4212 = vunpack.c.0.s8 %v4211
  %v4213 = vlaneseq
  %v4214 = vshrl.u32 %v4213, 7
  %v4215 = vsub.s32 %v4212, %v4214
  %v4216 = vrot.slane %v4202, %v4215
  %v4217 = vcombine.low %v4209, %v4216
  %v4219 = vadd.f32 %v3990, %v4217
  %v4220 = vxor.u32 %v4219, 2147483648
  %v4221 = vmul.f32 %v4220, 1.442695
  %v4222 = vpow.pop %v4221
  %v4223 = vadd.f32 %v4222, 1.0
  %v4224 = vrcp.pop %v4223
  %v4225 = vmul.f32 1.0, %v4224
  %v4227 = vrot.slane %v4219, 2
  %v4229 = vxor.u32 %v4227, 2147483648
  %v4230 = vmul.f32 %v4229, 1.442695
  %v4231 = vpow.pop %v4230
  %v4232 = vadd.f32 %v4231, 1.0
  %v4233 = vrcp.pop %v4232
  %v4234 = vmul.f32 1.0, %v4233
  %v4235 = vrot.slane %v4219, 4
  %v4237 = vtanh.pop %v4235
  %v4238 = vrot.slane %v4219, 6
  %v4240 = vxor.u32 %v4238, 2147483648
  %v4241 = vmul.f32 %v4240, 1.442695
  %v4242 = vpow.pop %v4241
  %v4243 = vadd.f32 %v4242, 1.0
  %v4244 = vrcp.pop %v4243
  %v4245 = vmul.f32 1.0, %v4244
  %v4246 = vmul.f32 %v4234, %v3989
  %v4247 = vmul.f32 %v4225, %v4237
  %v4248 = vadd.f32 %v4246, %v4247
  %v4249 = vtanh.pop %v4248
  %v4250 = vmul.f32 %v4245, %v4249
  %4251 = vst [vmem:[%s5] sm:$0x3] %v4250
  %v4252 = vld [vmem:[%s1032] sm:$0xff]
  %v4253 = vld [vmem:[%s3] sm:$0xff]
  %v4254 = vld [vmem:[%s3 + $0x8] sm:$0xff]
  %v4255 = vld [vmem:[%s3 + $0x10] sm:$0xff]
  %v4256 = vld [vmem:[%s3 + $0x18] sm:$0xff]
  %v4257 = vld [vmem:[%s3 + $0x20] sm:$0xff]
  %v4258 = vld [vmem:[%s3 + $0x28] sm:$0xff]
  %v4259 = vld [vmem:[%s3 + $0x30] sm:$0xff]
  %v4260 = vld [vmem:[%s3 + $0x38] sm:$0xff]
  %v4261 = vld [vmem:[%s3 + $0x40] sm:$0xff]
  %v4262 = vld [vmem:[%s3 + $0x48] sm:$0xff]
  %v4263 = vld [vmem:[%s3 + $0x50] sm:$0xff]
  %v4264 = vld [vmem:[%s3 + $0x58] sm:$0xff]
  %v4265 = vld [vmem:[%s3 + $0x60] sm:$0xff]
  %v4266 = vld [vmem:[%s3 + $0x68] sm:$0xff]
  %v4267 = vld [vmem:[%s3 + $0x70] sm:$0xff]
  %v4268 = vld [vmem:[%s3 + $0x78] sm:$0xff]
  %v4269 = vld [vmem:[%s3 + $0x80] sm:$0xff]
  %v4270 = vld [vmem:[%s3 + $0x88] sm:$0xff]
  %v4271 = vld [vmem:[%s3 + $0x90] sm:$0xff]
  %v4272 = vld [vmem:[%s3 + $0x98] sm:$0xff]
  %v4273 = vld [vmem:[%s3 + $0xa0] sm:$0xff]
  %v4274 = vld [vmem:[%s3 + $0xa8] sm:$0xff]
  %v4275 = vld [vmem:[%s3 + $0xb0] sm:$0xff]
  %v4276 = vld [vmem:[%s3 + $0xb8] sm:$0xff]
  %v4277 = vld [vmem:[%s3 + $0xc0] sm:$0xff]
  %v4278 = vld [vmem:[%s3 + $0xc8] sm:$0xff]
  %v4279 = vld [vmem:[%s3 + $0xd0] sm:$0xff]
  %v4280 = vld [vmem:[%s3 + $0xd8] sm:$0xff]
  %v4281 = vld [vmem:[%s3 + $0xe0] sm:$0xff]
  %v4282 = vld [vmem:[%s3 + $0xe8] sm:$0xff]
  %v4283 = vld [vmem:[%s3 + $0xf0] sm:$0xff]
  %v4284 = vld [vmem:[%s3 + $0xf8] sm:$0xff]
  %v4285 = vld [vmem:[%s3 + $0x100] sm:$0xff]
  %v4286 = vld [vmem:[%s3 + $0x108] sm:$0xff]
  %v4287 = vld [vmem:[%s3 + $0x110] sm:$0xff]
  %v4288 = vld [vmem:[%s3 + $0x118] sm:$0xff]
  %v4289 = vld [vmem:[%s3 + $0x120] sm:$0xff]
  %v4290 = vld [vmem:[%s3 + $0x128] sm:$0xff]
  %v4291 = vld [vmem:[%s3 + $0x130] sm:$0xff]
  %v4292 = vld [vmem:[%s3 + $0x138] sm:$0xff]
  %v4293 = vld [vmem:[%s3 + $0x140] sm:$0xff]
  %v4294 = vld [vmem:[%s3 + $0x148] sm:$0xff]
  %v4295 = vld [vmem:[%s3 + $0x150] sm:$0xff]
  %v4296 = vld [vmem:[%s3 + $0x158] sm:$0xff]
  %v4297 = vld [vmem:[%s3 + $0x160] sm:$0xff]
  %v4298 = vld [vmem:[%s3 + $0x168] sm:$0xff]
  %v4299 = vld [vmem:[%s3 + $0x170] sm:$0xff]
  %v4300 = vld [vmem:[%s3 + $0x178] sm:$0xff]
  %v4301 = vld [vmem:[%s3 + $0x180] sm:$0xff]
  %v4302 = vld [vmem:[%s3 + $0x188] sm:$0xff]
  %v4303 = vld [vmem:[%s3 + $0x190] sm:$0xff]
  %v4304 = vld [vmem:[%s3 + $0x198] sm:$0xff]
  %v4305 = vld [vmem:[%s3 + $0x1a0] sm:$0xff]
  %v4306 = vld [vmem:[%s3 + $0x1a8] sm:$0xff]
  %v4307 = vld [vmem:[%s3 + $0x1b0] sm:$0xff]
  %v4308 = vld [vmem:[%s3 + $0x1b8] sm:$0xff]
  %v4309 = vld [vmem:[%s3 + $0x1c0] sm:$0xff]
  %v4310 = vld [vmem:[%s3 + $0x1c8] sm:$0xff]
  %v4311 = vld [vmem:[%s3 + $0x1d0] sm:$0xff]
  %v4312 = vld [vmem:[%s3 + $0x1d8] sm:$0xff]
  %v4313 = vld [vmem:[%s3 + $0x1e0] sm:$0xff]
  %v4314 = vld [vmem:[%s3 + $0x1e8] sm:$0xff]
  %v4315 = vld [vmem:[%s3 + $0x1f0] sm:$0xff]
  %v4316 = vld [vmem:[%s3 + $0x1f8] sm:$0xff]
  %4317 = vmatprep.subr.mxu0 %v4254
  %4318 = vmatpush1.msra.mxu0 %v4253
  %4319 = vmatprep.subr.mxu0 %v4258
  %4320 = vmatpush1.msra.mxu0 %v4257
  %4321 = vmatprep.subr.mxu0 %v4262
  %4322 = vmatpush1.msra.mxu0 %v4261
  %4323 = vmatprep.subr.mxu0 %v4266
  %4324 = vmatpush1.msra.mxu0 %v4265
  %4325 = vmatprep.subr.mxu0 %v4270
  %4326 = vmatpush1.msra.mxu0 %v4269
  %4327 = vmatprep.subr.mxu0 %v4274
  %4328 = vmatpush1.msra.mxu0 %v4273
  %4329 = vmatprep.subr.mxu0 %v4278
  %4330 = vmatpush1.msra.mxu0 %v4277
  %4331 = vmatprep.subr.mxu0 %v4282
  %4332 = vmatpush1.msra.mxu0 %v4281
  %4333 = vmatprep.subr.mxu0 %v4286
  %4334 = vmatpush1.msra.mxu0 %v4285
  %4335 = vmatprep.subr.mxu0 %v4290
  %4336 = vmatpush1.msra.mxu0 %v4289
  %4337 = vmatprep.subr.mxu0 %v4294
  %4338 = vmatpush1.msra.mxu0 %v4293
  %4339 = vmatprep.subr.mxu0 %v4298
  %4340 = vmatpush1.msra.mxu0 %v4297
  %4341 = vmatprep.subr.mxu0 %v4302
  %4342 = vmatpush1.msra.mxu0 %v4301
  %4343 = vmatprep.subr.mxu0 %v4306
  %4344 = vmatpush1.msra.mxu0 %v4305
  %4345 = vmatprep.subr.mxu0 %v4310
  %4346 = vmatpush1.msra.mxu0 %v4309
  %4347 = vmatprep.subr.mxu0 %v4314
  %4348 = vmatpush1.msra.mxu0 %v4313
  %4349 = vmatprep.subr.mxu0 0.0
  %4350 = vmatpush1.msra.mxu0 0.0
  %4351 = vmatprep.subr.mxu0 0.0
  %4352 = vmatpush1.msra.mxu0 0.0
  %4353 = vmatprep.subr.mxu0 0.0
  %4354 = vmatpush1.msra.mxu0 0.0
  %4355 = vmatprep.subr.mxu0 0.0
  %4356 = vmatpush1.msra.mxu0 0.0
  %4357 = vmatprep.subr.mxu0 0.0
  %4358 = vmatpush1.msra.mxu0 0.0
  %4359 = vmatprep.subr.mxu0 0.0
  %4360 = vmatpush1.msra.mxu0 0.0
  %4361 = vmatprep.subr.mxu0 0.0
  %4362 = vmatpush1.msra.mxu0 0.0
  %4363 = vmatprep.subr.mxu0 0.0
  %4364 = vmatpush1.msra.mxu0 0.0
  %4365 = vmatprep.subr.mxu0 0.0
  %4366 = vmatpush1.msra.mxu0 0.0
  %4367 = vmatprep.subr.mxu0 0.0
  %4368 = vmatpush1.msra.mxu0 0.0
  %4369 = vmatprep.subr.mxu0 0.0
  %4370 = vmatpush1.msra.mxu0 0.0
  %4371 = vmatprep.subr.mxu0 0.0
  %4372 = vmatpush1.msra.mxu0 0.0
  %4373 = vmatprep.subr.mxu0 0.0
  %4374 = vmatpush1.msra.mxu0 0.0
  %4375 = vmatprep.subr.mxu0 0.0
  %4376 = vmatpush1.msra.mxu0 0.0
  %4377 = vmatprep.subr.mxu0 0.0
  %4378 = vmatpush1.msra.mxu0 0.0
  %4379 = vmatprep.subr.mxu0 0.0
  %4380 = vmatpush1.msra.mxu0 0.0
  %4381 = vmatprep.mubr.f32.mxu0 0.0
  %4382 = vmatmul.mubr.f32.gmra.mrb[0].mxu0 %v4250
  %v4383 = vpop.f32.mrb[0].mxu0
  %v4384 = vadd.f32 0.0, %v4383
  %v4385 = vpop.f32.mrb[0].mxu0
  %v4386 = vadd.f32 0.0, %v4385
  %4387 = vdwg.mxu0
  %4388 = vmatprep.subr.mxu0 %v4256
  %4389 = vmatpush1.msra.mxu0 %v4255
  %4390 = vmatprep.subr.mxu0 %v4260
  %4391 = vmatpush1.msra.mxu0 %v4259
  %4392 = vmatprep.subr.mxu0 %v4264
  %4393 = vmatpush1.msra.mxu0 %v4263
  %4394 = vmatprep.subr.mxu0 %v4268
  %4395 = vmatpush1.msra.mxu0 %v4267
  %4396 = vmatprep.subr.mxu0 %v4272
  %4397 = vmatpush1.msra.mxu0 %v4271
  %4398 = vmatprep.subr.mxu0 %v4276
  %4399 = vmatpush1.msra.mxu0 %v4275
  %4400 = vmatprep.subr.mxu0 %v4280
  %4401 = vmatpush1.msra.mxu0 %v4279
  %4402 = vmatprep.subr.mxu0 %v4284
  %4403 = vmatpush1.msra.mxu0 %v4283
  %4404 = vmatprep.subr.mxu0 %v4288
  %4405 = vmatpush1.msra.mxu0 %v4287
  %4406 = vmatprep.subr.mxu0 %v4292
  %4407 = vmatpush1.msra.mxu0 %v4291
  %4408 = vmatprep.subr.mxu0 %v4296
  %4409 = vmatpush1.msra.mxu0 %v4295
  %4410 = vmatprep.subr.mxu0 %v4300
  %4411 = vmatpush1.msra.mxu0 %v4299
  %4412 = vmatprep.subr.mxu0 %v4304
  %4413 = vmatpush1.msra.mxu0 %v4303
  %4414 = vmatprep.subr.mxu0 %v4308
  %4415 = vmatpush1.msra.mxu0 %v4307
  %4416 = vmatprep.subr.mxu0 %v4312
  %4417 = vmatpush1.msra.mxu0 %v4311
  %4418 = vmatprep.subr.mxu0 %v4316
  %4419 = vmatpush1.msra.mxu0 %v4315
  %4420 = vmatprep.subr.mxu0 0.0
  %4421 = vmatpush1.msra.mxu0 0.0
  %4422 = vmatprep.subr.mxu0 0.0
  %4423 = vmatpush1.msra.mxu0 0.0
  %4424 = vmatprep.subr.mxu0 0.0
  %4425 = vmatpush1.msra.mxu0 0.0
  %4426 = vmatprep.subr.mxu0 0.0
  %4427 = vmatpush1.msra.mxu0 0.0
  %4428 = vmatprep.subr.mxu0 0.0
  %4429 = vmatpush1.msra.mxu0 0.0
  %4430 = vmatprep.subr.mxu0 0.0
  %4431 = vmatpush1.msra.mxu0 0.0
  %4432 = vmatprep.subr.mxu0 0.0
  %4433 = vmatpush1.msra.mxu0 0.0
  %4434 = vmatprep.subr.mxu0 0.0
  %4435 = vmatpush1.msra.mxu0 0.0
  %4436 = vmatprep.subr.mxu0 0.0
  %4437 = vmatpush1.msra.mxu0 0.0
  %4438 = vmatprep.subr.mxu0 0.0
  %4439 = vmatpush1.msra.mxu0 0.0
  %4440 = vmatprep.subr.mxu0 0.0
  %4441 = vmatpush1.msra.mxu0 0.0
  %4442 = vmatprep.subr.mxu0 0.0
  %4443 = vmatpush1.msra.mxu0 0.0
  %4444 = vmatprep.subr.mxu0 0.0
  %4445 = vmatpush1.msra.mxu0 0.0
  %4446 = vmatprep.subr.mxu0 0.0
  %4447 = vmatpush1.msra.mxu0 0.0
  %4448 = vmatprep.subr.mxu0 0.0
  %4449 = vmatpush1.msra.mxu0 0.0
  %4450 = vmatprep.subr.mxu0 0.0
  %4451 = vmatpush1.msra.mxu0 0.0
  %4452 = vmatprep.mubr.f32.mxu0 0.0
  %4453 = vmatmul.mubr.f32.gmra.mrb[0].mxu0 %v4250
  %v4454 = vpop.f32.mrb[0].mxu0
  %v4455 = vadd.f32 0.0, %v4454
  %v4456 = vpop.f32.mrb[0].mxu0
  %v4457 = vadd.f32 0.0, %v4456
  %4458 = vdwg.mxu0
  %v4463 = vcombine.low %v4384, %v4386
  %v4464 = vcombine.low %v4455, %v4457
  %v4466 = vunpack.c.l.s4 1983009808
  %v4467 = vunpack.c.0.s8 %v4466
  %v4468 = vlaneseq
  %v4469 = vshrl.u32 %v4468, 7
  %v4470 = vsub.s32 %v4467, %v4469
  %v4471 = vrot.slane %v4463, %v4470
  %v4473 = vunpack.c.l.s4 1983009808
  %v4474 = vunpack.c.0.s8 %v4473
  %v4475 = vlaneseq
  %v4476 = vshrl.u32 %v4475, 7
  %v4477 = vsub.s32 %v4474, %v4476
  %v4478 = vrot.slane %v4464, %v4477
  %v4479 = vcombine.low %v4471, %v4478
  %v4481 = vadd.f32 %v4252, %v4479
  %v4482 = vxor.u32 %v4481, 2147483648
  %v4483 = vmul.f32 %v4482, 1.442695
  %v4484 = vpow.pop %v4483
  %v4485 = vadd.f32 %v4484, 1.0
  %v4486 = vrcp.pop %v4485
  %v4487 = vmul.f32 1.0, %v4486
  %v4489 = vrot.slane %v4481, 2
  %v4491 = vxor.u32 %v4489, 2147483648
  %v4492 = vmul.f32 %v4491, 1.442695
  %v4493 = vpow.pop %v4492
  %v4494 = vadd.f32 %v4493, 1.0
  %v4495 = vrcp.pop %v4494
  %v4496 = vmul.f32 1.0, %v4495
  %v4497 = vrot.slane %v4481, 4
  %v4499 = vtanh.pop %v4497
  %v4500 = vrot.slane %v4481, 6
  %v4502 = vxor.u32 %v4500, 2147483648
  %v4503 = vmul.f32 %v4502, 1.442695
  %v4504 = vpow.pop %v4503
  %v4505 = vadd.f32 %v4504, 1.0
  %v4506 = vrcp.pop %v4505
  %v4507 = vmul.f32 1.0, %v4506
  %v4508 = vmul.f32 %v4496, %v4248
  %v4509 = vmul.f32 %v4487, %v4499
  %v4510 = vadd.f32 %v4508, %v4509
  %v4511 = vtanh.pop %v4510
  %v4512 = vmul.f32 %v4507, %v4511
  %s4513 = scalar_lea.vmem %s5, 2
  %4514 = vst [vmem:[%s4513] sm:$0x3] %v4512
  %v4515 = vld [vmem:[%s1524] sm:$0xff]
  %v4516 = vld [vmem:[%s3] sm:$0xff]
  %v4517 = vld [vmem:[%s3 + $0x8] sm:$0xff]
  %v4518 = vld [vmem:[%s3 + $0x10] sm:$0xff]
  %v4519 = vld [vmem:[%s3 + $0x18] sm:$0xff]
  %v4520 = vld [vmem:[%s3 + $0x20] sm:$0xff]
  %v4521 = vld [vmem:[%s3 + $0x28] sm:$0xff]
  %v4522 = vld [vmem:[%s3 + $0x30] sm:$0xff]
  %v4523 = vld [vmem:[%s3 + $0x38] sm:$0xff]
  %v4524 = vld [vmem:[%s3 + $0x40] sm:$0xff]
  %v4525 = vld [vmem:[%s3 + $0x48] sm:$0xff]
  %v4526 = vld [vmem:[%s3 + $0x50] sm:$0xff]
  %v4527 = vld [vmem:[%s3 + $0x58] sm:$0xff]
  %v4528 = vld [vmem:[%s3 + $0x60] sm:$0xff]
  %v4529 = vld [vmem:[%s3 + $0x68] sm:$0xff]
  %v4530 = vld [vmem:[%s3 + $0x70] sm:$0xff]
  %v4531 = vld [vmem:[%s3 + $0x78] sm:$0xff]
  %v4532 = vld [vmem:[%s3 + $0x80] sm:$0xff]
  %v4533 = vld [vmem:[%s3 + $0x88] sm:$0xff]
  %v4534 = vld [vmem:[%s3 + $0x90] sm:$0xff]
  %v4535 = vld [vmem:[%s3 + $0x98] sm:$0xff]
  %v4536 = vld [vmem:[%s3 + $0xa0] sm:$0xff]
  %v4537 = vld [vmem:[%s3 + $0xa8] sm:$0xff]
  %v4538 = vld [vmem:[%s3 + $0xb0] sm:$0xff]
  %v4539 = vld [vmem:[%s3 + $0xb8] sm:$0xff]
  %v4540 = vld [vmem:[%s3 + $0xc0] sm:$0xff]
  %v4541 = vld [vmem:[%s3 + $0xc8] sm:$0xff]
  %v4542 = vld [vmem:[%s3 + $0xd0] sm:$0xff]
  %v4543 = vld [vmem:[%s3 + $0xd8] sm:$0xff]
  %v4544 = vld [vmem:[%s3 + $0xe0] sm:$0xff]
  %v4545 = vld [vmem:[%s3 + $0xe8] sm:$0xff]
  %v4546 = vld [vmem:[%s3 + $0xf0] sm:$0xff]
  %v4547 = vld [vmem:[%s3 + $0xf8] sm:$0xff]
  %v4548 = vld [vmem:[%s3 + $0x100] sm:$0xff]
  %v4549 = vld [vmem:[%s3 + $0x108] sm:$0xff]
  %v4550 = vld [vmem:[%s3 + $0x110] sm:$0xff]
  %v4551 = vld [vmem:[%s3 + $0x118] sm:$0xff]
  %v4552 = vld [vmem:[%s3 + $0x120] sm:$0xff]
  %v4553 = vld [vmem:[%s3 + $0x128] sm:$0xff]
  %v4554 = vld [vmem:[%s3 + $0x130] sm:$0xff]
  %v4555 = vld [vmem:[%s3 + $0x138] sm:$0xff]
  %v4556 = vld [vmem:[%s3 + $0x140] sm:$0xff]
  %v4557 = vld [vmem:[%s3 + $0x148] sm:$0xff]
  %v4558 = vld [vmem:[%s3 + $0x150] sm:$0xff]
  %v4559 = vld [vmem:[%s3 + $0x158] sm:$0xff]
  %v4560 = vld [vmem:[%s3 + $0x160] sm:$0xff]
  %v4561 = vld [vmem:[%s3 + $0x168] sm:$0xff]
  %v4562 = vld [vmem:[%s3 + $0x170] sm:$0xff]
  %v4563 = vld [vmem:[%s3 + $0x178] sm:$0xff]
  %v4564 = vld [vmem:[%s3 + $0x180] sm:$0xff]
  %v4565 = vld [vmem:[%s3 + $0x188] sm:$0xff]
  %v4566 = vld [vmem:[%s3 + $0x190] sm:$0xff]
  %v4567 = vld [vmem:[%s3 + $0x198] sm:$0xff]
  %v4568 = vld [vmem:[%s3 + $0x1a0] sm:$0xff]
  %v4569 = vld [vmem:[%s3 + $0x1a8] sm:$0xff]
  %v4570 = vld [vmem:[%s3 + $0x1b0] sm:$0xff]
  %v4571 = vld [vmem:[%s3 + $0x1b8] sm:$0xff]
  %v4572 = vld [vmem:[%s3 + $0x1c0] sm:$0xff]
  %v4573 = vld [vmem:[%s3 + $0x1c8] sm:$0xff]
  %v4574 = vld [vmem:[%s3 + $0x1d0] sm:$0xff]
  %v4575 = vld [vmem:[%s3 + $0x1d8] sm:$0xff]
  %v4576 = vld [vmem:[%s3 + $0x1e0] sm:$0xff]
  %v4577 = vld [vmem:[%s3 + $0x1e8] sm:$0xff]
  %v4578 = vld [vmem:[%s3 + $0x1f0] sm:$0xff]
  %v4579 = vld [vmem:[%s3 + $0x1f8] sm:$0xff]
  %4580 = vmatprep.subr.mxu0 %v4517
  %4581 = vmatpush1.msra.mxu0 %v4516
  %4582 = vmatprep.subr.mxu0 %v4521
  %4583 = vmatpush1.msra.mxu0 %v4520
  %4584 = vmatprep.subr.mxu0 %v4525
  %4585 = vmatpush1.msra.mxu0 %v4524
  %4586 = vmatprep.subr.mxu0 %v4529
  %4587 = vmatpush1.msra.mxu0 %v4528
  %4588 = vmatprep.subr.mxu0 %v4533
  %4589 = vmatpush1.msra.mxu0 %v4532
  %4590 = vmatprep.subr.mxu0 %v4537
  %4591 = vmatpush1.msra.mxu0 %v4536
  %4592 = vmatprep.subr.mxu0 %v4541
  %4593 = vmatpush1.msra.mxu0 %v4540
  %4594 = vmatprep.subr.mxu0 %v4545
  %4595 = vmatpush1.msra.mxu0 %v4544
  %4596 = vmatprep.subr.mxu0 %v4549
  %4597 = vmatpush1.msra.mxu0 %v4548
  %4598 = vmatprep.subr.mxu0 %v4553
  %4599 = vmatpush1.msra.mxu0 %v4552
  %4600 = vmatprep.subr.mxu0 %v4557
  %4601 = vmatpush1.msra.mxu0 %v4556
  %4602 = vmatprep.subr.mxu0 %v4561
  %4603 = vmatpush1.msra.mxu0 %v4560
  %4604 = vmatprep.subr.mxu0 %v4565
  %4605 = vmatpush1.msra.mxu0 %v4564
  %4606 = vmatprep.subr.mxu0 %v4569
  %4607 = vmatpush1.msra.mxu0 %v4568
  %4608 = vmatprep.subr.mxu0 %v4573
  %4609 = vmatpush1.msra.mxu0 %v4572
  %4610 = vmatprep.subr.mxu0 %v4577
  %4611 = vmatpush1.msra.mxu0 %v4576
  %4612 = vmatprep.subr.mxu0 0.0
  %4613 = vmatpush1.msra.mxu0 0.0
  %4614 = vmatprep.subr.mxu0 0.0
  %4615 = vmatpush1.msra.mxu0 0.0
  %4616 = vmatprep.subr.mxu0 0.0
  %4617 = vmatpush1.msra.mxu0 0.0
  %4618 = vmatprep.subr.mxu0 0.0
  %4619 = vmatpush1.msra.mxu0 0.0
  %4620 = vmatprep.subr.mxu0 0.0
  %4621 = vmatpush1.msra.mxu0 0.0
  %4622 = vmatprep.subr.mxu0 0.0
  %4623 = vmatpush1.msra.mxu0 0.0
  %4624 = vmatprep.subr.mxu0 0.0
  %4625 = vmatpush1.msra.mxu0 0.0
  %4626 = vmatprep.subr.mxu0 0.0
  %4627 = vmatpush1.msra.mxu0 0.0
  %4628 = vmatprep.subr.mxu0 0.0
  %4629 = vmatpush1.msra.mxu0 0.0
  %4630 = vmatprep.subr.mxu0 0.0
  %4631 = vmatpush1.msra.mxu0 0.0
  %4632 = vmatprep.subr.mxu0 0.0
  %4633 = vmatpush1.msra.mxu0 0.0
  %4634 = vmatprep.subr.mxu0 0.0
  %4635 = vmatpush1.msra.mxu0 0.0
  %4636 = vmatprep.subr.mxu0 0.0
  %4637 = vmatpush1.msra.mxu0 0.0
  %4638 = vmatprep.subr.mxu0 0.0
  %4639 = vmatpush1.msra.mxu0 0.0
  %4640 = vmatprep.subr.mxu0 0.0
  %4641 = vmatpush1.msra.mxu0 0.0
  %4642 = vmatprep.subr.mxu0 0.0
  %4643 = vmatpush1.msra.mxu0 0.0
  %4644 = vmatprep.mubr.f32.mxu0 0.0
  %4645 = vmatmul.mubr.f32.gmra.mrb[0].mxu0 %v4512
  %v4646 = vpop.f32.mrb[0].mxu0
  %v4647 = vadd.f32 0.0, %v4646
  %v4648 = vpop.f32.mrb[0].mxu0
  %v4649 = vadd.f32 0.0, %v4648
  %4650 = vdwg.mxu0
  %4651 = vmatprep.subr.mxu0 %v4519
  %4652 = vmatpush1.msra.mxu0 %v4518
  %4653 = vmatprep.subr.mxu0 %v4523
  %4654 = vmatpush1.msra.mxu0 %v4522
  %4655 = vmatprep.subr.mxu0 %v4527
  %4656 = vmatpush1.msra.mxu0 %v4526
  %4657 = vmatprep.subr.mxu0 %v4531
  %4658 = vmatpush1.msra.mxu0 %v4530
  %4659 = vmatprep.subr.mxu0 %v4535
  %4660 = vmatpush1.msra.mxu0 %v4534
  %4661 = vmatprep.subr.mxu0 %v4539
  %4662 = vmatpush1.msra.mxu0 %v4538
  %4663 = vmatprep.subr.mxu0 %v4543
  %4664 = vmatpush1.msra.mxu0 %v4542
  %4665 = vmatprep.subr.mxu0 %v4547
  %4666 = vmatpush1.msra.mxu0 %v4546
  %4667 = vmatprep.subr.mxu0 %v4551
  %4668 = vmatpush1.msra.mxu0 %v4550
  %4669 = vmatprep.subr.mxu0 %v4555
  %4670 = vmatpush1.msra.mxu0 %v4554
  %4671 = vmatprep.subr.mxu0 %v4559
  %4672 = vmatpush1.msra.mxu0 %v4558
  %4673 = vmatprep.subr.mxu0 %v4563
  %4674 = vmatpush1.msra.mxu0 %v4562
  %4675 = vmatprep.subr.mxu0 %v4567
  %4676 = vmatpush1.msra.mxu0 %v4566
  %4677 = vmatprep.subr.mxu0 %v4571
  %4678 = vmatpush1.msra.mxu0 %v4570
  %4679 = vmatprep.subr.mxu0 %v4575
  %4680 = vmatpush1.msra.mxu0 %v4574
  %4681 = vmatprep.subr.mxu0 %v4579
  %4682 = vmatpush1.msra.mxu0 %v4578
  %4683 = vmatprep.subr.mxu0 0.0
  %4684 = vmatpush1.msra.mxu0 0.0
  %4685 = vmatprep.subr.mxu0 0.0
  %4686 = vmatpush1.msra.mxu0 0.0
  %4687 = vmatprep.subr.mxu0 0.0
  %4688 = vmatpush1.msra.mxu0 0.0
  %4689 = vmatprep.subr.mxu0 0.0
  %4690 = vmatpush1.msra.mxu0 0.0
  %4691 = vmatprep.subr.mxu0 0.0
  %4692 = vmatpush1.msra.mxu0 0.0
  %4693 = vmatprep.subr.mxu0 0.0
  %4694 = vmatpush1.msra.mxu0 0.0
  %4695 = vmatprep.subr.mxu0 0.0
  %4696 = vmatpush1.msra.mxu0 0.0
  %4697 = vmatprep.subr.mxu0 0.0
  %4698 = vmatpush1.msra.mxu0 0.0
  %4699 = vmatprep.subr.mxu0 0.0
  %4700 = vmatpush1.msra.mxu0 0.0
  %4701 = vmatprep.subr.mxu0 0.0
  %4702 = vmatpush1.msra.mxu0 0.0
  %4703 = vmatprep.subr.mxu0 0.0
  %4704 = vmatpush1.msra.mxu0 0.0
  %4705 = vmatprep.subr.mxu0 0.0
  %4706 = vmatpush1.msra.mxu0 0.0
  %4707 = vmatprep.subr.mxu0 0.0
  %4708 = vmatpush1.msra.mxu0 0.0
  %4709 = vmatprep.subr.mxu0 0.0
  %4710 = vmatpush1.msra.mxu0 0.0
  %4711 = vmatprep.subr.mxu0 0.0
  %4712 = vmatpush1.msra.mxu0 0.0
  %4713 = vmatprep.subr.mxu0 0.0
  %4714 = vmatpush1.msra.mxu0 0.0
  %4715 = vmatprep.mubr.f32.mxu0 0.0
  %4716 = vmatmul.mubr.f32.gmra.mrb[0].mxu0 %v4512
  %v4717 = vpop.f32.mrb[0].mxu0
  %v4718 = vadd.f32 0.0, %v4717
  %v4719 = vpop.f32.mrb[0].mxu0
  %v4720 = vadd.f32 0.0, %v4719
  %4721 = vdwg.mxu0
  %v4726 = vcombine.low %v4647, %v4649
  %v4727 = vcombine.low %v4718, %v4720
  %v4729 = vunpack.c.l.s4 1983009808
  %v4730 = vunpack.c.0.s8 %v4729
  %v4731 = vlaneseq
  %v4732 = vshrl.u32 %v4731, 7
  %v4733 = vsub.s32 %v4730, %v4732
  %v4734 = vrot.slane %v4726, %v4733
  %v4736 = vunpack.c.l.s4 1983009808
  %v4737 = vunpack.c.0.s8 %v4736
  %v4738 = vlaneseq
  %v4739 = vshrl.u32 %v4738, 7
  %v4740 = vsub.s32 %v4737, %v4739
  %v4741 = vrot.slane %v4727, %v4740
  %v4742 = vcombine.low %v4734, %v4741
  %v4744 = vadd.f32 %v4515, %v4742
  %v4745 = vxor.u32 %v4744, 2147483648
  %v4746 = vmul.f32 %v4745, 1.442695
  %v4747 = vpow.pop %v4746
  %v4748 = vadd.f32 %v4747, 1.0
  %v4749 = vrcp.pop %v4748
  %v4750 = vmul.f32 1.0, %v4749
  %v4752 = vrot.slane %v4744, 2
  %v4754 = vxor.u32 %v4752, 2147483648
  %v4755 = vmul.f32 %v4754, 1.442695
  %v4756 = vpow.pop %v4755
  %v4757 = vadd.f32 %v4756, 1.0
  %v4758 = vrcp.pop %v4757
  %v4759 = vmul.f32 1.0, %v4758
  %v4760 = vrot.slane %v4744, 4
  %v4762 = vtanh.pop %v4760
  %v4763 = vrot.slane %v4744, 6
  %v4765 = vxor.u32 %v4763, 2147483648
  %v4766 = vmul.f32 %v4765, 1.442695
  %v4767 = vpow.pop %v4766
  %v4768 = vadd.f32 %v4767, 1.0
  %v4769 = vrcp.pop %v4768
  %v4770 = vmul.f32 1.0, %v4769
  %v4771 = vmul.f32 %v4759, %v4510
  %v4772 = vmul.f32 %v4750, %v4762
  %v4773 = vadd.f32 %v4771, %v4772
  %v4774 = vtanh.pop %v4773
  %v4775 = vmul.f32 %v4770, %v4774
  %s4776 = scalar_lea.vmem %s5, 4
  %4777 = vst [vmem:[%s4776] sm:$0x3] %v4775
  %v4778 = vld [vmem:[%s2016] sm:$0xff]
  %v4779 = vld [vmem:[%s3] sm:$0xff]
  %v4780 = vld [vmem:[%s3 + $0x8] sm:$0xff]
  %v4781 = vld [vmem:[%s3 + $0x10] sm:$0xff]
  %v4782 = vld [vmem:[%s3 + $0x18] sm:$0xff]
  %v4783 = vld [vmem:[%s3 + $0x20] sm:$0xff]
  %v4784 = vld [vmem:[%s3 + $0x28] sm:$0xff]
  %v4785 = vld [vmem:[%s3 + $0x30] sm:$0xff]
  %v4786 = vld [vmem:[%s3 + $0x38] sm:$0xff]
  %v4787 = vld [vmem:[%s3 + $0x40] sm:$0xff]
  %v4788 = vld [vmem:[%s3 + $0x48] sm:$0xff]
  %v4789 = vld [vmem:[%s3 + $0x50] sm:$0xff]
  %v4790 = vld [vmem:[%s3 + $0x58] sm:$0xff]
  %v4791 = vld [vmem:[%s3 + $0x60] sm:$0xff]
  %v4792 = vld [vmem:[%s3 + $0x68] sm:$0xff]
  %v4793 = vld [vmem:[%s3 + $0x70] sm:$0xff]
  %v4794 = vld [vmem:[%s3 + $0x78] sm:$0xff]
  %v4795 = vld [vmem:[%s3 + $0x80] sm:$0xff]
  %v4796 = vld [vmem:[%s3 + $0x88] sm:$0xff]
  %v4797 = vld [vmem:[%s3 + $0x90] sm:$0xff]
  %v4798 = vld [vmem:[%s3 + $0x98] sm:$0xff]
  %v4799 = vld [vmem:[%s3 + $0xa0] sm:$0xff]
  %v4800 = vld [vmem:[%s3 + $0xa8] sm:$0xff]
  %v4801 = vld [vmem:[%s3 + $0xb0] sm:$0xff]
  %v4802 = vld [vmem:[%s3 + $0xb8] sm:$0xff]
  %v4803 = vld [vmem:[%s3 + $0xc0] sm:$0xff]
  %v4804 = vld [vmem:[%s3 + $0xc8] sm:$0xff]
  %v4805 = vld [vmem:[%s3 + $0xd0] sm:$0xff]
  %v4806 = vld [vmem:[%s3 + $0xd8] sm:$0xff]
  %v4807 = vld [vmem:[%s3 + $0xe0] sm:$0xff]
  %v4808 = vld [vmem:[%s3 + $0xe8] sm:$0xff]
  %v4809 = vld [vmem:[%s3 + $0xf0] sm:$0xff]
  %v4810 = vld [vmem:[%s3 + $0xf8] sm:$0xff]
  %v4811 = vld [vmem:[%s3 + $0x100] sm:$0xff]
  %v4812 = vld [vmem:[%s3 + $0x108] sm:$0xff]
  %v4813 = vld [vmem:[%s3 + $0x110] sm:$0xff]
  %v4814 = vld [vmem:[%s3 + $0x118] sm:$0xff]
  %v4815 = vld [vmem:[%s3 + $0x120] sm:$0xff]
  %v4816 = vld [vmem:[%s3 + $0x128] sm:$0xff]
  %v4817 = vld [vmem:[%s3 + $0x130] sm:$0xff]
  %v4818 = vld [vmem:[%s3 + $0x138] sm:$0xff]
  %v4819 = vld [vmem:[%s3 + $0x140] sm:$0xff]
  %v4820 = vld [vmem:[%s3 + $0x148] sm:$0xff]
  %v4821 = vld [vmem:[%s3 + $0x150] sm:$0xff]
  %v4822 = vld [vmem:[%s3 + $0x158] sm:$0xff]
  %v4823 = vld [vmem:[%s3 + $0x160] sm:$0xff]
  %v4824 = vld [vmem:[%s3 + $0x168] sm:$0xff]
  %v4825 = vld [vmem:[%s3 + $0x170] sm:$0xff]
  %v4826 = vld [vmem:[%s3 + $0x178] sm:$0xff]
  %v4827 = vld [vmem:[%s3 + $0x180] sm:$0xff]
  %v4828 = vld [vmem:[%s3 + $0x188] sm:$0xff]
  %v4829 = vld [vmem:[%s3 + $0x190] sm:$0xff]
  %v4830 = vld [vmem:[%s3 + $0x198] sm:$0xff]
  %v4831 = vld [vmem:[%s3 + $0x1a0] sm:$0xff]
  %v4832 = vld [vmem:[%s3 + $0x1a8] sm:$0xff]
  %v4833 = vld [vmem:[%s3 + $0x1b0] sm:$0xff]
  %v4834 = vld [vmem:[%s3 + $0x1b8] sm:$0xff]
  %v4835 = vld [vmem:[%s3 + $0x1c0] sm:$0xff]
  %v4836 = vld [vmem:[%s3 + $0x1c8] sm:$0xff]
  %v4837 = vld [vmem:[%s3 + $0x1d0] sm:$0xff]
  %v4838 = vld [vmem:[%s3 + $0x1d8] sm:$0xff]
  %v4839 = vld [vmem:[%s3 + $0x1e0] sm:$0xff]
  %v4840 = vld [vmem:[%s3 + $0x1e8] sm:$0xff]
  %v4841 = vld [vmem:[%s3 + $0x1f0] sm:$0xff]
  %v4842 = vld [vmem:[%s3 + $0x1f8] sm:$0xff]
  %4843 = vmatprep.subr.mxu0 %v4780
  %4844 = vmatpush1.msra.mxu0 %v4779
  %4845 = vmatprep.subr.mxu0 %v4784
  %4846 = vmatpush1.msra.mxu0 %v4783
  %4847 = vmatprep.subr.mxu0 %v4788
  %4848 = vmatpush1.msra.mxu0 %v4787
  %4849 = vmatprep.subr.mxu0 %v4792
  %4850 = vmatpush1.msra.mxu0 %v4791
  %4851 = vmatprep.subr.mxu0 %v4796
  %4852 = vmatpush1.msra.mxu0 %v4795
  %4853 = vmatprep.subr.mxu0 %v4800
  %4854 = vmatpush1.msra.mxu0 %v4799
  %4855 = vmatprep.subr.mxu0 %v4804
  %4856 = vmatpush1.msra.mxu0 %v4803
  %4857 = vmatprep.subr.mxu0 %v4808
  %4858 = vmatpush1.msra.mxu0 %v4807
  %4859 = vmatprep.subr.mxu0 %v4812
  %4860 = vmatpush1.msra.mxu0 %v4811
  %4861 = vmatprep.subr.mxu0 %v4816
  %4862 = vmatpush1.msra.mxu0 %v4815
  %4863 = vmatprep.subr.mxu0 %v4820
  %4864 = vmatpush1.msra.mxu0 %v4819
  %4865 = vmatprep.subr.mxu0 %v4824
  %4866 = vmatpush1.msra.mxu0 %v4823
  %4867 = vmatprep.subr.mxu0 %v4828
  %4868 = vmatpush1.msra.mxu0 %v4827
  %4869 = vmatprep.subr.mxu0 %v4832
  %4870 = vmatpush1.msra.mxu0 %v4831
  %4871 = vmatprep.subr.mxu0 %v4836
  %4872 = vmatpush1.msra.mxu0 %v4835
  %4873 = vmatprep.subr.mxu0 %v4840
  %4874 = vmatpush1.msra.mxu0 %v4839
  %4875 = vmatprep.subr.mxu0 0.0
  %4876 = vmatpush1.msra.mxu0 0.0
  %4877 = vmatprep.subr.mxu0 0.0
  %4878 = vmatpush1.msra.mxu0 0.0
  %4879 = vmatprep.subr.mxu0 0.0
  %4880 = vmatpush1.msra.mxu0 0.0
  %4881 = vmatprep.subr.mxu0 0.0
  %4882 = vmatpush1.msra.mxu0 0.0
  %4883 = vmatprep.subr.mxu0 0.0
  %4884 = vmatpush1.msra.mxu0 0.0
  %4885 = vmatprep.subr.mxu0 0.0
  %4886 = vmatpush1.msra.mxu0 0.0
  %4887 = vmatprep.subr.mxu0 0.0
  %4888 = vmatpush1.msra.mxu0 0.0
  %4889 = vmatprep.subr.mxu0 0.0
  %4890 = vmatpush1.msra.mxu0 0.0
  %4891 = vmatprep.subr.mxu0 0.0
  %4892 = vmatpush1.msra.mxu0 0.0
  %4893 = vmatprep.subr.mxu0 0.0
  %4894 = vmatpush1.msra.mxu0 0.0
  %4895 = vmatprep.subr.mxu0 0.0
  %4896 = vmatpush1.msra.mxu0 0.0
  %4897 = vmatprep.subr.mxu0 0.0
  %4898 = vmatpush1.msra.mxu0 0.0
  %4899 = vmatprep.subr.mxu0 0.0
  %4900 = vmatpush1.msra.mxu0 0.0
  %4901 = vmatprep.subr.mxu0 0.0
  %4902 = vmatpush1.msra.mxu0 0.0
  %4903 = vmatprep.subr.mxu0 0.0
  %4904 = vmatpush1.msra.mxu0 0.0
  %4905 = vmatprep.subr.mxu0 0.0
  %4906 = vmatpush1.msra.mxu0 0.0
  %4907 = vmatprep.mubr.f32.mxu0 0.0
  %4908 = vmatmul.mubr.f32.gmra.mrb[0].mxu0 %v4775
  %v4909 = vpop.f32.mrb[0].mxu0
  %v4910 = vadd.f32 0.0, %v4909
  %v4911 = vpop.f32.mrb[0].mxu0
  %v4912 = vadd.f32 0.0, %v4911
  %4913 = vdwg.mxu0
  %4914 = vmatprep.subr.mxu0 %v4782
  %4915 = vmatpush1.msra.mxu0 %v4781
  %4916 = vmatprep.subr.mxu0 %v4786
  %4917 = vmatpush1.msra.mxu0 %v4785
  %4918 = vmatprep.subr.mxu0 %v4790
  %4919 = vmatpush1.msra.mxu0 %v4789
  %4920 = vmatprep.subr.mxu0 %v4794
  %4921 = vmatpush1.msra.mxu0 %v4793
  %4922 = vmatprep.subr.mxu0 %v4798
  %4923 = vmatpush1.msra.mxu0 %v4797
  %4924 = vmatprep.subr.mxu0 %v4802
  %4925 = vmatpush1.msra.mxu0 %v4801
  %4926 = vmatprep.subr.mxu0 %v4806
  %4927 = vmatpush1.msra.mxu0 %v4805
  %4928 = vmatprep.subr.mxu0 %v4810
  %4929 = vmatpush1.msra.mxu0 %v4809
  %4930 = vmatprep.subr.mxu0 %v4814
  %4931 = vmatpush1.msra.mxu0 %v4813
  %4932 = vmatprep.subr.mxu0 %v4818
  %4933 = vmatpush1.msra.mxu0 %v4817
  %4934 = vmatprep.subr.mxu0 %v4822
  %4935 = vmatpush1.msra.mxu0 %v4821
  %4936 = vmatprep.subr.mxu0 %v4826
  %4937 = vmatpush1.msra.mxu0 %v4825
  %4938 = vmatprep.subr.mxu0 %v4830
  %4939 = vmatpush1.msra.mxu0 %v4829
  %4940 = vmatprep.subr.mxu0 %v4834
  %4941 = vmatpush1.msra.mxu0 %v4833
  %4942 = vmatprep.subr.mxu0 %v4838
  %4943 = vmatpush1.msra.mxu0 %v4837
  %4944 = vmatprep.subr.mxu0 %v4842
  %4945 = vmatpush1.msra.mxu0 %v4841
  %4946 = vmatprep.subr.mxu0 0.0
  %4947 = vmatpush1.msra.mxu0 0.0
  %4948 = vmatprep.subr.mxu0 0.0
  %4949 = vmatpush1.msra.mxu0 0.0
  %4950 = vmatprep.subr.mxu0 0.0
  %4951 = vmatpush1.msra.mxu0 0.0
  %4952 = vmatprep.subr.mxu0 0.0
  %4953 = vmatpush1.msra.mxu0 0.0
  %4954 = vmatprep.subr.mxu0 0.0
  %4955 = vmatpush1.msra.mxu0 0.0
  %4956 = vmatprep.subr.mxu0 0.0
  %4957 = vmatpush1.msra.mxu0 0.0
  %4958 = vmatprep.subr.mxu0 0.0
  %4959 = vmatpush1.msra.mxu0 0.0
  %4960 = vmatprep.subr.mxu0 0.0
  %4961 = vmatpush1.msra.mxu0 0.0
  %4962 = vmatprep.subr.mxu0 0.0
  %4963 = vmatpush1.msra.mxu0 0.0
  %4964 = vmatprep.subr.mxu0 0.0
  %4965 = vmatpush1.msra.mxu0 0.0
  %4966 = vmatprep.subr.mxu0 0.0
  %4967 = vmatpush1.msra.mxu0 0.0
  %4968 = vmatprep.subr.mxu0 0.0
  %4969 = vmatpush1.msra.mxu0 0.0
  %4970 = vmatprep.subr.mxu0 0.0
  %4971 = vmatpush1.msra.mxu0 0.0
  %4972 = vmatprep.subr.mxu0 0.0
  %4973 = vmatpush1.msra.mxu0 0.0
  %4974 = vmatprep.subr.mxu0 0.0
  %4975 = vmatpush1.msra.mxu0 0.0
  %4976 = vmatprep.subr.mxu0 0.0
  %4977 = vmatpush1.msra.mxu0 0.0
  %4978 = vmatprep.mubr.f32.mxu0 0.0
  %4979 = vmatmul.mubr.f32.gmra.mrb[0].mxu0 %v4775
  %v4980 = vpop.f32.mrb[0].mxu0
  %v4981 = vadd.f32 0.0, %v4980
  %v4982 = vpop.f32.mrb[0].mxu0
  %v4983 = vadd.f32 0.0, %v4982
  %4984 = vdwg.mxu0
  %v4989 = vcombine.low %v4910, %v4912
  %v4990 = vcombine.low %v4981, %v4983
  %v4992 = vunpack.c.l.s4 1983009808
  %v4993 = vunpack.c.0.s8 %v4992
  %v4994 = vlaneseq
  %v4995 = vshrl.u32 %v4994, 7
  %v4996 = vsub.s32 %v4993, %v4995
  %v4997 = vrot.slane %v4989, %v4996
  %v4999 = vunpack.c.l.s4 1983009808
  %v5000 = vunpack.c.0.s8 %v4999
  %v5001 = vlaneseq
  %v5002 = vshrl.u32 %v5001, 7
  %v5003 = vsub.s32 %v5000, %v5002
  %v5004 = vrot.slane %v4990, %v5003
  %v5005 = vcombine.low %v4997, %v5004
  %v5007 = vadd.f32 %v4778, %v5005
  %v5008 = vxor.u32 %v5007, 2147483648
  %v5009 = vmul.f32 %v5008, 1.442695
  %v5010 = vpow.pop %v5009
  %v5011 = vadd.f32 %v5010, 1.0
  %v5012 = vrcp.pop %v5011
  %v5013 = vmul.f32 1.0, %v5012
  %v5015 = vrot.slane %v5007, 2
  %v5017 = vxor.u32 %v5015, 2147483648
  %v5018 = vmul.f32 %v5017, 1.442695
  %v5019 = vpow.pop %v5018
  %v5020 = vadd.f32 %v5019, 1.0
  %v5021 = vrcp.pop %v5020
  %v5022 = vmul.f32 1.0, %v5021
  %v5023 = vrot.slane %v5007, 4
  %v5025 = vtanh.pop %v5023
  %v5026 = vrot.slane %v5007, 6
  %v5028 = vxor.u32 %v5026, 2147483648
  %v5029 = vmul.f32 %v5028, 1.442695
  %v5030 = vpow.pop %v5029
  %v5031 = vadd.f32 %v5030, 1.0
  %v5032 = vrcp.pop %v5031
  %v5033 = vmul.f32 1.0, %v5032
  %v5034 = vmul.f32 %v5022, %v4773
  %v5035 = vmul.f32 %v5013, %v5025
  %v5036 = vadd.f32 %v5034, %v5035
  %v5037 = vtanh.pop %v5036
  %v5038 = vmul.f32 %v5033, %v5037
  %s5039 = scalar_lea.vmem %s5, 6
  %5040 = vst [vmem:[%s5039] sm:$0x3] %v5038
  %v5041 = vld [vmem:[%s2508] sm:$0xff]
  %v5042 = vld [vmem:[%s3] sm:$0xff]
  %v5043 = vld [vmem:[%s3 + $0x8] sm:$0xff]
  %v5044 = vld [vmem:[%s3 + $0x10] sm:$0xff]
  %v5045 = vld [vmem:[%s3 + $0x18] sm:$0xff]
  %v5046 = vld [vmem:[%s3 + $0x20] sm:$0xff]
  %v5047 = vld [vmem:[%s3 + $0x28] sm:$0xff]
  %v5048 = vld [vmem:[%s3 + $0x30] sm:$0xff]
  %v5049 = vld [vmem:[%s3 + $0x38] sm:$0xff]
  %v5050 = vld [vmem:[%s3 + $0x40] sm:$0xff]
  %v5051 = vld [vmem:[%s3 + $0x48] sm:$0xff]
  %v5052 = vld [vmem:[%s3 + $0x50] sm:$0xff]
  %v5053 = vld [vmem:[%s3 + $0x58] sm:$0xff]
  %v5054 = vld [vmem:[%s3 + $0x60] sm:$0xff]
  %v5055 = vld [vmem:[%s3 + $0x68] sm:$0xff]
  %v5056 = vld [vmem:[%s3 + $0x70] sm:$0xff]
  %v5057 = vld [vmem:[%s3 + $0x78] sm:$0xff]
  %v5058 = vld [vmem:[%s3 + $0x80] sm:$0xff]
  %v5059 = vld [vmem:[%s3 + $0x88] sm:$0xff]
  %v5060 = vld [vmem:[%s3 + $0x90] sm:$0xff]
  %v5061 = vld [vmem:[%s3 + $0x98] sm:$0xff]
  %v5062 = vld [vmem:[%s3 + $0xa0] sm:$0xff]
  %v5063 = vld [vmem:[%s3 + $0xa8] sm:$0xff]
  %v5064 = vld [vmem:[%s3 + $0xb0] sm:$0xff]
  %v5065 = vld [vmem:[%s3 + $0xb8] sm:$0xff]
  %v5066 = vld [vmem:[%s3 + $0xc0] sm:$0xff]
  %v5067 = vld [vmem:[%s3 + $0xc8] sm:$0xff]
  %v5068 = vld [vmem:[%s3 + $0xd0] sm:$0xff]
  %v5069 = vld [vmem:[%s3 + $0xd8] sm:$0xff]
  %v5070 = vld [vmem:[%s3 + $0xe0] sm:$0xff]
  %v5071 = vld [vmem:[%s3 + $0xe8] sm:$0xff]
  %v5072 = vld [vmem:[%s3 + $0xf0] sm:$0xff]
  %v5073 = vld [vmem:[%s3 + $0xf8] sm:$0xff]
  %v5074 = vld [vmem:[%s3 + $0x100] sm:$0xff]
  %v5075 = vld [vmem:[%s3 + $0x108] sm:$0xff]
  %v5076 = vld [vmem:[%s3 + $0x110] sm:$0xff]
  %v5077 = vld [vmem:[%s3 + $0x118] sm:$0xff]
  %v5078 = vld [vmem:[%s3 + $0x120] sm:$0xff]
  %v5079 = vld [vmem:[%s3 + $0x128] sm:$0xff]
  %v5080 = vld [vmem:[%s3 + $0x130] sm:$0xff]
  %v5081 = vld [vmem:[%s3 + $0x138] sm:$0xff]
  %v5082 = vld [vmem:[%s3 + $0x140] sm:$0xff]
  %v5083 = vld [vmem:[%s3 + $0x148] sm:$0xff]
  %v5084 = vld [vmem:[%s3 + $0x150] sm:$0xff]
  %v5085 = vld [vmem:[%s3 + $0x158] sm:$0xff]
  %v5086 = vld [vmem:[%s3 + $0x160] sm:$0xff]
  %v5087 = vld [vmem:[%s3 + $0x168] sm:$0xff]
  %v5088 = vld [vmem:[%s3 + $0x170] sm:$0xff]
  %v5089 = vld [vmem:[%s3 + $0x178] sm:$0xff]
  %v5090 = vld [vmem:[%s3 + $0x180] sm:$0xff]
  %v5091 = vld [vmem:[%s3 + $0x188] sm:$0xff]
  %v5092 = vld [vmem:[%s3 + $0x190] sm:$0xff]
  %v5093 = vld [vmem:[%s3 + $0x198] sm:$0xff]
  %v5094 = vld [vmem:[%s3 + $0x1a0] sm:$0xff]
  %v5095 = vld [vmem:[%s3 + $0x1a8] sm:$0xff]
  %v5096 = vld [vmem:[%s3 + $0x1b0] sm:$0xff]
  %v5097 = vld [vmem:[%s3 + $0x1b8] sm:$0xff]
  %v5098 = vld [vmem:[%s3 + $0x1c0] sm:$0xff]
  %v5099 = vld [vmem:[%s3 + $0x1c8] sm:$0xff]
  %v5100 = vld [vmem:[%s3 + $0x1d0] sm:$0xff]
  %v5101 = vld [vmem:[%s3 + $0x1d8] sm:$0xff]
  %v5102 = vld [vmem:[%s3 + $0x1e0] sm:$0xff]
  %v5103 = vld [vmem:[%s3 + $0x1e8] sm:$0xff]
  %v5104 = vld [vmem:[%s3 + $0x1f0] sm:$0xff]
  %v5105 = vld [vmem:[%s3 + $0x1f8] sm:$0xff]
  %5106 = vmatprep.subr.mxu0 %v5043
  %5107 = vmatpush1.msra.mxu0 %v5042
  %5108 = vmatprep.subr.mxu0 %v5047
  %5109 = vmatpush1.msra.mxu0 %v5046
  %5110 = vmatprep.subr.mxu0 %v5051
  %5111 = vmatpush1.msra.mxu0 %v5050
  %5112 = vmatprep.subr.mxu0 %v5055
  %5113 = vmatpush1.msra.mxu0 %v5054
  %5114 = vmatprep.subr.mxu0 %v5059
  %5115 = vmatpush1.msra.mxu0 %v5058
  %5116 = vmatprep.subr.mxu0 %v5063
  %5117 = vmatpush1.msra.mxu0 %v5062
  %5118 = vmatprep.subr.mxu0 %v5067
  %5119 = vmatpush1.msra.mxu0 %v5066
  %5120 = vmatprep.subr.mxu0 %v5071
  %5121 = vmatpush1.msra.mxu0 %v5070
  %5122 = vmatprep.subr.mxu0 %v5075
  %5123 = vmatpush1.msra.mxu0 %v5074
  %5124 = vmatprep.subr.mxu0 %v5079
  %5125 = vmatpush1.msra.mxu0 %v5078
  %5126 = vmatprep.subr.mxu0 %v5083
  %5127 = vmatpush1.msra.mxu0 %v5082
  %5128 = vmatprep.subr.mxu0 %v5087
  %5129 = vmatpush1.msra.mxu0 %v5086
  %5130 = vmatprep.subr.mxu0 %v5091
  %5131 = vmatpush1.msra.mxu0 %v5090
  %5132 = vmatprep.subr.mxu0 %v5095
  %5133 = vmatpush1.msra.mxu0 %v5094
  %5134 = vmatprep.subr.mxu0 %v5099
  %5135 = vmatpush1.msra.mxu0 %v5098
  %5136 = vmatprep.subr.mxu0 %v5103
  %5137 = vmatpush1.msra.mxu0 %v5102
  %5138 = vmatprep.subr.mxu0 0.0
  %5139 = vmatpush1.msra.mxu0 0.0
  %5140 = vmatprep.subr.mxu0 0.0
  %5141 = vmatpush1.msra.mxu0 0.0
  %5142 = vmatprep.subr.mxu0 0.0
  %5143 = vmatpush1.msra.mxu0 0.0
  %5144 = vmatprep.subr.mxu0 0.0
  %5145 = vmatpush1.msra.mxu0 0.0
  %5146 = vmatprep.subr.mxu0 0.0
  %5147 = vmatpush1.msra.mxu0 0.0
  %5148 = vmatprep.subr.mxu0 0.0
  %5149 = vmatpush1.msra.mxu0 0.0
  %5150 = vmatprep.subr.mxu0 0.0
  %5151 = vmatpush1.msra.mxu0 0.0
  %5152 = vmatprep.subr.mxu0 0.0
  %5153 = vmatpush1.msra.mxu0 0.0
  %5154 = vmatprep.subr.mxu0 0.0
  %5155 = vmatpush1.msra.mxu0 0.0
  %5156 = vmatprep.subr.mxu0 0.0
  %5157 = vmatpush1.msra.mxu0 0.0
  %5158 = vmatprep.subr.mxu0 0.0
  %5159 = vmatpush1.msra.mxu0 0.0
  %5160 = vmatprep.subr.mxu0 0.0
  %5161 = vmatpush1.msra.mxu0 0.0
  %5162 = vmatprep.subr.mxu0 0.0
  %5163 = vmatpush1.msra.mxu0 0.0
  %5164 = vmatprep.subr.mxu0 0.0
  %5165 = vmatpush1.msra.mxu0 0.0
  %5166 = vmatprep.subr.mxu0 0.0
  %5167 = vmatpush1.msra.mxu0 0.0
  %5168 = vmatprep.subr.mxu0 0.0
  %5169 = vmatpush1.msra.mxu0 0.0
  %5170 = vmatprep.mubr.f32.mxu0 0.0
  %5171 = vmatmul.mubr.f32.gmra.mrb[0].mxu0 %v5038
  %v5172 = vpop.f32.mrb[0].mxu0
  %v5173 = vadd.f32 0.0, %v5172
  %v5174 = vpop.f32.mrb[0].mxu0
  %v5175 = vadd.f32 0.0, %v5174
  %5176 = vdwg.mxu0
  %5177 = vmatprep.subr.mxu0 %v5045
  %5178 = vmatpush1.msra.mxu0 %v5044
  %5179 = vmatprep.subr.mxu0 %v5049
  %5180 = vmatpush1.msra.mxu0 %v5048
  %5181 = vmatprep.subr.mxu0 %v5053
  %5182 = vmatpush1.msra.mxu0 %v5052
  %5183 = vmatprep.subr.mxu0 %v5057
  %5184 = vmatpush1.msra.mxu0 %v5056
  %5185 = vmatprep.subr.mxu0 %v5061
  %5186 = vmatpush1.msra.mxu0 %v5060
  %5187 = vmatprep.subr.mxu0 %v5065
  %5188 = vmatpush1.msra.mxu0 %v5064
  %5189 = vmatprep.subr.mxu0 %v5069
  %5190 = vmatpush1.msra.mxu0 %v5068
  %5191 = vmatprep.subr.mxu0 %v5073
  %5192 = vmatpush1.msra.mxu0 %v5072
  %5193 = vmatprep.subr.mxu0 %v5077
  %5194 = vmatpush1.msra.mxu0 %v5076
  %5195 = vmatprep.subr.mxu0 %v5081
  %5196 = vmatpush1.msra.mxu0 %v5080
  %5197 = vmatprep.subr.mxu0 %v5085
  %5198 = vmatpush1.msra.mxu0 %v5084
  %5199 = vmatprep.subr.mxu0 %v5089
  %5200 = vmatpush1.msra.mxu0 %v5088
  %5201 = vmatprep.subr.mxu0 %v5093
  %5202 = vmatpush1.msra.mxu0 %v5092
  %5203 = vmatprep.subr.mxu0 %v5097
  %5204 = vmatpush1.msra.mxu0 %v5096
  %5205 = vmatprep.subr.mxu0 %v5101
  %5206 = vmatpush1.msra.mxu0 %v5100
  %5207 = vmatprep.subr.mxu0 %v5105
  %5208 = vmatpush1.msra.mxu0 %v5104
  %5209 = vmatprep.subr.mxu0 0.0
  %5210 = vmatpush1.msra.mxu0 0.0
  %5211 = vmatprep.subr.mxu0 0.0
  %5212 = vmatpush1.msra.mxu0 0.0
  %5213 = vmatprep.subr.mxu0 0.0
  %5214 = vmatpush1.msra.mxu0 0.0
  %5215 = vmatprep.subr.mxu0 0.0
  %5216 = vmatpush1.msra.mxu0 0.0
  %5217 = vmatprep.subr.mxu0 0.0
  %5218 = vmatpush1.msra.mxu0 0.0
  %5219 = vmatprep.subr.mxu0 0.0
  %5220 = vmatpush1.msra.mxu0 0.0
  %5221 = vmatprep.subr.mxu0 0.0
  %5222 = vmatpush1.msra.mxu0 0.0
  %5223 = vmatprep.subr.mxu0 0.0
  %5224 = vmatpush1.msra.mxu0 0.0
  %5225 = vmatprep.subr.mxu0 0.0
  %5226 = vmatpush1.msra.mxu0 0.0
  %5227 = vmatprep.subr.mxu0 0.0
  %5228 = vmatpush1.msra.mxu0 0.0
  %5229 = vmatprep.subr.mxu0 0.0
  %5230 = vmatpush1.msra.mxu0 0.0
  %5231 = vmatprep.subr.mxu0 0.0
  %5232 = vmatpush1.msra.mxu0 0.0
  %5233 = vmatprep.subr.mxu0 0.0
  %5234 = vmatpush1.msra.mxu0 0.0
  %5235 = vmatprep.subr.mxu0 0.0
  %5236 = vmatpush1.msra.mxu0 0.0
  %5237 = vmatprep.subr.mxu0 0.0
  %5238 = vmatpush1.msra.mxu0 0.0
  %5239 = vmatprep.subr.mxu0 0.0
  %5240 = vmatpush1.msra.mxu0 0.0
  %5241 = vmatprep.mubr.f32.mxu0 0.0
  %5242 = vmatmul.mubr.f32.gmra.mrb[0].mxu0 %v5038
  %v5243 = vpop.f32.mrb[0].mxu0
  %v5244 = vadd.f32 0.0, %v5243
  %v5245 = vpop.f32.mrb[0].mxu0
  %v5246 = vadd.f32 0.0, %v5245
  %5247 = vdwg.mxu0
  %v5252 = vcombine.low %v5173, %v5175
  %v5253 = vcombine.low %v5244, %v5246
  %v5255 = vunpack.c.l.s4 1983009808
  %v5256 = vunpack.c.0.s8 %v5255
  %v5257 = vlaneseq
  %v5258 = vshrl.u32 %v5257, 7
  %v5259 = vsub.s32 %v5256, %v5258
  %v5260 = vrot.slane %v5252, %v5259
  %v5262 = vunpack.c.l.s4 1983009808
  %v5263 = vunpack.c.0.s8 %v5262
  %v5264 = vlaneseq
  %v5265 = vshrl.u32 %v5264, 7
  %v5266 = vsub.s32 %v5263, %v5265
  %v5267 = vrot.slane %v5253, %v5266
  %v5268 = vcombine.low %v5260, %v5267
  %v5270 = vadd.f32 %v5041, %v5268
  %v5271 = vxor.u32 %v5270, 2147483648
  %v5272 = vmul.f32 %v5271, 1.442695
  %v5273 = vpow.pop %v5272
  %v5274 = vadd.f32 %v5273, 1.0
  %v5275 = vrcp.pop %v5274
  %v5276 = vmul.f32 1.0, %v5275
  %v5278 = vrot.slane %v5270, 2
  %v5280 = vxor.u32 %v5278, 2147483648
  %v5281 = vmul.f32 %v5280, 1.442695
  %v5282 = vpow.pop %v5281
  %v5283 = vadd.f32 %v5282, 1.0
  %v5284 = vrcp.pop %v5283
  %v5285 = vmul.f32 1.0, %v5284
  %v5286 = vrot.slane %v5270, 4
  %v5288 = vtanh.pop %v5286
  %v5289 = vrot.slane %v5270, 6
  %v5291 = vxor.u32 %v5289, 2147483648
  %v5292 = vmul.f32 %v5291, 1.442695
  %v5293 = vpow.pop %v5292
  %v5294 = vadd.f32 %v5293, 1.0
  %v5295 = vrcp.pop %v5294
  %v5296 = vmul.f32 1.0, %v5295
  %v5297 = vmul.f32 %v5285, %v5036
  %v5298 = vmul.f32 %v5276, %v5288
  %v5299 = vadd.f32 %v5297, %v5298
  %v5300 = vtanh.pop %v5299
  %v5301 = vmul.f32 %v5296, %v5300
  %s5302 = scalar_lea.vmem %s5, 8
  %5303 = vst [vmem:[%s5302] sm:$0x3] %v5301
  %v5304 = vld [vmem:[%s3000] sm:$0xff]
  %v5305 = vld [vmem:[%s3] sm:$0xff]
  %v5306 = vld [vmem:[%s3 + $0x8] sm:$0xff]
  %v5307 = vld [vmem:[%s3 + $0x10] sm:$0xff]
  %v5308 = vld [vmem:[%s3 + $0x18] sm:$0xff]
  %v5309 = vld [vmem:[%s3 + $0x20] sm:$0xff]
  %v5310 = vld [vmem:[%s3 + $0x28] sm:$0xff]
  %v5311 = vld [vmem:[%s3 + $0x30] sm:$0xff]
  %v5312 = vld [vmem:[%s3 + $0x38] sm:$0xff]
  %v5313 = vld [vmem:[%s3 + $0x40] sm:$0xff]
  %v5314 = vld [vmem:[%s3 + $0x48] sm:$0xff]
  %v5315 = vld [vmem:[%s3 + $0x50] sm:$0xff]
  %v5316 = vld [vmem:[%s3 + $0x58] sm:$0xff]
  %v5317 = vld [vmem:[%s3 + $0x60] sm:$0xff]
  %v5318 = vld [vmem:[%s3 + $0x68] sm:$0xff]
  %v5319 = vld [vmem:[%s3 + $0x70] sm:$0xff]
  %v5320 = vld [vmem:[%s3 + $0x78] sm:$0xff]
  %v5321 = vld [vmem:[%s3 + $0x80] sm:$0xff]
  %v5322 = vld [vmem:[%s3 + $0x88] sm:$0xff]
  %v5323 = vld [vmem:[%s3 + $0x90] sm:$0xff]
  %v5324 = vld [vmem:[%s3 + $0x98] sm:$0xff]
  %v5325 = vld [vmem:[%s3 + $0xa0] sm:$0xff]
  %v5326 = vld [vmem:[%s3 + $0xa8] sm:$0xff]
  %v5327 = vld [vmem:[%s3 + $0xb0] sm:$0xff]
  %v5328 = vld [vmem:[%s3 + $0xb8] sm:$0xff]
  %v5329 = vld [vmem:[%s3 + $0xc0] sm:$0xff]
  %v5330 = vld [vmem:[%s3 + $0xc8] sm:$0xff]
  %v5331 = vld [vmem:[%s3 + $0xd0] sm:$0xff]
  %v5332 = vld [vmem:[%s3 + $0xd8] sm:$0xff]
  %v5333 = vld [vmem:[%s3 + $0xe0] sm:$0xff]
  %v5334 = vld [vmem:[%s3 + $0xe8] sm:$0xff]
  %v5335 = vld [vmem:[%s3 + $0xf0] sm:$0xff]
  %v5336 = vld [vmem:[%s3 + $0xf8] sm:$0xff]
  %v5337 = vld [vmem:[%s3 + $0x100] sm:$0xff]
  %v5338 = vld [vmem:[%s3 + $0x108] sm:$0xff]
  %v5339 = vld [vmem:[%s3 + $0x110] sm:$0xff]
  %v5340 = vld [vmem:[%s3 + $0x118] sm:$0xff]
  %v5341 = vld [vmem:[%s3 + $0x120] sm:$0xff]
  %v5342 = vld [vmem:[%s3 + $0x128] sm:$0xff]
  %v5343 = vld [vmem:[%s3 + $0x130] sm:$0xff]
  %v5344 = vld [vmem:[%s3 + $0x138] sm:$0xff]
  %v5345 = vld [vmem:[%s3 + $0x140] sm:$0xff]
  %v5346 = vld [vmem:[%s3 + $0x148] sm:$0xff]
  %v5347 = vld [vmem:[%s3 + $0x150] sm:$0xff]
  %v5348 = vld [vmem:[%s3 + $0x158] sm:$0xff]
  %v5349 = vld [vmem:[%s3 + $0x160] sm:$0xff]
  %v5350 = vld [vmem:[%s3 + $0x168] sm:$0xff]
  %v5351 = vld [vmem:[%s3 + $0x170] sm:$0xff]
  %v5352 = vld [vmem:[%s3 + $0x178] sm:$0xff]
  %v5353 = vld [vmem:[%s3 + $0x180] sm:$0xff]
  %v5354 = vld [vmem:[%s3 + $0x188] sm:$0xff]
  %v5355 = vld [vmem:[%s3 + $0x190] sm:$0xff]
  %v5356 = vld [vmem:[%s3 + $0x198] sm:$0xff]
  %v5357 = vld [vmem:[%s3 + $0x1a0] sm:$0xff]
  %v5358 = vld [vmem:[%s3 + $0x1a8] sm:$0xff]
  %v5359 = vld [vmem:[%s3 + $0x1b0] sm:$0xff]
  %v5360 = vld [vmem:[%s3 + $0x1b8] sm:$0xff]
  %v5361 = vld [vmem:[%s3 + $0x1c0] sm:$0xff]
  %v5362 = vld [vmem:[%s3 + $0x1c8] sm:$0xff]
  %v5363 = vld [vmem:[%s3 + $0x1d0] sm:$0xff]
  %v5364 = vld [vmem:[%s3 + $0x1d8] sm:$0xff]
  %v5365 = vld [vmem:[%s3 + $0x1e0] sm:$0xff]
  %v5366 = vld [vmem:[%s3 + $0x1e8] sm:$0xff]
  %v5367 = vld [vmem:[%s3 + $0x1f0] sm:$0xff]
  %v5368 = vld [vmem:[%s3 + $0x1f8] sm:$0xff]
  %5369 = vmatprep.subr.mxu0 %v5306
  %5370 = vmatpush1.msra.mxu0 %v5305
  %5371 = vmatprep.subr.mxu0 %v5310
  %5372 = vmatpush1.msra.mxu0 %v5309
  %5373 = vmatprep.subr.mxu0 %v5314
  %5374 = vmatpush1.msra.mxu0 %v5313
  %5375 = vmatprep.subr.mxu0 %v5318
  %5376 = vmatpush1.msra.mxu0 %v5317
  %5377 = vmatprep.subr.mxu0 %v5322
  %5378 = vmatpush1.msra.mxu0 %v5321
  %5379 = vmatprep.subr.mxu0 %v5326
  %5380 = vmatpush1.msra.mxu0 %v5325
  %5381 = vmatprep.subr.mxu0 %v5330
  %5382 = vmatpush1.msra.mxu0 %v5329
  %5383 = vmatprep.subr.mxu0 %v5334
  %5384 = vmatpush1.msra.mxu0 %v5333
  %5385 = vmatprep.subr.mxu0 %v5338
  %5386 = vmatpush1.msra.mxu0 %v5337
  %5387 = vmatprep.subr.mxu0 %v5342
  %5388 = vmatpush1.msra.mxu0 %v5341
  %5389 = vmatprep.subr.mxu0 %v5346
  %5390 = vmatpush1.msra.mxu0 %v5345
  %5391 = vmatprep.subr.mxu0 %v5350
  %5392 = vmatpush1.msra.mxu0 %v5349
  %5393 = vmatprep.subr.mxu0 %v5354
  %5394 = vmatpush1.msra.mxu0 %v5353
  %5395 = vmatprep.subr.mxu0 %v5358
  %5396 = vmatpush1.msra.mxu0 %v5357
  %5397 = vmatprep.subr.mxu0 %v5362
  %5398 = vmatpush1.msra.mxu0 %v5361
  %5399 = vmatprep.subr.mxu0 %v5366
  %5400 = vmatpush1.msra.mxu0 %v5365
  %5401 = vmatprep.subr.mxu0 0.0
  %5402 = vmatpush1.msra.mxu0 0.0
  %5403 = vmatprep.subr.mxu0 0.0
  %5404 = vmatpush1.msra.mxu0 0.0
  %5405 = vmatprep.subr.mxu0 0.0
  %5406 = vmatpush1.msra.mxu0 0.0
  %5407 = vmatprep.subr.mxu0 0.0
  %5408 = vmatpush1.msra.mxu0 0.0
  %5409 = vmatprep.subr.mxu0 0.0
  %5410 = vmatpush1.msra.mxu0 0.0
  %5411 = vmatprep.subr.mxu0 0.0
  %5412 = vmatpush1.msra.mxu0 0.0
  %5413 = vmatprep.subr.mxu0 0.0
  %5414 = vmatpush1.msra.mxu0 0.0
  %5415 = vmatprep.subr.mxu0 0.0
  %5416 = vmatpush1.msra.mxu0 0.0
  %5417 = vmatprep.subr.mxu0 0.0
  %5418 = vmatpush1.msra.mxu0 0.0
  %5419 = vmatprep.subr.mxu0 0.0
  %5420 = vmatpush1.msra.mxu0 0.0
  %5421 = vmatprep.subr.mxu0 0.0
  %5422 = vmatpush1.msra.mxu0 0.0
  %5423 = vmatprep.subr.mxu0 0.0
  %5424 = vmatpush1.msra.mxu0 0.0
  %5425 = vmatprep.subr.mxu0 0.0
  %5426 = vmatpush1.msra.mxu0 0.0
  %5427 = vmatprep.subr.mxu0 0.0
  %5428 = vmatpush1.msra.mxu0 0.0
  %5429 = vmatprep.subr.mxu0 0.0
  %5430 = vmatpush1.msra.mxu0 0.0
  %5431 = vmatprep.subr.mxu0 0.0
  %5432 = vmatpush1.msra.mxu0 0.0
  %5433 = vmatprep.mubr.f32.mxu0 0.0
  %5434 = vmatmul.mubr.f32.gmra.mrb[0].mxu0 %v5301
  %v5435 = vpop.f32.mrb[0].mxu0
  %v5436 = vadd.f32 0.0, %v5435
  %v5437 = vpop.f32.mrb[0].mxu0
  %v5438 = vadd.f32 0.0, %v5437
  %5439 = vdwg.mxu0
  %5440 = vmatprep.subr.mxu0 %v5308
  %5441 = vmatpush1.msra.mxu0 %v5307
  %5442 = vmatprep.subr.mxu0 %v5312
  %5443 = vmatpush1.msra.mxu0 %v5311
  %5444 = vmatprep.subr.mxu0 %v5316
  %5445 = vmatpush1.msra.mxu0 %v5315
  %5446 = vmatprep.subr.mxu0 %v5320
  %5447 = vmatpush1.msra.mxu0 %v5319
  %5448 = vmatprep.subr.mxu0 %v5324
  %5449 = vmatpush1.msra.mxu0 %v5323
  %5450 = vmatprep.subr.mxu0 %v5328
  %5451 = vmatpush1.msra.mxu0 %v5327
  %5452 = vmatprep.subr.mxu0 %v5332
  %5453 = vmatpush1.msra.mxu0 %v5331
  %5454 = vmatprep.subr.mxu0 %v5336
  %5455 = vmatpush1.msra.mxu0 %v5335
  %5456 = vmatprep.subr.mxu0 %v5340
  %5457 = vmatpush1.msra.mxu0 %v5339
  %5458 = vmatprep.subr.mxu0 %v5344
  %5459 = vmatpush1.msra.mxu0 %v5343
  %5460 = vmatprep.subr.mxu0 %v5348
  %5461 = vmatpush1.msra.mxu0 %v5347
  %5462 = vmatprep.subr.mxu0 %v5352
  %5463 = vmatpush1.msra.mxu0 %v5351
  %5464 = vmatprep.subr.mxu0 %v5356
  %5465 = vmatpush1.msra.mxu0 %v5355
  %5466 = vmatprep.subr.mxu0 %v5360
  %5467 = vmatpush1.msra.mxu0 %v5359
  %5468 = vmatprep.subr.mxu0 %v5364
  %5469 = vmatpush1.msra.mxu0 %v5363
  %5470 = vmatprep.subr.mxu0 %v5368
  %5471 = vmatpush1.msra.mxu0 %v5367
  %5472 = vmatprep.subr.mxu0 0.0
  %5473 = vmatpush1.msra.mxu0 0.0
  %5474 = vmatprep.subr.mxu0 0.0
  %5475 = vmatpush1.msra.mxu0 0.0
  %5476 = vmatprep.subr.mxu0 0.0
  %5477 = vmatpush1.msra.mxu0 0.0
  %5478 = vmatprep.subr.mxu0 0.0
  %5479 = vmatpush1.msra.mxu0 0.0
  %5480 = vmatprep.subr.mxu0 0.0
  %5481 = vmatpush1.msra.mxu0 0.0
  %5482 = vmatprep.subr.mxu0 0.0
  %5483 = vmatpush1.msra.mxu0 0.0
  %5484 = vmatprep.subr.mxu0 0.0
  %5485 = vmatpush1.msra.mxu0 0.0
  %5486 = vmatprep.subr.mxu0 0.0
  %5487 = vmatpush1.msra.mxu0 0.0
  %5488 = vmatprep.subr.mxu0 0.0
  %5489 = vmatpush1.msra.mxu0 0.0
  %5490 = vmatprep.subr.mxu0 0.0
  %5491 = vmatpush1.msra.mxu0 0.0
  %5492 = vmatprep.subr.mxu0 0.0
  %5493 = vmatpush1.msra.mxu0 0.0
  %5494 = vmatprep.subr.mxu0 0.0
  %5495 = vmatpush1.msra.mxu0 0.0
  %5496 = vmatprep.subr.mxu0 0.0
  %5497 = vmatpush1.msra.mxu0 0.0
  %5498 = vmatprep.subr.mxu0 0.0
  %5499 = vmatpush1.msra.mxu0 0.0
  %5500 = vmatprep.subr.mxu0 0.0
  %5501 = vmatpush1.msra.mxu0 0.0
  %5502 = vmatprep.subr.mxu0 0.0
  %5503 = vmatpush1.msra.mxu0 0.0
  %5504 = vmatprep.mubr.f32.mxu0 0.0
  %5505 = vmatmul.mubr.f32.gmra.mrb[0].mxu0 %v5301
  %v5506 = vpop.f32.mrb[0].mxu0
  %v5507 = vadd.f32 0.0, %v5506
  %v5508 = vpop.f32.mrb[0].mxu0
  %v5509 = vadd.f32 0.0, %v5508
  %5510 = vdwg.mxu0
  %v5515 = vcombine.low %v5436, %v5438
  %v5516 = vcombine.low %v5507, %v5509
  %v5518 = vunpack.c.l.s4 1983009808
  %v5519 = vunpack.c.0.s8 %v5518
  %v5520 = vlaneseq
  %v5521 = vshrl.u32 %v5520, 7
  %v5522 = vsub.s32 %v5519, %v5521
  %v5523 = vrot.slane %v5515, %v5522
  %v5525 = vunpack.c.l.s4 1983009808
  %v5526 = vunpack.c.0.s8 %v5525
  %v5527 = vlaneseq
  %v5528 = vshrl.u32 %v5527, 7
  %v5529 = vsub.s32 %v5526, %v5528
  %v5530 = vrot.slane %v5516, %v5529
  %v5531 = vcombine.low %v5523, %v5530
  %v5533 = vadd.f32 %v5304, %v5531
  %v5534 = vxor.u32 %v5533, 2147483648
  %v5535 = vmul.f32 %v5534, 1.442695
  %v5536 = vpow.pop %v5535
  %v5537 = vadd.f32 %v5536, 1.0
  %v5538 = vrcp.pop %v5537
  %v5539 = vmul.f32 1.0, %v5538
  %v5541 = vrot.slane %v5533, 2
  %v5543 = vxor.u32 %v5541, 2147483648
  %v5544 = vmul.f32 %v5543, 1.442695
  %v5545 = vpow.pop %v5544
  %v5546 = vadd.f32 %v5545, 1.0
  %v5547 = vrcp.pop %v5546
  %v5548 = vmul.f32 1.0, %v5547
  %v5549 = vrot.slane %v5533, 4
  %v5551 = vtanh.pop %v5549
  %v5552 = vrot.slane %v5533, 6
  %v5554 = vxor.u32 %v5552, 2147483648
  %v5555 = vmul.f32 %v5554, 1.442695
  %v5556 = vpow.pop %v5555
  %v5557 = vadd.f32 %v5556, 1.0
  %v5558 = vrcp.pop %v5557
  %v5559 = vmul.f32 1.0, %v5558
  %v5560 = vmul.f32 %v5548, %v5299
  %v5561 = vmul.f32 %v5539, %v5551
  %v5562 = vadd.f32 %v5560, %v5561
  %v5563 = vtanh.pop %v5562
  %v5564 = vmul.f32 %v5559, %v5563
  %s5565 = scalar_lea.vmem %s5, 10
  %5566 = vst [vmem:[%s5565] sm:$0x3] %v5564
  %v5567 = vld [vmem:[%s3492] sm:$0xff]
  %v5568 = vld [vmem:[%s3] sm:$0xff]
  %v5569 = vld [vmem:[%s3 + $0x8] sm:$0xff]
  %v5570 = vld [vmem:[%s3 + $0x10] sm:$0xff]
  %v5571 = vld [vmem:[%s3 + $0x18] sm:$0xff]
  %v5572 = vld [vmem:[%s3 + $0x20] sm:$0xff]
  %v5573 = vld [vmem:[%s3 + $0x28] sm:$0xff]
  %v5574 = vld [vmem:[%s3 + $0x30] sm:$0xff]
  %v5575 = vld [vmem:[%s3 + $0x38] sm:$0xff]
  %v5576 = vld [vmem:[%s3 + $0x40] sm:$0xff]
  %v5577 = vld [vmem:[%s3 + $0x48] sm:$0xff]
  %v5578 = vld [vmem:[%s3 + $0x50] sm:$0xff]
  %v5579 = vld [vmem:[%s3 + $0x58] sm:$0xff]
  %v5580 = vld [vmem:[%s3 + $0x60] sm:$0xff]
  %v5581 = vld [vmem:[%s3 + $0x68] sm:$0xff]
  %v5582 = vld [vmem:[%s3 + $0x70] sm:$0xff]
  %v5583 = vld [vmem:[%s3 + $0x78] sm:$0xff]
  %v5584 = vld [vmem:[%s3 + $0x80] sm:$0xff]
  %v5585 = vld [vmem:[%s3 + $0x88] sm:$0xff]
  %v5586 = vld [vmem:[%s3 + $0x90] sm:$0xff]
  %v5587 = vld [vmem:[%s3 + $0x98] sm:$0xff]
  %v5588 = vld [vmem:[%s3 + $0xa0] sm:$0xff]
  %v5589 = vld [vmem:[%s3 + $0xa8] sm:$0xff]
  %v5590 = vld [vmem:[%s3 + $0xb0] sm:$0xff]
  %v5591 = vld [vmem:[%s3 + $0xb8] sm:$0xff]
  %v5592 = vld [vmem:[%s3 + $0xc0] sm:$0xff]
  %v5593 = vld [vmem:[%s3 + $0xc8] sm:$0xff]
  %v5594 = vld [vmem:[%s3 + $0xd0] sm:$0xff]
  %v5595 = vld [vmem:[%s3 + $0xd8] sm:$0xff]
  %v5596 = vld [vmem:[%s3 + $0xe0] sm:$0xff]
  %v5597 = vld [vmem:[%s3 + $0xe8] sm:$0xff]
  %v5598 = vld [vmem:[%s3 + $0xf0] sm:$0xff]
  %v5599 = vld [vmem:[%s3 + $0xf8] sm:$0xff]
  %v5600 = vld [vmem:[%s3 + $0x100] sm:$0xff]
  %v5601 = vld [vmem:[%s3 + $0x108] sm:$0xff]
  %v5602 = vld [vmem:[%s3 + $0x110] sm:$0xff]
  %v5603 = vld [vmem:[%s3 + $0x118] sm:$0xff]
  %v5604 = vld [vmem:[%s3 + $0x120] sm:$0xff]
  %v5605 = vld [vmem:[%s3 + $0x128] sm:$0xff]
  %v5606 = vld [vmem:[%s3 + $0x130] sm:$0xff]
  %v5607 = vld [vmem:[%s3 + $0x138] sm:$0xff]
  %v5608 = vld [vmem:[%s3 + $0x140] sm:$0xff]
  %v5609 = vld [vmem:[%s3 + $0x148] sm:$0xff]
  %v5610 = vld [vmem:[%s3 + $0x150] sm:$0xff]
  %v5611 = vld [vmem:[%s3 + $0x158] sm:$0xff]
  %v5612 = vld [vmem:[%s3 + $0x160] sm:$0xff]
  %v5613 = vld [vmem:[%s3 + $0x168] sm:$0xff]
  %v5614 = vld [vmem:[%s3 + $0x170] sm:$0xff]
  %v5615 = vld [vmem:[%s3 + $0x178] sm:$0xff]
  %v5616 = vld [vmem:[%s3 + $0x180] sm:$0xff]
  %v5617 = vld [vmem:[%s3 + $0x188] sm:$0xff]
  %v5618 = vld [vmem:[%s3 + $0x190] sm:$0xff]
  %v5619 = vld [vmem:[%s3 + $0x198] sm:$0xff]
  %v5620 = vld [vmem:[%s3 + $0x1a0] sm:$0xff]
  %v5621 = vld [vmem:[%s3 + $0x1a8] sm:$0xff]
  %v5622 = vld [vmem:[%s3 + $0x1b0] sm:$0xff]
  %v5623 = vld [vmem:[%s3 + $0x1b8] sm:$0xff]
  %v5624 = vld [vmem:[%s3 + $0x1c0] sm:$0xff]
  %v5625 = vld [vmem:[%s3 + $0x1c8] sm:$0xff]
  %v5626 = vld [vmem:[%s3 + $0x1d0] sm:$0xff]
  %v5627 = vld [vmem:[%s3 + $0x1d8] sm:$0xff]
  %v5628 = vld [vmem:[%s3 + $0x1e0] sm:$0xff]
  %v5629 = vld [vmem:[%s3 + $0x1e8] sm:$0xff]
  %v5630 = vld [vmem:[%s3 + $0x1f0] sm:$0xff]
  %v5631 = vld [vmem:[%s3 + $0x1f8] sm:$0xff]
  %5632 = vmatprep.subr.mxu0 %v5569
  %5633 = vmatpush1.msra.mxu0 %v5568
  %5634 = vmatprep.subr.mxu0 %v5573
  %5635 = vmatpush1.msra.mxu0 %v5572
  %5636 = vmatprep.subr.mxu0 %v5577
  %5637 = vmatpush1.msra.mxu0 %v5576
  %5638 = vmatprep.subr.mxu0 %v5581
  %5639 = vmatpush1.msra.mxu0 %v5580
  %5640 = vmatprep.subr.mxu0 %v5585
  %5641 = vmatpush1.msra.mxu0 %v5584
  %5642 = vmatprep.subr.mxu0 %v5589
  %5643 = vmatpush1.msra.mxu0 %v5588
  %5644 = vmatprep.subr.mxu0 %v5593
  %5645 = vmatpush1.msra.mxu0 %v5592
  %5646 = vmatprep.subr.mxu0 %v5597
  %5647 = vmatpush1.msra.mxu0 %v5596
  %5648 = vmatprep.subr.mxu0 %v5601
  %5649 = vmatpush1.msra.mxu0 %v5600
  %5650 = vmatprep.subr.mxu0 %v5605
  %5651 = vmatpush1.msra.mxu0 %v5604
  %5652 = vmatprep.subr.mxu0 %v5609
  %5653 = vmatpush1.msra.mxu0 %v5608
  %5654 = vmatprep.subr.mxu0 %v5613
  %5655 = vmatpush1.msra.mxu0 %v5612
  %5656 = vmatprep.subr.mxu0 %v5617
  %5657 = vmatpush1.msra.mxu0 %v5616
  %5658 = vmatprep.subr.mxu0 %v5621
  %5659 = vmatpush1.msra.mxu0 %v5620
  %5660 = vmatprep.subr.mxu0 %v5625
  %5661 = vmatpush1.msra.mxu0 %v5624
  %5662 = vmatprep.subr.mxu0 %v5629
  %5663 = vmatpush1.msra.mxu0 %v5628
  %5664 = vmatprep.subr.mxu0 0.0
  %5665 = vmatpush1.msra.mxu0 0.0
  %5666 = vmatprep.subr.mxu0 0.0
  %5667 = vmatpush1.msra.mxu0 0.0
  %5668 = vmatprep.subr.mxu0 0.0
  %5669 = vmatpush1.msra.mxu0 0.0
  %5670 = vmatprep.subr.mxu0 0.0
  %5671 = vmatpush1.msra.mxu0 0.0
  %5672 = vmatprep.subr.mxu0 0.0
  %5673 = vmatpush1.msra.mxu0 0.0
  %5674 = vmatprep.subr.mxu0 0.0
  %5675 = vmatpush1.msra.mxu0 0.0
  %5676 = vmatprep.subr.mxu0 0.0
  %5677 = vmatpush1.msra.mxu0 0.0
  %5678 = vmatprep.subr.mxu0 0.0
  %5679 = vmatpush1.msra.mxu0 0.0
  %5680 = vmatprep.subr.mxu0 0.0
  %5681 = vmatpush1.msra.mxu0 0.0
  %5682 = vmatprep.subr.mxu0 0.0
  %5683 = vmatpush1.msra.mxu0 0.0
  %5684 = vmatprep.subr.mxu0 0.0
  %5685 = vmatpush1.msra.mxu0 0.0
  %5686 = vmatprep.subr.mxu0 0.0
  %5687 = vmatpush1.msra.mxu0 0.0
  %5688 = vmatprep.subr.mxu0 0.0
  %5689 = vmatpush1.msra.mxu0 0.0
  %5690 = vmatprep.subr.mxu0 0.0
  %5691 = vmatpush1.msra.mxu0 0.0
  %5692 = vmatprep.subr.mxu0 0.0
  %5693 = vmatpush1.msra.mxu0 0.0
  %5694 = vmatprep.subr.mxu0 0.0
  %5695 = vmatpush1.msra.mxu0 0.0
  %5696 = vmatprep.mubr.f32.mxu0 0.0
  %5697 = vmatmul.mubr.f32.gmra.mrb[0].mxu0 %v5564
  %v5698 = vpop.f32.mrb[0].mxu0
  %v5699 = vadd.f32 0.0, %v5698
  %v5700 = vpop.f32.mrb[0].mxu0
  %v5701 = vadd.f32 0.0, %v5700
  %5702 = vdwg.mxu0
  %5703 = vmatprep.subr.mxu0 %v5571
  %5704 = vmatpush1.msra.mxu0 %v5570
  %5705 = vmatprep.subr.mxu0 %v5575
  %5706 = vmatpush1.msra.mxu0 %v5574
  %5707 = vmatprep.subr.mxu0 %v5579
  %5708 = vmatpush1.msra.mxu0 %v5578
  %5709 = vmatprep.subr.mxu0 %v5583
  %5710 = vmatpush1.msra.mxu0 %v5582
  %5711 = vmatprep.subr.mxu0 %v5587
  %5712 = vmatpush1.msra.mxu0 %v5586
  %5713 = vmatprep.subr.mxu0 %v5591
  %5714 = vmatpush1.msra.mxu0 %v5590
  %5715 = vmatprep.subr.mxu0 %v5595
  %5716 = vmatpush1.msra.mxu0 %v5594
  %5717 = vmatprep.subr.mxu0 %v5599
  %5718 = vmatpush1.msra.mxu0 %v5598
  %5719 = vmatprep.subr.mxu0 %v5603
  %5720 = vmatpush1.msra.mxu0 %v5602
  %5721 = vmatprep.subr.mxu0 %v5607
  %5722 = vmatpush1.msra.mxu0 %v5606
  %5723 = vmatprep.subr.mxu0 %v5611
  %5724 = vmatpush1.msra.mxu0 %v5610
  %5725 = vmatprep.subr.mxu0 %v5615
  %5726 = vmatpush1.msra.mxu0 %v5614
  %5727 = vmatprep.subr.mxu0 %v5619
  %5728 = vmatpush1.msra.mxu0 %v5618
  %5729 = vmatprep.subr.mxu0 %v5623
  %5730 = vmatpush1.msra.mxu0 %v5622
  %5731 = vmatprep.subr.mxu0 %v5627
  %5732 = vmatpush1.msra.mxu0 %v5626
  %5733 = vmatprep.subr.mxu0 %v5631
  %5734 = vmatpush1.msra.mxu0 %v5630
  %5735 = vmatprep.subr.mxu0 0.0
  %5736 = vmatpush1.msra.mxu0 0.0
  %5737 = vmatprep.subr.mxu0 0.0
  %5738 = vmatpush1.msra.mxu0 0.0
  %5739 = vmatprep.subr.mxu0 0.0
  %5740 = vmatpush1.msra.mxu0 0.0
  %5741 = vmatprep.subr.mxu0 0.0
  %5742 = vmatpush1.msra.mxu0 0.0
  %5743 = vmatprep.subr.mxu0 0.0
  %5744 = vmatpush1.msra.mxu0 0.0
  %5745 = vmatprep.subr.mxu0 0.0
  %5746 = vmatpush1.msra.mxu0 0.0
  %5747 = vmatprep.subr.mxu0 0.0
  %5748 = vmatpush1.msra.mxu0 0.0
  %5749 = vmatprep.subr.mxu0 0.0
  %5750 = vmatpush1.msra.mxu0 0.0
  %5751 = vmatprep.subr.mxu0 0.0
  %5752 = vmatpush1.msra.mxu0 0.0
  %5753 = vmatprep.subr.mxu0 0.0
  %5754 = vmatpush1.msra.mxu0 0.0
  %5755 = vmatprep.subr.mxu0 0.0
  %5756 = vmatpush1.msra.mxu0 0.0
  %5757 = vmatprep.subr.mxu0 0.0
  %5758 = vmatpush1.msra.mxu0 0.0
  %5759 = vmatprep.subr.mxu0 0.0
  %5760 = vmatpush1.msra.mxu0 0.0
  %5761 = vmatprep.subr.mxu0 0.0
  %5762 = vmatpush1.msra.mxu0 0.0
  %5763 = vmatprep.subr.mxu0 0.0
  %5764 = vmatpush1.msra.mxu0 0.0
  %5765 = vmatprep.subr.mxu0 0.0
  %5766 = vmatpush1.msra.mxu0 0.0
  %5767 = vmatprep.mubr.f32.mxu0 0.0
  %5768 = vmatmul.mubr.f32.gmra.mrb[0].mxu0 %v5564
  %v5769 = vpop.f32.mrb[0].mxu0
  %v5770 = vadd.f32 0.0, %v5769
  %v5771 = vpop.f32.mrb[0].mxu0
  %v5772 = vadd.f32 0.0, %v5771
  %5773 = vdwg.mxu0
  %v5778 = vcombine.low %v5699, %v5701
  %v5779 = vcombine.low %v5770, %v5772
  %v5781 = vunpack.c.l.s4 1983009808
  %v5782 = vunpack.c.0.s8 %v5781
  %v5783 = vlaneseq
  %v5784 = vshrl.u32 %v5783, 7
  %v5785 = vsub.s32 %v5782, %v5784
  %v5786 = vrot.slane %v5778, %v5785
  %v5788 = vunpack.c.l.s4 1983009808
  %v5789 = vunpack.c.0.s8 %v5788
  %v5790 = vlaneseq
  %v5791 = vshrl.u32 %v5790, 7
  %v5792 = vsub.s32 %v5789, %v5791
  %v5793 = vrot.slane %v5779, %v5792
  %v5794 = vcombine.low %v5786, %v5793
  %v5796 = vadd.f32 %v5567, %v5794
  %v5797 = vxor.u32 %v5796, 2147483648
  %v5798 = vmul.f32 %v5797, 1.442695
  %v5799 = vpow.pop %v5798
  %v5800 = vadd.f32 %v5799, 1.0
  %v5801 = vrcp.pop %v5800
  %v5802 = vmul.f32 1.0, %v5801
  %v5804 = vrot.slane %v5796, 2
  %v5806 = vxor.u32 %v5804, 2147483648
  %v5807 = vmul.f32 %v5806, 1.442695
  %v5808 = vpow.pop %v5807
  %v5809 = vadd.f32 %v5808, 1.0
  %v5810 = vrcp.pop %v5809
  %v5811 = vmul.f32 1.0, %v5810
  %v5812 = vrot.slane %v5796, 4
  %v5814 = vtanh.pop %v5812
  %v5815 = vrot.slane %v5796, 6
  %v5817 = vxor.u32 %v5815, 2147483648
  %v5818 = vmul.f32 %v5817, 1.442695
  %v5819 = vpow.pop %v5818
  %v5820 = vadd.f32 %v5819, 1.0
  %v5821 = vrcp.pop %v5820
  %v5822 = vmul.f32 1.0, %v5821
  %v5823 = vmul.f32 %v5811, %v5562
  %v5824 = vmul.f32 %v5802, %v5814
  %v5825 = vadd.f32 %v5823, %v5824
  %v5826 = vtanh.pop %v5825
  %v5827 = vmul.f32 %v5822, %v5826
  %s5828 = scalar_lea.vmem %s5, 12
  %5829 = vst [vmem:[%s5828] sm:$0x3] %v5827
  %v5830 = vld [vmem:[%s3984] sm:$0xff]
  %v5831 = vld [vmem:[%s3] sm:$0xff]
  %v5832 = vld [vmem:[%s3 + $0x8] sm:$0xff]
  %v5833 = vld [vmem:[%s3 + $0x10] sm:$0xff]
  %v5834 = vld [vmem:[%s3 + $0x18] sm:$0xff]
  %v5835 = vld [vmem:[%s3 + $0x20] sm:$0xff]
  %v5836 = vld [vmem:[%s3 + $0x28] sm:$0xff]
  %v5837 = vld [vmem:[%s3 + $0x30] sm:$0xff]
  %v5838 = vld [vmem:[%s3 + $0x38] sm:$0xff]
  %v5839 = vld [vmem:[%s3 + $0x40] sm:$0xff]
  %v5840 = vld [vmem:[%s3 + $0x48] sm:$0xff]
  %v5841 = vld [vmem:[%s3 + $0x50] sm:$0xff]
  %v5842 = vld [vmem:[%s3 + $0x58] sm:$0xff]
  %v5843 = vld [vmem:[%s3 + $0x60] sm:$0xff]
  %v5844 = vld [vmem:[%s3 + $0x68] sm:$0xff]
  %v5845 = vld [vmem:[%s3 + $0x70] sm:$0xff]
  %v5846 = vld [vmem:[%s3 + $0x78] sm:$0xff]
  %v5847 = vld [vmem:[%s3 + $0x80] sm:$0xff]
  %v5848 = vld [vmem:[%s3 + $0x88] sm:$0xff]
  %v5849 = vld [vmem:[%s3 + $0x90] sm:$0xff]
  %v5850 = vld [vmem:[%s3 + $0x98] sm:$0xff]
  %v5851 = vld [vmem:[%s3 + $0xa0] sm:$0xff]
  %v5852 = vld [vmem:[%s3 + $0xa8] sm:$0xff]
  %v5853 = vld [vmem:[%s3 + $0xb0] sm:$0xff]
  %v5854 = vld [vmem:[%s3 + $0xb8] sm:$0xff]
  %v5855 = vld [vmem:[%s3 + $0xc0] sm:$0xff]
  %v5856 = vld [vmem:[%s3 + $0xc8] sm:$0xff]
  %v5857 = vld [vmem:[%s3 + $0xd0] sm:$0xff]
  %v5858 = vld [vmem:[%s3 + $0xd8] sm:$0xff]
  %v5859 = vld [vmem:[%s3 + $0xe0] sm:$0xff]
  %v5860 = vld [vmem:[%s3 + $0xe8] sm:$0xff]
  %v5861 = vld [vmem:[%s3 + $0xf0] sm:$0xff]
  %v5862 = vld [vmem:[%s3 + $0xf8] sm:$0xff]
  %v5863 = vld [vmem:[%s3 + $0x100] sm:$0xff]
  %v5864 = vld [vmem:[%s3 + $0x108] sm:$0xff]
  %v5865 = vld [vmem:[%s3 + $0x110] sm:$0xff]
  %v5866 = vld [vmem:[%s3 + $0x118] sm:$0xff]
  %v5867 = vld [vmem:[%s3 + $0x120] sm:$0xff]
  %v5868 = vld [vmem:[%s3 + $0x128] sm:$0xff]
  %v5869 = vld [vmem:[%s3 + $0x130] sm:$0xff]
  %v5870 = vld [vmem:[%s3 + $0x138] sm:$0xff]
  %v5871 = vld [vmem:[%s3 + $0x140] sm:$0xff]
  %v5872 = vld [vmem:[%s3 + $0x148] sm:$0xff]
  %v5873 = vld [vmem:[%s3 + $0x150] sm:$0xff]
  %v5874 = vld [vmem:[%s3 + $0x158] sm:$0xff]
  %v5875 = vld [vmem:[%s3 + $0x160] sm:$0xff]
  %v5876 = vld [vmem:[%s3 + $0x168] sm:$0xff]
  %v5877 = vld [vmem:[%s3 + $0x170] sm:$0xff]
  %v5878 = vld [vmem:[%s3 + $0x178] sm:$0xff]
  %v5879 = vld [vmem:[%s3 + $0x180] sm:$0xff]
  %v5880 = vld [vmem:[%s3 + $0x188] sm:$0xff]
  %v5881 = vld [vmem:[%s3 + $0x190] sm:$0xff]
  %v5882 = vld [vmem:[%s3 + $0x198] sm:$0xff]
  %v5883 = vld [vmem:[%s3 + $0x1a0] sm:$0xff]
  %v5884 = vld [vmem:[%s3 + $0x1a8] sm:$0xff]
  %v5885 = vld [vmem:[%s3 + $0x1b0] sm:$0xff]
  %v5886 = vld [vmem:[%s3 + $0x1b8] sm:$0xff]
  %v5887 = vld [vmem:[%s3 + $0x1c0] sm:$0xff]
  %v5888 = vld [vmem:[%s3 + $0x1c8] sm:$0xff]
  %v5889 = vld [vmem:[%s3 + $0x1d0] sm:$0xff]
  %v5890 = vld [vmem:[%s3 + $0x1d8] sm:$0xff]
  %v5891 = vld [vmem:[%s3 + $0x1e0] sm:$0xff]
  %v5892 = vld [vmem:[%s3 + $0x1e8] sm:$0xff]
  %v5893 = vld [vmem:[%s3 + $0x1f0] sm:$0xff]
  %v5894 = vld [vmem:[%s3 + $0x1f8] sm:$0xff]
  %5895 = vmatprep.subr.mxu0 %v5832
  %5896 = vmatpush1.msra.mxu0 %v5831
  %5897 = vmatprep.subr.mxu0 %v5836
  %5898 = vmatpush1.msra.mxu0 %v5835
  %5899 = vmatprep.subr.mxu0 %v5840
  %5900 = vmatpush1.msra.mxu0 %v5839
  %5901 = vmatprep.subr.mxu0 %v5844
  %5902 = vmatpush1.msra.mxu0 %v5843
  %5903 = vmatprep.subr.mxu0 %v5848
  %5904 = vmatpush1.msra.mxu0 %v5847
  %5905 = vmatprep.subr.mxu0 %v5852
  %5906 = vmatpush1.msra.mxu0 %v5851
  %5907 = vmatprep.subr.mxu0 %v5856
  %5908 = vmatpush1.msra.mxu0 %v5855
  %5909 = vmatprep.subr.mxu0 %v5860
  %5910 = vmatpush1.msra.mxu0 %v5859
  %5911 = vmatprep.subr.mxu0 %v5864
  %5912 = vmatpush1.msra.mxu0 %v5863
  %5913 = vmatprep.subr.mxu0 %v5868
  %5914 = vmatpush1.msra.mxu0 %v5867
  %5915 = vmatprep.subr.mxu0 %v5872
  %5916 = vmatpush1.msra.mxu0 %v5871
  %5917 = vmatprep.subr.mxu0 %v5876
  %5918 = vmatpush1.msra.mxu0 %v5875
  %5919 = vmatprep.subr.mxu0 %v5880
  %5920 = vmatpush1.msra.mxu0 %v5879
  %5921 = vmatprep.subr.mxu0 %v5884
  %5922 = vmatpush1.msra.mxu0 %v5883
  %5923 = vmatprep.subr.mxu0 %v5888
  %5924 = vmatpush1.msra.mxu0 %v5887
  %5925 = vmatprep.subr.mxu0 %v5892
  %5926 = vmatpush1.msra.mxu0 %v5891
  %5927 = vmatprep.subr.mxu0 0.0
  %5928 = vmatpush1.msra.mxu0 0.0
  %5929 = vmatprep.subr.mxu0 0.0
  %5930 = vmatpush1.msra.mxu0 0.0
  %5931 = vmatprep.subr.mxu0 0.0
  %5932 = vmatpush1.msra.mxu0 0.0
  %5933 = vmatprep.subr.mxu0 0.0
  %5934 = vmatpush1.msra.mxu0 0.0
  %5935 = vmatprep.subr.mxu0 0.0
  %5936 = vmatpush1.msra.mxu0 0.0
  %5937 = vmatprep.subr.mxu0 0.0
  %5938 = vmatpush1.msra.mxu0 0.0
  %5939 = vmatprep.subr.mxu0 0.0
  %5940 = vmatpush1.msra.mxu0 0.0
  %5941 = vmatprep.subr.mxu0 0.0
  %5942 = vmatpush1.msra.mxu0 0.0
  %5943 = vmatprep.subr.mxu0 0.0
  %5944 = vmatpush1.msra.mxu0 0.0
  %5945 = vmatprep.subr.mxu0 0.0
  %5946 = vmatpush1.msra.mxu0 0.0
  %5947 = vmatprep.subr.mxu0 0.0
  %5948 = vmatpush1.msra.mxu0 0.0
  %5949 = vmatprep.subr.mxu0 0.0
  %5950 = vmatpush1.msra.mxu0 0.0
  %5951 = vmatprep.subr.mxu0 0.0
  %5952 = vmatpush1.msra.mxu0 0.0
  %5953 = vmatprep.subr.mxu0 0.0
  %5954 = vmatpush1.msra.mxu0 0.0
  %5955 = vmatprep.subr.mxu0 0.0
  %5956 = vmatpush1.msra.mxu0 0.0
  %5957 = vmatprep.subr.mxu0 0.0
  %5958 = vmatpush1.msra.mxu0 0.0
  %5959 = vmatprep.mubr.f32.mxu0 0.0
  %5960 = vmatmul.mubr.f32.gmra.mrb[0].mxu0 %v5827
  %v5961 = vpop.f32.mrb[0].mxu0
  %v5962 = vadd.f32 0.0, %v5961
  %v5963 = vpop.f32.mrb[0].mxu0
  %v5964 = vadd.f32 0.0, %v5963
  %5965 = vdwg.mxu0
  %5966 = vmatprep.subr.mxu0 %v5834
  %5967 = vmatpush1.msra.mxu0 %v5833
  %5968 = vmatprep.subr.mxu0 %v5838
  %5969 = vmatpush1.msra.mxu0 %v5837
  %5970 = vmatprep.subr.mxu0 %v5842
  %5971 = vmatpush1.msra.mxu0 %v5841
  %5972 = vmatprep.subr.mxu0 %v5846
  %5973 = vmatpush1.msra.mxu0 %v5845
  %5974 = vmatprep.subr.mxu0 %v5850
  %5975 = vmatpush1.msra.mxu0 %v5849
  %5976 = vmatprep.subr.mxu0 %v5854
  %5977 = vmatpush1.msra.mxu0 %v5853
  %5978 = vmatprep.subr.mxu0 %v5858
  %5979 = vmatpush1.msra.mxu0 %v5857
  %5980 = vmatprep.subr.mxu0 %v5862
  %5981 = vmatpush1.msra.mxu0 %v5861
  %5982 = vmatprep.subr.mxu0 %v5866
  %5983 = vmatpush1.msra.mxu0 %v5865
  %5984 = vmatprep.subr.mxu0 %v5870
  %5985 = vmatpush1.msra.mxu0 %v5869
  %5986 = vmatprep.subr.mxu0 %v5874
  %5987 = vmatpush1.msra.mxu0 %v5873
  %5988 = vmatprep.subr.mxu0 %v5878
  %5989 = vmatpush1.msra.mxu0 %v5877
  %5990 = vmatprep.subr.mxu0 %v5882
  %5991 = vmatpush1.msra.mxu0 %v5881
  %5992 = vmatprep.subr.mxu0 %v5886
  %5993 = vmatpush1.msra.mxu0 %v5885
  %5994 = vmatprep.subr.mxu0 %v5890
  %5995 = vmatpush1.msra.mxu0 %v5889
  %5996 = vmatprep.subr.mxu0 %v5894
  %5997 = vmatpush1.msra.mxu0 %v5893
  %5998 = vmatprep.subr.mxu0 0.0
  %5999 = vmatpush1.msra.mxu0 0.0
  %6000 = vmatprep.subr.mxu0 0.0
  %6001 = vmatpush1.msra.mxu0 0.0
  %6002 = vmatprep.subr.mxu0 0.0
  %6003 = vmatpush1.msra.mxu0 0.0
  %6004 = vmatprep.subr.mxu0 0.0
  %6005 = vmatpush1.msra.mxu0 0.0
  %6006 = vmatprep.subr.mxu0 0.0
  %6007 = vmatpush1.msra.mxu0 0.0
  %6008 = vmatprep.subr.mxu0 0.0
  %6009 = vmatpush1.msra.mxu0 0.0
  %6010 = vmatprep.subr.mxu0 0.0
  %6011 = vmatpush1.msra.mxu0 0.0
  %6012 = vmatprep.subr.mxu0 0.0
  %6013 = vmatpush1.msra.mxu0 0.0
  %6014 = vmatprep.subr.mxu0 0.0
  %6015 = vmatpush1.msra.mxu0 0.0
  %6016 = vmatprep.subr.mxu0 0.0
  %6017 = vmatpush1.msra.mxu0 0.0
  %6018 = vmatprep.subr.mxu0 0.0
  %6019 = vmatpush1.msra.mxu0 0.0
  %6020 = vmatprep.subr.mxu0 0.0
  %6021 = vmatpush1.msra.mxu0 0.0
  %6022 = vmatprep.subr.mxu0 0.0
  %6023 = vmatpush1.msra.mxu0 0.0
  %6024 = vmatprep.subr.mxu0 0.0
  %6025 = vmatpush1.msra.mxu0 0.0
  %6026 = vmatprep.subr.mxu0 0.0
  %6027 = vmatpush1.msra.mxu0 0.0
  %6028 = vmatprep.subr.mxu0 0.0
  %6029 = vmatpush1.msra.mxu0 0.0
  %6030 = vmatprep.mubr.f32.mxu0 0.0
  %6031 = vmatmul.mubr.f32.gmra.mrb[0].mxu0 %v5827
  %v6032 = vpop.f32.mrb[0].mxu0
  %v6033 = vadd.f32 0.0, %v6032
  %v6034 = vpop.f32.mrb[0].mxu0
  %v6035 = vadd.f32 0.0, %v6034
  %6036 = vdwg.mxu0
  %v6041 = vcombine.low %v5962, %v5964
  %v6042 = vcombine.low %v6033, %v6035
  %v6044 = vunpack.c.l.s4 1983009808
  %v6045 = vunpack.c.0.s8 %v6044
  %v6046 = vlaneseq
  %v6047 = vshrl.u32 %v6046, 7
  %v6048 = vsub.s32 %v6045, %v6047
  %v6049 = vrot.slane %v6041, %v6048
  %v6051 = vunpack.c.l.s4 1983009808
  %v6052 = vunpack.c.0.s8 %v6051
  %v6053 = vlaneseq
  %v6054 = vshrl.u32 %v6053, 7
  %v6055 = vsub.s32 %v6052, %v6054
  %v6056 = vrot.slane %v6042, %v6055
  %v6057 = vcombine.low %v6049, %v6056
  %v6059 = vadd.f32 %v5830, %v6057
  %v6060 = vxor.u32 %v6059, 2147483648
  %v6061 = vmul.f32 %v6060, 1.442695
  %v6062 = vpow.pop %v6061
  %v6063 = vadd.f32 %v6062, 1.0
  %v6064 = vrcp.pop %v6063
  %v6065 = vmul.f32 1.0, %v6064
  %v6067 = vrot.slane %v6059, 2
  %v6069 = vxor.u32 %v6067, 2147483648
  %v6070 = vmul.f32 %v6069, 1.442695
  %v6071 = vpow.pop %v6070
  %v6072 = vadd.f32 %v6071, 1.0
  %v6073 = vrcp.pop %v6072
  %v6074 = vmul.f32 1.0, %v6073
  %v6075 = vrot.slane %v6059, 4
  %v6077 = vtanh.pop %v6075
  %v6078 = vrot.slane %v6059, 6
  %v6080 = vxor.u32 %v6078, 2147483648
  %v6081 = vmul.f32 %v6080, 1.442695
  %v6082 = vpow.pop %v6081
  %v6083 = vadd.f32 %v6082, 1.0
  %v6084 = vrcp.pop %v6083
  %v6085 = vmul.f32 1.0, %v6084
  %v6086 = vmul.f32 %v6074, %v5825
  %v6087 = vmul.f32 %v6065, %v6077
  %v6088 = vadd.f32 %v6086, %v6087
  %v6089 = vtanh.pop %v6088
  %v6090 = vmul.f32 %v6085, %v6089
  %s6091 = scalar_lea.vmem %s5, 14
  %6092 = vst [vmem:[%s6091] sm:$0x3] %v6090
  %6093 = vst [vmem:[#allocation5] sm:$0x3] %v6090
  %6094 = vst [vmem:[#allocation6] sm:$0x3] %v6088
  // Predicated region
  $region26: #{context_encoder_pallas.1} parent=0 // pred_check
    _
  $region27: #{context_encoder_pallas.1} parent=0 // pred_check_branch
    %6096 = sbr.rel (0) target = $region29
  $region28: #{context_encoder_pallas.1} parent=0 // pred_region
    _
  $region29: #{context_encoder_pallas.1} parent=0 // pred_fallthru
    _
  // Predicated region
  $region30: #{context_encoder_pallas.1} parent=0 // pred_check
    _
  $region31: #{context_encoder_pallas.1} parent=0 // pred_check_branch
    %6098 = sbr.rel (0) target = $region33
  $region32: #{context_encoder_pallas.1} parent=0 // pred_region
    _
  $region33: #{context_encoder_pallas.1} parent=0 // pred_fallthru
    _

</llo_original>
